<compile_context>
chip_gen: v6e
topology: v6e:2x2x1
jax: 0.10.0
libtpu: 0.0.40
codegen_flags: <defaults>
</compile_context>

<pallas_src>
import functools

import jax
import jax.numpy as jnp
from jax.experimental import pallas as pl
from jax.experimental.pallas import tpu as pltpu

LATENT_SIZE = 100
N_CLASSES = 10
NB_FILTER = 8            # small synthetic size (PyTorch module is parametric in nb_filter)
BN_EPS = 1e-5
VMEM_LIMIT_BYTES = 32 * 1024 * 1024   # live footprint is <4 MiB; safe even on v7x (64 MiB)


# ConvTranspose2d(k=4, s=2, p=1): output parity -> ((input row/col delta, kernel tap), ...)
#   even output rows (oh=2p):   x[p] * W[kh=1] + x[p-1] * W[kh=3]
#   odd  output rows (oh=2p+1): x[p] * W[kh=2] + x[p+1] * W[kh=0]
_TAPS = (((0, 1), (-1, 3)), ((0, 2), (1, 0)))


def _parity_taps(a, b):
    """Tap list [((dh, dw), (kh, kw)), ...] for output parity (oh%2, ow%2) = (a, b).

    Single source of truth for the tap order shared by the weight pre-stacking
    (prepare_generator_params) and the in-kernel shifted-window concatenation.
    """
    return [((dh, dw), (kh, kw)) for (dh, kh) in _TAPS[a] for (dw, kw) in _TAPS[b]]


@functools.lru_cache(maxsize=None)
def _roll_sign():
    """Sign s so that pltpu.roll(x, shift=(s*d) % n, axis=-1)[..., i] == x[..., (i+d) % n].

    pltpu.roll follows jnp.roll semantics (elements move forward by `shift`),
    i.e. s = -1; this tiny one-off probe guards against the opposite rotate
    convention.  It must run outside jit (prepare_generator_params calls it) so
    the cached result is a plain Python int by the time the kernels are traced.
    """
    def probe(o_ref):
        o_ref[...] = pltpu.roll(
            jax.lax.broadcasted_iota(jnp.int32, (8, 128), 1), shift=1, axis=1)

    try:
        r = pl.pallas_call(
            probe, out_shape=jax.ShapeDtypeStruct((8, 128), jnp.int32))()
        return 1 if int(r[0, 0]) == 1 else -1
    except Exception:          # defensive: fall back to the jnp.roll convention
        return -1


# ----------------------------------------------------------------------------
# Pallas kernels (single invocation, whole arrays resident in VMEM)
# ----------------------------------------------------------------------------
def _head_kernel(label_ref, wemb_ref, bemb_ref, latent_ref, w1_ref, o_ref):
    """embedding Linear + latent modulation + layer1 ConvT(k4,s1,p0 on 1x1) + ReLU.

    layer1 on a 1x1 spatial input is a pure matmul; w1_ref columns are ordered
    (cout, kh, kw), so o_ref is the flattened (N, C1*16) layer-1 activation with
    1024 dense lanes.
    """
    emb = jnp.dot(label_ref[...], wemb_ref[...], preferred_element_type=jnp.float32)
    emb = emb + bemb_ref[...]
    x = emb * latent_ref[...]                                         # (N, latent)
    y = jnp.dot(x, w1_ref[...], preferred_element_type=jnp.float32)   # (N, C1*16)
    o_ref[...] = jnp.maximum(y, 0.0)


def _convt_parity_kernel(*refs, H, W, n_valid, bn, use_tanh):
    """Fused ConvTranspose2d(4, 2, 1, bias=False) [+ train-mode BatchNorm + ReLU | + Tanh].

    Lane-dense transposed layout (channels in sublanes, pixels in lanes):
      x_ref: (Cin, Rp)         Rp = lane-padded N*H*W, row-major (n, h, w); only the
                               first n_valid lanes are real pixels.
      w_ref: (4, Cout, 4*Cin)  per-output-parity tap-stacked weights (_parity_taps order)
      o_ref: (4, Cout, Rp)     parity slabs, p = 2*(oh%2) + (ow%2)
    The 2x overlap-add happens in VMEM via the parity decomposition: each output
    parity is ONE MXU matmul over the K-concatenated shifted windows.
    """
    if bn:
        x_ref, w_ref, gamma_ref, beta_ref, o_ref = refs
    else:
        x_ref, w_ref, o_ref = refs

    x = x_ref[...]
    _, rp = x.shape
    sgn = _roll_sign()

    # Image-boundary validity masks on the flattened lane index.  H and W are
    # powers of two, so positions reduce to bitwise ANDs (no vector int division).
    r = jax.lax.broadcasted_iota(jnp.int32, (1, rp), 1)
    wpos = r & (W - 1)                 # w within the image row
    hwpos = r & (H * W - 1)            # (h, w) within the image
    valid = None if rp == n_valid else (r < n_valid)
    row_ok = {-1: hwpos >= W, 0: None, 1: hwpos < (H - 1) * W}
    col_ok = {-1: wpos >= 1, 0: None, 1: wpos < (W - 1)}

    # The 9 distinct shifted windows, materialized once (deduped across 16 taps).
    # pltpu.roll wraps rows across image / array / padding boundaries, but every
    # wrapped or padded lane is zeroed by the masks below.
    shifted = {}
    for dh in (-1, 0, 1):
        for dw in (-1, 0, 1):
            d = dh * W + dw
            s = x if d == 0 else pltpu.roll(x, shift=(sgn * d) % rp, axis=1)
            mask = valid
            for cond in (row_ok[dh], col_ok[dw]):
                if cond is not None:
                    mask = cond if mask is None else jnp.logical_and(mask, cond)
            if mask is not None:
                s = jnp.where(mask, s, 0.0)
            shifted[(dh, dw)] = s

    accs = []
    for a in (0, 1):                   # output row parity
        for b in (0, 1):               # output col parity
            xcat = jnp.concatenate(
                [shifted[dhdw] for dhdw, _ in _parity_taps(a, b)], axis=0)  # (4*Cin, Rp)
            acc = jnp.dot(w_ref[2 * a + b], xcat,
                          preferred_element_type=jnp.float32)              # (Cout, Rp)
            if bn:
                accs.append(acc)       # statistics need all 4 parity slabs
            else:
                o_ref[2 * a + b] = jnp.tanh(acc) if use_tanh else acc

    if bn:
        # Train-mode BatchNorm2d with biased batch statistics, computed in one
        # pass (sum / sum-of-squares), fused with ReLU.  Padding lanes hold exact
        # zeros (their windows are masked), so they do not perturb the sums and
        # the count uses only the n_valid real pixels.
        # TODO(synk): eval-mode running statistics are not implemented.
        cnt = 4.0 * n_valid
        total = sum(jnp.sum(o, axis=1, keepdims=True) for o in accs)
        total_sq = sum(jnp.sum(o * o, axis=1, keepdims=True) for o in accs)
        mean = total / cnt
        var = total_sq / cnt - mean * mean
        scale = gamma_ref[...] * jax.lax.rsqrt(var + BN_EPS)
        shift = beta_ref[...] - mean * scale
        for p in range(4):
            o_ref[p] = jnp.maximum(accs[p] * scale + shift, 0.0)


# ----------------------------------------------------------------------------
# pallas_call wrappers (whole-array VMEM blocks, no grid)
# ----------------------------------------------------------------------------
def head_block(label, w_emb, b_emb, latent, w1r):
    n = latent.shape[0]
    return pl.pallas_call(
        _head_kernel,
        out_shape=jax.ShapeDtypeStruct((n, w1r.shape[1]), jnp.float32),
        compiler_params=pltpu.CompilerParams(vmem_limit_bytes=VMEM_LIMIT_BYTES),
    )(label, w_emb, b_emb, latent, w1r)


def convt_s2_block(x, w_taps, gamma=None, beta=None, *, H, W, bn, use_tanh):
    assert (H & (H - 1)) == 0 and (W & (W - 1)) == 0, \
        "bitmask position decoding requires power-of-two H, W"
    c_out = w_taps.shape[1]
    R = x.shape[1]
    Rp = ((R + 127) // 128) * 128          # lane-align the pixel axis (only layer 2 pads)
    if Rp != R:
        x = jnp.pad(x, ((0, 0), (0, Rp - R)))
    kern = functools.partial(_convt_parity_kernel, H=H, W=W, n_valid=R,
                             bn=bn, use_tanh=use_tanh)
    args = (x, w_taps) + ((gamma, beta) if bn else ())
    out = pl.pallas_call(
        kern,
        out_shape=jax.ShapeDtypeStruct((4, c_out, Rp), jnp.float32),
        compiler_params=pltpu.CompilerParams(vmem_limit_bytes=VMEM_LIMIT_BYTES),
    )(*args)
    return out if Rp == R else out[..., :R]


def _interleave_parity(o4, n, H, W):
    """(4, C, N*H*W) parity slabs -> (C, N*2H*2W) dense row-major image.

    TODO(synk): pure XLA permutation (<=1 MiB); doing it in-kernel would need a
    lane-granular shuffle that Mosaic does not reliably support.
    """
    c = o4.shape[1]
    t = o4.reshape(2, 2, c, n, H, W)              # (a, b, c, n, h, w)
    t = jnp.transpose(t, (2, 3, 4, 0, 5, 1))      # (c, n, h, a, w, b)
    return t.reshape(c, n * 2 * H * 2 * W)


# ----------------------------------------------------------------------------
# Parameter preparation (one-off, outside jit) and Generator forward
# ----------------------------------------------------------------------------
def prepare_generator_params(params):
    """Convert PyTorch-layout parameters to kernel layouts (done once, not per call)."""
    _roll_sign()    # cache the rotate-convention probe before any kernel is traced

    def stack_taps(w):      # (Cin, Cout, 4, 4) -> (4, Cout, 4*Cin), _parity_taps order
        blocks = []
        for a in (0, 1):
            for b in (0, 1):
                blocks.append(jnp.concatenate(
                    [w[:, :, kh, kw].T for _, (kh, kw) in _parity_taps(a, b)], axis=1))
        return jnp.stack(blocks, axis=0)

    gp = {
        "w_emb": params["w_emb"],
        "b_emb": params["b_emb"],
        "w1r": params["w1"].reshape(params["w1"].shape[0], -1),   # (latent, C1*16)
    }
    for i in (2, 3, 4, 5):
        gp[f"w{i}t"] = stack_taps(params[f"w{i}"])
    for i in (2, 3, 4):
        gp[f"g{i}"] = params[f"g{i}"].reshape(-1, 1)              # channels -> sublanes
        gp[f"b{i}"] = params[f"b{i}"].reshape(-1, 1)
    return gp


def generator_forward(latent, label, gp):
    n = latent.shape[0]
    c1 = gp["w1r"].shape[1] // 16

    # K1: embedding Linear + modulation + layer1 + ReLU -> (N, C1*16), lane-dense
    y = head_block(label, gp["w_emb"], gp["b_emb"], latent, gp["w1r"])
    # tiny XLA permutation into channels-in-sublanes / pixels-in-lanes layout
    x = y.reshape(n, c1, 16).transpose(1, 0, 2).reshape(c1, n * 16)   # (C1, N*4*4)

    # K2-K4: ConvTranspose(4,2,1) + BatchNorm + ReLU, one fused VMEM kernel per layer
    spatial = 4
    for i in (2, 3, 4):
        o4 = convt_s2_block(x, gp[f"w{i}t"], gp[f"g{i}"], gp[f"b{i}"],
                            H=spatial, W=spatial, bn=True, use_tanh=False)
        x = _interleave_parity(o4, n, spatial, spatial)
        spatial *= 2

    # K5: ConvTranspose(4,2,1) + Tanh
    o4 = convt_s2_block(x, gp["w5t"], H=spatial, W=spatial, bn=False, use_tanh=True)
    img = _interleave_parity(o4, n, spatial, spatial).reshape(3, n, 2 * spatial, 2 * spatial)
    return jnp.transpose(img, (1, 0, 2, 3))                           # NCHW (N, 3, 64, 64)


def init_params(key, latent_size=LATENT_SIZE, nf=NB_FILTER, n_classes=N_CLASSES):
    ks = jax.random.split(key, 8)
    std = 0.02
    return {
        "w_emb": jax.random.normal(ks[0], (n_classes, latent_size), jnp.float32) * std,
        "b_emb": jax.random.normal(ks[1], (1, latent_size), jnp.float32) * std,
        # PyTorch ConvTranspose2d weight layout: (Cin, Cout, kH, kW)
        "w1": jax.random.normal(ks[2], (latent_size, nf * 8, 4, 4), jnp.float32) * std,
        "w2": jax.random.normal(ks[3], (nf * 8, nf * 4, 4, 4), jnp.float32) * std,
        "w3": jax.random.normal(ks[4], (nf * 4, nf * 2, 4, 4), jnp.float32) * std,
        "w4": jax.random.normal(ks[5], (nf * 2, nf, 4, 4), jnp.float32) * std,
        "w5": jax.random.normal(ks[6], (nf, 3, 4, 4), jnp.float32) * std,
        # BatchNorm2d defaults: weight=1, bias=0 (train-mode batch statistics)
        "g2": jnp.ones((1, nf * 4), jnp.float32),
        "b2": jnp.zeros((1, nf * 4), jnp.float32),
        "g3": jnp.ones((1, nf * 2), jnp.float32),
        "b3": jnp.zeros((1, nf * 2), jnp.float32),
        "g4": jnp.ones((1, nf), jnp.float32),
        "b4": jnp.zeros((1, nf), jnp.float32),
    }


# ----------------------------------------------------------------------------
# Plain-JAX reference (same math, used for an in-script numerical self-check)
# ----------------------------------------------------------------------------
def _reference_forward(latent, label, params):
    hi = jax.lax.Precision.HIGHEST

    emb = jnp.dot(label, params["w_emb"], precision=hi) + params["b_emb"]
    x = emb * latent
    y = jnp.einsum("nc,cohw->nohw", x, params["w1"], precision=hi)   # (N, C1, 4, 4)
    y = jax.nn.relu(y)

    def convt(x_nchw, w):                                            # k=4, s=2, p=1
        n_, _, h_, w_sz = x_nchw.shape
        co = w.shape[1]
        y_ = jnp.einsum("nihw,iokl->nohwkl", x_nchw, w, precision=hi)
        out = jnp.zeros((n_, co, 2 * h_ + 2, 2 * w_sz + 2), jnp.float32)
        for kh in range(4):
            for kw in range(4):
                out = out.at[:, :, kh:kh + 2 * h_:2, kw:kw + 2 * w_sz:2].add(y_[..., kh, kw])
        return out[:, :, 1:1 + 2 * h_, 1:1 + 2 * w_sz]

    def bn_relu(x_nchw, g, b):
        mean = jnp.mean(x_nchw, axis=(0, 2, 3), keepdims=True)
        var = jnp.mean((x_nchw - mean) ** 2, axis=(0, 2, 3), keepdims=True)
        y_ = (x_nchw - mean) * jax.lax.rsqrt(var + BN_EPS)
        return jax.nn.relu(y_ * g.reshape(1, -1, 1, 1) + b.reshape(1, -1, 1, 1))

    y = bn_relu(convt(y, params["w2"]), params["g2"], params["b2"])
    y = bn_relu(convt(y, params["w3"]), params["g3"], params["b3"])
    y = bn_relu(convt(y, params["w4"]), params["g4"], params["b4"])
    return jnp.tanh(convt(y, params["w5"]))


if __name__ == "__main__":
    key = jax.random.PRNGKey(0)
    k_param, k_latent, k_label = jax.random.split(key, 3)

    batch = 2
    params = init_params(k_param)
    gen_params = prepare_generator_params(params)   # one-off kernel-layout weights

    latent = jax.random.normal(k_latent, (batch, LATENT_SIZE), jnp.float32)
    label_idx = jax.random.randint(k_label, (batch,), 0, N_CLASSES)
    label = jax.nn.one_hot(label_idx, N_CLASSES, dtype=jnp.float32)

    fwd = jax.jit(generator_forward)
    out = jax.block_until_ready(fwd(latent, label, gen_params))

    assert out.shape == (batch, 3, 64, 64), out.shape
    assert out.dtype == jnp.float32
    assert bool(jnp.all(jnp.isfinite(out)))

    # Numerical self-check against a plain-JAX reference of the same module.
    ref = jax.block_until_ready(jax.jit(_reference_forward)(latent, label, params))
    err = float(jnp.max(jnp.abs(out - ref)))
    assert bool(jnp.allclose(out, ref, atol=2e-3, rtol=2e-3)), err

    print("KERNEL_OK")
</pallas_src>

<mosaic_0001>
module attributes {stable_mosaic.version = 11 : i64} {
  func.func @_head_kernel(%arg0: memref<2x10xf32, #tpu.memory_space<vmem>>, %arg1: memref<10x100xf32, #tpu.memory_space<vmem>>, %arg2: memref<1x100xf32, #tpu.memory_space<vmem>>, %arg3: memref<2x100xf32, #tpu.memory_space<vmem>>, %arg4: memref<100x1024xf32, #tpu.memory_space<vmem>>, %arg5: memref<2x1024xf32, #tpu.memory_space<vmem>>) attributes {dimension_semantics = [], scalar_prefetch = 0 : i64, scratch_operands = 0 : i64, tpu.core_type = #tpu.core_type<tc>} {
    %c0 = arith.constant 0 : index
    %c0_0 = arith.constant 0 : index
    %0 = vector.load %arg0[%c0, %c0_0] : memref<2x10xf32, #tpu.memory_space<vmem>>, vector<2x10xf32>
    %c0_1 = arith.constant 0 : index
    %c0_2 = arith.constant 0 : index
    %1 = vector.load %arg1[%c0_1, %c0_2] : memref<10x100xf32, #tpu.memory_space<vmem>>, vector<10x100xf32>
    %cst = arith.constant dense<0.000000e+00> : vector<2x100xf32>
    %2 = tpu.matmul %0, %1, %cst {dimension_numbers = #tpu.dot_dimension_numbers<[1], [0], [0], [1], [0, 0, 1, 1], [], []>} : vector<2x10xf32>, vector<10x100xf32>, vector<2x100xf32> -> vector<2x100xf32>
    %c0_3 = arith.constant 0 : index
    %c0_4 = arith.constant 0 : index
    %3 = vector.load %arg2[%c0_3, %c0_4] : memref<1x100xf32, #tpu.memory_space<vmem>>, vector<1x100xf32>
    %4 = vector.broadcast %3 : vector<1x100xf32> to vector<2x100xf32>
    %5 = arith.addf %2, %4 : vector<2x100xf32>
    %c0_5 = arith.constant 0 : index
    %c0_6 = arith.constant 0 : index
    %6 = vector.load %arg3[%c0_5, %c0_6] : memref<2x100xf32, #tpu.memory_space<vmem>>, vector<2x100xf32>
    %7 = arith.mulf %5, %6 : vector<2x100xf32>
    %c0_7 = arith.constant 0 : index
    %c0_8 = arith.constant 0 : index
    %8 = vector.load %arg4[%c0_7, %c0_8] : memref<100x1024xf32, #tpu.memory_space<vmem>>, vector<100x1024xf32>
    %cst_9 = arith.constant dense<0.000000e+00> : vector<2x1024xf32>
    %9 = tpu.matmul %7, %8, %cst_9 {dimension_numbers = #tpu.dot_dimension_numbers<[1], [0], [0], [1], [0, 0, 1, 1], [], []>} : vector<2x100xf32>, vector<100x1024xf32>, vector<2x1024xf32> -> vector<2x1024xf32>
    %cst_10 = arith.constant 0.000000e+00 : f32
    %10 = vector.broadcast %cst_10 : f32 to vector<2x1024xf32>
    %11 = arith.maximumf %9, %10 : vector<2x1024xf32>
    %c0_11 = arith.constant 0 : index
    %c0_12 = arith.constant 0 : index
    %12 = vector.load %arg5[%c0_11, %c0_12] : memref<2x1024xf32, #tpu.memory_space<vmem>>, vector<2x1024xf32>
    tpu.vector_store %arg5[%c0_11, %c0_12], %11 {strides = array<i32>} : memref<2x1024xf32, #tpu.memory_space<vmem>>, vector<2x1024xf32>,
    return
  }
}

module attributes {stable_mosaic.version = 11 : i64} {
  func.func @_convt_parity_kernel(%arg0: memref<64x128xf32, #tpu.memory_space<vmem>>, %arg1: memref<4x32x256xf32, #tpu.memory_space<vmem>>, %arg2: memref<32x1xf32, #tpu.memory_space<vmem>>, %arg3: memref<32x1xf32, #tpu.memory_space<vmem>>, %arg4: memref<4x32x128xf32, #tpu.memory_space<vmem>>) attributes {dimension_semantics = [], scalar_prefetch = 0 : i64, scratch_operands = 0 : i64, tpu.core_type = #tpu.core_type<tc>} {
    %c0 = arith.constant 0 : index
    %c0_0 = arith.constant 0 : index
    %0 = vector.load %arg0[%c0, %c0_0] : memref<64x128xf32, #tpu.memory_space<vmem>>, vector<64x128xf32>
    %1 = tpu.iota {dimensions = array<i32: 1>} : vector<1x128xi32>
    %c3_i32 = arith.constant 3 : i32
    %2 = vector.broadcast %c3_i32 : i32 to vector<1x128xi32>
    %3 = arith.andi %1, %2 : vector<1x128xi32>
    %c15_i32 = arith.constant 15 : i32
    %4 = vector.broadcast %c15_i32 : i32 to vector<1x128xi32>
    %5 = arith.andi %1, %4 : vector<1x128xi32>
    %c32_i32 = arith.constant 32 : i32
    %6 = vector.broadcast %c32_i32 : i32 to vector<1x128xi32>
    %7 = arith.cmpi slt, %1, %6 : vector<1x128xi32>
    %c4_i32 = arith.constant 4 : i32
    %8 = vector.broadcast %c4_i32 : i32 to vector<1x128xi32>
    %9 = arith.cmpi sge, %5, %8 : vector<1x128xi32>
    %c12_i32 = arith.constant 12 : i32
    %10 = vector.broadcast %c12_i32 : i32 to vector<1x128xi32>
    %11 = arith.cmpi slt, %5, %10 : vector<1x128xi32>
    %c1_i32 = arith.constant 1 : i32
    %12 = vector.broadcast %c1_i32 : i32 to vector<1x128xi32>
    %13 = arith.cmpi sge, %3, %12 : vector<1x128xi32>
    %c3_i32_1 = arith.constant 3 : i32
    %14 = vector.broadcast %c3_i32_1 : i32 to vector<1x128xi32>
    %15 = arith.cmpi slt, %3, %14 : vector<1x128xi32>
    %c5_i32 = arith.constant 5 : i32
    %16 = tpu.dynamic_rotate %0 by %c5_i32 dim 1 : vector<64x128xf32>, i32 -> vector<64x128xf32>
    %17 = arith.andi %7, %9 : vector<1x128xi1>
    %18 = arith.andi %17, %13 : vector<1x128xi1>
    %cst = arith.constant 0.000000e+00 : f32
    %19 = vector.shape_cast %18 : vector<1x128xi1> to vector<1x128xi1>
    %20 = vector.broadcast %19 : vector<1x128xi1> to vector<64x128xi1>
    %21 = vector.broadcast %cst : f32 to vector<64x128xf32>
    %22 = arith.select %20, %16, %21 : vector<64x128xi1>, vector<64x128xf32>
    %c4_i32_2 = arith.constant 4 : i32
    %23 = tpu.dynamic_rotate %0 by %c4_i32_2 dim 1 : vector<64x128xf32>, i32 -> vector<64x128xf32>
    %24 = arith.andi %7, %9 : vector<1x128xi1>
    %cst_3 = arith.constant 0.000000e+00 : f32
    %25 = vector.shape_cast %24 : vector<1x128xi1> to vector<1x128xi1>
    %26 = vector.broadcast %25 : vector<1x128xi1> to vector<64x128xi1>
    %27 = vector.broadcast %cst_3 : f32 to vector<64x128xf32>
    %28 = arith.select %26, %23, %27 : vector<64x128xi1>, vector<64x128xf32>
    %c3_i32_4 = arith.constant 3 : i32
    %29 = tpu.dynamic_rotate %0 by %c3_i32_4 dim 1 : vector<64x128xf32>, i32 -> vector<64x128xf32>
    %30 = arith.andi %7, %9 : vector<1x128xi1>
    %31 = arith.andi %30, %15 : vector<1x128xi1>
    %cst_5 = arith.constant 0.000000e+00 : f32
    %32 = vector.shape_cast %31 : vector<1x128xi1> to vector<1x128xi1>
    %33 = vector.broadcast %32 : vector<1x128xi1> to vector<64x128xi1>
    %34 = vector.broadcast %cst_5 : f32 to vector<64x128xf32>
    %35 = arith.select %33, %29, %34 : vector<64x128xi1>, vector<64x128xf32>
    %c1_i32_6 = arith.constant 1 : i32
    %36 = tpu.dynamic_rotate %0 by %c1_i32_6 dim 1 : vector<64x128xf32>, i32 -> vector<64x128xf32>
    %37 = arith.andi %7, %13 : vector<1x128xi1>
    %cst_7 = arith.constant 0.000000e+00 : f32
    %38 = vector.shape_cast %37 : vector<1x128xi1> to vector<1x128xi1>
    %39 = vector.broadcast %38 : vector<1x128xi1> to vector<64x128xi1>
    %40 = vector.broadcast %cst_7 : f32 to vector<64x128xf32>
    %41 = arith.select %39, %36, %40 : vector<64x128xi1>, vector<64x128xf32>
    %cst_8 = arith.constant 0.000000e+00 : f32
    %42 = vector.shape_cast %7 : vector<1x128xi1> to vector<1x128xi1>
    %43 = vector.broadcast %42 : vector<1x128xi1> to vector<64x128xi1>
    %44 = vector.broadcast %cst_8 : f32 to vector<64x128xf32>
    %45 = arith.select %43, %0, %44 : vector<64x128xi1>, vector<64x128xf32>
    %c127_i32 = arith.constant 127 : i32
    %46 = tpu.dynamic_rotate %0 by %c127_i32 dim 1 : vector<64x128xf32>, i32 -> vector<64x128xf32>
    %47 = arith.andi %7, %15 : vector<1x128xi1>
    %cst_9 = arith.constant 0.000000e+00 : f32
    %48 = vector.shape_cast %47 : vector<1x128xi1> to vector<1x128xi1>
    %49 = vector.broadcast %48 : vector<1x128xi1> to vector<64x128xi1>
    %50 = vector.broadcast %cst_9 : f32 to vector<64x128xf32>
    %51 = arith.select %49, %46, %50 : vector<64x128xi1>, vector<64x128xf32>
    %c125_i32 = arith.constant 125 : i32
    %52 = tpu.dynamic_rotate %0 by %c125_i32 dim 1 : vector<64x128xf32>, i32 -> vector<64x128xf32>
    %53 = arith.andi %7, %11 : vector<1x128xi1>
    %54 = arith.andi %53, %13 : vector<1x128xi1>
    %cst_10 = arith.constant 0.000000e+00 : f32
    %55 = vector.shape_cast %54 : vector<1x128xi1> to vector<1x128xi1>
    %56 = vector.broadcast %55 : vector<1x128xi1> to vector<64x128xi1>
    %57 = vector.broadcast %cst_10 : f32 to vector<64x128xf32>
    %58 = arith.select %56, %52, %57 : vector<64x128xi1>, vector<64x128xf32>
    %c124_i32 = arith.constant 124 : i32
    %59 = tpu.dynamic_rotate %0 by %c124_i32 dim 1 : vector<64x128xf32>, i32 -> vector<64x128xf32>
    %60 = arith.andi %7, %11 : vector<1x128xi1>
    %cst_11 = arith.constant 0.000000e+00 : f32
    %61 = vector.shape_cast %60 : vector<1x128xi1> to vector<1x128xi1>
    %62 = vector.broadcast %61 : vector<1x128xi1> to vector<64x128xi1>
    %63 = vector.broadcast %cst_11 : f32 to vector<64x128xf32>
    %64 = arith.select %62, %59, %63 : vector<64x128xi1>, vector<64x128xf32>
    %c123_i32 = arith.constant 123 : i32
    %65 = tpu.dynamic_rotate %0 by %c123_i32 dim 1 : vector<64x128xf32>, i32 -> vector<64x128xf32>
    %66 = arith.andi %7, %11 : vector<1x128xi1>
    %67 = arith.andi %66, %15 : vector<1x128xi1>
    %cst_12 = arith.constant 0.000000e+00 : f32
    %68 = vector.shape_cast %67 : vector<1x128xi1> to vector<1x128xi1>
    %69 = vector.broadcast %68 : vector<1x128xi1> to vector<64x128xi1>
    %70 = vector.broadcast %cst_12 : f32 to vector<64x128xf32>
    %71 = arith.select %69, %65, %70 : vector<64x128xi1>, vector<64x128xf32>
    %72 = tpu.concatenate %45, %41, %28, %22 in 0 : vector<64x128xf32>, vector<64x128xf32>, vector<64x128xf32>, vector<64x128xf32> -> vector<256x128xf32>
    %c0_13 = arith.constant 0 : index
    %c0_14 = arith.constant 0 : index
    %c0_15 = arith.constant 0 : index
    %73 = vector.load %arg1[%c0_13, %c0_14, %c0_15] : memref<4x32x256xf32, #tpu.memory_space<vmem>>, vector<1x32x256xf32>
    %74 = vector.shape_cast %73 : vector<1x32x256xf32> to vector<32x256xf32>
    %cst_16 = arith.constant dense<0.000000e+00> : vector<32x128xf32>
    %75 = tpu.matmul %74, %72, %cst_16 {dimension_numbers = #tpu.dot_dimension_numbers<[1], [0], [0], [1], [0, 0, 1, 1], [], []>} : vector<32x256xf32>, vector<256x128xf32>, vector<32x128xf32> -> vector<32x128xf32>
    %76 = tpu.concatenate %45, %51, %28, %35 in 0 : vector<64x128xf32>, vector<64x128xf32>, vector<64x128xf32>, vector<64x128xf32> -> vector<256x128xf32>
    %c1 = arith.constant 1 : index
    %c0_17 = arith.constant 0 : index
    %c0_18 = arith.constant 0 : index
    %77 = vector.load %arg1[%c1, %c0_17, %c0_18] : memref<4x32x256xf32, #tpu.memory_space<vmem>>, vector<1x32x256xf32>
    %78 = vector.shape_cast %77 : vector<1x32x256xf32> to vector<32x256xf32>
    %cst_19 = arith.constant dense<0.000000e+00> : vector<32x128xf32>
    %79 = tpu.matmul %78, %76, %cst_19 {dimension_numbers = #tpu.dot_dimension_numbers<[1], [0], [0], [1], [0, 0, 1, 1], [], []>} : vector<32x256xf32>, vector<256x128xf32>, vector<32x128xf32> -> vector<32x128xf32>
    %80 = tpu.concatenate %45, %41, %64, %58 in 0 : vector<64x128xf32>, vector<64x128xf32>, vector<64x128xf32>, vector<64x128xf32> -> vector<256x128xf32>
    %c2 = arith.constant 2 : index
    %c0_20 = arith.constant 0 : index
    %c0_21 = arith.constant 0 : index
    %81 = vector.load %arg1[%c2, %c0_20, %c0_21] : memref<4x32x256xf32, #tpu.memory_space<vmem>>, vector<1x32x256xf32>
    %82 = vector.shape_cast %81 : vector<1x32x256xf32> to vector<32x256xf32>
    %cst_22 = arith.constant dense<0.000000e+00> : vector<32x128xf32>
    %83 = tpu.matmul %82, %80, %cst_22 {dimension_numbers = #tpu.dot_dimension_numbers<[1], [0], [0], [1], [0, 0, 1, 1], [], []>} : vector<32x256xf32>, vector<256x128xf32>, vector<32x128xf32> -> vector<32x128xf32>
    %84 = tpu.concatenate %45, %51, %64, %71 in 0 : vector<64x128xf32>, vector<64x128xf32>, vector<64x128xf32>, vector<64x128xf32> -> vector<256x128xf32>
    %c3 = arith.constant 3 : index
    %c0_23 = arith.constant 0 : index
    %c0_24 = arith.constant 0 : index
    %85 = vector.load %arg1[%c3, %c0_23, %c0_24] : memref<4x32x256xf32, #tpu.memory_space<vmem>>, vector<1x32x256xf32>
    %86 = vector.shape_cast %85 : vector<1x32x256xf32> to vector<32x256xf32>
    %cst_25 = arith.constant dense<0.000000e+00> : vector<32x128xf32>
    %87 = tpu.matmul %86, %84, %cst_25 {dimension_numbers = #tpu.dot_dimension_numbers<[1], [0], [0], [1], [0, 0, 1, 1], [], []>} : vector<32x256xf32>, vector<256x128xf32>, vector<32x128xf32> -> vector<32x128xf32>
    %cst_26 = arith.constant dense<0.000000e+00> : vector<32xf32>
    %88 = vector.multi_reduction <add>, %75, %cst_26 [1] : vector<32x128xf32> to vector<32xf32>
    %89 = vector.shape_cast %88 : vector<32xf32> to vector<32x1xf32>
    %cst_27 = arith.constant 0.000000e+00 : f32
    %90 = vector.broadcast %cst_27 : f32 to vector<32x1xf32>
    %91 = arith.addf %90, %89 : vector<32x1xf32>
    %cst_28 = arith.constant dense<0.000000e+00> : vector<32xf32>
    %92 = vector.multi_reduction <add>, %79, %cst_28 [1] : vector<32x128xf32> to vector<32xf32>
    %93 = vector.shape_cast %92 : vector<32xf32> to vector<32x1xf32>
    %94 = arith.addf %91, %93 : vector<32x1xf32>
    %cst_29 = arith.constant dense<0.000000e+00> : vector<32xf32>
    %95 = vector.multi_reduction <add>, %83, %cst_29 [1] : vector<32x128xf32> to vector<32xf32>
    %96 = vector.shape_cast %95 : vector<32xf32> to vector<32x1xf32>
    %97 = arith.addf %94, %96 : vector<32x1xf32>
    %cst_30 = arith.constant dense<0.000000e+00> : vector<32xf32>
    %98 = vector.multi_reduction <add>, %87, %cst_30 [1] : vector<32x128xf32> to vector<32xf32>
    %99 = vector.shape_cast %98 : vector<32xf32> to vector<32x1xf32>
    %100 = arith.addf %97, %99 : vector<32x1xf32>
    %101 = arith.mulf %75, %75 : vector<32x128xf32>
    %cst_31 = arith.constant dense<0.000000e+00> : vector<32xf32>
    %102 = vector.multi_reduction <add>, %101, %cst_31 [1] : vector<32x128xf32> to vector<32xf32>
    %103 = vector.shape_cast %102 : vector<32xf32> to vector<32x1xf32>
    %cst_32 = arith.constant 0.000000e+00 : f32
    %104 = vector.broadcast %cst_32 : f32 to vector<32x1xf32>
    %105 = arith.addf %104, %103 : vector<32x1xf32>
    %106 = arith.mulf %79, %79 : vector<32x128xf32>
    %cst_33 = arith.constant dense<0.000000e+00> : vector<32xf32>
    %107 = vector.multi_reduction <add>, %106, %cst_33 [1] : vector<32x128xf32> to vector<32xf32>
    %108 = vector.shape_cast %107 : vector<32xf32> to vector<32x1xf32>
    %109 = arith.addf %105, %108 : vector<32x1xf32>
    %110 = arith.mulf %83, %83 : vector<32x128xf32>
    %cst_34 = arith.constant dense<0.000000e+00> : vector<32xf32>
    %111 = vector.multi_reduction <add>, %110, %cst_34 [1] : vector<32x128xf32> to vector<32xf32>
    %112 = vector.shape_cast %111 : vector<32xf32> to vector<32x1xf32>
    %113 = arith.addf %109, %112 : vector<32x1xf32>
    %114 = arith.mulf %87, %87 : vector<32x128xf32>
    %cst_35 = arith.constant dense<0.000000e+00> : vector<32xf32>
    %115 = vector.multi_reduction <add>, %114, %cst_35 [1] : vector<32x128xf32> to vector<32xf32>
    %116 = vector.shape_cast %115 : vector<32xf32> to vector<32x1xf32>
    %117 = arith.addf %113, %116 : vector<32x1xf32>
    %cst_36 = arith.constant 1.280000e+02 : f32
    %118 = vector.broadcast %cst_36 : f32 to vector<32x1xf32>
    %119 = arith.divf %100, %118 : vector<32x1xf32>
    %cst_37 = arith.constant 1.280000e+02 : f32
    %120 = vector.broadcast %cst_37 : f32 to vector<32x1xf32>
    %121 = arith.divf %117, %120 : vector<32x1xf32>
    %122 = arith.mulf %119, %119 : vector<32x1xf32>
    %123 = arith.subf %121, %122 : vector<32x1xf32>
    %c0_38 = arith.constant 0 : index
    %c0_39 = arith.constant 0 : index
    %124 = vector.load %arg2[%c0_38, %c0_39] : memref<32x1xf32, #tpu.memory_space<vmem>>, vector<32x1xf32>
    %cst_40 = arith.constant 9.99999974E-6 : f32
    %125 = vector.broadcast %cst_40 : f32 to vector<32x1xf32>
    %126 = arith.addf %123, %125 : vector<32x1xf32>
    %127 = math.rsqrt %126 : vector<32x1xf32>
    %128 = arith.mulf %124, %127 : vector<32x1xf32>
    %c0_41 = arith.constant 0 : index
    %c0_42 = arith.constant 0 : index
    %129 = vector.load %arg3[%c0_41, %c0_42] : memref<32x1xf32, #tpu.memory_space<vmem>>, vector<32x1xf32>
    %130 = arith.mulf %119, %128 : vector<32x1xf32>
    %131 = arith.subf %129, %130 : vector<32x1xf32>
    %132 = vector.broadcast %128 : vector<32x1xf32> to vector<32x128xf32>
    %133 = arith.mulf %75, %132 : vector<32x128xf32>
    %134 = vector.broadcast %131 : vector<32x1xf32> to vector<32x128xf32>
    %135 = arith.addf %133, %134 : vector<32x128xf32>
    %cst_43 = arith.constant 0.000000e+00 : f32
    %136 = vector.broadcast %cst_43 : f32 to vector<32x128xf32>
    %137 = arith.maximumf %135, %136 : vector<32x128xf32>
    %c0_44 = arith.constant 0 : index
    %c0_45 = arith.constant 0 : index
    %c0_46 = arith.constant 0 : index
    %138 = vector.load %arg4[%c0_44, %c0_45, %c0_46] : memref<4x32x128xf32, #tpu.memory_space<vmem>>, vector<1x32x128xf32>
    %139 = vector.shape_cast %138 : vector<1x32x128xf32> to vector<32x128xf32>
    %140 = vector.shape_cast %137 : vector<32x128xf32> to vector<1x32x128xf32>
    tpu.vector_store %arg4[%c0_44, %c0_45, %c0_46], %140 {strides = array<i32>} : memref<4x32x128xf32, #tpu.memory_space<vmem>>, vector<1x32x128xf32>,
    %141 = vector.broadcast %128 : vector<32x1xf32> to vector<32x128xf32>
    %142 = arith.mulf %79, %141 : vector<32x128xf32>
    %143 = vector.broadcast %131 : vector<32x1xf32> to vector<32x128xf32>
    %144 = arith.addf %142, %143 : vector<32x128xf32>
    %cst_47 = arith.constant 0.000000e+00 : f32
    %145 = vector.broadcast %cst_47 : f32 to vector<32x128xf32>
    %146 = arith.maximumf %144, %145 : vector<32x128xf32>
    %c1_48 = arith.constant 1 : index
    %c0_49 = arith.constant 0 : index
    %c0_50 = arith.constant 0 : index
    %147 = vector.load %arg4[%c1_48, %c0_49, %c0_50] : memref<4x32x128xf32, #tpu.memory_space<vmem>>, vector<1x32x128xf32>
    %148 = vector.shape_cast %147 : vector<1x32x128xf32> to vector<32x128xf32>
    %149 = vector.shape_cast %146 : vector<32x128xf32> to vector<1x32x128xf32>
    tpu.vector_store %arg4[%c1_48, %c0_49, %c0_50], %149 {strides = array<i32>} : memref<4x32x128xf32, #tpu.memory_space<vmem>>, vector<1x32x128xf32>,
    %150 = vector.broadcast %128 : vector<32x1xf32> to vector<32x128xf32>
    %151 = arith.mulf %83, %150 : vector<32x128xf32>
    %152 = vector.broadcast %131 : vector<32x1xf32> to vector<32x128xf32>
    %153 = arith.addf %151, %152 : vector<32x128xf32>
    %cst_51 = arith.constant 0.000000e+00 : f32
    %154 = vector.broadcast %cst_51 : f32 to vector<32x128xf32>
    %155 = arith.maximumf %153, %154 : vector<32x128xf32>
    %c2_52 = arith.constant 2 : index
    %c0_53 = arith.constant 0 : index
    %c0_54 = arith.constant 0 : index
    %156 = vector.load %arg4[%c2_52, %c0_53, %c0_54] : memref<4x32x128xf32, #tpu.memory_space<vmem>>, vector<1x32x128xf32>
    %157 = vector.shape_cast %156 : vector<1x32x128xf32> to vector<32x128xf32>
    %158 = vector.shape_cast %155 : vector<32x128xf32> to vector<1x32x128xf32>
    tpu.vector_store %arg4[%c2_52, %c0_53, %c0_54], %158 {strides = array<i32>} : memref<4x32x128xf32, #tpu.memory_space<vmem>>, vector<1x32x128xf32>,
    %159 = vector.broadcast %128 : vector<32x1xf32> to vector<32x128xf32>
    %160 = arith.mulf %87, %159 : vector<32x128xf32>
    %161 = vector.broadcast %131 : vector<32x1xf32> to vector<32x128xf32>
    %162 = arith.addf %160, %161 : vector<32x128xf32>
    %cst_55 = arith.constant 0.000000e+00 : f32
    %163 = vector.broadcast %cst_55 : f32 to vector<32x128xf32>
    %164 = arith.maximumf %162, %163 : vector<32x128xf32>
    %c3_56 = arith.constant 3 : index
    %c0_57 = arith.constant 0 : index
    %c0_58 = arith.constant 0 : index
    %165 = vector.load %arg4[%c3_56, %c0_57, %c0_58] : memref<4x32x128xf32, #tpu.memory_space<vmem>>, vector<1x32x128xf32>
    %166 = vector.shape_cast %165 : vector<1x32x128xf32> to vector<32x128xf32>
    %167 = vector.shape_cast %164 : vector<32x128xf32> to vector<1x32x128xf32>
    tpu.vector_store %arg4[%c3_56, %c0_57, %c0_58], %167 {strides = array<i32>} : memref<4x32x128xf32, #tpu.memory_space<vmem>>, vector<1x32x128xf32>,
    return
  }
}

module attributes {stable_mosaic.version = 11 : i64} {
  func.func @_convt_parity_kernel(%arg0: memref<32x128xf32, #tpu.memory_space<vmem>>, %arg1: memref<4x16x128xf32, #tpu.memory_space<vmem>>, %arg2: memref<16x1xf32, #tpu.memory_space<vmem>>, %arg3: memref<16x1xf32, #tpu.memory_space<vmem>>, %arg4: memref<4x16x128xf32, #tpu.memory_space<vmem>>) attributes {dimension_semantics = [], scalar_prefetch = 0 : i64, scratch_operands = 0 : i64, tpu.core_type = #tpu.core_type<tc>} {
    %c0 = arith.constant 0 : index
    %c0_0 = arith.constant 0 : index
    %0 = vector.load %arg0[%c0, %c0_0] : memref<32x128xf32, #tpu.memory_space<vmem>>, vector<32x128xf32>
    %1 = tpu.iota {dimensions = array<i32: 1>} : vector<1x128xi32>
    %c7_i32 = arith.constant 7 : i32
    %2 = vector.broadcast %c7_i32 : i32 to vector<1x128xi32>
    %3 = arith.andi %1, %2 : vector<1x128xi32>
    %c63_i32 = arith.constant 63 : i32
    %4 = vector.broadcast %c63_i32 : i32 to vector<1x128xi32>
    %5 = arith.andi %1, %4 : vector<1x128xi32>
    %c8_i32 = arith.constant 8 : i32
    %6 = vector.broadcast %c8_i32 : i32 to vector<1x128xi32>
    %7 = arith.cmpi sge, %5, %6 : vector<1x128xi32>
    %c56_i32 = arith.constant 56 : i32
    %8 = vector.broadcast %c56_i32 : i32 to vector<1x128xi32>
    %9 = arith.cmpi slt, %5, %8 : vector<1x128xi32>
    %c1_i32 = arith.constant 1 : i32
    %10 = vector.broadcast %c1_i32 : i32 to vector<1x128xi32>
    %11 = arith.cmpi sge, %3, %10 : vector<1x128xi32>
    %c7_i32_1 = arith.constant 7 : i32
    %12 = vector.broadcast %c7_i32_1 : i32 to vector<1x128xi32>
    %13 = arith.cmpi slt, %3, %12 : vector<1x128xi32>
    %c9_i32 = arith.constant 9 : i32
    %14 = tpu.dynamic_rotate %0 by %c9_i32 dim 1 : vector<32x128xf32>, i32 -> vector<32x128xf32>
    %15 = arith.andi %7, %11 : vector<1x128xi1>
    %cst = arith.constant 0.000000e+00 : f32
    %16 = vector.shape_cast %15 : vector<1x128xi1> to vector<1x128xi1>
    %17 = vector.broadcast %16 : vector<1x128xi1> to vector<32x128xi1>
    %18 = vector.broadcast %cst : f32 to vector<32x128xf32>
    %19 = arith.select %17, %14, %18 : vector<32x128xi1>, vector<32x128xf32>
    %c8_i32_2 = arith.constant 8 : i32
    %20 = tpu.dynamic_rotate %0 by %c8_i32_2 dim 1 : vector<32x128xf32>, i32 -> vector<32x128xf32>
    %cst_3 = arith.constant 0.000000e+00 : f32
    %21 = vector.shape_cast %7 : vector<1x128xi1> to vector<1x128xi1>
    %22 = vector.broadcast %21 : vector<1x128xi1> to vector<32x128xi1>
    %23 = vector.broadcast %cst_3 : f32 to vector<32x128xf32>
    %24 = arith.select %22, %20, %23 : vector<32x128xi1>, vector<32x128xf32>
    %c7_i32_4 = arith.constant 7 : i32
    %25 = tpu.dynamic_rotate %0 by %c7_i32_4 dim 1 : vector<32x128xf32>, i32 -> vector<32x128xf32>
    %26 = arith.andi %7, %13 : vector<1x128xi1>
    %cst_5 = arith.constant 0.000000e+00 : f32
    %27 = vector.shape_cast %26 : vector<1x128xi1> to vector<1x128xi1>
    %28 = vector.broadcast %27 : vector<1x128xi1> to vector<32x128xi1>
    %29 = vector.broadcast %cst_5 : f32 to vector<32x128xf32>
    %30 = arith.select %28, %25, %29 : vector<32x128xi1>, vector<32x128xf32>
    %c1_i32_6 = arith.constant 1 : i32
    %31 = tpu.dynamic_rotate %0 by %c1_i32_6 dim 1 : vector<32x128xf32>, i32 -> vector<32x128xf32>
    %cst_7 = arith.constant 0.000000e+00 : f32
    %32 = vector.shape_cast %11 : vector<1x128xi1> to vector<1x128xi1>
    %33 = vector.broadcast %32 : vector<1x128xi1> to vector<32x128xi1>
    %34 = vector.broadcast %cst_7 : f32 to vector<32x128xf32>
    %35 = arith.select %33, %31, %34 : vector<32x128xi1>, vector<32x128xf32>
    %c127_i32 = arith.constant 127 : i32
    %36 = tpu.dynamic_rotate %0 by %c127_i32 dim 1 : vector<32x128xf32>, i32 -> vector<32x128xf32>
    %cst_8 = arith.constant 0.000000e+00 : f32
    %37 = vector.shape_cast %13 : vector<1x128xi1> to vector<1x128xi1>
    %38 = vector.broadcast %37 : vector<1x128xi1> to vector<32x128xi1>
    %39 = vector.broadcast %cst_8 : f32 to vector<32x128xf32>
    %40 = arith.select %38, %36, %39 : vector<32x128xi1>, vector<32x128xf32>
    %c121_i32 = arith.constant 121 : i32
    %41 = tpu.dynamic_rotate %0 by %c121_i32 dim 1 : vector<32x128xf32>, i32 -> vector<32x128xf32>
    %42 = arith.andi %9, %11 : vector<1x128xi1>
    %cst_9 = arith.constant 0.000000e+00 : f32
    %43 = vector.shape_cast %42 : vector<1x128xi1> to vector<1x128xi1>
    %44 = vector.broadcast %43 : vector<1x128xi1> to vector<32x128xi1>
    %45 = vector.broadcast %cst_9 : f32 to vector<32x128xf32>
    %46 = arith.select %44, %41, %45 : vector<32x128xi1>, vector<32x128xf32>
    %c120_i32 = arith.constant 120 : i32
    %47 = tpu.dynamic_rotate %0 by %c120_i32 dim 1 : vector<32x128xf32>, i32 -> vector<32x128xf32>
    %cst_10 = arith.constant 0.000000e+00 : f32
    %48 = vector.shape_cast %9 : vector<1x128xi1> to vector<1x128xi1>
    %49 = vector.broadcast %48 : vector<1x128xi1> to vector<32x128xi1>
    %50 = vector.broadcast %cst_10 : f32 to vector<32x128xf32>
    %51 = arith.select %49, %47, %50 : vector<32x128xi1>, vector<32x128xf32>
    %c119_i32 = arith.constant 119 : i32
    %52 = tpu.dynamic_rotate %0 by %c119_i32 dim 1 : vector<32x128xf32>, i32 -> vector<32x128xf32>
    %53 = arith.andi %9, %13 : vector<1x128xi1>
    %cst_11 = arith.constant 0.000000e+00 : f32
    %54 = vector.shape_cast %53 : vector<1x128xi1> to vector<1x128xi1>
    %55 = vector.broadcast %54 : vector<1x128xi1> to vector<32x128xi1>
    %56 = vector.broadcast %cst_11 : f32 to vector<32x128xf32>
    %57 = arith.select %55, %52, %56 : vector<32x128xi1>, vector<32x128xf32>
    %58 = tpu.concatenate %0, %35, %24, %19 in 0 : vector<32x128xf32>, vector<32x128xf32>, vector<32x128xf32>, vector<32x128xf32> -> vector<128x128xf32>
    %c0_12 = arith.constant 0 : index
    %c0_13 = arith.constant 0 : index
    %c0_14 = arith.constant 0 : index
    %59 = vector.load %arg1[%c0_12, %c0_13, %c0_14] : memref<4x16x128xf32, #tpu.memory_space<vmem>>, vector<1x16x128xf32>
    %60 = vector.shape_cast %59 : vector<1x16x128xf32> to vector<16x128xf32>
    %cst_15 = arith.constant dense<0.000000e+00> : vector<16x128xf32>
    %61 = tpu.matmul %60, %58, %cst_15 {dimension_numbers = #tpu.dot_dimension_numbers<[1], [0], [0], [1], [0, 0, 1, 1], [], []>} : vector<16x128xf32>, vector<128x128xf32>, vector<16x128xf32> -> vector<16x128xf32>
    %62 = tpu.concatenate %0, %40, %24, %30 in 0 : vector<32x128xf32>, vector<32x128xf32>, vector<32x128xf32>, vector<32x128xf32> -> vector<128x128xf32>
    %c1 = arith.constant 1 : index
    %c0_16 = arith.constant 0 : index
    %c0_17 = arith.constant 0 : index
    %63 = vector.load %arg1[%c1, %c0_16, %c0_17] : memref<4x16x128xf32, #tpu.memory_space<vmem>>, vector<1x16x128xf32>
    %64 = vector.shape_cast %63 : vector<1x16x128xf32> to vector<16x128xf32>
    %cst_18 = arith.constant dense<0.000000e+00> : vector<16x128xf32>
    %65 = tpu.matmul %64, %62, %cst_18 {dimension_numbers = #tpu.dot_dimension_numbers<[1], [0], [0], [1], [0, 0, 1, 1], [], []>} : vector<16x128xf32>, vector<128x128xf32>, vector<16x128xf32> -> vector<16x128xf32>
    %66 = tpu.concatenate %0, %35, %51, %46 in 0 : vector<32x128xf32>, vector<32x128xf32>, vector<32x128xf32>, vector<32x128xf32> -> vector<128x128xf32>
    %c2 = arith.constant 2 : index
    %c0_19 = arith.constant 0 : index
    %c0_20 = arith.constant 0 : index
    %67 = vector.load %arg1[%c2, %c0_19, %c0_20] : memref<4x16x128xf32, #tpu.memory_space<vmem>>, vector<1x16x128xf32>
    %68 = vector.shape_cast %67 : vector<1x16x128xf32> to vector<16x128xf32>
    %cst_21 = arith.constant dense<0.000000e+00> : vector<16x128xf32>
    %69 = tpu.matmul %68, %66, %cst_21 {dimension_numbers = #tpu.dot_dimension_numbers<[1], [0], [0], [1], [0, 0, 1, 1], [], []>} : vector<16x128xf32>, vector<128x128xf32>, vector<16x128xf32> -> vector<16x128xf32>
    %70 = tpu.concatenate %0, %40, %51, %57 in 0 : vector<32x128xf32>, vector<32x128xf32>, vector<32x128xf32>, vector<32x128xf32> -> vector<128x128xf32>
    %c3 = arith.constant 3 : index
    %c0_22 = arith.constant 0 : index
    %c0_23 = arith.constant 0 : index
    %71 = vector.load %arg1[%c3, %c0_22, %c0_23] : memref<4x16x128xf32, #tpu.memory_space<vmem>>, vector<1x16x128xf32>
    %72 = vector.shape_cast %71 : vector<1x16x128xf32> to vector<16x128xf32>
    %cst_24 = arith.constant dense<0.000000e+00> : vector<16x128xf32>
    %73 = tpu.matmul %72, %70, %cst_24 {dimension_numbers = #tpu.dot_dimension_numbers<[1], [0], [0], [1], [0, 0, 1, 1], [], []>} : vector<16x128xf32>, vector<128x128xf32>, vector<16x128xf32> -> vector<16x128xf32>
    %cst_25 = arith.constant dense<0.000000e+00> : vector<16xf32>
    %74 = vector.multi_reduction <add>, %61, %cst_25 [1] : vector<16x128xf32> to vector<16xf32>
    %75 = vector.shape_cast %74 : vector<16xf32> to vector<16x1xf32>
    %cst_26 = arith.constant 0.000000e+00 : f32
    %76 = vector.broadcast %cst_26 : f32 to vector<16x1xf32>
    %77 = arith.addf %76, %75 : vector<16x1xf32>
    %cst_27 = arith.constant dense<0.000000e+00> : vector<16xf32>
    %78 = vector.multi_reduction <add>, %65, %cst_27 [1] : vector<16x128xf32> to vector<16xf32>
    %79 = vector.shape_cast %78 : vector<16xf32> to vector<16x1xf32>
    %80 = arith.addf %77, %79 : vector<16x1xf32>
    %cst_28 = arith.constant dense<0.000000e+00> : vector<16xf32>
    %81 = vector.multi_reduction <add>, %69, %cst_28 [1] : vector<16x128xf32> to vector<16xf32>
    %82 = vector.shape_cast %81 : vector<16xf32> to vector<16x1xf32>
    %83 = arith.addf %80, %82 : vector<16x1xf32>
    %cst_29 = arith.constant dense<0.000000e+00> : vector<16xf32>
    %84 = vector.multi_reduction <add>, %73, %cst_29 [1] : vector<16x128xf32> to vector<16xf32>
    %85 = vector.shape_cast %84 : vector<16xf32> to vector<16x1xf32>
    %86 = arith.addf %83, %85 : vector<16x1xf32>
    %87 = arith.mulf %61, %61 : vector<16x128xf32>
    %cst_30 = arith.constant dense<0.000000e+00> : vector<16xf32>
    %88 = vector.multi_reduction <add>, %87, %cst_30 [1] : vector<16x128xf32> to vector<16xf32>
    %89 = vector.shape_cast %88 : vector<16xf32> to vector<16x1xf32>
    %cst_31 = arith.constant 0.000000e+00 : f32
    %90 = vector.broadcast %cst_31 : f32 to vector<16x1xf32>
    %91 = arith.addf %90, %89 : vector<16x1xf32>
    %92 = arith.mulf %65, %65 : vector<16x128xf32>
    %cst_32 = arith.constant dense<0.000000e+00> : vector<16xf32>
    %93 = vector.multi_reduction <add>, %92, %cst_32 [1] : vector<16x128xf32> to vector<16xf32>
    %94 = vector.shape_cast %93 : vector<16xf32> to vector<16x1xf32>
    %95 = arith.addf %91, %94 : vector<16x1xf32>
    %96 = arith.mulf %69, %69 : vector<16x128xf32>
    %cst_33 = arith.constant dense<0.000000e+00> : vector<16xf32>
    %97 = vector.multi_reduction <add>, %96, %cst_33 [1] : vector<16x128xf32> to vector<16xf32>
    %98 = vector.shape_cast %97 : vector<16xf32> to vector<16x1xf32>
    %99 = arith.addf %95, %98 : vector<16x1xf32>
    %100 = arith.mulf %73, %73 : vector<16x128xf32>
    %cst_34 = arith.constant dense<0.000000e+00> : vector<16xf32>
    %101 = vector.multi_reduction <add>, %100, %cst_34 [1] : vector<16x128xf32> to vector<16xf32>
    %102 = vector.shape_cast %101 : vector<16xf32> to vector<16x1xf32>
    %103 = arith.addf %99, %102 : vector<16x1xf32>
    %cst_35 = arith.constant 5.120000e+02 : f32
    %104 = vector.broadcast %cst_35 : f32 to vector<16x1xf32>
    %105 = arith.divf %86, %104 : vector<16x1xf32>
    %cst_36 = arith.constant 5.120000e+02 : f32
    %106 = vector.broadcast %cst_36 : f32 to vector<16x1xf32>
    %107 = arith.divf %103, %106 : vector<16x1xf32>
    %108 = arith.mulf %105, %105 : vector<16x1xf32>
    %109 = arith.subf %107, %108 : vector<16x1xf32>
    %c0_37 = arith.constant 0 : index
    %c0_38 = arith.constant 0 : index
    %110 = vector.load %arg2[%c0_37, %c0_38] : memref<16x1xf32, #tpu.memory_space<vmem>>, vector<16x1xf32>
    %cst_39 = arith.constant 9.99999974E-6 : f32
    %111 = vector.broadcast %cst_39 : f32 to vector<16x1xf32>
    %112 = arith.addf %109, %111 : vector<16x1xf32>
    %113 = math.rsqrt %112 : vector<16x1xf32>
    %114 = arith.mulf %110, %113 : vector<16x1xf32>
    %c0_40 = arith.constant 0 : index
    %c0_41 = arith.constant 0 : index
    %115 = vector.load %arg3[%c0_40, %c0_41] : memref<16x1xf32, #tpu.memory_space<vmem>>, vector<16x1xf32>
    %116 = arith.mulf %105, %114 : vector<16x1xf32>
    %117 = arith.subf %115, %116 : vector<16x1xf32>
    %118 = vector.broadcast %114 : vector<16x1xf32> to vector<16x128xf32>
    %119 = arith.mulf %61, %118 : vector<16x128xf32>
    %120 = vector.broadcast %117 : vector<16x1xf32> to vector<16x128xf32>
    %121 = arith.addf %119, %120 : vector<16x128xf32>
    %cst_42 = arith.constant 0.000000e+00 : f32
    %122 = vector.broadcast %cst_42 : f32 to vector<16x128xf32>
    %123 = arith.maximumf %121, %122 : vector<16x128xf32>
    %c0_43 = arith.constant 0 : index
    %c0_44 = arith.constant 0 : index
    %c0_45 = arith.constant 0 : index
    %124 = vector.load %arg4[%c0_43, %c0_44, %c0_45] : memref<4x16x128xf32, #tpu.memory_space<vmem>>, vector<1x16x128xf32>
    %125 = vector.shape_cast %124 : vector<1x16x128xf32> to vector<16x128xf32>
    %126 = vector.shape_cast %123 : vector<16x128xf32> to vector<1x16x128xf32>
    tpu.vector_store %arg4[%c0_43, %c0_44, %c0_45], %126 {strides = array<i32>} : memref<4x16x128xf32, #tpu.memory_space<vmem>>, vector<1x16x128xf32>,
    %127 = vector.broadcast %114 : vector<16x1xf32> to vector<16x128xf32>
    %128 = arith.mulf %65, %127 : vector<16x128xf32>
    %129 = vector.broadcast %117 : vector<16x1xf32> to vector<16x128xf32>
    %130 = arith.addf %128, %129 : vector<16x128xf32>
    %cst_46 = arith.constant 0.000000e+00 : f32
    %131 = vector.broadcast %cst_46 : f32 to vector<16x128xf32>
    %132 = arith.maximumf %130, %131 : vector<16x128xf32>
    %c1_47 = arith.constant 1 : index
    %c0_48 = arith.constant 0 : index
    %c0_49 = arith.constant 0 : index
    %133 = vector.load %arg4[%c1_47, %c0_48, %c0_49] : memref<4x16x128xf32, #tpu.memory_space<vmem>>, vector<1x16x128xf32>
    %134 = vector.shape_cast %133 : vector<1x16x128xf32> to vector<16x128xf32>
    %135 = vector.shape_cast %132 : vector<16x128xf32> to vector<1x16x128xf32>
    tpu.vector_store %arg4[%c1_47, %c0_48, %c0_49], %135 {strides = array<i32>} : memref<4x16x128xf32, #tpu.memory_space<vmem>>, vector<1x16x128xf32>,
    %136 = vector.broadcast %114 : vector<16x1xf32> to vector<16x128xf32>
    %137 = arith.mulf %69, %136 : vector<16x128xf32>
    %138 = vector.broadcast %117 : vector<16x1xf32> to vector<16x128xf32>
    %139 = arith.addf %137, %138 : vector<16x128xf32>
    %cst_50 = arith.constant 0.000000e+00 : f32
    %140 = vector.broadcast %cst_50 : f32 to vector<16x128xf32>
    %141 = arith.maximumf %139, %140 : vector<16x128xf32>
    %c2_51 = arith.constant 2 : index
    %c0_52 = arith.constant 0 : index
    %c0_53 = arith.constant 0 : index
    %142 = vector.load %arg4[%c2_51, %c0_52, %c0_53] : memref<4x16x128xf32, #tpu.memory_space<vmem>>, vector<1x16x128xf32>
    %143 = vector.shape_cast %142 : vector<1x16x128xf32> to vector<16x128xf32>
    %144 = vector.shape_cast %141 : vector<16x128xf32> to vector<1x16x128xf32>
    tpu.vector_store %arg4[%c2_51, %c0_52, %c0_53], %144 {strides = array<i32>} : memref<4x16x128xf32, #tpu.memory_space<vmem>>, vector<1x16x128xf32>,
    %145 = vector.broadcast %114 : vector<16x1xf32> to vector<16x128xf32>
    %146 = arith.mulf %73, %145 : vector<16x128xf32>
    %147 = vector.broadcast %117 : vector<16x1xf32> to vector<16x128xf32>
    %148 = arith.addf %146, %147 : vector<16x128xf32>
    %cst_54 = arith.constant 0.000000e+00 : f32
    %149 = vector.broadcast %cst_54 : f32 to vector<16x128xf32>
    %150 = arith.maximumf %148, %149 : vector<16x128xf32>
    %c3_55 = arith.constant 3 : index
    %c0_56 = arith.constant 0 : index
    %c0_57 = arith.constant 0 : index
    %151 = vector.load %arg4[%c3_55, %c0_56, %c0_57] : memref<4x16x128xf32, #tpu.memory_space<vmem>>, vector<1x16x128xf32>
    %152 = vector.shape_cast %151 : vector<1x16x128xf32> to vector<16x128xf32>
    %153 = vector.shape_cast %150 : vector<16x128xf32> to vector<1x16x128xf32>
    tpu.vector_store %arg4[%c3_55, %c0_56, %c0_57], %153 {strides = array<i32>} : memref<4x16x128xf32, #tpu.memory_space<vmem>>, vector<1x16x128xf32>,
    return
  }
}

module attributes {stable_mosaic.version = 11 : i64} {
  func.func @_convt_parity_kernel(%arg0: memref<16x512xf32, #tpu.memory_space<vmem>>, %arg1: memref<4x8x64xf32, #tpu.memory_space<vmem>>, %arg2: memref<8x1xf32, #tpu.memory_space<vmem>>, %arg3: memref<8x1xf32, #tpu.memory_space<vmem>>, %arg4: memref<4x8x512xf32, #tpu.memory_space<vmem>>) attributes {dimension_semantics = [], scalar_prefetch = 0 : i64, scratch_operands = 0 : i64, tpu.core_type = #tpu.core_type<tc>} {
    %c0 = arith.constant 0 : index
    %c0_0 = arith.constant 0 : index
    %0 = vector.load %arg0[%c0, %c0_0] : memref<16x512xf32, #tpu.memory_space<vmem>>, vector<16x512xf32>
    %1 = tpu.iota {dimensions = array<i32: 1>} : vector<1x512xi32>
    %c15_i32 = arith.constant 15 : i32
    %2 = vector.broadcast %c15_i32 : i32 to vector<1x512xi32>
    %3 = arith.andi %1, %2 : vector<1x512xi32>
    %c255_i32 = arith.constant 255 : i32
    %4 = vector.broadcast %c255_i32 : i32 to vector<1x512xi32>
    %5 = arith.andi %1, %4 : vector<1x512xi32>
    %c16_i32 = arith.constant 16 : i32
    %6 = vector.broadcast %c16_i32 : i32 to vector<1x512xi32>
    %7 = arith.cmpi sge, %5, %6 : vector<1x512xi32>
    %c240_i32 = arith.constant 240 : i32
    %8 = vector.broadcast %c240_i32 : i32 to vector<1x512xi32>
    %9 = arith.cmpi slt, %5, %8 : vector<1x512xi32>
    %c1_i32 = arith.constant 1 : i32
    %10 = vector.broadcast %c1_i32 : i32 to vector<1x512xi32>
    %11 = arith.cmpi sge, %3, %10 : vector<1x512xi32>
    %c15_i32_1 = arith.constant 15 : i32
    %12 = vector.broadcast %c15_i32_1 : i32 to vector<1x512xi32>
    %13 = arith.cmpi slt, %3, %12 : vector<1x512xi32>
    %c17_i32 = arith.constant 17 : i32
    %14 = tpu.dynamic_rotate %0 by %c17_i32 dim 1 : vector<16x512xf32>, i32 -> vector<16x512xf32>
    %15 = arith.andi %7, %11 : vector<1x512xi1>
    %cst = arith.constant 0.000000e+00 : f32
    %16 = vector.shape_cast %15 : vector<1x512xi1> to vector<1x512xi1>
    %17 = vector.broadcast %16 : vector<1x512xi1> to vector<16x512xi1>
    %18 = vector.broadcast %cst : f32 to vector<16x512xf32>
    %19 = arith.select %17, %14, %18 : vector<16x512xi1>, vector<16x512xf32>
    %c16_i32_2 = arith.constant 16 : i32
    %20 = tpu.dynamic_rotate %0 by %c16_i32_2 dim 1 : vector<16x512xf32>, i32 -> vector<16x512xf32>
    %cst_3 = arith.constant 0.000000e+00 : f32
    %21 = vector.shape_cast %7 : vector<1x512xi1> to vector<1x512xi1>
    %22 = vector.broadcast %21 : vector<1x512xi1> to vector<16x512xi1>
    %23 = vector.broadcast %cst_3 : f32 to vector<16x512xf32>
    %24 = arith.select %22, %20, %23 : vector<16x512xi1>, vector<16x512xf32>
    %c15_i32_4 = arith.constant 15 : i32
    %25 = tpu.dynamic_rotate %0 by %c15_i32_4 dim 1 : vector<16x512xf32>, i32 -> vector<16x512xf32>
    %26 = arith.andi %7, %13 : vector<1x512xi1>
    %cst_5 = arith.constant 0.000000e+00 : f32
    %27 = vector.shape_cast %26 : vector<1x512xi1> to vector<1x512xi1>
    %28 = vector.broadcast %27 : vector<1x512xi1> to vector<16x512xi1>
    %29 = vector.broadcast %cst_5 : f32 to vector<16x512xf32>
    %30 = arith.select %28, %25, %29 : vector<16x512xi1>, vector<16x512xf32>
    %c1_i32_6 = arith.constant 1 : i32
    %31 = tpu.dynamic_rotate %0 by %c1_i32_6 dim 1 : vector<16x512xf32>, i32 -> vector<16x512xf32>
    %cst_7 = arith.constant 0.000000e+00 : f32
    %32 = vector.shape_cast %11 : vector<1x512xi1> to vector<1x512xi1>
    %33 = vector.broadcast %32 : vector<1x512xi1> to vector<16x512xi1>
    %34 = vector.broadcast %cst_7 : f32 to vector<16x512xf32>
    %35 = arith.select %33, %31, %34 : vector<16x512xi1>, vector<16x512xf32>
    %c511_i32 = arith.constant 511 : i32
    %36 = tpu.dynamic_rotate %0 by %c511_i32 dim 1 : vector<16x512xf32>, i32 -> vector<16x512xf32>
    %cst_8 = arith.constant 0.000000e+00 : f32
    %37 = vector.shape_cast %13 : vector<1x512xi1> to vector<1x512xi1>
    %38 = vector.broadcast %37 : vector<1x512xi1> to vector<16x512xi1>
    %39 = vector.broadcast %cst_8 : f32 to vector<16x512xf32>
    %40 = arith.select %38, %36, %39 : vector<16x512xi1>, vector<16x512xf32>
    %c497_i32 = arith.constant 497 : i32
    %41 = tpu.dynamic_rotate %0 by %c497_i32 dim 1 : vector<16x512xf32>, i32 -> vector<16x512xf32>
    %42 = arith.andi %9, %11 : vector<1x512xi1>
    %cst_9 = arith.constant 0.000000e+00 : f32
    %43 = vector.shape_cast %42 : vector<1x512xi1> to vector<1x512xi1>
    %44 = vector.broadcast %43 : vector<1x512xi1> to vector<16x512xi1>
    %45 = vector.broadcast %cst_9 : f32 to vector<16x512xf32>
    %46 = arith.select %44, %41, %45 : vector<16x512xi1>, vector<16x512xf32>
    %c496_i32 = arith.constant 496 : i32
    %47 = tpu.dynamic_rotate %0 by %c496_i32 dim 1 : vector<16x512xf32>, i32 -> vector<16x512xf32>
    %cst_10 = arith.constant 0.000000e+00 : f32
    %48 = vector.shape_cast %9 : vector<1x512xi1> to vector<1x512xi1>
    %49 = vector.broadcast %48 : vector<1x512xi1> to vector<16x512xi1>
    %50 = vector.broadcast %cst_10 : f32 to vector<16x512xf32>
    %51 = arith.select %49, %47, %50 : vector<16x512xi1>, vector<16x512xf32>
    %c495_i32 = arith.constant 495 : i32
    %52 = tpu.dynamic_rotate %0 by %c495_i32 dim 1 : vector<16x512xf32>, i32 -> vector<16x512xf32>
    %53 = arith.andi %9, %13 : vector<1x512xi1>
    %cst_11 = arith.constant 0.000000e+00 : f32
    %54 = vector.shape_cast %53 : vector<1x512xi1> to vector<1x512xi1>
    %55 = vector.broadcast %54 : vector<1x512xi1> to vector<16x512xi1>
    %56 = vector.broadcast %cst_11 : f32 to vector<16x512xf32>
    %57 = arith.select %55, %52, %56 : vector<16x512xi1>, vector<16x512xf32>
    %58 = tpu.concatenate %0, %35, %24, %19 in 0 : vector<16x512xf32>, vector<16x512xf32>, vector<16x512xf32>, vector<16x512xf32> -> vector<64x512xf32>
    %c0_12 = arith.constant 0 : index
    %c0_13 = arith.constant 0 : index
    %c0_14 = arith.constant 0 : index
    %59 = vector.load %arg1[%c0_12, %c0_13, %c0_14] : memref<4x8x64xf32, #tpu.memory_space<vmem>>, vector<1x8x64xf32>
    %60 = vector.shape_cast %59 : vector<1x8x64xf32> to vector<8x64xf32>
    %cst_15 = arith.constant dense<0.000000e+00> : vector<8x512xf32>
    %61 = tpu.matmul %60, %58, %cst_15 {dimension_numbers = #tpu.dot_dimension_numbers<[1], [0], [0], [1], [0, 0, 1, 1], [], []>} : vector<8x64xf32>, vector<64x512xf32>, vector<8x512xf32> -> vector<8x512xf32>
    %62 = tpu.concatenate %0, %40, %24, %30 in 0 : vector<16x512xf32>, vector<16x512xf32>, vector<16x512xf32>, vector<16x512xf32> -> vector<64x512xf32>
    %c1 = arith.constant 1 : index
    %c0_16 = arith.constant 0 : index
    %c0_17 = arith.constant 0 : index
    %63 = vector.load %arg1[%c1, %c0_16, %c0_17] : memref<4x8x64xf32, #tpu.memory_space<vmem>>, vector<1x8x64xf32>
    %64 = vector.shape_cast %63 : vector<1x8x64xf32> to vector<8x64xf32>
    %cst_18 = arith.constant dense<0.000000e+00> : vector<8x512xf32>
    %65 = tpu.matmul %64, %62, %cst_18 {dimension_numbers = #tpu.dot_dimension_numbers<[1], [0], [0], [1], [0, 0, 1, 1], [], []>} : vector<8x64xf32>, vector<64x512xf32>, vector<8x512xf32> -> vector<8x512xf32>
    %66 = tpu.concatenate %0, %35, %51, %46 in 0 : vector<16x512xf32>, vector<16x512xf32>, vector<16x512xf32>, vector<16x512xf32> -> vector<64x512xf32>
    %c2 = arith.constant 2 : index
    %c0_19 = arith.constant 0 : index
    %c0_20 = arith.constant 0 : index
    %67 = vector.load %arg1[%c2, %c0_19, %c0_20] : memref<4x8x64xf32, #tpu.memory_space<vmem>>, vector<1x8x64xf32>
    %68 = vector.shape_cast %67 : vector<1x8x64xf32> to vector<8x64xf32>
    %cst_21 = arith.constant dense<0.000000e+00> : vector<8x512xf32>
    %69 = tpu.matmul %68, %66, %cst_21 {dimension_numbers = #tpu.dot_dimension_numbers<[1], [0], [0], [1], [0, 0, 1, 1], [], []>} : vector<8x64xf32>, vector<64x512xf32>, vector<8x512xf32> -> vector<8x512xf32>
    %70 = tpu.concatenate %0, %40, %51, %57 in 0 : vector<16x512xf32>, vector<16x512xf32>, vector<16x512xf32>, vector<16x512xf32> -> vector<64x512xf32>
    %c3 = arith.constant 3 : index
    %c0_22 = arith.constant 0 : index
    %c0_23 = arith.constant 0 : index
    %71 = vector.load %arg1[%c3, %c0_22, %c0_23] : memref<4x8x64xf32, #tpu.memory_space<vmem>>, vector<1x8x64xf32>
    %72 = vector.shape_cast %71 : vector<1x8x64xf32> to vector<8x64xf32>
    %cst_24 = arith.constant dense<0.000000e+00> : vector<8x512xf32>
    %73 = tpu.matmul %72, %70, %cst_24 {dimension_numbers = #tpu.dot_dimension_numbers<[1], [0], [0], [1], [0, 0, 1, 1], [], []>} : vector<8x64xf32>, vector<64x512xf32>, vector<8x512xf32> -> vector<8x512xf32>
    %cst_25 = arith.constant dense<0.000000e+00> : vector<8xf32>
    %74 = vector.multi_reduction <add>, %61, %cst_25 [1] : vector<8x512xf32> to vector<8xf32>
    %75 = vector.shape_cast %74 : vector<8xf32> to vector<8x1xf32>
    %cst_26 = arith.constant 0.000000e+00 : f32
    %76 = vector.broadcast %cst_26 : f32 to vector<8x1xf32>
    %77 = arith.addf %76, %75 : vector<8x1xf32>
    %cst_27 = arith.constant dense<0.000000e+00> : vector<8xf32>
    %78 = vector.multi_reduction <add>, %65, %cst_27 [1] : vector<8x512xf32> to vector<8xf32>
    %79 = vector.shape_cast %78 : vector<8xf32> to vector<8x1xf32>
    %80 = arith.addf %77, %79 : vector<8x1xf32>
    %cst_28 = arith.constant dense<0.000000e+00> : vector<8xf32>
    %81 = vector.multi_reduction <add>, %69, %cst_28 [1] : vector<8x512xf32> to vector<8xf32>
    %82 = vector.shape_cast %81 : vector<8xf32> to vector<8x1xf32>
    %83 = arith.addf %80, %82 : vector<8x1xf32>
    %cst_29 = arith.constant dense<0.000000e+00> : vector<8xf32>
    %84 = vector.multi_reduction <add>, %73, %cst_29 [1] : vector<8x512xf32> to vector<8xf32>
    %85 = vector.shape_cast %84 : vector<8xf32> to vector<8x1xf32>
    %86 = arith.addf %83, %85 : vector<8x1xf32>
    %87 = arith.mulf %61, %61 : vector<8x512xf32>
    %cst_30 = arith.constant dense<0.000000e+00> : vector<8xf32>
    %88 = vector.multi_reduction <add>, %87, %cst_30 [1] : vector<8x512xf32> to vector<8xf32>
    %89 = vector.shape_cast %88 : vector<8xf32> to vector<8x1xf32>
    %cst_31 = arith.constant 0.000000e+00 : f32
    %90 = vector.broadcast %cst_31 : f32 to vector<8x1xf32>
    %91 = arith.addf %90, %89 : vector<8x1xf32>
    %92 = arith.mulf %65, %65 : vector<8x512xf32>
    %cst_32 = arith.constant dense<0.000000e+00> : vector<8xf32>
    %93 = vector.multi_reduction <add>, %92, %cst_32 [1] : vector<8x512xf32> to vector<8xf32>
    %94 = vector.shape_cast %93 : vector<8xf32> to vector<8x1xf32>
    %95 = arith.addf %91, %94 : vector<8x1xf32>
    %96 = arith.mulf %69, %69 : vector<8x512xf32>
    %cst_33 = arith.constant dense<0.000000e+00> : vector<8xf32>
    %97 = vector.multi_reduction <add>, %96, %cst_33 [1] : vector<8x512xf32> to vector<8xf32>
    %98 = vector.shape_cast %97 : vector<8xf32> to vector<8x1xf32>
    %99 = arith.addf %95, %98 : vector<8x1xf32>
    %100 = arith.mulf %73, %73 : vector<8x512xf32>
    %cst_34 = arith.constant dense<0.000000e+00> : vector<8xf32>
    %101 = vector.multi_reduction <add>, %100, %cst_34 [1] : vector<8x512xf32> to vector<8xf32>
    %102 = vector.shape_cast %101 : vector<8xf32> to vector<8x1xf32>
    %103 = arith.addf %99, %102 : vector<8x1xf32>
    %cst_35 = arith.constant 2.048000e+03 : f32
    %104 = vector.broadcast %cst_35 : f32 to vector<8x1xf32>
    %105 = arith.divf %86, %104 : vector<8x1xf32>
    %cst_36 = arith.constant 2.048000e+03 : f32
    %106 = vector.broadcast %cst_36 : f32 to vector<8x1xf32>
    %107 = arith.divf %103, %106 : vector<8x1xf32>
    %108 = arith.mulf %105, %105 : vector<8x1xf32>
    %109 = arith.subf %107, %108 : vector<8x1xf32>
    %c0_37 = arith.constant 0 : index
    %c0_38 = arith.constant 0 : index
    %110 = vector.load %arg2[%c0_37, %c0_38] : memref<8x1xf32, #tpu.memory_space<vmem>>, vector<8x1xf32>
    %cst_39 = arith.constant 9.99999974E-6 : f32
    %111 = vector.broadcast %cst_39 : f32 to vector<8x1xf32>
    %112 = arith.addf %109, %111 : vector<8x1xf32>
    %113 = math.rsqrt %112 : vector<8x1xf32>
    %114 = arith.mulf %110, %113 : vector<8x1xf32>
    %c0_40 = arith.constant 0 : index
    %c0_41 = arith.constant 0 : index
    %115 = vector.load %arg3[%c0_40, %c0_41] : memref<8x1xf32, #tpu.memory_space<vmem>>, vector<8x1xf32>
    %116 = arith.mulf %105, %114 : vector<8x1xf32>
    %117 = arith.subf %115, %116 : vector<8x1xf32>
    %118 = vector.broadcast %114 : vector<8x1xf32> to vector<8x512xf32>
    %119 = arith.mulf %61, %118 : vector<8x512xf32>
    %120 = vector.broadcast %117 : vector<8x1xf32> to vector<8x512xf32>
    %121 = arith.addf %119, %120 : vector<8x512xf32>
    %cst_42 = arith.constant 0.000000e+00 : f32
    %122 = vector.broadcast %cst_42 : f32 to vector<8x512xf32>
    %123 = arith.maximumf %121, %122 : vector<8x512xf32>
    %c0_43 = arith.constant 0 : index
    %c0_44 = arith.constant 0 : index
    %c0_45 = arith.constant 0 : index
    %124 = vector.load %arg4[%c0_43, %c0_44, %c0_45] : memref<4x8x512xf32, #tpu.memory_space<vmem>>, vector<1x8x512xf32>
    %125 = vector.shape_cast %124 : vector<1x8x512xf32> to vector<8x512xf32>
    %126 = vector.shape_cast %123 : vector<8x512xf32> to vector<1x8x512xf32>
    tpu.vector_store %arg4[%c0_43, %c0_44, %c0_45], %126 {strides = array<i32>} : memref<4x8x512xf32, #tpu.memory_space<vmem>>, vector<1x8x512xf32>,
    %127 = vector.broadcast %114 : vector<8x1xf32> to vector<8x512xf32>
    %128 = arith.mulf %65, %127 : vector<8x512xf32>
    %129 = vector.broadcast %117 : vector<8x1xf32> to vector<8x512xf32>
    %130 = arith.addf %128, %129 : vector<8x512xf32>
    %cst_46 = arith.constant 0.000000e+00 : f32
    %131 = vector.broadcast %cst_46 : f32 to vector<8x512xf32>
    %132 = arith.maximumf %130, %131 : vector<8x512xf32>
    %c1_47 = arith.constant 1 : index
    %c0_48 = arith.constant 0 : index
    %c0_49 = arith.constant 0 : index
    %133 = vector.load %arg4[%c1_47, %c0_48, %c0_49] : memref<4x8x512xf32, #tpu.memory_space<vmem>>, vector<1x8x512xf32>
    %134 = vector.shape_cast %133 : vector<1x8x512xf32> to vector<8x512xf32>
    %135 = vector.shape_cast %132 : vector<8x512xf32> to vector<1x8x512xf32>
    tpu.vector_store %arg4[%c1_47, %c0_48, %c0_49], %135 {strides = array<i32>} : memref<4x8x512xf32, #tpu.memory_space<vmem>>, vector<1x8x512xf32>,
    %136 = vector.broadcast %114 : vector<8x1xf32> to vector<8x512xf32>
    %137 = arith.mulf %69, %136 : vector<8x512xf32>
    %138 = vector.broadcast %117 : vector<8x1xf32> to vector<8x512xf32>
    %139 = arith.addf %137, %138 : vector<8x512xf32>
    %cst_50 = arith.constant 0.000000e+00 : f32
    %140 = vector.broadcast %cst_50 : f32 to vector<8x512xf32>
    %141 = arith.maximumf %139, %140 : vector<8x512xf32>
    %c2_51 = arith.constant 2 : index
    %c0_52 = arith.constant 0 : index
    %c0_53 = arith.constant 0 : index
    %142 = vector.load %arg4[%c2_51, %c0_52, %c0_53] : memref<4x8x512xf32, #tpu.memory_space<vmem>>, vector<1x8x512xf32>
    %143 = vector.shape_cast %142 : vector<1x8x512xf32> to vector<8x512xf32>
    %144 = vector.shape_cast %141 : vector<8x512xf32> to vector<1x8x512xf32>
    tpu.vector_store %arg4[%c2_51, %c0_52, %c0_53], %144 {strides = array<i32>} : memref<4x8x512xf32, #tpu.memory_space<vmem>>, vector<1x8x512xf32>,
    %145 = vector.broadcast %114 : vector<8x1xf32> to vector<8x512xf32>
    %146 = arith.mulf %73, %145 : vector<8x512xf32>
    %147 = vector.broadcast %117 : vector<8x1xf32> to vector<8x512xf32>
    %148 = arith.addf %146, %147 : vector<8x512xf32>
    %cst_54 = arith.constant 0.000000e+00 : f32
    %149 = vector.broadcast %cst_54 : f32 to vector<8x512xf32>
    %150 = arith.maximumf %148, %149 : vector<8x512xf32>
    %c3_55 = arith.constant 3 : index
    %c0_56 = arith.constant 0 : index
    %c0_57 = arith.constant 0 : index
    %151 = vector.load %arg4[%c3_55, %c0_56, %c0_57] : memref<4x8x512xf32, #tpu.memory_space<vmem>>, vector<1x8x512xf32>
    %152 = vector.shape_cast %151 : vector<1x8x512xf32> to vector<8x512xf32>
    %153 = vector.shape_cast %150 : vector<8x512xf32> to vector<1x8x512xf32>
    tpu.vector_store %arg4[%c3_55, %c0_56, %c0_57], %153 {strides = array<i32>} : memref<4x8x512xf32, #tpu.memory_space<vmem>>, vector<1x8x512xf32>,
    return
  }
}

module attributes {stable_mosaic.version = 11 : i64} {
  func.func @_convt_parity_kernel(%arg0: memref<8x2048xf32, #tpu.memory_space<vmem>>, %arg1: memref<4x3x32xf32, #tpu.memory_space<vmem>>, %arg2: memref<4x3x2048xf32, #tpu.memory_space<vmem>>) attributes {dimension_semantics = [], scalar_prefetch = 0 : i64, scratch_operands = 0 : i64, tpu.core_type = #tpu.core_type<tc>} {
    %c0 = arith.constant 0 : index
    %c0_0 = arith.constant 0 : index
    %0 = vector.load %arg0[%c0, %c0_0] : memref<8x2048xf32, #tpu.memory_space<vmem>>, vector<8x2048xf32>
    %1 = tpu.iota {dimensions = array<i32: 1>} : vector<1x2048xi32>
    %c31_i32 = arith.constant 31 : i32
    %2 = vector.broadcast %c31_i32 : i32 to vector<1x2048xi32>
    %3 = arith.andi %1, %2 : vector<1x2048xi32>
    %c1023_i32 = arith.constant 1023 : i32
    %4 = vector.broadcast %c1023_i32 : i32 to vector<1x2048xi32>
    %5 = arith.andi %1, %4 : vector<1x2048xi32>
    %c32_i32 = arith.constant 32 : i32
    %6 = vector.broadcast %c32_i32 : i32 to vector<1x2048xi32>
    %7 = arith.cmpi sge, %5, %6 : vector<1x2048xi32>
    %c992_i32 = arith.constant 992 : i32
    %8 = vector.broadcast %c992_i32 : i32 to vector<1x2048xi32>
    %9 = arith.cmpi slt, %5, %8 : vector<1x2048xi32>
    %c1_i32 = arith.constant 1 : i32
    %10 = vector.broadcast %c1_i32 : i32 to vector<1x2048xi32>
    %11 = arith.cmpi sge, %3, %10 : vector<1x2048xi32>
    %c31_i32_1 = arith.constant 31 : i32
    %12 = vector.broadcast %c31_i32_1 : i32 to vector<1x2048xi32>
    %13 = arith.cmpi slt, %3, %12 : vector<1x2048xi32>
    %c33_i32 = arith.constant 33 : i32
    %14 = tpu.dynamic_rotate %0 by %c33_i32 dim 1 : vector<8x2048xf32>, i32 -> vector<8x2048xf32>
    %15 = arith.andi %7, %11 : vector<1x2048xi1>
    %cst = arith.constant 0.000000e+00 : f32
    %16 = vector.shape_cast %15 : vector<1x2048xi1> to vector<1x2048xi1>
    %17 = vector.broadcast %16 : vector<1x2048xi1> to vector<8x2048xi1>
    %18 = vector.broadcast %cst : f32 to vector<8x2048xf32>
    %19 = arith.select %17, %14, %18 : vector<8x2048xi1>, vector<8x2048xf32>
    %c32_i32_2 = arith.constant 32 : i32
    %20 = tpu.dynamic_rotate %0 by %c32_i32_2 dim 1 : vector<8x2048xf32>, i32 -> vector<8x2048xf32>
    %cst_3 = arith.constant 0.000000e+00 : f32
    %21 = vector.shape_cast %7 : vector<1x2048xi1> to vector<1x2048xi1>
    %22 = vector.broadcast %21 : vector<1x2048xi1> to vector<8x2048xi1>
    %23 = vector.broadcast %cst_3 : f32 to vector<8x2048xf32>
    %24 = arith.select %22, %20, %23 : vector<8x2048xi1>, vector<8x2048xf32>
    %c31_i32_4 = arith.constant 31 : i32
    %25 = tpu.dynamic_rotate %0 by %c31_i32_4 dim 1 : vector<8x2048xf32>, i32 -> vector<8x2048xf32>
    %26 = arith.andi %7, %13 : vector<1x2048xi1>
    %cst_5 = arith.constant 0.000000e+00 : f32
    %27 = vector.shape_cast %26 : vector<1x2048xi1> to vector<1x2048xi1>
    %28 = vector.broadcast %27 : vector<1x2048xi1> to vector<8x2048xi1>
    %29 = vector.broadcast %cst_5 : f32 to vector<8x2048xf32>
    %30 = arith.select %28, %25, %29 : vector<8x2048xi1>, vector<8x2048xf32>
    %c1_i32_6 = arith.constant 1 : i32
    %31 = tpu.dynamic_rotate %0 by %c1_i32_6 dim 1 : vector<8x2048xf32>, i32 -> vector<8x2048xf32>
    %cst_7 = arith.constant 0.000000e+00 : f32
    %32 = vector.shape_cast %11 : vector<1x2048xi1> to vector<1x2048xi1>
    %33 = vector.broadcast %32 : vector<1x2048xi1> to vector<8x2048xi1>
    %34 = vector.broadcast %cst_7 : f32 to vector<8x2048xf32>
    %35 = arith.select %33, %31, %34 : vector<8x2048xi1>, vector<8x2048xf32>
    %c2047_i32 = arith.constant 2047 : i32
    %36 = tpu.dynamic_rotate %0 by %c2047_i32 dim 1 : vector<8x2048xf32>, i32 -> vector<8x2048xf32>
    %cst_8 = arith.constant 0.000000e+00 : f32
    %37 = vector.shape_cast %13 : vector<1x2048xi1> to vector<1x2048xi1>
    %38 = vector.broadcast %37 : vector<1x2048xi1> to vector<8x2048xi1>
    %39 = vector.broadcast %cst_8 : f32 to vector<8x2048xf32>
    %40 = arith.select %38, %36, %39 : vector<8x2048xi1>, vector<8x2048xf32>
    %c2017_i32 = arith.constant 2017 : i32
    %41 = tpu.dynamic_rotate %0 by %c2017_i32 dim 1 : vector<8x2048xf32>, i32 -> vector<8x2048xf32>
    %42 = arith.andi %9, %11 : vector<1x2048xi1>
    %cst_9 = arith.constant 0.000000e+00 : f32
    %43 = vector.shape_cast %42 : vector<1x2048xi1> to vector<1x2048xi1>
    %44 = vector.broadcast %43 : vector<1x2048xi1> to vector<8x2048xi1>
    %45 = vector.broadcast %cst_9 : f32 to vector<8x2048xf32>
    %46 = arith.select %44, %41, %45 : vector<8x2048xi1>, vector<8x2048xf32>
    %c2016_i32 = arith.constant 2016 : i32
    %47 = tpu.dynamic_rotate %0 by %c2016_i32 dim 1 : vector<8x2048xf32>, i32 -> vector<8x2048xf32>
    %cst_10 = arith.constant 0.000000e+00 : f32
    %48 = vector.shape_cast %9 : vector<1x2048xi1> to vector<1x2048xi1>
    %49 = vector.broadcast %48 : vector<1x2048xi1> to vector<8x2048xi1>
    %50 = vector.broadcast %cst_10 : f32 to vector<8x2048xf32>
    %51 = arith.select %49, %47, %50 : vector<8x2048xi1>, vector<8x2048xf32>
    %c2015_i32 = arith.constant 2015 : i32
    %52 = tpu.dynamic_rotate %0 by %c2015_i32 dim 1 : vector<8x2048xf32>, i32 -> vector<8x2048xf32>
    %53 = arith.andi %9, %13 : vector<1x2048xi1>
    %cst_11 = arith.constant 0.000000e+00 : f32
    %54 = vector.shape_cast %53 : vector<1x2048xi1> to vector<1x2048xi1>
    %55 = vector.broadcast %54 : vector<1x2048xi1> to vector<8x2048xi1>
    %56 = vector.broadcast %cst_11 : f32 to vector<8x2048xf32>
    %57 = arith.select %55, %52, %56 : vector<8x2048xi1>, vector<8x2048xf32>
    %58 = tpu.concatenate %0, %35, %24, %19 in 0 : vector<8x2048xf32>, vector<8x2048xf32>, vector<8x2048xf32>, vector<8x2048xf32> -> vector<32x2048xf32>
    %c0_12 = arith.constant 0 : index
    %c0_13 = arith.constant 0 : index
    %c0_14 = arith.constant 0 : index
    %59 = vector.load %arg1[%c0_12, %c0_13, %c0_14] : memref<4x3x32xf32, #tpu.memory_space<vmem>>, vector<1x3x32xf32>
    %60 = vector.shape_cast %59 : vector<1x3x32xf32> to vector<3x32xf32>
    %cst_15 = arith.constant dense<0.000000e+00> : vector<3x2048xf32>
    %61 = tpu.matmul %60, %58, %cst_15 {dimension_numbers = #tpu.dot_dimension_numbers<[1], [0], [0], [1], [0, 0, 1, 1], [], []>} : vector<3x32xf32>, vector<32x2048xf32>, vector<3x2048xf32> -> vector<3x2048xf32>
    %62 = math.tanh %61 : vector<3x2048xf32>
    %c0_16 = arith.constant 0 : index
    %c0_17 = arith.constant 0 : index
    %c0_18 = arith.constant 0 : index
    %63 = vector.load %arg2[%c0_16, %c0_17, %c0_18] : memref<4x3x2048xf32, #tpu.memory_space<vmem>>, vector<1x3x2048xf32>
    %64 = vector.shape_cast %63 : vector<1x3x2048xf32> to vector<3x2048xf32>
    %65 = vector.shape_cast %62 : vector<3x2048xf32> to vector<1x3x2048xf32>
    tpu.vector_store %arg2[%c0_16, %c0_17, %c0_18], %65 {strides = array<i32>} : memref<4x3x2048xf32, #tpu.memory_space<vmem>>, vector<1x3x2048xf32>,
    %66 = tpu.concatenate %0, %40, %24, %30 in 0 : vector<8x2048xf32>, vector<8x2048xf32>, vector<8x2048xf32>, vector<8x2048xf32> -> vector<32x2048xf32>
    %c1 = arith.constant 1 : index
    %c0_19 = arith.constant 0 : index
    %c0_20 = arith.constant 0 : index
    %67 = vector.load %arg1[%c1, %c0_19, %c0_20] : memref<4x3x32xf32, #tpu.memory_space<vmem>>, vector<1x3x32xf32>
    %68 = vector.shape_cast %67 : vector<1x3x32xf32> to vector<3x32xf32>
    %cst_21 = arith.constant dense<0.000000e+00> : vector<3x2048xf32>
    %69 = tpu.matmul %68, %66, %cst_21 {dimension_numbers = #tpu.dot_dimension_numbers<[1], [0], [0], [1], [0, 0, 1, 1], [], []>} : vector<3x32xf32>, vector<32x2048xf32>, vector<3x2048xf32> -> vector<3x2048xf32>
    %70 = math.tanh %69 : vector<3x2048xf32>
    %c1_22 = arith.constant 1 : index
    %c0_23 = arith.constant 0 : index
    %c0_24 = arith.constant 0 : index
    %71 = vector.load %arg2[%c1_22, %c0_23, %c0_24] : memref<4x3x2048xf32, #tpu.memory_space<vmem>>, vector<1x3x2048xf32>
    %72 = vector.shape_cast %71 : vector<1x3x2048xf32> to vector<3x2048xf32>
    %73 = vector.shape_cast %70 : vector<3x2048xf32> to vector<1x3x2048xf32>
    tpu.vector_store %arg2[%c1_22, %c0_23, %c0_24], %73 {strides = array<i32>} : memref<4x3x2048xf32, #tpu.memory_space<vmem>>, vector<1x3x2048xf32>,
    %74 = tpu.concatenate %0, %35, %51, %46 in 0 : vector<8x2048xf32>, vector<8x2048xf32>, vector<8x2048xf32>, vector<8x2048xf32> -> vector<32x2048xf32>
    %c2 = arith.constant 2 : index
    %c0_25 = arith.constant 0 : index
    %c0_26 = arith.constant 0 : index
    %75 = vector.load %arg1[%c2, %c0_25, %c0_26] : memref<4x3x32xf32, #tpu.memory_space<vmem>>, vector<1x3x32xf32>
    %76 = vector.shape_cast %75 : vector<1x3x32xf32> to vector<3x32xf32>
    %cst_27 = arith.constant dense<0.000000e+00> : vector<3x2048xf32>
    %77 = tpu.matmul %76, %74, %cst_27 {dimension_numbers = #tpu.dot_dimension_numbers<[1], [0], [0], [1], [0, 0, 1, 1], [], []>} : vector<3x32xf32>, vector<32x2048xf32>, vector<3x2048xf32> -> vector<3x2048xf32>
    %78 = math.tanh %77 : vector<3x2048xf32>
    %c2_28 = arith.constant 2 : index
    %c0_29 = arith.constant 0 : index
    %c0_30 = arith.constant 0 : index
    %79 = vector.load %arg2[%c2_28, %c0_29, %c0_30] : memref<4x3x2048xf32, #tpu.memory_space<vmem>>, vector<1x3x2048xf32>
    %80 = vector.shape_cast %79 : vector<1x3x2048xf32> to vector<3x2048xf32>
    %81 = vector.shape_cast %78 : vector<3x2048xf32> to vector<1x3x2048xf32>
    tpu.vector_store %arg2[%c2_28, %c0_29, %c0_30], %81 {strides = array<i32>} : memref<4x3x2048xf32, #tpu.memory_space<vmem>>, vector<1x3x2048xf32>,
    %82 = tpu.concatenate %0, %40, %51, %57 in 0 : vector<8x2048xf32>, vector<8x2048xf32>, vector<8x2048xf32>, vector<8x2048xf32> -> vector<32x2048xf32>
    %c3 = arith.constant 3 : index
    %c0_31 = arith.constant 0 : index
    %c0_32 = arith.constant 0 : index
    %83 = vector.load %arg1[%c3, %c0_31, %c0_32] : memref<4x3x32xf32, #tpu.memory_space<vmem>>, vector<1x3x32xf32>
    %84 = vector.shape_cast %83 : vector<1x3x32xf32> to vector<3x32xf32>
    %cst_33 = arith.constant dense<0.000000e+00> : vector<3x2048xf32>
    %85 = tpu.matmul %84, %82, %cst_33 {dimension_numbers = #tpu.dot_dimension_numbers<[1], [0], [0], [1], [0, 0, 1, 1], [], []>} : vector<3x32xf32>, vector<32x2048xf32>, vector<3x2048xf32> -> vector<3x2048xf32>
    %86 = math.tanh %85 : vector<3x2048xf32>
    %c3_34 = arith.constant 3 : index
    %c0_35 = arith.constant 0 : index
    %c0_36 = arith.constant 0 : index
    %87 = vector.load %arg2[%c3_34, %c0_35, %c0_36] : memref<4x3x2048xf32, #tpu.memory_space<vmem>>, vector<1x3x2048xf32>
    %88 = vector.shape_cast %87 : vector<1x3x2048xf32> to vector<3x2048xf32>
    %89 = vector.shape_cast %86 : vector<3x2048xf32> to vector<1x3x2048xf32>
    tpu.vector_store %arg2[%c3_34, %c0_35, %c0_36], %89 {strides = array<i32>} : memref<4x3x2048xf32, #tpu.memory_space<vmem>>, vector<1x3x2048xf32>,
    return
  }
}

</mosaic_0001>

<llo_original>
// kernel: generator_forward.5
$region0: #{generator_forward.5}
  #allocation0 [shape = 'u32[]', space=smem, size = 0x4, offset = 0x4, fixed_abs, tag = 'smem constant byte address 0x4 - core index']
  #allocation1 [shape = 'u32[144,128]{1,0:T(1,128)}', space=vmem, size = 0x12000, scoped, tag = 'internal scratch']
  %s0 = inlined_call_operand.hbm [shape: f32[2,10], index: 0, kind: input, shape index: {}]
  %s1 = inlined_call_operand.hbm [shape: f32[10,100], index: 1, kind: input, shape index: {}]
  %s2 = inlined_call_operand.hbm [shape: f32[1,100], index: 2, kind: input, shape index: {}]
  %s3 = inlined_call_operand.hbm [shape: f32[2,100], index: 3, kind: input, shape index: {}]
  %s4 = inlined_call_operand.hbm [shape: f32[100,1024], index: 4, kind: input, shape index: {}]
  %s5 = inlined_call_operand.vmem [shape: f32[2,1024], index: 5, kind: output, shape index: {}]
  %s6 = sld [smem:[#allocation0]]
  $region50: #{generator_forward.5} parent=0
    _
  %s8 = ssub.s32 1, %s6
  %s9 = scalar_select 0, %s8, %s6
  $region1: #{generator_forward.5} parent=0
    #allocation2 [shape = 'u8[1024]{0}', space=vmem, size = 0x400, scoped, tag = 'input window, operand 0, single buffered']
    #allocation3 [shape = 's32[1]{0}', space=sflag, size = 0x4, scoped, tag = 'scoped memory for generator_forward.5']
    #allocation4 [shape = 'u8[8192]{0}', space=vmem, size = 0x2000, scoped, tag = 'input window, operand 1, single buffered']
    #allocation5 [shape = 's32[1]{0}', space=sflag, size = 0x4, scoped, tag = 'scoped memory for generator_forward.5']
    #allocation6 [shape = 'u8[512]{0}', space=vmem, size = 0x400, scoped, tag = 'input window, operand 2, single buffered']
    #allocation7 [shape = 'u8[1024]{0}', space=vmem, size = 0x400, scoped, tag = 'input window, operand 3, single buffered']
    #allocation8 [shape = 's32[1]{0}', space=sflag, size = 0x4, scoped, tag = 'scoped memory for generator_forward.5']
    #allocation9 [shape = 'u8[425984]{0}', space=vmem, size = 0x68000, scoped, tag = 'input window, operand 4, single buffered']
    %10 = vsyncpa [#allocation3], 0
    %11 = vsyncpa [#allocation5], 0
    %12 = vsyncpa [#allocation8], 0
    // Predicated region
    $region2: #{generator_forward.5} parent=1 // pred_check
      _
    $region3: #{generator_forward.5} parent=1 // pred_check_branch
      %14 = sbr.rel (0) target = $region5
    $region4: #{generator_forward.5} parent=1 // pred_region
      %s16 = ssub.s32 32, 32
      %17 = vsyncadd [#allocation3], %s16
      %s19 = sshll.u32 [#allocation2], 4
      %s20 = int_to_ptr.vmem [resolvable:$true] %s19
      %22 = dma.hbm_to_vmem [thread:$0]  %s0, 32, %s20, [#allocation3]
    $region5: #{generator_forward.5} parent=1 // pred_fallthru
      _
    // Predicated region
    $region6: #{generator_forward.5} parent=1 // pred_check
      _
    $region7: #{generator_forward.5} parent=1 // pred_check_branch
      %24 = sbr.rel (0) target = $region9
    $region8: #{generator_forward.5} parent=1 // pred_region
      %s26 = ssub.s32 256, 256
      %27 = vsyncadd [#allocation5], %s26
      %s28 = sshll.u32 [#allocation4], 4
      %s29 = int_to_ptr.vmem [resolvable:$true] %s28
      %34 = dma.hbm_to_vmem [thread:$0]  %s1, 256, %s29, [#allocation5], 128, 128, 8
    $region9: #{generator_forward.5} parent=1 // pred_fallthru
      _
    // Predicated region
    $region10: #{generator_forward.5} parent=1 // pred_check
      _
    $region11: #{generator_forward.5} parent=1 // pred_check_branch
      %36 = sbr.rel (0) target = $region13
    $region12: #{generator_forward.5} parent=1 // pred_region
      %s38 = ssub.s32 16, 16
      %39 = vsyncadd [#allocation5], %s38
      %s41 = sshll.u32 [#allocation6], 4
      %s42 = int_to_ptr.vmem [resolvable:$true] %s41
      %44 = dma.hbm_to_vmem [thread:$0]  %s2, 16, %s42, [#allocation5]
    $region13: #{generator_forward.5} parent=1 // pred_fallthru
      _
    // Predicated region
    $region14: #{generator_forward.5} parent=1 // pred_check
      _
    $region15: #{generator_forward.5} parent=1 // pred_check_branch
      %46 = sbr.rel (0) target = $region17
    $region16: #{generator_forward.5} parent=1 // pred_region
      %s48 = ssub.s32 32, 32
      %49 = vsyncadd [#allocation8], %s48
      %s51 = sshll.u32 [#allocation7], 4
      %s52 = int_to_ptr.vmem [resolvable:$true] %s51
      %54 = dma.hbm_to_vmem [thread:$0]  %s3, 32, %s52, [#allocation8]
    $region17: #{generator_forward.5} parent=1 // pred_fallthru
      _
    // Predicated region
    $region18: #{generator_forward.5} parent=1 // pred_check
      _
    $region19: #{generator_forward.5} parent=1 // pred_check_branch
      %56 = sbr.rel (0) target = $region21
    $region20: #{generator_forward.5} parent=1 // pred_region
      %s58 = ssub.s32 13312, 13312
      %59 = vsyncadd [#allocation8], %s58
      %s60 = sshll.u32 [#allocation9], 4
      %s61 = int_to_ptr.vmem [resolvable:$true] %s60
      %66 = dma.hbm_to_vmem [thread:$0]  %s4, 13312, %s61, [#allocation8], 1024, 1024, 64
    $region21: #{generator_forward.5} parent=1 // pred_fallthru
      _
    // Predicated region
    $region22: #{generator_forward.5} parent=1 // pred_check
      _
    $region23: #{generator_forward.5} parent=1 // pred_check_branch
      %68 = sbr.rel (0) target = $region25
    $region24: #{generator_forward.5} parent=1 // pred_region
      %69 = dma.done [#allocation3], 32
    $region25: #{generator_forward.5} parent=1 // pred_fallthru
      _
    // Predicated region
    $region26: #{generator_forward.5} parent=1 // pred_check
      _
    $region27: #{generator_forward.5} parent=1 // pred_check_branch
      %71 = sbr.rel (0) target = $region29
    $region28: #{generator_forward.5} parent=1 // pred_region
      %72 = dma.done [#allocation5], 256
    $region29: #{generator_forward.5} parent=1 // pred_fallthru
      _
    // Predicated region
    $region30: #{generator_forward.5} parent=1 // pred_check
      _
    $region31: #{generator_forward.5} parent=1 // pred_check_branch
      %74 = sbr.rel (0) target = $region33
    $region32: #{generator_forward.5} parent=1 // pred_region
      %75 = dma.done [#allocation5], 16
    $region33: #{generator_forward.5} parent=1 // pred_fallthru
      _
    // Predicated region
    $region34: #{generator_forward.5} parent=1 // pred_check
      _
    $region35: #{generator_forward.5} parent=1 // pred_check_branch
      %77 = sbr.rel (0) target = $region37
    $region36: #{generator_forward.5} parent=1 // pred_region
      %78 = dma.done [#allocation8], 32
    $region37: #{generator_forward.5} parent=1 // pred_fallthru
      _
    // Predicated region
    $region38: #{generator_forward.5} parent=1 // pred_check
      _
    $region39: #{generator_forward.5} parent=1 // pred_check_branch
      %80 = sbr.rel (0) target = $region41
    $region40: #{generator_forward.5} parent=1 // pred_region
      %81 = dma.done [#allocation8], 13312
    $region41: #{generator_forward.5} parent=1 // pred_fallthru
      _
    %v82 = vld [vmem:[#allocation2] sm:$0x3]
    %v83 = vld [vmem:[#allocation4] sm:$0xff]
    %v84 = vld [vmem:[#allocation4 + $0x8] sm:$0x3]
    %v85 = vld [vmem:[#allocation6] sm:$0x1]
    %v87 = vlaneseq
    %v88 = vshrl.u32 %v87, 7
    %v89 = vsub.s32 0, %v88
    %v90 = vrot.slane %v85, %v89
    %vm92 = vcmask 80896
    %v94 = vsel %vm92, %v82, 0
    %vm96 = vcmask 1041408
    %v98 = vsel %vm96, %v84, 0
    %100 = vmatprep.subr.mxu0 0.0
    %101 = vmatpush1.msra.mxu0 0.0
    %102 = vmatprep.subr.mxu0 0.0
    %103 = vmatpush1.msra.mxu0 0.0
    %104 = vmatprep.subr.mxu0 0.0
    %105 = vmatpush1.msra.mxu0 0.0
    %106 = vmatprep.subr.mxu0 0.0
    %107 = vmatpush1.msra.mxu0 0.0
    %108 = vmatprep.subr.mxu0 0.0
    %109 = vmatpush1.msra.mxu0 0.0
    %110 = vmatprep.subr.mxu0 0.0
    %111 = vmatpush1.msra.mxu0 0.0
    %112 = vmatprep.subr.mxu0 0.0
    %113 = vmatpush1.msra.mxu0 0.0
    %114 = vmatprep.subr.mxu0 0.0
    %115 = vmatpush1.msra.mxu0 0.0
    %116 = vmatprep.subr.mxu0 0.0
    %117 = vmatpush1.msra.mxu0 0.0
    %118 = vmatprep.subr.mxu0 0.0
    %119 = vmatpush1.msra.mxu0 0.0
    %120 = vmatprep.subr.mxu0 0.0
    %121 = vmatpush1.msra.mxu0 0.0
    %122 = vmatprep.subr.mxu0 0.0
    %123 = vmatpush1.msra.mxu0 0.0
    %124 = vmatprep.subr.mxu0 0.0
    %125 = vmatpush1.msra.mxu0 0.0
    %126 = vmatprep.subr.mxu0 0.0
    %127 = vmatpush1.msra.mxu0 0.0
    %128 = vmatprep.subr.mxu0 0.0
    %129 = vmatpush1.msra.mxu0 %v98
    %130 = vmatprep.subr.mxu0 0.0
    %131 = vmatpush1.msra.mxu0 %v83
    %132 = vmatprep.subr.mxu0 0.0
    %133 = vmatpush2.msra.mxu0 0.0
    %134 = vmatprep.subr.mxu0 0.0
    %135 = vmatpush2.msra.mxu0 0.0
    %136 = vmatprep.subr.mxu0 0.0
    %137 = vmatpush2.msra.mxu0 0.0
    %138 = vmatprep.subr.mxu0 0.0
    %139 = vmatpush2.msra.mxu0 0.0
    %140 = vmatprep.subr.mxu0 0.0
    %141 = vmatpush2.msra.mxu0 0.0
    %142 = vmatprep.subr.mxu0 0.0
    %143 = vmatpush2.msra.mxu0 0.0
    %144 = vmatprep.subr.mxu0 0.0
    %145 = vmatpush2.msra.mxu0 0.0
    %146 = vmatprep.subr.mxu0 0.0
    %147 = vmatpush2.msra.mxu0 0.0
    %148 = vmatprep.subr.mxu0 0.0
    %149 = vmatpush2.msra.mxu0 0.0
    %150 = vmatprep.subr.mxu0 0.0
    %151 = vmatpush2.msra.mxu0 0.0
    %152 = vmatprep.subr.mxu0 0.0
    %153 = vmatpush2.msra.mxu0 0.0
    %154 = vmatprep.subr.mxu0 0.0
    %155 = vmatpush2.msra.mxu0 0.0
    %156 = vmatprep.subr.mxu0 0.0
    %157 = vmatpush2.msra.mxu0 0.0
    %158 = vmatprep.subr.mxu0 0.0
    %159 = vmatpush2.msra.mxu0 0.0
    %160 = vmatprep.subr.mxu0 0.0
    %161 = vmatpush2.msra.mxu0 0.0
    %162 = vmatprep.subr.mxu0 0.0
    %163 = vmatpush2.msra.mxu0 0.0
    %164 = vmatprep.mubr.f32.mxu0 0.0
    %165 = vmatmul.mubr.f32.gmra.mxu0 %v94
    %v166 = vpop.f32.mrf.mxu0
    %v167 = vadd.f32 %v90, %v166
    %v168 = vpop.f32.mrf.mxu0
    %169 = vdwg.mxu0
    %v170 = vld [vmem:[#allocation7] sm:$0x3]
    %v171 = vmul.f32 %v167, %v170
    %v172 = vld [vmem:[#allocation9] sm:$0xff]
    %v173 = vld [vmem:[#allocation9 + $0x8] sm:$0xff]
    %v174 = vld [vmem:[#allocation9 + $0x10] sm:$0xff]
    %v175 = vld [vmem:[#allocation9 + $0x18] sm:$0xff]
    %v176 = vld [vmem:[#allocation9 + $0x20] sm:$0xff]
    %v177 = vld [vmem:[#allocation9 + $0x28] sm:$0xff]
    %v178 = vld [vmem:[#allocation9 + $0x30] sm:$0xff]
    %v179 = vld [vmem:[#allocation9 + $0x38] sm:$0xff]
    %v180 = vld [vmem:[#allocation9 + $0x40] sm:$0xff]
    %v181 = vld [vmem:[#allocation9 + $0x48] sm:$0xff]
    %v182 = vld [vmem:[#allocation9 + $0x50] sm:$0xff]
    %v183 = vld [vmem:[#allocation9 + $0x58] sm:$0xff]
    %v184 = vld [vmem:[#allocation9 + $0x60] sm:$0xff]
    %v185 = vld [vmem:[#allocation9 + $0x68] sm:$0xff]
    %v186 = vld [vmem:[#allocation9 + $0x70] sm:$0xff]
    %v187 = vld [vmem:[#allocation9 + $0x78] sm:$0xff]
    %v188 = vld [vmem:[#allocation9 + $0x80] sm:$0xff]
    %v189 = vld [vmem:[#allocation9 + $0x88] sm:$0xff]
    %v190 = vld [vmem:[#allocation9 + $0x90] sm:$0xff]
    %v191 = vld [vmem:[#allocation9 + $0x98] sm:$0xff]
    %v192 = vld [vmem:[#allocation9 + $0xa0] sm:$0xff]
    %v193 = vld [vmem:[#allocation9 + $0xa8] sm:$0xff]
    %v194 = vld [vmem:[#allocation9 + $0xb0] sm:$0xff]
    %v195 = vld [vmem:[#allocation9 + $0xb8] sm:$0xff]
    %v196 = vld [vmem:[#allocation9 + $0xc0] sm:$0xff]
    %v197 = vld [vmem:[#allocation9 + $0xc8] sm:$0xff]
    %v198 = vld [vmem:[#allocation9 + $0xd0] sm:$0xff]
    %v199 = vld [vmem:[#allocation9 + $0xd8] sm:$0xff]
    %v200 = vld [vmem:[#allocation9 + $0xe0] sm:$0xff]
    %v201 = vld [vmem:[#allocation9 + $0xe8] sm:$0xff]
    %v202 = vld [vmem:[#allocation9 + $0xf0] sm:$0xff]
    %v203 = vld [vmem:[#allocation9 + $0xf8] sm:$0xff]
    %v204 = vld [vmem:[#allocation9 + $0x100] sm:$0xff]
    %v205 = vld [vmem:[#allocation9 + $0x108] sm:$0xff]
    %v206 = vld [vmem:[#allocation9 + $0x110] sm:$0xff]
    %v207 = vld [vmem:[#allocation9 + $0x118] sm:$0xff]
    %v208 = vld [vmem:[#allocation9 + $0x120] sm:$0xff]
    %v209 = vld [vmem:[#allocation9 + $0x128] sm:$0xff]
    %v210 = vld [vmem:[#allocation9 + $0x130] sm:$0xff]
    %v211 = vld [vmem:[#allocation9 + $0x138] sm:$0xff]
    %v212 = vld [vmem:[#allocation9 + $0x140] sm:$0xff]
    %v213 = vld [vmem:[#allocation9 + $0x148] sm:$0xff]
    %v214 = vld [vmem:[#allocation9 + $0x150] sm:$0xff]
    %v215 = vld [vmem:[#allocation9 + $0x158] sm:$0xff]
    %v216 = vld [vmem:[#allocation9 + $0x160] sm:$0xff]
    %v217 = vld [vmem:[#allocation9 + $0x168] sm:$0xff]
    %v218 = vld [vmem:[#allocation9 + $0x170] sm:$0xff]
    %v219 = vld [vmem:[#allocation9 + $0x178] sm:$0xff]
    %v220 = vld [vmem:[#allocation9 + $0x180] sm:$0xff]
    %v221 = vld [vmem:[#allocation9 + $0x188] sm:$0xff]
    %v222 = vld [vmem:[#allocation9 + $0x190] sm:$0xff]
    %v223 = vld [vmem:[#allocation9 + $0x198] sm:$0xff]
    %v224 = vld [vmem:[#allocation9 + $0x1a0] sm:$0xff]
    %v225 = vld [vmem:[#allocation9 + $0x1a8] sm:$0xff]
    %v226 = vld [vmem:[#allocation9 + $0x1b0] sm:$0xff]
    %v227 = vld [vmem:[#allocation9 + $0x1b8] sm:$0xff]
    %v228 = vld [vmem:[#allocation9 + $0x1c0] sm:$0xff]
    %v229 = vld [vmem:[#allocation9 + $0x1c8] sm:$0xff]
    %v230 = vld [vmem:[#allocation9 + $0x1d0] sm:$0xff]
    %v231 = vld [vmem:[#allocation9 + $0x1d8] sm:$0xff]
    %v232 = vld [vmem:[#allocation9 + $0x1e0] sm:$0xff]
    %v233 = vld [vmem:[#allocation9 + $0x1e8] sm:$0xff]
    %v234 = vld [vmem:[#allocation9 + $0x1f0] sm:$0xff]
    %v235 = vld [vmem:[#allocation9 + $0x1f8] sm:$0xff]
    %v236 = vld [vmem:[#allocation9 + $0x200] sm:$0xff]
    %v237 = vld [vmem:[#allocation9 + $0x208] sm:$0xff]
    %v238 = vld [vmem:[#allocation9 + $0x210] sm:$0xff]
    %v239 = vld [vmem:[#allocation9 + $0x218] sm:$0xff]
    %v240 = vld [vmem:[#allocation9 + $0x220] sm:$0xff]
    %v241 = vld [vmem:[#allocation9 + $0x228] sm:$0xff]
    %v242 = vld [vmem:[#allocation9 + $0x230] sm:$0xff]
    %v243 = vld [vmem:[#allocation9 + $0x238] sm:$0xff]
    %v244 = vld [vmem:[#allocation9 + $0x240] sm:$0xff]
    %v245 = vld [vmem:[#allocation9 + $0x248] sm:$0xff]
    %v246 = vld [vmem:[#allocation9 + $0x250] sm:$0xff]
    %v247 = vld [vmem:[#allocation9 + $0x258] sm:$0xff]
    %v248 = vld [vmem:[#allocation9 + $0x260] sm:$0xff]
    %v249 = vld [vmem:[#allocation9 + $0x268] sm:$0xff]
    %v250 = vld [vmem:[#allocation9 + $0x270] sm:$0xff]
    %v251 = vld [vmem:[#allocation9 + $0x278] sm:$0xff]
    %v252 = vld [vmem:[#allocation9 + $0x280] sm:$0xff]
    %v253 = vld [vmem:[#allocation9 + $0x288] sm:$0xff]
    %v254 = vld [vmem:[#allocation9 + $0x290] sm:$0xff]
    %v255 = vld [vmem:[#allocation9 + $0x298] sm:$0xff]
    %v256 = vld [vmem:[#allocation9 + $0x2a0] sm:$0xff]
    %v257 = vld [vmem:[#allocation9 + $0x2a8] sm:$0xff]
    %v258 = vld [vmem:[#allocation9 + $0x2b0] sm:$0xff]
    %v259 = vld [vmem:[#allocation9 + $0x2b8] sm:$0xff]
    %v260 = vld [vmem:[#allocation9 + $0x2c0] sm:$0xff]
    %v261 = vld [vmem:[#allocation9 + $0x2c8] sm:$0xff]
    %v262 = vld [vmem:[#allocation9 + $0x2d0] sm:$0xff]
    %v263 = vld [vmem:[#allocation9 + $0x2d8] sm:$0xff]
    %v264 = vld [vmem:[#allocation9 + $0x2e0] sm:$0xff]
    %v265 = vld [vmem:[#allocation9 + $0x2e8] sm:$0xff]
    %v266 = vld [vmem:[#allocation9 + $0x2f0] sm:$0xff]
    %v267 = vld [vmem:[#allocation9 + $0x2f8] sm:$0xff]
    %v268 = vld [vmem:[#allocation9 + $0x300] sm:$0xf]
    %v269 = vld [vmem:[#allocation9 + $0x308] sm:$0xf]
    %v270 = vld [vmem:[#allocation9 + $0x310] sm:$0xf]
    %v271 = vld [vmem:[#allocation9 + $0x318] sm:$0xf]
    %v272 = vld [vmem:[#allocation9 + $0x320] sm:$0xf]
    %v273 = vld [vmem:[#allocation9 + $0x328] sm:$0xf]
    %v274 = vld [vmem:[#allocation9 + $0x330] sm:$0xf]
    %v275 = vld [vmem:[#allocation9 + $0x338] sm:$0xf]
    %vm276 = vcmask 818176
    %v278 = vsel %vm276, %v171, 0
    %vm280 = vcmask 1043456
    %v282 = vsel %vm280, %v268, 0
    %v285 = vsel %vm280, %v269, 0
    %v288 = vsel %vm280, %v270, 0
    %v291 = vsel %vm280, %v271, 0
    %v294 = vsel %vm280, %v272, 0
    %v297 = vsel %vm280, %v273, 0
    %v300 = vsel %vm280, %v274, 0
    %v303 = vsel %vm280, %v275, 0
    %305 = vmatprep.subr.mxu0 0.0
    %306 = vmatpush1.msra.mxu0 0.0
    %307 = vmatprep.subr.mxu0 0.0
    %308 = vmatpush1.msra.mxu0 0.0
    %309 = vmatprep.subr.mxu0 0.0
    %310 = vmatpush1.msra.mxu0 0.0
    %311 = vmatprep.subr.mxu0 %v285
    %312 = vmatpush1.msra.mxu0 %v282
    %313 = vmatprep.subr.mxu0 %v261
    %314 = vmatpush1.msra.mxu0 %v260
    %315 = vmatprep.subr.mxu0 %v253
    %316 = vmatpush1.msra.mxu0 %v252
    %317 = vmatprep.subr.mxu0 %v245
    %318 = vmatpush1.msra.mxu0 %v244
    %319 = vmatprep.subr.mxu0 %v237
    %320 = vmatpush1.msra.mxu0 %v236
    %321 = vmatprep.subr.mxu0 %v229
    %322 = vmatpush1.msra.mxu0 %v228
    %323 = vmatprep.subr.mxu0 %v221
    %324 = vmatpush1.msra.mxu0 %v220
    %325 = vmatprep.subr.mxu0 %v213
    %326 = vmatpush1.msra.mxu0 %v212
    %327 = vmatprep.subr.mxu0 %v205
    %328 = vmatpush1.msra.mxu0 %v204
    %329 = vmatprep.subr.mxu0 %v197
    %330 = vmatpush1.msra.mxu0 %v196
    %331 = vmatprep.subr.mxu0 %v189
    %332 = vmatpush1.msra.mxu0 %v188
    %333 = vmatprep.subr.mxu0 %v181
    %334 = vmatpush1.msra.mxu0 %v180
    %335 = vmatprep.subr.mxu0 %v173
    %336 = vmatpush1.msra.mxu0 %v172
    %337 = vmatprep.subr.mxu0 0.0
    %338 = vmatpush2.msra.mxu0 0.0
    %339 = vmatprep.subr.mxu0 0.0
    %340 = vmatpush2.msra.mxu0 0.0
    %341 = vmatprep.subr.mxu0 0.0
    %342 = vmatpush2.msra.mxu0 0.0
    %343 = vmatprep.subr.mxu0 0.0
    %344 = vmatpush2.msra.mxu0 0.0
    %345 = vmatprep.subr.mxu0 0.0
    %346 = vmatpush2.msra.mxu0 0.0
    %347 = vmatprep.subr.mxu0 0.0
    %348 = vmatpush2.msra.mxu0 0.0
    %349 = vmatprep.subr.mxu0 0.0
    %350 = vmatpush2.msra.mxu0 0.0
    %351 = vmatprep.subr.mxu0 0.0
    %352 = vmatpush2.msra.mxu0 0.0
    %353 = vmatprep.subr.mxu0 0.0
    %354 = vmatpush2.msra.mxu0 0.0
    %355 = vmatprep.subr.mxu0 0.0
    %356 = vmatpush2.msra.mxu0 0.0
    %357 = vmatprep.subr.mxu0 0.0
    %358 = vmatpush2.msra.mxu0 0.0
    %359 = vmatprep.subr.mxu0 0.0
    %360 = vmatpush2.msra.mxu0 0.0
    %361 = vmatprep.subr.mxu0 0.0
    %362 = vmatpush2.msra.mxu0 0.0
    %363 = vmatprep.subr.mxu0 0.0
    %364 = vmatpush2.msra.mxu0 0.0
    %365 = vmatprep.subr.mxu0 0.0
    %366 = vmatpush2.msra.mxu0 0.0
    %367 = vmatprep.subr.mxu0 0.0
    %368 = vmatpush2.msra.mxu0 0.0
    %369 = vmatprep.mubr.f32.mxu0 0.0
    %370 = vmatmul.mubr.f32.gmra.mxu0 %v278
    %v371 = vpop.f32.mrf.mxu0
    %v372 = vadd.f32 0.0, %v371
    %v373 = vpop.f32.mrf.mxu0
    %v374 = vadd.f32 0.0, %v373
    %375 = vdwg.mxu0
    %376 = vmatprep.subr.mxu0 0.0
    %377 = vmatpush1.msra.mxu0 0.0
    %378 = vmatprep.subr.mxu0 0.0
    %379 = vmatpush1.msra.mxu0 0.0
    %380 = vmatprep.subr.mxu0 0.0
    %381 = vmatpush1.msra.mxu0 0.0
    %382 = vmatprep.subr.mxu0 %v291
    %383 = vmatpush1.msra.mxu0 %v288
    %384 = vmatprep.subr.mxu0 %v263
    %385 = vmatpush1.msra.mxu0 %v262
    %386 = vmatprep.subr.mxu0 %v255
    %387 = vmatpush1.msra.mxu0 %v254
    %388 = vmatprep.subr.mxu0 %v247
    %389 = vmatpush1.msra.mxu0 %v246
    %390 = vmatprep.subr.mxu0 %v239
    %391 = vmatpush1.msra.mxu0 %v238
    %392 = vmatprep.subr.mxu0 %v231
    %393 = vmatpush1.msra.mxu0 %v230
    %394 = vmatprep.subr.mxu0 %v223
    %395 = vmatpush1.msra.mxu0 %v222
    %396 = vmatprep.subr.mxu0 %v215
    %397 = vmatpush1.msra.mxu0 %v214
    %398 = vmatprep.subr.mxu0 %v207
    %399 = vmatpush1.msra.mxu0 %v206
    %400 = vmatprep.subr.mxu0 %v199
    %401 = vmatpush1.msra.mxu0 %v198
    %402 = vmatprep.subr.mxu0 %v191
    %403 = vmatpush1.msra.mxu0 %v190
    %404 = vmatprep.subr.mxu0 %v183
    %405 = vmatpush1.msra.mxu0 %v182
    %406 = vmatprep.subr.mxu0 %v175
    %407 = vmatpush1.msra.mxu0 %v174
    %408 = vmatprep.subr.mxu0 0.0
    %409 = vmatpush2.msra.mxu0 0.0
    %410 = vmatprep.subr.mxu0 0.0
    %411 = vmatpush2.msra.mxu0 0.0
    %412 = vmatprep.subr.mxu0 0.0
    %413 = vmatpush2.msra.mxu0 0.0
    %414 = vmatprep.subr.mxu0 0.0
    %415 = vmatpush2.msra.mxu0 0.0
    %416 = vmatprep.subr.mxu0 0.0
    %417 = vmatpush2.msra.mxu0 0.0
    %418 = vmatprep.subr.mxu0 0.0
    %419 = vmatpush2.msra.mxu0 0.0
    %420 = vmatprep.subr.mxu0 0.0
    %421 = vmatpush2.msra.mxu0 0.0
    %422 = vmatprep.subr.mxu0 0.0
    %423 = vmatpush2.msra.mxu0 0.0
    %424 = vmatprep.subr.mxu0 0.0
    %425 = vmatpush2.msra.mxu0 0.0
    %426 = vmatprep.subr.mxu0 0.0
    %427 = vmatpush2.msra.mxu0 0.0
    %428 = vmatprep.subr.mxu0 0.0
    %429 = vmatpush2.msra.mxu0 0.0
    %430 = vmatprep.subr.mxu0 0.0
    %431 = vmatpush2.msra.mxu0 0.0
    %432 = vmatprep.subr.mxu0 0.0
    %433 = vmatpush2.msra.mxu0 0.0
    %434 = vmatprep.subr.mxu0 0.0
    %435 = vmatpush2.msra.mxu0 0.0
    %436 = vmatprep.subr.mxu0 0.0
    %437 = vmatpush2.msra.mxu0 0.0
    %438 = vmatprep.subr.mxu0 0.0
    %439 = vmatpush2.msra.mxu0 0.0
    %440 = vmatprep.mubr.f32.mxu0 0.0
    %441 = vmatmul.mubr.f32.gmra.mxu0 %v278
    %v442 = vpop.f32.mrf.mxu0
    %v443 = vadd.f32 0.0, %v442
    %v444 = vpop.f32.mrf.mxu0
    %v445 = vadd.f32 0.0, %v444
    %446 = vdwg.mxu0
    %447 = vmatprep.subr.mxu0 0.0
    %448 = vmatpush1.msra.mxu0 0.0
    %449 = vmatprep.subr.mxu0 0.0
    %450 = vmatpush1.msra.mxu0 0.0
    %451 = vmatprep.subr.mxu0 0.0
    %452 = vmatpush1.msra.mxu0 0.0
    %453 = vmatprep.subr.mxu0 %v297
    %454 = vmatpush1.msra.mxu0 %v294
    %455 = vmatprep.subr.mxu0 %v265
    %456 = vmatpush1.msra.mxu0 %v264
    %457 = vmatprep.subr.mxu0 %v257
    %458 = vmatpush1.msra.mxu0 %v256
    %459 = vmatprep.subr.mxu0 %v249
    %460 = vmatpush1.msra.mxu0 %v248
    %461 = vmatprep.subr.mxu0 %v241
    %462 = vmatpush1.msra.mxu0 %v240
    %463 = vmatprep.subr.mxu0 %v233
    %464 = vmatpush1.msra.mxu0 %v232
    %465 = vmatprep.subr.mxu0 %v225
    %466 = vmatpush1.msra.mxu0 %v224
    %467 = vmatprep.subr.mxu0 %v217
    %468 = vmatpush1.msra.mxu0 %v216
    %469 = vmatprep.subr.mxu0 %v209
    %470 = vmatpush1.msra.mxu0 %v208
    %471 = vmatprep.subr.mxu0 %v201
    %472 = vmatpush1.msra.mxu0 %v200
    %473 = vmatprep.subr.mxu0 %v193
    %474 = vmatpush1.msra.mxu0 %v192
    %475 = vmatprep.subr.mxu0 %v185
    %476 = vmatpush1.msra.mxu0 %v184
    %477 = vmatprep.subr.mxu0 %v177
    %478 = vmatpush1.msra.mxu0 %v176
    %479 = vmatprep.subr.mxu0 0.0
    %480 = vmatpush2.msra.mxu0 0.0
    %481 = vmatprep.subr.mxu0 0.0
    %482 = vmatpush2.msra.mxu0 0.0
    %483 = vmatprep.subr.mxu0 0.0
    %484 = vmatpush2.msra.mxu0 0.0
    %485 = vmatprep.subr.mxu0 0.0
    %486 = vmatpush2.msra.mxu0 0.0
    %487 = vmatprep.subr.mxu0 0.0
    %488 = vmatpush2.msra.mxu0 0.0
    %489 = vmatprep.subr.mxu0 0.0
    %490 = vmatpush2.msra.mxu0 0.0
    %491 = vmatprep.subr.mxu0 0.0
    %492 = vmatpush2.msra.mxu0 0.0
    %493 = vmatprep.subr.mxu0 0.0
    %494 = vmatpush2.msra.mxu0 0.0
    %495 = vmatprep.subr.mxu0 0.0
    %496 = vmatpush2.msra.mxu0 0.0
    %497 = vmatprep.subr.mxu0 0.0
    %498 = vmatpush2.msra.mxu0 0.0
    %499 = vmatprep.subr.mxu0 0.0
    %500 = vmatpush2.msra.mxu0 0.0
    %501 = vmatprep.subr.mxu0 0.0
    %502 = vmatpush2.msra.mxu0 0.0
    %503 = vmatprep.subr.mxu0 0.0
    %504 = vmatpush2.msra.mxu0 0.0
    %505 = vmatprep.subr.mxu0 0.0
    %506 = vmatpush2.msra.mxu0 0.0
    %507 = vmatprep.subr.mxu0 0.0
    %508 = vmatpush2.msra.mxu0 0.0
    %509 = vmatprep.subr.mxu0 0.0
    %510 = vmatpush2.msra.mxu0 0.0
    %511 = vmatprep.mubr.f32.mxu0 0.0
    %512 = vmatmul.mubr.f32.gmra.mxu0 %v278
    %v513 = vpop.f32.mrf.mxu0
    %v514 = vadd.f32 0.0, %v513
    %v515 = vpop.f32.mrf.mxu0
    %v516 = vadd.f32 0.0, %v515
    %517 = vdwg.mxu0
    %518 = vmatprep.subr.mxu0 0.0
    %519 = vmatpush1.msra.mxu0 0.0
    %520 = vmatprep.subr.mxu0 0.0
    %521 = vmatpush1.msra.mxu0 0.0
    %522 = vmatprep.subr.mxu0 0.0
    %523 = vmatpush1.msra.mxu0 0.0
    %524 = vmatprep.subr.mxu0 %v303
    %525 = vmatpush1.msra.mxu0 %v300
    %526 = vmatprep.subr.mxu0 %v267
    %527 = vmatpush1.msra.mxu0 %v266
    %528 = vmatprep.subr.mxu0 %v259
    %529 = vmatpush1.msra.mxu0 %v258
    %530 = vmatprep.subr.mxu0 %v251
    %531 = vmatpush1.msra.mxu0 %v250
    %532 = vmatprep.subr.mxu0 %v243
    %533 = vmatpush1.msra.mxu0 %v242
    %534 = vmatprep.subr.mxu0 %v235
    %535 = vmatpush1.msra.mxu0 %v234
    %536 = vmatprep.subr.mxu0 %v227
    %537 = vmatpush1.msra.mxu0 %v226
    %538 = vmatprep.subr.mxu0 %v219
    %539 = vmatpush1.msra.mxu0 %v218
    %540 = vmatprep.subr.mxu0 %v211
    %541 = vmatpush1.msra.mxu0 %v210
    %542 = vmatprep.subr.mxu0 %v203
    %543 = vmatpush1.msra.mxu0 %v202
    %544 = vmatprep.subr.mxu0 %v195
    %545 = vmatpush1.msra.mxu0 %v194
    %546 = vmatprep.subr.mxu0 %v187
    %547 = vmatpush1.msra.mxu0 %v186
    %548 = vmatprep.subr.mxu0 %v179
    %549 = vmatpush1.msra.mxu0 %v178
    %550 = vmatprep.subr.mxu0 0.0
    %551 = vmatpush2.msra.mxu0 0.0
    %552 = vmatprep.subr.mxu0 0.0
    %553 = vmatpush2.msra.mxu0 0.0
    %554 = vmatprep.subr.mxu0 0.0
    %555 = vmatpush2.msra.mxu0 0.0
    %556 = vmatprep.subr.mxu0 0.0
    %557 = vmatpush2.msra.mxu0 0.0
    %558 = vmatprep.subr.mxu0 0.0
    %559 = vmatpush2.msra.mxu0 0.0
    %560 = vmatprep.subr.mxu0 0.0
    %561 = vmatpush2.msra.mxu0 0.0
    %562 = vmatprep.subr.mxu0 0.0
    %563 = vmatpush2.msra.mxu0 0.0
    %564 = vmatprep.subr.mxu0 0.0
    %565 = vmatpush2.msra.mxu0 0.0
    %566 = vmatprep.subr.mxu0 0.0
    %567 = vmatpush2.msra.mxu0 0.0
    %568 = vmatprep.subr.mxu0 0.0
    %569 = vmatpush2.msra.mxu0 0.0
    %570 = vmatprep.subr.mxu0 0.0
    %571 = vmatpush2.msra.mxu0 0.0
    %572 = vmatprep.subr.mxu0 0.0
    %573 = vmatpush2.msra.mxu0 0.0
    %574 = vmatprep.subr.mxu0 0.0
    %575 = vmatpush2.msra.mxu0 0.0
    %576 = vmatprep.subr.mxu0 0.0
    %577 = vmatpush2.msra.mxu0 0.0
    %578 = vmatprep.subr.mxu0 0.0
    %579 = vmatpush2.msra.mxu0 0.0
    %580 = vmatprep.subr.mxu0 0.0
    %581 = vmatpush2.msra.mxu0 0.0
    %582 = vmatprep.mubr.f32.mxu0 0.0
    %583 = vmatmul.mubr.f32.gmra.mxu0 %v278
    %v584 = vpop.f32.mrf.mxu0
    %v585 = vadd.f32 0.0, %v584
    %v586 = vpop.f32.mrf.mxu0
    %v587 = vadd.f32 0.0, %v586
    %588 = vdwg.mxu0
    %v589 = vmax.f32 %v372, 0.0
    %v590 = vmax.f32 %v374, 0.0
    %v591 = vmax.f32 %v443, 0.0
    %v592 = vmax.f32 %v445, 0.0
    %v593 = vmax.f32 %v514, 0.0
    %v594 = vmax.f32 %v516, 0.0
    %v595 = vmax.f32 %v585, 0.0
    %v596 = vmax.f32 %v587, 0.0
    %v605 = vcombine.low %v589, %v590
    %v606 = vcombine.low %v591, %v592
    %v608 = vunpack.c.l.s4 1983009808
    %v609 = vunpack.c.0.s8 %v608
    %v610 = vlaneseq
    %v611 = vshrl.u32 %v610, 7
    %v612 = vsub.s32 %v609, %v611
    %v613 = vrot.slane %v605, %v612
    %v615 = vunpack.c.l.s4 1983009808
    %v616 = vunpack.c.0.s8 %v615
    %v617 = vlaneseq
    %v618 = vshrl.u32 %v617, 7
    %v619 = vsub.s32 %v616, %v618
    %v620 = vrot.slane %v606, %v619
    %v621 = vcombine.low %v613, %v620
    %v622 = vcombine.low %v593, %v594
    %v623 = vcombine.low %v595, %v596
    %v625 = vunpack.c.l.s4 1983009808
    %v626 = vunpack.c.0.s8 %v625
    %v627 = vlaneseq
    %v628 = vshrl.u32 %v627, 7
    %v629 = vsub.s32 %v626, %v628
    %v630 = vrot.slane %v622, %v629
    %v632 = vunpack.c.l.s4 1983009808
    %v633 = vunpack.c.0.s8 %v632
    %v634 = vlaneseq
    %v635 = vshrl.u32 %v634, 7
    %v636 = vsub.s32 %v633, %v635
    %v637 = vrot.slane %v623, %v636
    %v638 = vcombine.low %v630, %v637
    %641 = vst [vmem:[%s5] sm:$0xff] %v621
    %642 = vst [vmem:[%s5 + $0x8] sm:$0xff] %v638
    // Predicated region
    $region42: #{generator_forward.5} parent=1 // pred_check
      _
    $region43: #{generator_forward.5} parent=1 // pred_check_branch
      %644 = sbr.rel (0) target = $region45
    $region44: #{generator_forward.5} parent=1 // pred_region
      _
    $region45: #{generator_forward.5} parent=1 // pred_fallthru
      _
    // Predicated region
    $region46: #{generator_forward.5} parent=1 // pred_check
      _
    $region47: #{generator_forward.5} parent=1 // pred_check_branch
      %646 = sbr.rel (0) target = $region49
    $region48: #{generator_forward.5} parent=1 // pred_region
      _
    $region49: #{generator_forward.5} parent=1 // pred_fallthru
      _
    %647 = vsyncpa [#allocation3], 1
    %648 = vsyncpa [#allocation5], 1
    %649 = vsyncpa [#allocation8], 1

// kernel: generator_forward.6
$region0: #{generator_forward.6}
  #allocation0 [shape = 'u32[]', space=smem, size = 0x4, offset = 0x4, fixed_abs, tag = 'smem constant byte address 0x4 - core index']
  #allocation1 [shape = 'u32[144,128]{1,0:T(1,128)}', space=vmem, size = 0x12000, scoped, tag = 'internal scratch']
  %s0 = inlined_call_operand.vmem [shape: f32[64,128], index: 0, kind: input, shape index: {}]
  %s1 = inlined_call_operand.hbm [shape: f32[4,32,256], index: 1, kind: input, shape index: {}]
  %s2 = inlined_call_operand.vmem [shape: f32[32,1], index: 2, kind: input, shape index: {}]
  %s3 = inlined_call_operand.vmem [shape: f32[32,1], index: 3, kind: input, shape index: {}]
  %s4 = inlined_call_operand.vmem [shape: f32[4,32,128], index: 4, kind: output, shape index: {}]
  %s5 = sld [smem:[#allocation0]]
  $region30: #{generator_forward.6} parent=0
    _
  %s7 = ssub.s32 1, %s5
  %s8 = scalar_select 0, %s7, %s5
  $region1: #{generator_forward.6} parent=0
    #allocation2 [shape = 'u8[131072]{0}', space=vmem, size = 0x20000, scoped, tag = 'input window, operand 1, single buffered']
    #allocation3 [shape = 's32[1]{0}', space=sflag, size = 0x4, scoped, tag = 'scoped memory for generator_forward.6']
    %9 = vsyncpa [#allocation3], 0
    // Predicated region
    $region2: #{generator_forward.6} parent=1 // pred_check
      _
    $region3: #{generator_forward.6} parent=1 // pred_check_branch
      %11 = sbr.rel (0) target = $region5
    $region4: #{generator_forward.6} parent=1 // pred_region
      _
    $region5: #{generator_forward.6} parent=1 // pred_fallthru
      _
    // Predicated region
    $region6: #{generator_forward.6} parent=1 // pred_check
      _
    $region7: #{generator_forward.6} parent=1 // pred_check_branch
      %13 = sbr.rel (0) target = $region9
    $region8: #{generator_forward.6} parent=1 // pred_region
      %s15 = ssub.s32 4096, 4096
      %16 = vsyncadd [#allocation3], %s15
      %s17 = sshll.u32 [#allocation2], 4
      %s18 = int_to_ptr.vmem [resolvable:$true] %s17
      %23 = dma.hbm_to_vmem [thread:$0]  %s1, 4096, %s18, [#allocation3], 256, 256, 16
    $region9: #{generator_forward.6} parent=1 // pred_fallthru
      _
    // Predicated region
    $region10: #{generator_forward.6} parent=1 // pred_check
      _
    $region11: #{generator_forward.6} parent=1 // pred_check_branch
      %25 = sbr.rel (0) target = $region13
    $region12: #{generator_forward.6} parent=1 // pred_region
      _
    $region13: #{generator_forward.6} parent=1 // pred_fallthru
      _
    // Predicated region
    $region14: #{generator_forward.6} parent=1 // pred_check
      _
    $region15: #{generator_forward.6} parent=1 // pred_check_branch
      %27 = sbr.rel (0) target = $region17
    $region16: #{generator_forward.6} parent=1 // pred_region
      _
    $region17: #{generator_forward.6} parent=1 // pred_fallthru
      _
    // Predicated region
    $region18: #{generator_forward.6} parent=1 // pred_check
      _
    $region19: #{generator_forward.6} parent=1 // pred_check_branch
      %29 = sbr.rel (0) target = $region21
    $region20: #{generator_forward.6} parent=1 // pred_region
      %30 = dma.done [#allocation3], 4096
    $region21: #{generator_forward.6} parent=1 // pred_fallthru
      _
    %v31 = vld [vmem:[%s0] sm:$0xff]
    %v32 = vld [vmem:[%s0 + $0x8] sm:$0xff]
    %v33 = vld [vmem:[%s0 + $0x10] sm:$0xff]
    %v34 = vld [vmem:[%s0 + $0x18] sm:$0xff]
    %v35 = vld [vmem:[%s0 + $0x20] sm:$0xff]
    %v36 = vld [vmem:[%s0 + $0x28] sm:$0xff]
    %v37 = vld [vmem:[%s0 + $0x30] sm:$0xff]
    %v38 = vld [vmem:[%s0 + $0x38] sm:$0xff]
    %v39 = vlaneseq
    %v40 = vand.u32 %v39, 127
    %v41 = vand.u32 %v40, 3
    %v42 = vand.u32 %v40, 15
    %vm43 = vcmp.lt.s32.totalorder %v40, 32
    %vm44 = vcmp.ge.s32.totalorder %v42, 4
    %vm45 = vcmp.lt.s32.totalorder %v42, 12
    %vm46 = vcmp.ge.s32.totalorder %v41, 1
    %vm47 = vcmp.lt.s32.totalorder %v41, 3
    %48 = vrot.lane.b32.xlu0 %v31, 5
    %v49 = vpop.permute.xlu0 %48
    %50 = vrot.lane.b32.xlu0 %v32, 5
    %v51 = vpop.permute.xlu0 %50
    %52 = vrot.lane.b32.xlu0 %v33, 5
    %v53 = vpop.permute.xlu0 %52
    %54 = vrot.lane.b32.xlu0 %v34, 5
    %v55 = vpop.permute.xlu0 %54
    %56 = vrot.lane.b32.xlu0 %v35, 5
    %v57 = vpop.permute.xlu0 %56
    %58 = vrot.lane.b32.xlu0 %v36, 5
    %v59 = vpop.permute.xlu0 %58
    %60 = vrot.lane.b32.xlu0 %v37, 5
    %v61 = vpop.permute.xlu0 %60
    %62 = vrot.lane.b32.xlu0 %v38, 5
    %v63 = vpop.permute.xlu0 %62
    %vm64 = vmand %vm43, %vm44
    %vm65 = vmand %vm64, %vm46
    %v66 = vsel %vm65, 1, 0
    %vm67 = vcmp.eq.s32.totalorder %v66, 1
    %v68 = vsel %vm67, %v49, 0.0
    %v69 = vsel %vm67, %v51, 0.0
    %v70 = vsel %vm67, %v53, 0.0
    %v71 = vsel %vm67, %v55, 0.0
    %v72 = vsel %vm67, %v57, 0.0
    %v73 = vsel %vm67, %v59, 0.0
    %v74 = vsel %vm67, %v61, 0.0
    %v75 = vsel %vm67, %v63, 0.0
    %76 = vrot.lane.b32.xlu0 %v31, 4
    %v77 = vpop.permute.xlu0 %76
    %78 = vrot.lane.b32.xlu0 %v32, 4
    %v79 = vpop.permute.xlu0 %78
    %80 = vrot.lane.b32.xlu0 %v33, 4
    %v81 = vpop.permute.xlu0 %80
    %82 = vrot.lane.b32.xlu0 %v34, 4
    %v83 = vpop.permute.xlu0 %82
    %84 = vrot.lane.b32.xlu0 %v35, 4
    %v85 = vpop.permute.xlu0 %84
    %86 = vrot.lane.b32.xlu0 %v36, 4
    %v87 = vpop.permute.xlu0 %86
    %88 = vrot.lane.b32.xlu0 %v37, 4
    %v89 = vpop.permute.xlu0 %88
    %90 = vrot.lane.b32.xlu0 %v38, 4
    %v91 = vpop.permute.xlu0 %90
    %v92 = vsel %vm64, 1, 0
    %vm93 = vcmp.eq.s32.totalorder %v92, 1
    %v94 = vsel %vm93, %v77, 0.0
    %v95 = vsel %vm93, %v79, 0.0
    %v96 = vsel %vm93, %v81, 0.0
    %v97 = vsel %vm93, %v83, 0.0
    %v98 = vsel %vm93, %v85, 0.0
    %v99 = vsel %vm93, %v87, 0.0
    %v100 = vsel %vm93, %v89, 0.0
    %v101 = vsel %vm93, %v91, 0.0
    %102 = vrot.lane.b32.xlu0 %v31, 3
    %v103 = vpop.permute.xlu0 %102
    %104 = vrot.lane.b32.xlu0 %v32, 3
    %v105 = vpop.permute.xlu0 %104
    %106 = vrot.lane.b32.xlu0 %v33, 3
    %v107 = vpop.permute.xlu0 %106
    %108 = vrot.lane.b32.xlu0 %v34, 3
    %v109 = vpop.permute.xlu0 %108
    %110 = vrot.lane.b32.xlu0 %v35, 3
    %v111 = vpop.permute.xlu0 %110
    %112 = vrot.lane.b32.xlu0 %v36, 3
    %v113 = vpop.permute.xlu0 %112
    %114 = vrot.lane.b32.xlu0 %v37, 3
    %v115 = vpop.permute.xlu0 %114
    %116 = vrot.lane.b32.xlu0 %v38, 3
    %v117 = vpop.permute.xlu0 %116
    %vm118 = vmand %vm64, %vm47
    %v119 = vsel %vm118, 1, 0
    %vm120 = vcmp.eq.s32.totalorder %v119, 1
    %v121 = vsel %vm120, %v103, 0.0
    %v122 = vsel %vm120, %v105, 0.0
    %v123 = vsel %vm120, %v107, 0.0
    %v124 = vsel %vm120, %v109, 0.0
    %v125 = vsel %vm120, %v111, 0.0
    %v126 = vsel %vm120, %v113, 0.0
    %v127 = vsel %vm120, %v115, 0.0
    %v128 = vsel %vm120, %v117, 0.0
    %129 = vrot.lane.b32.xlu0 %v31, 1
    %v130 = vpop.permute.xlu0 %129
    %131 = vrot.lane.b32.xlu0 %v32, 1
    %v132 = vpop.permute.xlu0 %131
    %133 = vrot.lane.b32.xlu0 %v33, 1
    %v134 = vpop.permute.xlu0 %133
    %135 = vrot.lane.b32.xlu0 %v34, 1
    %v136 = vpop.permute.xlu0 %135
    %137 = vrot.lane.b32.xlu0 %v35, 1
    %v138 = vpop.permute.xlu0 %137
    %139 = vrot.lane.b32.xlu0 %v36, 1
    %v140 = vpop.permute.xlu0 %139
    %141 = vrot.lane.b32.xlu0 %v37, 1
    %v142 = vpop.permute.xlu0 %141
    %143 = vrot.lane.b32.xlu0 %v38, 1
    %v144 = vpop.permute.xlu0 %143
    %vm145 = vmand %vm43, %vm46
    %v146 = vsel %vm145, 1, 0
    %vm147 = vcmp.eq.s32.totalorder %v146, 1
    %v148 = vsel %vm147, %v130, 0.0
    %v149 = vsel %vm147, %v132, 0.0
    %v150 = vsel %vm147, %v134, 0.0
    %v151 = vsel %vm147, %v136, 0.0
    %v152 = vsel %vm147, %v138, 0.0
    %v153 = vsel %vm147, %v140, 0.0
    %v154 = vsel %vm147, %v142, 0.0
    %v155 = vsel %vm147, %v144, 0.0
    %v156 = vsel %vm43, 1, 0
    %vm157 = vcmp.eq.s32.totalorder %v156, 1
    %v158 = vsel %vm157, %v31, 0.0
    %v159 = vsel %vm157, %v32, 0.0
    %v160 = vsel %vm157, %v33, 0.0
    %v161 = vsel %vm157, %v34, 0.0
    %v162 = vsel %vm157, %v35, 0.0
    %v163 = vsel %vm157, %v36, 0.0
    %v164 = vsel %vm157, %v37, 0.0
    %v165 = vsel %vm157, %v38, 0.0
    %166 = vrot.lane.b32.xlu0 %v31, 127
    %v167 = vpop.permute.xlu0 %166
    %168 = vrot.lane.b32.xlu0 %v32, 127
    %v169 = vpop.permute.xlu0 %168
    %170 = vrot.lane.b32.xlu0 %v33, 127
    %v171 = vpop.permute.xlu0 %170
    %172 = vrot.lane.b32.xlu0 %v34, 127
    %v173 = vpop.permute.xlu0 %172
    %174 = vrot.lane.b32.xlu0 %v35, 127
    %v175 = vpop.permute.xlu0 %174
    %176 = vrot.lane.b32.xlu0 %v36, 127
    %v177 = vpop.permute.xlu0 %176
    %178 = vrot.lane.b32.xlu0 %v37, 127
    %v179 = vpop.permute.xlu0 %178
    %180 = vrot.lane.b32.xlu0 %v38, 127
    %v181 = vpop.permute.xlu0 %180
    %vm182 = vmand %vm43, %vm47
    %v183 = vsel %vm182, 1, 0
    %vm184 = vcmp.eq.s32.totalorder %v183, 1
    %v185 = vsel %vm184, %v167, 0.0
    %v186 = vsel %vm184, %v169, 0.0
    %v187 = vsel %vm184, %v171, 0.0
    %v188 = vsel %vm184, %v173, 0.0
    %v189 = vsel %vm184, %v175, 0.0
    %v190 = vsel %vm184, %v177, 0.0
    %v191 = vsel %vm184, %v179, 0.0
    %v192 = vsel %vm184, %v181, 0.0
    %193 = vrot.lane.b32.xlu0 %v31, 125
    %v194 = vpop.permute.xlu0 %193
    %195 = vrot.lane.b32.xlu0 %v32, 125
    %v196 = vpop.permute.xlu0 %195
    %197 = vrot.lane.b32.xlu0 %v33, 125
    %v198 = vpop.permute.xlu0 %197
    %199 = vrot.lane.b32.xlu0 %v34, 125
    %v200 = vpop.permute.xlu0 %199
    %201 = vrot.lane.b32.xlu0 %v35, 125
    %v202 = vpop.permute.xlu0 %201
    %203 = vrot.lane.b32.xlu0 %v36, 125
    %v204 = vpop.permute.xlu0 %203
    %205 = vrot.lane.b32.xlu0 %v37, 125
    %v206 = vpop.permute.xlu0 %205
    %207 = vrot.lane.b32.xlu0 %v38, 125
    %v208 = vpop.permute.xlu0 %207
    %vm209 = vmand %vm43, %vm45
    %vm210 = vmand %vm209, %vm46
    %v211 = vsel %vm210, 1, 0
    %vm212 = vcmp.eq.s32.totalorder %v211, 1
    %v213 = vsel %vm212, %v194, 0.0
    %v214 = vsel %vm212, %v196, 0.0
    %v215 = vsel %vm212, %v198, 0.0
    %v216 = vsel %vm212, %v200, 0.0
    %v217 = vsel %vm212, %v202, 0.0
    %v218 = vsel %vm212, %v204, 0.0
    %v219 = vsel %vm212, %v206, 0.0
    %v220 = vsel %vm212, %v208, 0.0
    %221 = vrot.lane.b32.xlu0 %v31, 124
    %v222 = vpop.permute.xlu0 %221
    %223 = vrot.lane.b32.xlu0 %v32, 124
    %v224 = vpop.permute.xlu0 %223
    %225 = vrot.lane.b32.xlu0 %v33, 124
    %v226 = vpop.permute.xlu0 %225
    %227 = vrot.lane.b32.xlu0 %v34, 124
    %v228 = vpop.permute.xlu0 %227
    %229 = vrot.lane.b32.xlu0 %v35, 124
    %v230 = vpop.permute.xlu0 %229
    %231 = vrot.lane.b32.xlu0 %v36, 124
    %v232 = vpop.permute.xlu0 %231
    %233 = vrot.lane.b32.xlu0 %v37, 124
    %v234 = vpop.permute.xlu0 %233
    %235 = vrot.lane.b32.xlu0 %v38, 124
    %v236 = vpop.permute.xlu0 %235
    %v237 = vsel %vm209, 1, 0
    %vm238 = vcmp.eq.s32.totalorder %v237, 1
    %v239 = vsel %vm238, %v222, 0.0
    %v240 = vsel %vm238, %v224, 0.0
    %v241 = vsel %vm238, %v226, 0.0
    %v242 = vsel %vm238, %v228, 0.0
    %v243 = vsel %vm238, %v230, 0.0
    %v244 = vsel %vm238, %v232, 0.0
    %v245 = vsel %vm238, %v234, 0.0
    %v246 = vsel %vm238, %v236, 0.0
    %247 = vrot.lane.b32.xlu0 %v31, 123
    %v248 = vpop.permute.xlu0 %247
    %249 = vrot.lane.b32.xlu0 %v32, 123
    %v250 = vpop.permute.xlu0 %249
    %251 = vrot.lane.b32.xlu0 %v33, 123
    %v252 = vpop.permute.xlu0 %251
    %253 = vrot.lane.b32.xlu0 %v34, 123
    %v254 = vpop.permute.xlu0 %253
    %255 = vrot.lane.b32.xlu0 %v35, 123
    %v256 = vpop.permute.xlu0 %255
    %257 = vrot.lane.b32.xlu0 %v36, 123
    %v258 = vpop.permute.xlu0 %257
    %259 = vrot.lane.b32.xlu0 %v37, 123
    %v260 = vpop.permute.xlu0 %259
    %261 = vrot.lane.b32.xlu0 %v38, 123
    %v262 = vpop.permute.xlu0 %261
    %vm263 = vmand %vm209, %vm47
    %v264 = vsel %vm263, 1, 0
    %vm265 = vcmp.eq.s32.totalorder %v264, 1
    %v266 = vsel %vm265, %v248, 0.0
    %v267 = vsel %vm265, %v250, 0.0
    %v268 = vsel %vm265, %v252, 0.0
    %v269 = vsel %vm265, %v254, 0.0
    %v270 = vsel %vm265, %v256, 0.0
    %v271 = vsel %vm265, %v258, 0.0
    %v272 = vsel %vm265, %v260, 0.0
    %v273 = vsel %vm265, %v262, 0.0
    %v274 = vld [vmem:[#allocation2] sm:$0xff]
    %v275 = vld [vmem:[#allocation2 + $0x8] sm:$0xff]
    %v276 = vld [vmem:[#allocation2 + $0x10] sm:$0xff]
    %v277 = vld [vmem:[#allocation2 + $0x18] sm:$0xff]
    %v278 = vld [vmem:[#allocation2 + $0x20] sm:$0xff]
    %v279 = vld [vmem:[#allocation2 + $0x28] sm:$0xff]
    %v280 = vld [vmem:[#allocation2 + $0x30] sm:$0xff]
    %v281 = vld [vmem:[#allocation2 + $0x38] sm:$0xff]
    %282 = vmatprep.subr.mxu0 0.0
    %283 = vmatpush1.msra.mxu0 %v155
    %284 = vmatprep.subr.mxu0 0.0
    %285 = vmatpush1.msra.mxu0 %v154
    %286 = vmatprep.subr.mxu0 0.0
    %287 = vmatpush1.msra.mxu0 %v153
    %288 = vmatprep.subr.mxu0 0.0
    %289 = vmatpush1.msra.mxu0 %v152
    %290 = vmatprep.subr.mxu0 0.0
    %291 = vmatpush1.msra.mxu0 %v151
    %292 = vmatprep.subr.mxu0 0.0
    %293 = vmatpush1.msra.mxu0 %v150
    %294 = vmatprep.subr.mxu0 0.0
    %295 = vmatpush1.msra.mxu0 %v149
    %296 = vmatprep.subr.mxu0 0.0
    %297 = vmatpush1.msra.mxu0 %v148
    %298 = vmatprep.subr.mxu0 0.0
    %299 = vmatpush1.msra.mxu0 %v165
    %300 = vmatprep.subr.mxu0 0.0
    %301 = vmatpush1.msra.mxu0 %v164
    %302 = vmatprep.subr.mxu0 0.0
    %303 = vmatpush1.msra.mxu0 %v163
    %304 = vmatprep.subr.mxu0 0.0
    %305 = vmatpush1.msra.mxu0 %v162
    %306 = vmatprep.subr.mxu0 0.0
    %307 = vmatpush1.msra.mxu0 %v161
    %308 = vmatprep.subr.mxu0 0.0
    %309 = vmatpush1.msra.mxu0 %v160
    %310 = vmatprep.subr.mxu0 0.0
    %311 = vmatpush1.msra.mxu0 %v159
    %312 = vmatprep.subr.mxu0 0.0
    %313 = vmatpush1.msra.mxu0 %v158
    %314 = vmatprep.subr.mxu0 0.0
    %315 = vmatpush2.msra.mxu0 %v75
    %316 = vmatprep.subr.mxu0 0.0
    %317 = vmatpush2.msra.mxu0 %v74
    %318 = vmatprep.subr.mxu0 0.0
    %319 = vmatpush2.msra.mxu0 %v73
    %320 = vmatprep.subr.mxu0 0.0
    %321 = vmatpush2.msra.mxu0 %v72
    %322 = vmatprep.subr.mxu0 0.0
    %323 = vmatpush2.msra.mxu0 %v71
    %324 = vmatprep.subr.mxu0 0.0
    %325 = vmatpush2.msra.mxu0 %v70
    %326 = vmatprep.subr.mxu0 0.0
    %327 = vmatpush2.msra.mxu0 %v69
    %328 = vmatprep.subr.mxu0 0.0
    %329 = vmatpush2.msra.mxu0 %v68
    %330 = vmatprep.subr.mxu0 0.0
    %331 = vmatpush2.msra.mxu0 %v101
    %332 = vmatprep.subr.mxu0 0.0
    %333 = vmatpush2.msra.mxu0 %v100
    %334 = vmatprep.subr.mxu0 0.0
    %335 = vmatpush2.msra.mxu0 %v99
    %336 = vmatprep.subr.mxu0 0.0
    %337 = vmatpush2.msra.mxu0 %v98
    %338 = vmatprep.subr.mxu0 0.0
    %339 = vmatpush2.msra.mxu0 %v97
    %340 = vmatprep.subr.mxu0 0.0
    %341 = vmatpush2.msra.mxu0 %v96
    %342 = vmatprep.subr.mxu0 0.0
    %343 = vmatpush2.msra.mxu0 %v95
    %344 = vmatprep.subr.mxu0 0.0
    %345 = vmatpush2.msra.mxu0 %v94
    %346 = vmatprep.mubr.f32.mxu0 %v275
    %347 = vmatmul.mubr.f32.gmra.mxu0 %v274
    %v348 = vpop.f32.mrf.mxu0
    %v349 = vadd.f32 0.0, %v348
    %v350 = vpop.f32.mrf.mxu0
    %351 = vmatprep.mubr.f32.mxu0 %v277
    %352 = vmatmul.mubr.f32.gmra.mxu0 %v276
    %v353 = vpop.f32.mrf.mxu0
    %v354 = vadd.f32 0.0, %v353
    %v355 = vpop.f32.mrf.mxu0
    %356 = vmatprep.mubr.f32.mxu0 %v279
    %357 = vmatmul.mubr.f32.gmra.mxu0 %v278
    %v358 = vpop.f32.mrf.mxu0
    %v359 = vadd.f32 0.0, %v358
    %v360 = vpop.f32.mrf.mxu0
    %361 = vmatprep.mubr.f32.mxu0 %v281
    %362 = vmatmul.mubr.f32.gmra.mxu0 %v280
    %v363 = vpop.f32.mrf.mxu0
    %v364 = vadd.f32 0.0, %v363
    %v365 = vpop.f32.mrf.mxu0
    %366 = vdwg.mxu0
    %s367 = scalar_lea.vmem [#allocation2], 64
    %v368 = vld [vmem:[%s367] sm:$0xff]
    %v369 = vld [vmem:[%s367 + $0x8] sm:$0xff]
    %v370 = vld [vmem:[%s367 + $0x10] sm:$0xff]
    %v371 = vld [vmem:[%s367 + $0x18] sm:$0xff]
    %v372 = vld [vmem:[%s367 + $0x20] sm:$0xff]
    %v373 = vld [vmem:[%s367 + $0x28] sm:$0xff]
    %v374 = vld [vmem:[%s367 + $0x30] sm:$0xff]
    %v375 = vld [vmem:[%s367 + $0x38] sm:$0xff]
    %376 = vmatprep.subr.mxu0 0.0
    %377 = vmatpush1.msra.mxu0 %v192
    %378 = vmatprep.subr.mxu0 0.0
    %379 = vmatpush1.msra.mxu0 %v191
    %380 = vmatprep.subr.mxu0 0.0
    %381 = vmatpush1.msra.mxu0 %v190
    %382 = vmatprep.subr.mxu0 0.0
    %383 = vmatpush1.msra.mxu0 %v189
    %384 = vmatprep.subr.mxu0 0.0
    %385 = vmatpush1.msra.mxu0 %v188
    %386 = vmatprep.subr.mxu0 0.0
    %387 = vmatpush1.msra.mxu0 %v187
    %388 = vmatprep.subr.mxu0 0.0
    %389 = vmatpush1.msra.mxu0 %v186
    %390 = vmatprep.subr.mxu0 0.0
    %391 = vmatpush1.msra.mxu0 %v185
    %392 = vmatprep.subr.mxu0 0.0
    %393 = vmatpush1.msra.mxu0 %v165
    %394 = vmatprep.subr.mxu0 0.0
    %395 = vmatpush1.msra.mxu0 %v164
    %396 = vmatprep.subr.mxu0 0.0
    %397 = vmatpush1.msra.mxu0 %v163
    %398 = vmatprep.subr.mxu0 0.0
    %399 = vmatpush1.msra.mxu0 %v162
    %400 = vmatprep.subr.mxu0 0.0
    %401 = vmatpush1.msra.mxu0 %v161
    %402 = vmatprep.subr.mxu0 0.0
    %403 = vmatpush1.msra.mxu0 %v160
    %404 = vmatprep.subr.mxu0 0.0
    %405 = vmatpush1.msra.mxu0 %v159
    %406 = vmatprep.subr.mxu0 0.0
    %407 = vmatpush1.msra.mxu0 %v158
    %408 = vmatprep.subr.mxu0 0.0
    %409 = vmatpush2.msra.mxu0 %v128
    %410 = vmatprep.subr.mxu0 0.0
    %411 = vmatpush2.msra.mxu0 %v127
    %412 = vmatprep.subr.mxu0 0.0
    %413 = vmatpush2.msra.mxu0 %v126
    %414 = vmatprep.subr.mxu0 0.0
    %415 = vmatpush2.msra.mxu0 %v125
    %416 = vmatprep.subr.mxu0 0.0
    %417 = vmatpush2.msra.mxu0 %v124
    %418 = vmatprep.subr.mxu0 0.0
    %419 = vmatpush2.msra.mxu0 %v123
    %420 = vmatprep.subr.mxu0 0.0
    %421 = vmatpush2.msra.mxu0 %v122
    %422 = vmatprep.subr.mxu0 0.0
    %423 = vmatpush2.msra.mxu0 %v121
    %424 = vmatprep.subr.mxu0 0.0
    %425 = vmatpush2.msra.mxu0 %v101
    %426 = vmatprep.subr.mxu0 0.0
    %427 = vmatpush2.msra.mxu0 %v100
    %428 = vmatprep.subr.mxu0 0.0
    %429 = vmatpush2.msra.mxu0 %v99
    %430 = vmatprep.subr.mxu0 0.0
    %431 = vmatpush2.msra.mxu0 %v98
    %432 = vmatprep.subr.mxu0 0.0
    %433 = vmatpush2.msra.mxu0 %v97
    %434 = vmatprep.subr.mxu0 0.0
    %435 = vmatpush2.msra.mxu0 %v96
    %436 = vmatprep.subr.mxu0 0.0
    %437 = vmatpush2.msra.mxu0 %v95
    %438 = vmatprep.subr.mxu0 0.0
    %439 = vmatpush2.msra.mxu0 %v94
    %440 = vmatprep.mubr.f32.mxu0 %v369
    %441 = vmatmul.mubr.f32.gmra.mxu0 %v368
    %v442 = vpop.f32.mrf.mxu0
    %v443 = vadd.f32 0.0, %v442
    %v444 = vpop.f32.mrf.mxu0
    %445 = vmatprep.mubr.f32.mxu0 %v371
    %446 = vmatmul.mubr.f32.gmra.mxu0 %v370
    %v447 = vpop.f32.mrf.mxu0
    %v448 = vadd.f32 0.0, %v447
    %v449 = vpop.f32.mrf.mxu0
    %450 = vmatprep.mubr.f32.mxu0 %v373
    %451 = vmatmul.mubr.f32.gmra.mxu0 %v372
    %v452 = vpop.f32.mrf.mxu0
    %v453 = vadd.f32 0.0, %v452
    %v454 = vpop.f32.mrf.mxu0
    %455 = vmatprep.mubr.f32.mxu0 %v375
    %456 = vmatmul.mubr.f32.gmra.mxu0 %v374
    %v457 = vpop.f32.mrf.mxu0
    %v458 = vadd.f32 0.0, %v457
    %v459 = vpop.f32.mrf.mxu0
    %460 = vdwg.mxu0
    %s461 = scalar_lea.vmem [#allocation2], 128
    %v462 = vld [vmem:[%s461] sm:$0xff]
    %v463 = vld [vmem:[%s461 + $0x8] sm:$0xff]
    %v464 = vld [vmem:[%s461 + $0x10] sm:$0xff]
    %v465 = vld [vmem:[%s461 + $0x18] sm:$0xff]
    %v466 = vld [vmem:[%s461 + $0x20] sm:$0xff]
    %v467 = vld [vmem:[%s461 + $0x28] sm:$0xff]
    %v468 = vld [vmem:[%s461 + $0x30] sm:$0xff]
    %v469 = vld [vmem:[%s461 + $0x38] sm:$0xff]
    %470 = vmatprep.subr.mxu0 0.0
    %471 = vmatpush1.msra.mxu0 %v155
    %472 = vmatprep.subr.mxu0 0.0
    %473 = vmatpush1.msra.mxu0 %v154
    %474 = vmatprep.subr.mxu0 0.0
    %475 = vmatpush1.msra.mxu0 %v153
    %476 = vmatprep.subr.mxu0 0.0
    %477 = vmatpush1.msra.mxu0 %v152
    %478 = vmatprep.subr.mxu0 0.0
    %479 = vmatpush1.msra.mxu0 %v151
    %480 = vmatprep.subr.mxu0 0.0
    %481 = vmatpush1.msra.mxu0 %v150
    %482 = vmatprep.subr.mxu0 0.0
    %483 = vmatpush1.msra.mxu0 %v149
    %484 = vmatprep.subr.mxu0 0.0
    %485 = vmatpush1.msra.mxu0 %v148
    %486 = vmatprep.subr.mxu0 0.0
    %487 = vmatpush1.msra.mxu0 %v165
    %488 = vmatprep.subr.mxu0 0.0
    %489 = vmatpush1.msra.mxu0 %v164
    %490 = vmatprep.subr.mxu0 0.0
    %491 = vmatpush1.msra.mxu0 %v163
    %492 = vmatprep.subr.mxu0 0.0
    %493 = vmatpush1.msra.mxu0 %v162
    %494 = vmatprep.subr.mxu0 0.0
    %495 = vmatpush1.msra.mxu0 %v161
    %496 = vmatprep.subr.mxu0 0.0
    %497 = vmatpush1.msra.mxu0 %v160
    %498 = vmatprep.subr.mxu0 0.0
    %499 = vmatpush1.msra.mxu0 %v159
    %500 = vmatprep.subr.mxu0 0.0
    %501 = vmatpush1.msra.mxu0 %v158
    %502 = vmatprep.subr.mxu0 0.0
    %503 = vmatpush2.msra.mxu0 %v220
    %504 = vmatprep.subr.mxu0 0.0
    %505 = vmatpush2.msra.mxu0 %v219
    %506 = vmatprep.subr.mxu0 0.0
    %507 = vmatpush2.msra.mxu0 %v218
    %508 = vmatprep.subr.mxu0 0.0
    %509 = vmatpush2.msra.mxu0 %v217
    %510 = vmatprep.subr.mxu0 0.0
    %511 = vmatpush2.msra.mxu0 %v216
    %512 = vmatprep.subr.mxu0 0.0
    %513 = vmatpush2.msra.mxu0 %v215
    %514 = vmatprep.subr.mxu0 0.0
    %515 = vmatpush2.msra.mxu0 %v214
    %516 = vmatprep.subr.mxu0 0.0
    %517 = vmatpush2.msra.mxu0 %v213
    %518 = vmatprep.subr.mxu0 0.0
    %519 = vmatpush2.msra.mxu0 %v246
    %520 = vmatprep.subr.mxu0 0.0
    %521 = vmatpush2.msra.mxu0 %v245
    %522 = vmatprep.subr.mxu0 0.0
    %523 = vmatpush2.msra.mxu0 %v244
    %524 = vmatprep.subr.mxu0 0.0
    %525 = vmatpush2.msra.mxu0 %v243
    %526 = vmatprep.subr.mxu0 0.0
    %527 = vmatpush2.msra.mxu0 %v242
    %528 = vmatprep.subr.mxu0 0.0
    %529 = vmatpush2.msra.mxu0 %v241
    %530 = vmatprep.subr.mxu0 0.0
    %531 = vmatpush2.msra.mxu0 %v240
    %532 = vmatprep.subr.mxu0 0.0
    %533 = vmatpush2.msra.mxu0 %v239
    %534 = vmatprep.mubr.f32.mxu0 %v463
    %535 = vmatmul.mubr.f32.gmra.mxu0 %v462
    %v536 = vpop.f32.mrf.mxu0
    %v537 = vadd.f32 0.0, %v536
    %v538 = vpop.f32.mrf.mxu0
    %539 = vmatprep.mubr.f32.mxu0 %v465
    %540 = vmatmul.mubr.f32.gmra.mxu0 %v464
    %v541 = vpop.f32.mrf.mxu0
    %v542 = vadd.f32 0.0, %v541
    %v543 = vpop.f32.mrf.mxu0
    %544 = vmatprep.mubr.f32.mxu0 %v467
    %545 = vmatmul.mubr.f32.gmra.mxu0 %v466
    %v546 = vpop.f32.mrf.mxu0
    %v547 = vadd.f32 0.0, %v546
    %v548 = vpop.f32.mrf.mxu0
    %549 = vmatprep.mubr.f32.mxu0 %v469
    %550 = vmatmul.mubr.f32.gmra.mxu0 %v468
    %v551 = vpop.f32.mrf.mxu0
    %v552 = vadd.f32 0.0, %v551
    %v553 = vpop.f32.mrf.mxu0
    %554 = vdwg.mxu0
    %s555 = scalar_lea.vmem [#allocation2], 192
    %v556 = vld [vmem:[%s555] sm:$0xff]
    %v557 = vld [vmem:[%s555 + $0x8] sm:$0xff]
    %v558 = vld [vmem:[%s555 + $0x10] sm:$0xff]
    %v559 = vld [vmem:[%s555 + $0x18] sm:$0xff]
    %v560 = vld [vmem:[%s555 + $0x20] sm:$0xff]
    %v561 = vld [vmem:[%s555 + $0x28] sm:$0xff]
    %v562 = vld [vmem:[%s555 + $0x30] sm:$0xff]
    %v563 = vld [vmem:[%s555 + $0x38] sm:$0xff]
    %564 = vmatprep.subr.mxu0 0.0
    %565 = vmatpush1.msra.mxu0 %v192
    %566 = vmatprep.subr.mxu0 0.0
    %567 = vmatpush1.msra.mxu0 %v191
    %568 = vmatprep.subr.mxu0 0.0
    %569 = vmatpush1.msra.mxu0 %v190
    %570 = vmatprep.subr.mxu0 0.0
    %571 = vmatpush1.msra.mxu0 %v189
    %572 = vmatprep.subr.mxu0 0.0
    %573 = vmatpush1.msra.mxu0 %v188
    %574 = vmatprep.subr.mxu0 0.0
    %575 = vmatpush1.msra.mxu0 %v187
    %576 = vmatprep.subr.mxu0 0.0
    %577 = vmatpush1.msra.mxu0 %v186
    %578 = vmatprep.subr.mxu0 0.0
    %579 = vmatpush1.msra.mxu0 %v185
    %580 = vmatprep.subr.mxu0 0.0
    %581 = vmatpush1.msra.mxu0 %v165
    %582 = vmatprep.subr.mxu0 0.0
    %583 = vmatpush1.msra.mxu0 %v164
    %584 = vmatprep.subr.mxu0 0.0
    %585 = vmatpush1.msra.mxu0 %v163
    %586 = vmatprep.subr.mxu0 0.0
    %587 = vmatpush1.msra.mxu0 %v162
    %588 = vmatprep.subr.mxu0 0.0
    %589 = vmatpush1.msra.mxu0 %v161
    %590 = vmatprep.subr.mxu0 0.0
    %591 = vmatpush1.msra.mxu0 %v160
    %592 = vmatprep.subr.mxu0 0.0
    %593 = vmatpush1.msra.mxu0 %v159
    %594 = vmatprep.subr.mxu0 0.0
    %595 = vmatpush1.msra.mxu0 %v158
    %596 = vmatprep.subr.mxu0 0.0
    %597 = vmatpush2.msra.mxu0 %v273
    %598 = vmatprep.subr.mxu0 0.0
    %599 = vmatpush2.msra.mxu0 %v272
    %600 = vmatprep.subr.mxu0 0.0
    %601 = vmatpush2.msra.mxu0 %v271
    %602 = vmatprep.subr.mxu0 0.0
    %603 = vmatpush2.msra.mxu0 %v270
    %604 = vmatprep.subr.mxu0 0.0
    %605 = vmatpush2.msra.mxu0 %v269
    %606 = vmatprep.subr.mxu0 0.0
    %607 = vmatpush2.msra.mxu0 %v268
    %608 = vmatprep.subr.mxu0 0.0
    %609 = vmatpush2.msra.mxu0 %v267
    %610 = vmatprep.subr.mxu0 0.0
    %611 = vmatpush2.msra.mxu0 %v266
    %612 = vmatprep.subr.mxu0 0.0
    %613 = vmatpush2.msra.mxu0 %v246
    %614 = vmatprep.subr.mxu0 0.0
    %615 = vmatpush2.msra.mxu0 %v245
    %616 = vmatprep.subr.mxu0 0.0
    %617 = vmatpush2.msra.mxu0 %v244
    %618 = vmatprep.subr.mxu0 0.0
    %619 = vmatpush2.msra.mxu0 %v243
    %620 = vmatprep.subr.mxu0 0.0
    %621 = vmatpush2.msra.mxu0 %v242
    %622 = vmatprep.subr.mxu0 0.0
    %623 = vmatpush2.msra.mxu0 %v241
    %624 = vmatprep.subr.mxu0 0.0
    %625 = vmatpush2.msra.mxu0 %v240
    %626 = vmatprep.subr.mxu0 0.0
    %627 = vmatpush2.msra.mxu0 %v239
    %628 = vmatprep.mubr.f32.mxu0 %v557
    %629 = vmatmul.mubr.f32.gmra.mxu0 %v556
    %v630 = vpop.f32.mrf.mxu0
    %v631 = vadd.f32 0.0, %v630
    %v632 = vpop.f32.mrf.mxu0
    %633 = vmatprep.mubr.f32.mxu0 %v559
    %634 = vmatmul.mubr.f32.gmra.mxu0 %v558
    %v635 = vpop.f32.mrf.mxu0
    %v636 = vadd.f32 0.0, %v635
    %v637 = vpop.f32.mrf.mxu0
    %638 = vmatprep.mubr.f32.mxu0 %v561
    %639 = vmatmul.mubr.f32.gmra.mxu0 %v560
    %v640 = vpop.f32.mrf.mxu0
    %v641 = vadd.f32 0.0, %v640
    %v642 = vpop.f32.mrf.mxu0
    %643 = vmatprep.mubr.f32.mxu0 %v563
    %644 = vmatmul.mubr.f32.gmra.mxu0 %v562
    %v645 = vpop.f32.mrf.mxu0
    %v646 = vadd.f32 0.0, %v645
    %v647 = vpop.f32.mrf.mxu0
    %648 = vdwg.mxu0
    %649 = vadd.xlane.f32.xlu0 %v349
    %v650 = vpop.xlane.xlu0 %649
    %651 = vadd.xlane.f32.xlu0 %v354
    %v652 = vpop.xlane.xlu0 %651
    %653 = vadd.xlane.f32.xlu0 %v359
    %v654 = vpop.xlane.xlu0 %653
    %655 = vadd.xlane.f32.xlu0 %v364
    %v656 = vpop.xlane.xlu0 %655
    %v657 = vadd.f32 %v650, 0.0
    %v658 = vadd.f32 %v652, 0.0
    %v659 = vadd.f32 %v654, 0.0
    %v660 = vadd.f32 %v656, 0.0
    %661 = vadd.xlane.f32.xlu0 %v443
    %v662 = vpop.xlane.xlu0 %661
    %663 = vadd.xlane.f32.xlu0 %v448
    %v664 = vpop.xlane.xlu0 %663
    %665 = vadd.xlane.f32.xlu0 %v453
    %v666 = vpop.xlane.xlu0 %665
    %667 = vadd.xlane.f32.xlu0 %v458
    %v668 = vpop.xlane.xlu0 %667
    %v669 = vadd.f32 %v657, %v662
    %v670 = vadd.f32 %v658, %v664
    %v671 = vadd.f32 %v659, %v666
    %v672 = vadd.f32 %v660, %v668
    %673 = vadd.xlane.f32.xlu0 %v537
    %v674 = vpop.xlane.xlu0 %673
    %675 = vadd.xlane.f32.xlu0 %v542
    %v676 = vpop.xlane.xlu0 %675
    %677 = vadd.xlane.f32.xlu0 %v547
    %v678 = vpop.xlane.xlu0 %677
    %679 = vadd.xlane.f32.xlu0 %v552
    %v680 = vpop.xlane.xlu0 %679
    %v681 = vadd.f32 %v669, %v674
    %v682 = vadd.f32 %v670, %v676
    %v683 = vadd.f32 %v671, %v678
    %v684 = vadd.f32 %v672, %v680
    %685 = vadd.xlane.f32.xlu0 %v631
    %v686 = vpop.xlane.xlu0 %685
    %687 = vadd.xlane.f32.xlu0 %v636
    %v688 = vpop.xlane.xlu0 %687
    %689 = vadd.xlane.f32.xlu0 %v641
    %v690 = vpop.xlane.xlu0 %689
    %691 = vadd.xlane.f32.xlu0 %v646
    %v692 = vpop.xlane.xlu0 %691
    %v693 = vadd.f32 %v681, %v686
    %v694 = vadd.f32 %v682, %v688
    %v695 = vadd.f32 %v683, %v690
    %v696 = vadd.f32 %v684, %v692
    %v697 = vmul.f32 %v349, %v349
    %v698 = vmul.f32 %v354, %v354
    %v699 = vmul.f32 %v359, %v359
    %v700 = vmul.f32 %v364, %v364
    %701 = vadd.xlane.f32.xlu0 %v697
    %v702 = vpop.xlane.xlu0 %701
    %703 = vadd.xlane.f32.xlu0 %v698
    %v704 = vpop.xlane.xlu0 %703
    %705 = vadd.xlane.f32.xlu0 %v699
    %v706 = vpop.xlane.xlu0 %705
    %707 = vadd.xlane.f32.xlu0 %v700
    %v708 = vpop.xlane.xlu0 %707
    %v709 = vadd.f32 %v702, 0.0
    %v710 = vadd.f32 %v704, 0.0
    %v711 = vadd.f32 %v706, 0.0
    %v712 = vadd.f32 %v708, 0.0
    %v713 = vmul.f32 %v443, %v443
    %v714 = vmul.f32 %v448, %v448
    %v715 = vmul.f32 %v453, %v453
    %v716 = vmul.f32 %v458, %v458
    %717 = vadd.xlane.f32.xlu0 %v713
    %v718 = vpop.xlane.xlu0 %717
    %719 = vadd.xlane.f32.xlu0 %v714
    %v720 = vpop.xlane.xlu0 %719
    %721 = vadd.xlane.f32.xlu0 %v715
    %v722 = vpop.xlane.xlu0 %721
    %723 = vadd.xlane.f32.xlu0 %v716
    %v724 = vpop.xlane.xlu0 %723
    %v725 = vadd.f32 %v709, %v718
    %v726 = vadd.f32 %v710, %v720
    %v727 = vadd.f32 %v711, %v722
    %v728 = vadd.f32 %v712, %v724
    %v729 = vmul.f32 %v537, %v537
    %v730 = vmul.f32 %v542, %v542
    %v731 = vmul.f32 %v547, %v547
    %v732 = vmul.f32 %v552, %v552
    %733 = vadd.xlane.f32.xlu0 %v729
    %v734 = vpop.xlane.xlu0 %733
    %735 = vadd.xlane.f32.xlu0 %v730
    %v736 = vpop.xlane.xlu0 %735
    %737 = vadd.xlane.f32.xlu0 %v731
    %v738 = vpop.xlane.xlu0 %737
    %739 = vadd.xlane.f32.xlu0 %v732
    %v740 = vpop.xlane.xlu0 %739
    %v741 = vadd.f32 %v725, %v734
    %v742 = vadd.f32 %v726, %v736
    %v743 = vadd.f32 %v727, %v738
    %v744 = vadd.f32 %v728, %v740
    %v745 = vmul.f32 %v631, %v631
    %v746 = vmul.f32 %v636, %v636
    %v747 = vmul.f32 %v641, %v641
    %v748 = vmul.f32 %v646, %v646
    %749 = vadd.xlane.f32.xlu0 %v745
    %v750 = vpop.xlane.xlu0 %749
    %751 = vadd.xlane.f32.xlu0 %v746
    %v752 = vpop.xlane.xlu0 %751
    %753 = vadd.xlane.f32.xlu0 %v747
    %v754 = vpop.xlane.xlu0 %753
    %755 = vadd.xlane.f32.xlu0 %v748
    %v756 = vpop.xlane.xlu0 %755
    %v757 = vadd.f32 %v741, %v750
    %v758 = vadd.f32 %v742, %v752
    %v759 = vadd.f32 %v743, %v754
    %v760 = vadd.f32 %v744, %v756
    %v761 = vrcp.pop 128.0
    %v762 = vmul.f32 %v693, %v761
    %v763 = vmul.f32 %v694, %v761
    %v764 = vmul.f32 %v695, %v761
    %v765 = vmul.f32 %v696, %v761
    %v766 = vmul.f32 %v757, %v761
    %v767 = vmul.f32 %v758, %v761
    %v768 = vmul.f32 %v759, %v761
    %v769 = vmul.f32 %v760, %v761
    %v770 = vmul.f32 %v762, %v762
    %v771 = vmul.f32 %v763, %v763
    %v772 = vmul.f32 %v764, %v764
    %v773 = vmul.f32 %v765, %v765
    %v774 = vsub.f32 %v766, %v770
    %v775 = vsub.f32 %v767, %v771
    %v776 = vsub.f32 %v768, %v772
    %v777 = vsub.f32 %v769, %v773
    %v778 = vld [vmem:[%s2] sm:$0xff]
    %v779 = vld [vmem:[%s2 + $0x8] sm:$0xff]
    %v780 = vld [vmem:[%s2 + $0x10] sm:$0xff]
    %v781 = vld [vmem:[%s2 + $0x18] sm:$0xff]
    %v782 = vadd.f32 %v774, 1e-05
    %v783 = vadd.f32 %v775, 1e-05
    %v784 = vadd.f32 %v776, 1e-05
    %v785 = vadd.f32 %v777, 1e-05
    %v786 = vrsqrt.pop %v782
    %v787 = vrsqrt.pop %v783
    %v788 = vrsqrt.pop %v784
    %v789 = vrsqrt.pop %v785
    %v790 = vmul.f32 %v778, %v786
    %v791 = vmul.f32 %v779, %v787
    %v792 = vmul.f32 %v780, %v788
    %v793 = vmul.f32 %v781, %v789
    %v794 = vld [vmem:[%s3] sm:$0xff]
    %v795 = vld [vmem:[%s3 + $0x8] sm:$0xff]
    %v796 = vld [vmem:[%s3 + $0x10] sm:$0xff]
    %v797 = vld [vmem:[%s3 + $0x18] sm:$0xff]
    %v798 = vmul.f32 %v762, %v790
    %v799 = vmul.f32 %v763, %v791
    %v800 = vmul.f32 %v764, %v792
    %v801 = vmul.f32 %v765, %v793
    %v802 = vsub.f32 %v794, %v798
    %v803 = vsub.f32 %v795, %v799
    %v804 = vsub.f32 %v796, %v800
    %v805 = vsub.f32 %v797, %v801
    %807 = vset.pattern.permute.xlu0 0
    %808 = vperm.xlu0 %807, %v790
    %v809 = vpop.permute.xlu0 %808
    %812 = vset.pattern.permute.xlu0 0
    %813 = vperm.xlu0 %812, %v791
    %v814 = vpop.permute.xlu0 %813
    %817 = vset.pattern.permute.xlu0 0
    %818 = vperm.xlu0 %817, %v792
    %v819 = vpop.permute.xlu0 %818
    %822 = vset.pattern.permute.xlu0 0
    %823 = vperm.xlu0 %822, %v793
    %v824 = vpop.permute.xlu0 %823
    %v826 = vmul.f32 %v349, %v809
    %v827 = vmul.f32 %v354, %v814
    %v828 = vmul.f32 %v359, %v819
    %v829 = vmul.f32 %v364, %v824
    %831 = vset.pattern.permute.xlu0 0
    %832 = vperm.xlu0 %831, %v802
    %v833 = vpop.permute.xlu0 %832
    %836 = vset.pattern.permute.xlu0 0
    %837 = vperm.xlu0 %836, %v803
    %v838 = vpop.permute.xlu0 %837
    %841 = vset.pattern.permute.xlu0 0
    %842 = vperm.xlu0 %841, %v804
    %v843 = vpop.permute.xlu0 %842
    %846 = vset.pattern.permute.xlu0 0
    %847 = vperm.xlu0 %846, %v805
    %v848 = vpop.permute.xlu0 %847
    %v850 = vadd.f32 %v826, %v833
    %v851 = vadd.f32 %v827, %v838
    %v852 = vadd.f32 %v828, %v843
    %v853 = vadd.f32 %v829, %v848
    %v854 = vmax.f32 %v850, 0.0
    %v855 = vmax.f32 %v851, 0.0
    %v856 = vmax.f32 %v852, 0.0
    %v857 = vmax.f32 %v853, 0.0
    %858 = vst [vmem:[%s4] sm:$0xff] %v854
    %859 = vst [vmem:[%s4 + $0x8] sm:$0xff] %v855
    %860 = vst [vmem:[%s4 + $0x10] sm:$0xff] %v856
    %861 = vst [vmem:[%s4 + $0x18] sm:$0xff] %v857
    %v862 = vmul.f32 %v443, %v809
    %v863 = vmul.f32 %v448, %v814
    %v864 = vmul.f32 %v453, %v819
    %v865 = vmul.f32 %v458, %v824
    %v866 = vadd.f32 %v862, %v833
    %v867 = vadd.f32 %v863, %v838
    %v868 = vadd.f32 %v864, %v843
    %v869 = vadd.f32 %v865, %v848
    %v870 = vmax.f32 %v866, 0.0
    %v871 = vmax.f32 %v867, 0.0
    %v872 = vmax.f32 %v868, 0.0
    %v873 = vmax.f32 %v869, 0.0
    %s874 = scalar_lea.vmem %s4, 32
    %875 = vst [vmem:[%s874] sm:$0xff] %v870
    %876 = vst [vmem:[%s874 + $0x8] sm:$0xff] %v871
    %877 = vst [vmem:[%s874 + $0x10] sm:$0xff] %v872
    %878 = vst [vmem:[%s874 + $0x18] sm:$0xff] %v873
    %v879 = vmul.f32 %v537, %v809
    %v880 = vmul.f32 %v542, %v814
    %v881 = vmul.f32 %v547, %v819
    %v882 = vmul.f32 %v552, %v824
    %v883 = vadd.f32 %v879, %v833
    %v884 = vadd.f32 %v880, %v838
    %v885 = vadd.f32 %v881, %v843
    %v886 = vadd.f32 %v882, %v848
    %v887 = vmax.f32 %v883, 0.0
    %v888 = vmax.f32 %v884, 0.0
    %v889 = vmax.f32 %v885, 0.0
    %v890 = vmax.f32 %v886, 0.0
    %s891 = scalar_lea.vmem %s4, 64
    %892 = vst [vmem:[%s891] sm:$0xff] %v887
    %893 = vst [vmem:[%s891 + $0x8] sm:$0xff] %v888
    %894 = vst [vmem:[%s891 + $0x10] sm:$0xff] %v889
    %895 = vst [vmem:[%s891 + $0x18] sm:$0xff] %v890
    %v896 = vmul.f32 %v631, %v809
    %v897 = vmul.f32 %v636, %v814
    %v898 = vmul.f32 %v641, %v819
    %v899 = vmul.f32 %v646, %v824
    %v900 = vadd.f32 %v896, %v833
    %v901 = vadd.f32 %v897, %v838
    %v902 = vadd.f32 %v898, %v843
    %v903 = vadd.f32 %v899, %v848
    %v904 = vmax.f32 %v900, 0.0
    %v905 = vmax.f32 %v901, 0.0
    %v906 = vmax.f32 %v902, 0.0
    %v907 = vmax.f32 %v903, 0.0
    %s908 = scalar_lea.vmem %s4, 96
    %909 = vst [vmem:[%s908] sm:$0xff] %v904
    %910 = vst [vmem:[%s908 + $0x8] sm:$0xff] %v905
    %911 = vst [vmem:[%s908 + $0x10] sm:$0xff] %v906
    %912 = vst [vmem:[%s908 + $0x18] sm:$0xff] %v907
    // Predicated region
    $region22: #{generator_forward.6} parent=1 // pred_check
      _
    $region23: #{generator_forward.6} parent=1 // pred_check_branch
      %914 = sbr.rel (0) target = $region25
    $region24: #{generator_forward.6} parent=1 // pred_region
      _
    $region25: #{generator_forward.6} parent=1 // pred_fallthru
      _
    // Predicated region
    $region26: #{generator_forward.6} parent=1 // pred_check
      _
    $region27: #{generator_forward.6} parent=1 // pred_check_branch
      %916 = sbr.rel (0) target = $region29
    $region28: #{generator_forward.6} parent=1 // pred_region
      _
    $region29: #{generator_forward.6} parent=1 // pred_fallthru
      _
    %917 = vsyncpa [#allocation3], 1

// kernel: generator_forward.7
$region0: #{generator_forward.7}
  #allocation0 [shape = 'u32[]', space=smem, size = 0x4, offset = 0x4, fixed_abs, tag = 'smem constant byte address 0x4 - core index']
  #allocation1 [shape = 'u32[144,128]{1,0:T(1,128)}', space=vmem, size = 0x12000, scoped, tag = 'internal scratch']
  %s0 = inlined_call_operand.vmem [shape: f32[32,128], index: 0, kind: input, shape index: {}]
  %s1 = inlined_call_operand.hbm [shape: f32[4,16,128], index: 1, kind: input, shape index: {}]
  %s2 = inlined_call_operand.vmem [shape: f32[16,1], index: 2, kind: input, shape index: {}]
  %s3 = inlined_call_operand.vmem [shape: f32[16,1], index: 3, kind: input, shape index: {}]
  %s4 = inlined_call_operand.vmem [shape: f32[4,16,128], index: 4, kind: output, shape index: {}]
  %s5 = sld [smem:[#allocation0]]
  $region30: #{generator_forward.7} parent=0
    _
  %s7 = ssub.s32 1, %s5
  %s8 = scalar_select 0, %s7, %s5
  $region1: #{generator_forward.7} parent=0
    #allocation2 [shape = 'u8[32768]{0}', space=vmem, size = 0x8000, scoped, tag = 'input window, operand 1, single buffered']
    #allocation3 [shape = 's32[1]{0}', space=sflag, size = 0x4, scoped, tag = 'scoped memory for generator_forward.7']
    %9 = vsyncpa [#allocation3], 0
    // Predicated region
    $region2: #{generator_forward.7} parent=1 // pred_check
      _
    $region3: #{generator_forward.7} parent=1 // pred_check_branch
      %11 = sbr.rel (0) target = $region5
    $region4: #{generator_forward.7} parent=1 // pred_region
      _
    $region5: #{generator_forward.7} parent=1 // pred_fallthru
      _
    // Predicated region
    $region6: #{generator_forward.7} parent=1 // pred_check
      _
    $region7: #{generator_forward.7} parent=1 // pred_check_branch
      %13 = sbr.rel (0) target = $region9
    $region8: #{generator_forward.7} parent=1 // pred_region
      %s15 = ssub.s32 1024, 1024
      %16 = vsyncadd [#allocation3], %s15
      %s17 = sshll.u32 [#allocation2], 4
      %s18 = int_to_ptr.vmem [resolvable:$true] %s17
      %23 = dma.hbm_to_vmem [thread:$0]  %s1, 1024, %s18, [#allocation3], 128, 128, 8
    $region9: #{generator_forward.7} parent=1 // pred_fallthru
      _
    // Predicated region
    $region10: #{generator_forward.7} parent=1 // pred_check
      _
    $region11: #{generator_forward.7} parent=1 // pred_check_branch
      %25 = sbr.rel (0) target = $region13
    $region12: #{generator_forward.7} parent=1 // pred_region
      _
    $region13: #{generator_forward.7} parent=1 // pred_fallthru
      _
    // Predicated region
    $region14: #{generator_forward.7} parent=1 // pred_check
      _
    $region15: #{generator_forward.7} parent=1 // pred_check_branch
      %27 = sbr.rel (0) target = $region17
    $region16: #{generator_forward.7} parent=1 // pred_region
      _
    $region17: #{generator_forward.7} parent=1 // pred_fallthru
      _
    // Predicated region
    $region18: #{generator_forward.7} parent=1 // pred_check
      _
    $region19: #{generator_forward.7} parent=1 // pred_check_branch
      %29 = sbr.rel (0) target = $region21
    $region20: #{generator_forward.7} parent=1 // pred_region
      %30 = dma.done [#allocation3], 1024
    $region21: #{generator_forward.7} parent=1 // pred_fallthru
      _
    %v31 = vld [vmem:[%s0] sm:$0xff]
    %v32 = vld [vmem:[%s0 + $0x8] sm:$0xff]
    %v33 = vld [vmem:[%s0 + $0x10] sm:$0xff]
    %v34 = vld [vmem:[%s0 + $0x18] sm:$0xff]
    %v35 = vlaneseq
    %v36 = vand.u32 %v35, 127
    %v37 = vand.u32 %v36, 7
    %v38 = vand.u32 %v36, 63
    %vm39 = vcmp.ge.s32.totalorder %v38, 8
    %vm40 = vcmp.lt.s32.totalorder %v38, 56
    %vm41 = vcmp.ge.s32.totalorder %v37, 1
    %vm42 = vcmp.lt.s32.totalorder %v37, 7
    %43 = vrot.lane.b32.xlu0 %v31, 9
    %v44 = vpop.permute.xlu0 %43
    %45 = vrot.lane.b32.xlu0 %v32, 9
    %v46 = vpop.permute.xlu0 %45
    %47 = vrot.lane.b32.xlu0 %v33, 9
    %v48 = vpop.permute.xlu0 %47
    %49 = vrot.lane.b32.xlu0 %v34, 9
    %v50 = vpop.permute.xlu0 %49
    %vm51 = vmand %vm39, %vm41
    %v52 = vsel %vm51, 1, 0
    %vm53 = vcmp.eq.s32.totalorder %v52, 1
    %v54 = vsel %vm53, %v44, 0.0
    %v55 = vsel %vm53, %v46, 0.0
    %v56 = vsel %vm53, %v48, 0.0
    %v57 = vsel %vm53, %v50, 0.0
    %58 = vrot.lane.b32.xlu0 %v31, 8
    %v59 = vpop.permute.xlu0 %58
    %60 = vrot.lane.b32.xlu0 %v32, 8
    %v61 = vpop.permute.xlu0 %60
    %62 = vrot.lane.b32.xlu0 %v33, 8
    %v63 = vpop.permute.xlu0 %62
    %64 = vrot.lane.b32.xlu0 %v34, 8
    %v65 = vpop.permute.xlu0 %64
    %v66 = vsel %vm39, 1, 0
    %vm67 = vcmp.eq.s32.totalorder %v66, 1
    %v68 = vsel %vm67, %v59, 0.0
    %v69 = vsel %vm67, %v61, 0.0
    %v70 = vsel %vm67, %v63, 0.0
    %v71 = vsel %vm67, %v65, 0.0
    %72 = vrot.lane.b32.xlu0 %v31, 7
    %v73 = vpop.permute.xlu0 %72
    %74 = vrot.lane.b32.xlu0 %v32, 7
    %v75 = vpop.permute.xlu0 %74
    %76 = vrot.lane.b32.xlu0 %v33, 7
    %v77 = vpop.permute.xlu0 %76
    %78 = vrot.lane.b32.xlu0 %v34, 7
    %v79 = vpop.permute.xlu0 %78
    %vm80 = vmand %vm39, %vm42
    %v81 = vsel %vm80, 1, 0
    %vm82 = vcmp.eq.s32.totalorder %v81, 1
    %v83 = vsel %vm82, %v73, 0.0
    %v84 = vsel %vm82, %v75, 0.0
    %v85 = vsel %vm82, %v77, 0.0
    %v86 = vsel %vm82, %v79, 0.0
    %87 = vrot.lane.b32.xlu0 %v31, 1
    %v88 = vpop.permute.xlu0 %87
    %89 = vrot.lane.b32.xlu0 %v32, 1
    %v90 = vpop.permute.xlu0 %89
    %91 = vrot.lane.b32.xlu0 %v33, 1
    %v92 = vpop.permute.xlu0 %91
    %93 = vrot.lane.b32.xlu0 %v34, 1
    %v94 = vpop.permute.xlu0 %93
    %v95 = vsel %vm41, 1, 0
    %vm96 = vcmp.eq.s32.totalorder %v95, 1
    %v97 = vsel %vm96, %v88, 0.0
    %v98 = vsel %vm96, %v90, 0.0
    %v99 = vsel %vm96, %v92, 0.0
    %v100 = vsel %vm96, %v94, 0.0
    %101 = vrot.lane.b32.xlu0 %v31, 127
    %v102 = vpop.permute.xlu0 %101
    %103 = vrot.lane.b32.xlu0 %v32, 127
    %v104 = vpop.permute.xlu0 %103
    %105 = vrot.lane.b32.xlu0 %v33, 127
    %v106 = vpop.permute.xlu0 %105
    %107 = vrot.lane.b32.xlu0 %v34, 127
    %v108 = vpop.permute.xlu0 %107
    %v109 = vsel %vm42, 1, 0
    %vm110 = vcmp.eq.s32.totalorder %v109, 1
    %v111 = vsel %vm110, %v102, 0.0
    %v112 = vsel %vm110, %v104, 0.0
    %v113 = vsel %vm110, %v106, 0.0
    %v114 = vsel %vm110, %v108, 0.0
    %115 = vrot.lane.b32.xlu0 %v31, 121
    %v116 = vpop.permute.xlu0 %115
    %117 = vrot.lane.b32.xlu0 %v32, 121
    %v118 = vpop.permute.xlu0 %117
    %119 = vrot.lane.b32.xlu0 %v33, 121
    %v120 = vpop.permute.xlu0 %119
    %121 = vrot.lane.b32.xlu0 %v34, 121
    %v122 = vpop.permute.xlu0 %121
    %vm123 = vmand %vm40, %vm41
    %v124 = vsel %vm123, 1, 0
    %vm125 = vcmp.eq.s32.totalorder %v124, 1
    %v126 = vsel %vm125, %v116, 0.0
    %v127 = vsel %vm125, %v118, 0.0
    %v128 = vsel %vm125, %v120, 0.0
    %v129 = vsel %vm125, %v122, 0.0
    %130 = vrot.lane.b32.xlu0 %v31, 120
    %v131 = vpop.permute.xlu0 %130
    %132 = vrot.lane.b32.xlu0 %v32, 120
    %v133 = vpop.permute.xlu0 %132
    %134 = vrot.lane.b32.xlu0 %v33, 120
    %v135 = vpop.permute.xlu0 %134
    %136 = vrot.lane.b32.xlu0 %v34, 120
    %v137 = vpop.permute.xlu0 %136
    %v138 = vsel %vm40, 1, 0
    %vm139 = vcmp.eq.s32.totalorder %v138, 1
    %v140 = vsel %vm139, %v131, 0.0
    %v141 = vsel %vm139, %v133, 0.0
    %v142 = vsel %vm139, %v135, 0.0
    %v143 = vsel %vm139, %v137, 0.0
    %144 = vrot.lane.b32.xlu0 %v31, 119
    %v145 = vpop.permute.xlu0 %144
    %146 = vrot.lane.b32.xlu0 %v32, 119
    %v147 = vpop.permute.xlu0 %146
    %148 = vrot.lane.b32.xlu0 %v33, 119
    %v149 = vpop.permute.xlu0 %148
    %150 = vrot.lane.b32.xlu0 %v34, 119
    %v151 = vpop.permute.xlu0 %150
    %vm152 = vmand %vm40, %vm42
    %v153 = vsel %vm152, 1, 0
    %vm154 = vcmp.eq.s32.totalorder %v153, 1
    %v155 = vsel %vm154, %v145, 0.0
    %v156 = vsel %vm154, %v147, 0.0
    %v157 = vsel %vm154, %v149, 0.0
    %v158 = vsel %vm154, %v151, 0.0
    %v159 = vld [vmem:[#allocation2] sm:$0xff]
    %v160 = vld [vmem:[#allocation2 + $0x8] sm:$0xff]
    %161 = vmatprep.subr.mxu0 0.0
    %162 = vmatpush1.msra.mxu0 %v57
    %163 = vmatprep.subr.mxu0 0.0
    %164 = vmatpush1.msra.mxu0 %v56
    %165 = vmatprep.subr.mxu0 0.0
    %166 = vmatpush1.msra.mxu0 %v55
    %167 = vmatprep.subr.mxu0 0.0
    %168 = vmatpush1.msra.mxu0 %v54
    %169 = vmatprep.subr.mxu0 0.0
    %170 = vmatpush1.msra.mxu0 %v71
    %171 = vmatprep.subr.mxu0 0.0
    %172 = vmatpush1.msra.mxu0 %v70
    %173 = vmatprep.subr.mxu0 0.0
    %174 = vmatpush1.msra.mxu0 %v69
    %175 = vmatprep.subr.mxu0 0.0
    %176 = vmatpush1.msra.mxu0 %v68
    %177 = vmatprep.subr.mxu0 0.0
    %178 = vmatpush1.msra.mxu0 %v100
    %179 = vmatprep.subr.mxu0 0.0
    %180 = vmatpush1.msra.mxu0 %v99
    %181 = vmatprep.subr.mxu0 0.0
    %182 = vmatpush1.msra.mxu0 %v98
    %183 = vmatprep.subr.mxu0 0.0
    %184 = vmatpush1.msra.mxu0 %v97
    %185 = vmatprep.subr.mxu0 0.0
    %186 = vmatpush1.msra.mxu0 %v34
    %187 = vmatprep.subr.mxu0 0.0
    %188 = vmatpush1.msra.mxu0 %v33
    %189 = vmatprep.subr.mxu0 0.0
    %190 = vmatpush1.msra.mxu0 %v32
    %191 = vmatprep.subr.mxu0 0.0
    %192 = vmatpush1.msra.mxu0 %v31
    %193 = vmatprep.subr.mxu0 0.0
    %194 = vmatpush2.msra.mxu0 0.0
    %195 = vmatprep.subr.mxu0 0.0
    %196 = vmatpush2.msra.mxu0 0.0
    %197 = vmatprep.subr.mxu0 0.0
    %198 = vmatpush2.msra.mxu0 0.0
    %199 = vmatprep.subr.mxu0 0.0
    %200 = vmatpush2.msra.mxu0 0.0
    %201 = vmatprep.subr.mxu0 0.0
    %202 = vmatpush2.msra.mxu0 0.0
    %203 = vmatprep.subr.mxu0 0.0
    %204 = vmatpush2.msra.mxu0 0.0
    %205 = vmatprep.subr.mxu0 0.0
    %206 = vmatpush2.msra.mxu0 0.0
    %207 = vmatprep.subr.mxu0 0.0
    %208 = vmatpush2.msra.mxu0 0.0
    %209 = vmatprep.subr.mxu0 0.0
    %210 = vmatpush2.msra.mxu0 0.0
    %211 = vmatprep.subr.mxu0 0.0
    %212 = vmatpush2.msra.mxu0 0.0
    %213 = vmatprep.subr.mxu0 0.0
    %214 = vmatpush2.msra.mxu0 0.0
    %215 = vmatprep.subr.mxu0 0.0
    %216 = vmatpush2.msra.mxu0 0.0
    %217 = vmatprep.subr.mxu0 0.0
    %218 = vmatpush2.msra.mxu0 0.0
    %219 = vmatprep.subr.mxu0 0.0
    %220 = vmatpush2.msra.mxu0 0.0
    %221 = vmatprep.subr.mxu0 0.0
    %222 = vmatpush2.msra.mxu0 0.0
    %223 = vmatprep.subr.mxu0 0.0
    %224 = vmatpush2.msra.mxu0 0.0
    %225 = vmatprep.mubr.f32.mxu0 0.0
    %226 = vmatmul.mubr.f32.gmra.mxu0 %v159
    %v227 = vpop.f32.mrf.mxu0
    %v228 = vadd.f32 0.0, %v227
    %v229 = vpop.f32.mrf.mxu0
    %230 = vmatprep.mubr.f32.mxu0 0.0
    %231 = vmatmul.mubr.f32.gmra.mxu0 %v160
    %v232 = vpop.f32.mrf.mxu0
    %v233 = vadd.f32 0.0, %v232
    %v234 = vpop.f32.mrf.mxu0
    %235 = vdwg.mxu0
    %s236 = scalar_lea.vmem [#allocation2], 16
    %v237 = vld [vmem:[%s236] sm:$0xff]
    %v238 = vld [vmem:[%s236 + $0x8] sm:$0xff]
    %239 = vmatprep.subr.mxu0 0.0
    %240 = vmatpush1.msra.mxu0 %v86
    %241 = vmatprep.subr.mxu0 0.0
    %242 = vmatpush1.msra.mxu0 %v85
    %243 = vmatprep.subr.mxu0 0.0
    %244 = vmatpush1.msra.mxu0 %v84
    %245 = vmatprep.subr.mxu0 0.0
    %246 = vmatpush1.msra.mxu0 %v83
    %247 = vmatprep.subr.mxu0 0.0
    %248 = vmatpush1.msra.mxu0 %v71
    %249 = vmatprep.subr.mxu0 0.0
    %250 = vmatpush1.msra.mxu0 %v70
    %251 = vmatprep.subr.mxu0 0.0
    %252 = vmatpush1.msra.mxu0 %v69
    %253 = vmatprep.subr.mxu0 0.0
    %254 = vmatpush1.msra.mxu0 %v68
    %255 = vmatprep.subr.mxu0 0.0
    %256 = vmatpush1.msra.mxu0 %v114
    %257 = vmatprep.subr.mxu0 0.0
    %258 = vmatpush1.msra.mxu0 %v113
    %259 = vmatprep.subr.mxu0 0.0
    %260 = vmatpush1.msra.mxu0 %v112
    %261 = vmatprep.subr.mxu0 0.0
    %262 = vmatpush1.msra.mxu0 %v111
    %263 = vmatprep.subr.mxu0 0.0
    %264 = vmatpush1.msra.mxu0 %v34
    %265 = vmatprep.subr.mxu0 0.0
    %266 = vmatpush1.msra.mxu0 %v33
    %267 = vmatprep.subr.mxu0 0.0
    %268 = vmatpush1.msra.mxu0 %v32
    %269 = vmatprep.subr.mxu0 0.0
    %270 = vmatpush1.msra.mxu0 %v31
    %271 = vmatprep.subr.mxu0 0.0
    %272 = vmatpush2.msra.mxu0 0.0
    %273 = vmatprep.subr.mxu0 0.0
    %274 = vmatpush2.msra.mxu0 0.0
    %275 = vmatprep.subr.mxu0 0.0
    %276 = vmatpush2.msra.mxu0 0.0
    %277 = vmatprep.subr.mxu0 0.0
    %278 = vmatpush2.msra.mxu0 0.0
    %279 = vmatprep.subr.mxu0 0.0
    %280 = vmatpush2.msra.mxu0 0.0
    %281 = vmatprep.subr.mxu0 0.0
    %282 = vmatpush2.msra.mxu0 0.0
    %283 = vmatprep.subr.mxu0 0.0
    %284 = vmatpush2.msra.mxu0 0.0
    %285 = vmatprep.subr.mxu0 0.0
    %286 = vmatpush2.msra.mxu0 0.0
    %287 = vmatprep.subr.mxu0 0.0
    %288 = vmatpush2.msra.mxu0 0.0
    %289 = vmatprep.subr.mxu0 0.0
    %290 = vmatpush2.msra.mxu0 0.0
    %291 = vmatprep.subr.mxu0 0.0
    %292 = vmatpush2.msra.mxu0 0.0
    %293 = vmatprep.subr.mxu0 0.0
    %294 = vmatpush2.msra.mxu0 0.0
    %295 = vmatprep.subr.mxu0 0.0
    %296 = vmatpush2.msra.mxu0 0.0
    %297 = vmatprep.subr.mxu0 0.0
    %298 = vmatpush2.msra.mxu0 0.0
    %299 = vmatprep.subr.mxu0 0.0
    %300 = vmatpush2.msra.mxu0 0.0
    %301 = vmatprep.subr.mxu0 0.0
    %302 = vmatpush2.msra.mxu0 0.0
    %303 = vmatprep.mubr.f32.mxu0 0.0
    %304 = vmatmul.mubr.f32.gmra.mxu0 %v237
    %v305 = vpop.f32.mrf.mxu0
    %v306 = vadd.f32 0.0, %v305
    %v307 = vpop.f32.mrf.mxu0
    %308 = vmatprep.mubr.f32.mxu0 0.0
    %309 = vmatmul.mubr.f32.gmra.mxu0 %v238
    %v310 = vpop.f32.mrf.mxu0
    %v311 = vadd.f32 0.0, %v310
    %v312 = vpop.f32.mrf.mxu0
    %313 = vdwg.mxu0
    %s314 = scalar_lea.vmem [#allocation2], 32
    %v315 = vld [vmem:[%s314] sm:$0xff]
    %v316 = vld [vmem:[%s314 + $0x8] sm:$0xff]
    %317 = vmatprep.subr.mxu0 0.0
    %318 = vmatpush1.msra.mxu0 %v129
    %319 = vmatprep.subr.mxu0 0.0
    %320 = vmatpush1.msra.mxu0 %v128
    %321 = vmatprep.subr.mxu0 0.0
    %322 = vmatpush1.msra.mxu0 %v127
    %323 = vmatprep.subr.mxu0 0.0
    %324 = vmatpush1.msra.mxu0 %v126
    %325 = vmatprep.subr.mxu0 0.0
    %326 = vmatpush1.msra.mxu0 %v143
    %327 = vmatprep.subr.mxu0 0.0
    %328 = vmatpush1.msra.mxu0 %v142
    %329 = vmatprep.subr.mxu0 0.0
    %330 = vmatpush1.msra.mxu0 %v141
    %331 = vmatprep.subr.mxu0 0.0
    %332 = vmatpush1.msra.mxu0 %v140
    %333 = vmatprep.subr.mxu0 0.0
    %334 = vmatpush1.msra.mxu0 %v100
    %335 = vmatprep.subr.mxu0 0.0
    %336 = vmatpush1.msra.mxu0 %v99
    %337 = vmatprep.subr.mxu0 0.0
    %338 = vmatpush1.msra.mxu0 %v98
    %339 = vmatprep.subr.mxu0 0.0
    %340 = vmatpush1.msra.mxu0 %v97
    %341 = vmatprep.subr.mxu0 0.0
    %342 = vmatpush1.msra.mxu0 %v34
    %343 = vmatprep.subr.mxu0 0.0
    %344 = vmatpush1.msra.mxu0 %v33
    %345 = vmatprep.subr.mxu0 0.0
    %346 = vmatpush1.msra.mxu0 %v32
    %347 = vmatprep.subr.mxu0 0.0
    %348 = vmatpush1.msra.mxu0 %v31
    %349 = vmatprep.subr.mxu0 0.0
    %350 = vmatpush2.msra.mxu0 0.0
    %351 = vmatprep.subr.mxu0 0.0
    %352 = vmatpush2.msra.mxu0 0.0
    %353 = vmatprep.subr.mxu0 0.0
    %354 = vmatpush2.msra.mxu0 0.0
    %355 = vmatprep.subr.mxu0 0.0
    %356 = vmatpush2.msra.mxu0 0.0
    %357 = vmatprep.subr.mxu0 0.0
    %358 = vmatpush2.msra.mxu0 0.0
    %359 = vmatprep.subr.mxu0 0.0
    %360 = vmatpush2.msra.mxu0 0.0
    %361 = vmatprep.subr.mxu0 0.0
    %362 = vmatpush2.msra.mxu0 0.0
    %363 = vmatprep.subr.mxu0 0.0
    %364 = vmatpush2.msra.mxu0 0.0
    %365 = vmatprep.subr.mxu0 0.0
    %366 = vmatpush2.msra.mxu0 0.0
    %367 = vmatprep.subr.mxu0 0.0
    %368 = vmatpush2.msra.mxu0 0.0
    %369 = vmatprep.subr.mxu0 0.0
    %370 = vmatpush2.msra.mxu0 0.0
    %371 = vmatprep.subr.mxu0 0.0
    %372 = vmatpush2.msra.mxu0 0.0
    %373 = vmatprep.subr.mxu0 0.0
    %374 = vmatpush2.msra.mxu0 0.0
    %375 = vmatprep.subr.mxu0 0.0
    %376 = vmatpush2.msra.mxu0 0.0
    %377 = vmatprep.subr.mxu0 0.0
    %378 = vmatpush2.msra.mxu0 0.0
    %379 = vmatprep.subr.mxu0 0.0
    %380 = vmatpush2.msra.mxu0 0.0
    %381 = vmatprep.mubr.f32.mxu0 0.0
    %382 = vmatmul.mubr.f32.gmra.mxu0 %v315
    %v383 = vpop.f32.mrf.mxu0
    %v384 = vadd.f32 0.0, %v383
    %v385 = vpop.f32.mrf.mxu0
    %386 = vmatprep.mubr.f32.mxu0 0.0
    %387 = vmatmul.mubr.f32.gmra.mxu0 %v316
    %v388 = vpop.f32.mrf.mxu0
    %v389 = vadd.f32 0.0, %v388
    %v390 = vpop.f32.mrf.mxu0
    %391 = vdwg.mxu0
    %s392 = scalar_lea.vmem [#allocation2], 48
    %v393 = vld [vmem:[%s392] sm:$0xff]
    %v394 = vld [vmem:[%s392 + $0x8] sm:$0xff]
    %395 = vmatprep.subr.mxu0 0.0
    %396 = vmatpush1.msra.mxu0 %v158
    %397 = vmatprep.subr.mxu0 0.0
    %398 = vmatpush1.msra.mxu0 %v157
    %399 = vmatprep.subr.mxu0 0.0
    %400 = vmatpush1.msra.mxu0 %v156
    %401 = vmatprep.subr.mxu0 0.0
    %402 = vmatpush1.msra.mxu0 %v155
    %403 = vmatprep.subr.mxu0 0.0
    %404 = vmatpush1.msra.mxu0 %v143
    %405 = vmatprep.subr.mxu0 0.0
    %406 = vmatpush1.msra.mxu0 %v142
    %407 = vmatprep.subr.mxu0 0.0
    %408 = vmatpush1.msra.mxu0 %v141
    %409 = vmatprep.subr.mxu0 0.0
    %410 = vmatpush1.msra.mxu0 %v140
    %411 = vmatprep.subr.mxu0 0.0
    %412 = vmatpush1.msra.mxu0 %v114
    %413 = vmatprep.subr.mxu0 0.0
    %414 = vmatpush1.msra.mxu0 %v113
    %415 = vmatprep.subr.mxu0 0.0
    %416 = vmatpush1.msra.mxu0 %v112
    %417 = vmatprep.subr.mxu0 0.0
    %418 = vmatpush1.msra.mxu0 %v111
    %419 = vmatprep.subr.mxu0 0.0
    %420 = vmatpush1.msra.mxu0 %v34
    %421 = vmatprep.subr.mxu0 0.0
    %422 = vmatpush1.msra.mxu0 %v33
    %423 = vmatprep.subr.mxu0 0.0
    %424 = vmatpush1.msra.mxu0 %v32
    %425 = vmatprep.subr.mxu0 0.0
    %426 = vmatpush1.msra.mxu0 %v31
    %427 = vmatprep.subr.mxu0 0.0
    %428 = vmatpush2.msra.mxu0 0.0
    %429 = vmatprep.subr.mxu0 0.0
    %430 = vmatpush2.msra.mxu0 0.0
    %431 = vmatprep.subr.mxu0 0.0
    %432 = vmatpush2.msra.mxu0 0.0
    %433 = vmatprep.subr.mxu0 0.0
    %434 = vmatpush2.msra.mxu0 0.0
    %435 = vmatprep.subr.mxu0 0.0
    %436 = vmatpush2.msra.mxu0 0.0
    %437 = vmatprep.subr.mxu0 0.0
    %438 = vmatpush2.msra.mxu0 0.0
    %439 = vmatprep.subr.mxu0 0.0
    %440 = vmatpush2.msra.mxu0 0.0
    %441 = vmatprep.subr.mxu0 0.0
    %442 = vmatpush2.msra.mxu0 0.0
    %443 = vmatprep.subr.mxu0 0.0
    %444 = vmatpush2.msra.mxu0 0.0
    %445 = vmatprep.subr.mxu0 0.0
    %446 = vmatpush2.msra.mxu0 0.0
    %447 = vmatprep.subr.mxu0 0.0
    %448 = vmatpush2.msra.mxu0 0.0
    %449 = vmatprep.subr.mxu0 0.0
    %450 = vmatpush2.msra.mxu0 0.0
    %451 = vmatprep.subr.mxu0 0.0
    %452 = vmatpush2.msra.mxu0 0.0
    %453 = vmatprep.subr.mxu0 0.0
    %454 = vmatpush2.msra.mxu0 0.0
    %455 = vmatprep.subr.mxu0 0.0
    %456 = vmatpush2.msra.mxu0 0.0
    %457 = vmatprep.subr.mxu0 0.0
    %458 = vmatpush2.msra.mxu0 0.0
    %459 = vmatprep.mubr.f32.mxu0 0.0
    %460 = vmatmul.mubr.f32.gmra.mxu0 %v393
    %v461 = vpop.f32.mrf.mxu0
    %v462 = vadd.f32 0.0, %v461
    %v463 = vpop.f32.mrf.mxu0
    %464 = vmatprep.mubr.f32.mxu0 0.0
    %465 = vmatmul.mubr.f32.gmra.mxu0 %v394
    %v466 = vpop.f32.mrf.mxu0
    %v467 = vadd.f32 0.0, %v466
    %v468 = vpop.f32.mrf.mxu0
    %469 = vdwg.mxu0
    %470 = vadd.xlane.f32.xlu0 %v228
    %v471 = vpop.xlane.xlu0 %470
    %472 = vadd.xlane.f32.xlu0 %v233
    %v473 = vpop.xlane.xlu0 %472
    %v474 = vadd.f32 %v471, 0.0
    %v475 = vadd.f32 %v473, 0.0
    %476 = vadd.xlane.f32.xlu0 %v306
    %v477 = vpop.xlane.xlu0 %476
    %478 = vadd.xlane.f32.xlu0 %v311
    %v479 = vpop.xlane.xlu0 %478
    %v480 = vadd.f32 %v474, %v477
    %v481 = vadd.f32 %v475, %v479
    %482 = vadd.xlane.f32.xlu0 %v384
    %v483 = vpop.xlane.xlu0 %482
    %484 = vadd.xlane.f32.xlu0 %v389
    %v485 = vpop.xlane.xlu0 %484
    %v486 = vadd.f32 %v480, %v483
    %v487 = vadd.f32 %v481, %v485
    %488 = vadd.xlane.f32.xlu0 %v462
    %v489 = vpop.xlane.xlu0 %488
    %490 = vadd.xlane.f32.xlu0 %v467
    %v491 = vpop.xlane.xlu0 %490
    %v492 = vadd.f32 %v486, %v489
    %v493 = vadd.f32 %v487, %v491
    %v494 = vmul.f32 %v228, %v228
    %v495 = vmul.f32 %v233, %v233
    %496 = vadd.xlane.f32.xlu0 %v494
    %v497 = vpop.xlane.xlu0 %496
    %498 = vadd.xlane.f32.xlu0 %v495
    %v499 = vpop.xlane.xlu0 %498
    %v500 = vadd.f32 %v497, 0.0
    %v501 = vadd.f32 %v499, 0.0
    %v502 = vmul.f32 %v306, %v306
    %v503 = vmul.f32 %v311, %v311
    %504 = vadd.xlane.f32.xlu0 %v502
    %v505 = vpop.xlane.xlu0 %504
    %506 = vadd.xlane.f32.xlu0 %v503
    %v507 = vpop.xlane.xlu0 %506
    %v508 = vadd.f32 %v500, %v505
    %v509 = vadd.f32 %v501, %v507
    %v510 = vmul.f32 %v384, %v384
    %v511 = vmul.f32 %v389, %v389
    %512 = vadd.xlane.f32.xlu0 %v510
    %v513 = vpop.xlane.xlu0 %512
    %514 = vadd.xlane.f32.xlu0 %v511
    %v515 = vpop.xlane.xlu0 %514
    %v516 = vadd.f32 %v508, %v513
    %v517 = vadd.f32 %v509, %v515
    %v518 = vmul.f32 %v462, %v462
    %v519 = vmul.f32 %v467, %v467
    %520 = vadd.xlane.f32.xlu0 %v518
    %v521 = vpop.xlane.xlu0 %520
    %522 = vadd.xlane.f32.xlu0 %v519
    %v523 = vpop.xlane.xlu0 %522
    %v524 = vadd.f32 %v516, %v521
    %v525 = vadd.f32 %v517, %v523
    %v526 = vrcp.pop 512.0
    %v527 = vmul.f32 %v492, %v526
    %v528 = vmul.f32 %v493, %v526
    %v529 = vmul.f32 %v524, %v526
    %v530 = vmul.f32 %v525, %v526
    %v531 = vmul.f32 %v527, %v527
    %v532 = vmul.f32 %v528, %v528
    %v533 = vsub.f32 %v529, %v531
    %v534 = vsub.f32 %v530, %v532
    %v535 = vld [vmem:[%s2] sm:$0xff]
    %v536 = vld [vmem:[%s2 + $0x8] sm:$0xff]
    %v537 = vadd.f32 %v533, 1e-05
    %v538 = vadd.f32 %v534, 1e-05
    %v539 = vrsqrt.pop %v537
    %v540 = vrsqrt.pop %v538
    %v541 = vmul.f32 %v535, %v539
    %v542 = vmul.f32 %v536, %v540
    %v543 = vld [vmem:[%s3] sm:$0xff]
    %v544 = vld [vmem:[%s3 + $0x8] sm:$0xff]
    %v545 = vmul.f32 %v527, %v541
    %v546 = vmul.f32 %v528, %v542
    %v547 = vsub.f32 %v543, %v545
    %v548 = vsub.f32 %v544, %v546
    %550 = vset.pattern.permute.xlu0 0
    %551 = vperm.xlu0 %550, %v541
    %v552 = vpop.permute.xlu0 %551
    %555 = vset.pattern.permute.xlu0 0
    %556 = vperm.xlu0 %555, %v542
    %v557 = vpop.permute.xlu0 %556
    %v559 = vmul.f32 %v228, %v552
    %v560 = vmul.f32 %v233, %v557
    %562 = vset.pattern.permute.xlu0 0
    %563 = vperm.xlu0 %562, %v547
    %v564 = vpop.permute.xlu0 %563
    %567 = vset.pattern.permute.xlu0 0
    %568 = vperm.xlu0 %567, %v548
    %v569 = vpop.permute.xlu0 %568
    %v571 = vadd.f32 %v559, %v564
    %v572 = vadd.f32 %v560, %v569
    %v573 = vmax.f32 %v571, 0.0
    %v574 = vmax.f32 %v572, 0.0
    %575 = vst [vmem:[%s4] sm:$0xff] %v573
    %576 = vst [vmem:[%s4 + $0x8] sm:$0xff] %v574
    %v577 = vmul.f32 %v306, %v552
    %v578 = vmul.f32 %v311, %v557
    %v579 = vadd.f32 %v577, %v564
    %v580 = vadd.f32 %v578, %v569
    %v581 = vmax.f32 %v579, 0.0
    %v582 = vmax.f32 %v580, 0.0
    %s583 = scalar_lea.vmem %s4, 16
    %584 = vst [vmem:[%s583] sm:$0xff] %v581
    %585 = vst [vmem:[%s583 + $0x8] sm:$0xff] %v582
    %v586 = vmul.f32 %v384, %v552
    %v587 = vmul.f32 %v389, %v557
    %v588 = vadd.f32 %v586, %v564
    %v589 = vadd.f32 %v587, %v569
    %v590 = vmax.f32 %v588, 0.0
    %v591 = vmax.f32 %v589, 0.0
    %s592 = scalar_lea.vmem %s4, 32
    %593 = vst [vmem:[%s592] sm:$0xff] %v590
    %594 = vst [vmem:[%s592 + $0x8] sm:$0xff] %v591
    %v595 = vmul.f32 %v462, %v552
    %v596 = vmul.f32 %v467, %v557
    %v597 = vadd.f32 %v595, %v564
    %v598 = vadd.f32 %v596, %v569
    %v599 = vmax.f32 %v597, 0.0
    %v600 = vmax.f32 %v598, 0.0
    %s601 = scalar_lea.vmem %s4, 48
    %602 = vst [vmem:[%s601] sm:$0xff] %v599
    %603 = vst [vmem:[%s601 + $0x8] sm:$0xff] %v600
    // Predicated region
    $region22: #{generator_forward.7} parent=1 // pred_check
      _
    $region23: #{generator_forward.7} parent=1 // pred_check_branch
      %605 = sbr.rel (0) target = $region25
    $region24: #{generator_forward.7} parent=1 // pred_region
      _
    $region25: #{generator_forward.7} parent=1 // pred_fallthru
      _
    // Predicated region
    $region26: #{generator_forward.7} parent=1 // pred_check
      _
    $region27: #{generator_forward.7} parent=1 // pred_check_branch
      %607 = sbr.rel (0) target = $region29
    $region28: #{generator_forward.7} parent=1 // pred_region
      _
    $region29: #{generator_forward.7} parent=1 // pred_fallthru
      _
    %608 = vsyncpa [#allocation3], 1

// kernel: generator_forward.8
$region0: #{generator_forward.8}
  #allocation0 [shape = 'u32[]', space=smem, size = 0x4, offset = 0x4, fixed_abs, tag = 'smem constant byte address 0x4 - core index']
  #allocation1 [shape = 'u32[144,128]{1,0:T(1,128)}', space=vmem, size = 0x12000, scoped, tag = 'internal scratch']
  %s0 = inlined_call_operand.vmem [shape: f32[16,512], index: 0, kind: input, shape index: {}]
  %s1 = inlined_call_operand.hbm [shape: f32[4,8,64], index: 1, kind: input, shape index: {}]
  %s2 = inlined_call_operand.vmem [shape: f32[8,1], index: 2, kind: input, shape index: {}]
  %s3 = inlined_call_operand.vmem [shape: f32[8,1], index: 3, kind: input, shape index: {}]
  %s4 = inlined_call_operand.vmem [shape: f32[4,8,512], index: 4, kind: output, shape index: {}]
  %s5 = sld [smem:[#allocation0]]
  $region30: #{generator_forward.8} parent=0
    _
  %s7 = ssub.s32 1, %s5
  %s8 = scalar_select 0, %s7, %s5
  $region1: #{generator_forward.8} parent=0
    #allocation2 [shape = 'u8[16384]{0}', space=vmem, size = 0x4000, scoped, tag = 'input window, operand 1, single buffered']
    #allocation3 [shape = 's32[1]{0}', space=sflag, size = 0x4, scoped, tag = 'scoped memory for generator_forward.8']
    %9 = vsyncpa [#allocation3], 0
    // Predicated region
    $region2: #{generator_forward.8} parent=1 // pred_check
      _
    $region3: #{generator_forward.8} parent=1 // pred_check_branch
      %11 = sbr.rel (0) target = $region5
    $region4: #{generator_forward.8} parent=1 // pred_region
      _
    $region5: #{generator_forward.8} parent=1 // pred_fallthru
      _
    // Predicated region
    $region6: #{generator_forward.8} parent=1 // pred_check
      _
    $region7: #{generator_forward.8} parent=1 // pred_check_branch
      %13 = sbr.rel (0) target = $region9
    $region8: #{generator_forward.8} parent=1 // pred_region
      %s15 = ssub.s32 512, 512
      %16 = vsyncadd [#allocation3], %s15
      %s17 = sshll.u32 [#allocation2], 4
      %s18 = int_to_ptr.vmem [resolvable:$true] %s17
      %23 = dma.hbm_to_vmem [thread:$0]  %s1, 512, %s18, [#allocation3], 128, 128, 8
    $region9: #{generator_forward.8} parent=1 // pred_fallthru
      _
    // Predicated region
    $region10: #{generator_forward.8} parent=1 // pred_check
      _
    $region11: #{generator_forward.8} parent=1 // pred_check_branch
      %25 = sbr.rel (0) target = $region13
    $region12: #{generator_forward.8} parent=1 // pred_region
      _
    $region13: #{generator_forward.8} parent=1 // pred_fallthru
      _
    // Predicated region
    $region14: #{generator_forward.8} parent=1 // pred_check
      _
    $region15: #{generator_forward.8} parent=1 // pred_check_branch
      %27 = sbr.rel (0) target = $region17
    $region16: #{generator_forward.8} parent=1 // pred_region
      _
    $region17: #{generator_forward.8} parent=1 // pred_fallthru
      _
    // Predicated region
    $region18: #{generator_forward.8} parent=1 // pred_check
      _
    $region19: #{generator_forward.8} parent=1 // pred_check_branch
      %29 = sbr.rel (0) target = $region21
    $region20: #{generator_forward.8} parent=1 // pred_region
      %30 = dma.done [#allocation3], 512
    $region21: #{generator_forward.8} parent=1 // pred_fallthru
      _
    %v31 = vld [vmem:[%s0] sm:$0xff]
    %v32 = vld [vmem:[%s0 + $0x8] sm:$0xff]
    %v33 = vld [vmem:[%s0 + $0x10] sm:$0xff]
    %v34 = vld [vmem:[%s0 + $0x18] sm:$0xff]
    %v35 = vld [vmem:[%s0 + $0x20] sm:$0xff]
    %v36 = vld [vmem:[%s0 + $0x28] sm:$0xff]
    %v37 = vld [vmem:[%s0 + $0x30] sm:$0xff]
    %v38 = vld [vmem:[%s0 + $0x38] sm:$0xff]
    %v39 = vlaneseq
    %v40 = vand.u32 %v39, 127
    %v41 = vadd.s32 %v40, 128
    %v42 = vadd.s32 %v40, 256
    %v43 = vadd.s32 %v40, 384
    %v44 = vand.u32 %v40, 15
    %v45 = vand.u32 %v41, 15
    %v46 = vand.u32 %v42, 15
    %v47 = vand.u32 %v43, 15
    %v48 = vand.u32 %v40, 255
    %v49 = vand.u32 %v41, 255
    %v50 = vand.u32 %v42, 255
    %v51 = vand.u32 %v43, 255
    %vm52 = vcmp.ge.s32.totalorder %v48, 16
    %vm53 = vcmp.ge.s32.totalorder %v49, 16
    %vm54 = vcmp.ge.s32.totalorder %v50, 16
    %vm55 = vcmp.ge.s32.totalorder %v51, 16
    %vm56 = vcmp.lt.s32.totalorder %v48, 240
    %vm57 = vcmp.lt.s32.totalorder %v49, 240
    %vm58 = vcmp.lt.s32.totalorder %v50, 240
    %vm59 = vcmp.lt.s32.totalorder %v51, 240
    %vm60 = vcmp.ge.s32.totalorder %v44, 1
    %vm61 = vcmp.ge.s32.totalorder %v45, 1
    %vm62 = vcmp.ge.s32.totalorder %v46, 1
    %vm63 = vcmp.ge.s32.totalorder %v47, 1
    %vm64 = vcmp.lt.s32.totalorder %v44, 15
    %vm65 = vcmp.lt.s32.totalorder %v45, 15
    %vm66 = vcmp.lt.s32.totalorder %v46, 15
    %vm67 = vcmp.lt.s32.totalorder %v47, 15
    %68 = vrot.lane.b32.xlu0 %v31, 17
    %v69 = vpop.permute.xlu0 %68
    %70 = vrot.lane.b32.xlu0 %v35, 17
    %v71 = vpop.permute.xlu0 %70
    %72 = vrot.lane.b32.xlu0 %v32, 17
    %v73 = vpop.permute.xlu0 %72
    %74 = vrot.lane.b32.xlu0 %v36, 17
    %v75 = vpop.permute.xlu0 %74
    %76 = vrot.lane.b32.xlu0 %v33, 17
    %v77 = vpop.permute.xlu0 %76
    %78 = vrot.lane.b32.xlu0 %v37, 17
    %v79 = vpop.permute.xlu0 %78
    %80 = vrot.lane.b32.xlu0 %v34, 17
    %v81 = vpop.permute.xlu0 %80
    %82 = vrot.lane.b32.xlu0 %v38, 17
    %v83 = vpop.permute.xlu0 %82
    %vm84 = vcmp.lt.s32.totalorder %v40, 17
    %v85 = vsel %vm84, %v77, %v81
    %v86 = vsel %vm84, %v79, %v83
    %v87 = vsel %vm84, %v73, %v77
    %v88 = vsel %vm84, %v75, %v79
    %v89 = vsel %vm84, %v69, %v73
    %v90 = vsel %vm84, %v71, %v75
    %v91 = vsel %vm84, %v81, %v69
    %v92 = vsel %vm84, %v83, %v71
    %vm93 = vmand %vm52, %vm60
    %vm94 = vmand %vm53, %vm61
    %vm95 = vmand %vm54, %vm62
    %vm96 = vmand %vm55, %vm63
    %v97 = vsel %vm93, 1, 0
    %v98 = vsel %vm94, 1, 0
    %v99 = vsel %vm95, 1, 0
    %v100 = vsel %vm96, 1, 0
    %vm101 = vcmp.eq.s32.totalorder %v97, 1
    %vm102 = vcmp.eq.s32.totalorder %v98, 1
    %vm103 = vcmp.eq.s32.totalorder %v99, 1
    %vm104 = vcmp.eq.s32.totalorder %v100, 1
    %v105 = vsel %vm101, %v91, 0.0
    %v106 = vsel %vm102, %v89, 0.0
    %v107 = vsel %vm103, %v87, 0.0
    %v108 = vsel %vm104, %v85, 0.0
    %v109 = vsel %vm101, %v92, 0.0
    %v110 = vsel %vm102, %v90, 0.0
    %v111 = vsel %vm103, %v88, 0.0
    %v112 = vsel %vm104, %v86, 0.0
    %113 = vrot.lane.b32.xlu0 %v31, 16
    %v114 = vpop.permute.xlu0 %113
    %115 = vrot.lane.b32.xlu0 %v35, 16
    %v116 = vpop.permute.xlu0 %115
    %117 = vrot.lane.b32.xlu0 %v32, 16
    %v118 = vpop.permute.xlu0 %117
    %119 = vrot.lane.b32.xlu0 %v36, 16
    %v120 = vpop.permute.xlu0 %119
    %121 = vrot.lane.b32.xlu0 %v33, 16
    %v122 = vpop.permute.xlu0 %121
    %123 = vrot.lane.b32.xlu0 %v37, 16
    %v124 = vpop.permute.xlu0 %123
    %125 = vrot.lane.b32.xlu0 %v34, 16
    %v126 = vpop.permute.xlu0 %125
    %127 = vrot.lane.b32.xlu0 %v38, 16
    %v128 = vpop.permute.xlu0 %127
    %vm129 = vcmp.lt.s32.totalorder %v40, 16
    %v130 = vsel %vm129, %v122, %v126
    %v131 = vsel %vm129, %v124, %v128
    %v132 = vsel %vm129, %v118, %v122
    %v133 = vsel %vm129, %v120, %v124
    %v134 = vsel %vm129, %v114, %v118
    %v135 = vsel %vm129, %v116, %v120
    %v136 = vsel %vm129, %v126, %v114
    %v137 = vsel %vm129, %v128, %v116
    %v138 = vsel %vm52, 1, 0
    %v139 = vsel %vm53, 1, 0
    %v140 = vsel %vm54, 1, 0
    %v141 = vsel %vm55, 1, 0
    %vm142 = vcmp.eq.s32.totalorder %v138, 1
    %vm143 = vcmp.eq.s32.totalorder %v139, 1
    %vm144 = vcmp.eq.s32.totalorder %v140, 1
    %vm145 = vcmp.eq.s32.totalorder %v141, 1
    %v146 = vsel %vm142, %v136, 0.0
    %v147 = vsel %vm143, %v134, 0.0
    %v148 = vsel %vm144, %v132, 0.0
    %v149 = vsel %vm145, %v130, 0.0
    %v150 = vsel %vm142, %v137, 0.0
    %v151 = vsel %vm143, %v135, 0.0
    %v152 = vsel %vm144, %v133, 0.0
    %v153 = vsel %vm145, %v131, 0.0
    %154 = vrot.lane.b32.xlu0 %v31, 15
    %v155 = vpop.permute.xlu0 %154
    %156 = vrot.lane.b32.xlu0 %v35, 15
    %v157 = vpop.permute.xlu0 %156
    %158 = vrot.lane.b32.xlu0 %v32, 15
    %v159 = vpop.permute.xlu0 %158
    %160 = vrot.lane.b32.xlu0 %v36, 15
    %v161 = vpop.permute.xlu0 %160
    %162 = vrot.lane.b32.xlu0 %v33, 15
    %v163 = vpop.permute.xlu0 %162
    %164 = vrot.lane.b32.xlu0 %v37, 15
    %v165 = vpop.permute.xlu0 %164
    %166 = vrot.lane.b32.xlu0 %v34, 15
    %v167 = vpop.permute.xlu0 %166
    %168 = vrot.lane.b32.xlu0 %v38, 15
    %v169 = vpop.permute.xlu0 %168
    %vm170 = vcmp.lt.s32.totalorder %v40, 15
    %v171 = vsel %vm170, %v163, %v167
    %v172 = vsel %vm170, %v165, %v169
    %v173 = vsel %vm170, %v159, %v163
    %v174 = vsel %vm170, %v161, %v165
    %v175 = vsel %vm170, %v155, %v159
    %v176 = vsel %vm170, %v157, %v161
    %v177 = vsel %vm170, %v167, %v155
    %v178 = vsel %vm170, %v169, %v157
    %vm179 = vmand %vm52, %vm64
    %vm180 = vmand %vm53, %vm65
    %vm181 = vmand %vm54, %vm66
    %vm182 = vmand %vm55, %vm67
    %v183 = vsel %vm179, 1, 0
    %v184 = vsel %vm180, 1, 0
    %v185 = vsel %vm181, 1, 0
    %v186 = vsel %vm182, 1, 0
    %vm187 = vcmp.eq.s32.totalorder %v183, 1
    %vm188 = vcmp.eq.s32.totalorder %v184, 1
    %vm189 = vcmp.eq.s32.totalorder %v185, 1
    %vm190 = vcmp.eq.s32.totalorder %v186, 1
    %v191 = vsel %vm187, %v177, 0.0
    %v192 = vsel %vm188, %v175, 0.0
    %v193 = vsel %vm189, %v173, 0.0
    %v194 = vsel %vm190, %v171, 0.0
    %v195 = vsel %vm187, %v178, 0.0
    %v196 = vsel %vm188, %v176, 0.0
    %v197 = vsel %vm189, %v174, 0.0
    %v198 = vsel %vm190, %v172, 0.0
    %199 = vrot.lane.b32.xlu0 %v31, 1
    %v200 = vpop.permute.xlu0 %199
    %201 = vrot.lane.b32.xlu0 %v35, 1
    %v202 = vpop.permute.xlu0 %201
    %203 = vrot.lane.b32.xlu0 %v32, 1
    %v204 = vpop.permute.xlu0 %203
    %205 = vrot.lane.b32.xlu0 %v36, 1
    %v206 = vpop.permute.xlu0 %205
    %207 = vrot.lane.b32.xlu0 %v33, 1
    %v208 = vpop.permute.xlu0 %207
    %209 = vrot.lane.b32.xlu0 %v37, 1
    %v210 = vpop.permute.xlu0 %209
    %211 = vrot.lane.b32.xlu0 %v34, 1
    %v212 = vpop.permute.xlu0 %211
    %213 = vrot.lane.b32.xlu0 %v38, 1
    %v214 = vpop.permute.xlu0 %213
    %vm215 = vcmp.lt.s32.totalorder %v40, 1
    %v216 = vsel %vm215, %v208, %v212
    %v217 = vsel %vm215, %v210, %v214
    %v218 = vsel %vm215, %v204, %v208
    %v219 = vsel %vm215, %v206, %v210
    %v220 = vsel %vm215, %v200, %v204
    %v221 = vsel %vm215, %v202, %v206
    %v222 = vsel %vm215, %v212, %v200
    %v223 = vsel %vm215, %v214, %v202
    %v224 = vsel %vm60, 1, 0
    %v225 = vsel %vm61, 1, 0
    %v226 = vsel %vm62, 1, 0
    %v227 = vsel %vm63, 1, 0
    %vm228 = vcmp.eq.s32.totalorder %v224, 1
    %vm229 = vcmp.eq.s32.totalorder %v225, 1
    %vm230 = vcmp.eq.s32.totalorder %v226, 1
    %vm231 = vcmp.eq.s32.totalorder %v227, 1
    %v232 = vsel %vm228, %v222, 0.0
    %v233 = vsel %vm229, %v220, 0.0
    %v234 = vsel %vm230, %v218, 0.0
    %v235 = vsel %vm231, %v216, 0.0
    %v236 = vsel %vm228, %v223, 0.0
    %v237 = vsel %vm229, %v221, 0.0
    %v238 = vsel %vm230, %v219, 0.0
    %v239 = vsel %vm231, %v217, 0.0
    %240 = vrot.lane.b32.xlu0 %v31, 127
    %v241 = vpop.permute.xlu0 %240
    %242 = vrot.lane.b32.xlu0 %v35, 127
    %v243 = vpop.permute.xlu0 %242
    %244 = vrot.lane.b32.xlu0 %v32, 127
    %v245 = vpop.permute.xlu0 %244
    %246 = vrot.lane.b32.xlu0 %v36, 127
    %v247 = vpop.permute.xlu0 %246
    %248 = vrot.lane.b32.xlu0 %v33, 127
    %v249 = vpop.permute.xlu0 %248
    %250 = vrot.lane.b32.xlu0 %v37, 127
    %v251 = vpop.permute.xlu0 %250
    %252 = vrot.lane.b32.xlu0 %v34, 127
    %v253 = vpop.permute.xlu0 %252
    %254 = vrot.lane.b32.xlu0 %v38, 127
    %v255 = vpop.permute.xlu0 %254
    %vm256 = vcmp.lt.s32.totalorder %v40, 127
    %v257 = vsel %vm256, %v249, %v253
    %v258 = vsel %vm256, %v251, %v255
    %v259 = vsel %vm256, %v245, %v249
    %v260 = vsel %vm256, %v247, %v251
    %v261 = vsel %vm256, %v241, %v245
    %v262 = vsel %vm256, %v243, %v247
    %v263 = vsel %vm256, %v253, %v241
    %v264 = vsel %vm256, %v255, %v243
    %v265 = vsel %vm64, 1, 0
    %v266 = vsel %vm65, 1, 0
    %v267 = vsel %vm66, 1, 0
    %v268 = vsel %vm67, 1, 0
    %vm269 = vcmp.eq.s32.totalorder %v265, 1
    %vm270 = vcmp.eq.s32.totalorder %v266, 1
    %vm271 = vcmp.eq.s32.totalorder %v267, 1
    %vm272 = vcmp.eq.s32.totalorder %v268, 1
    %v273 = vsel %vm269, %v261, 0.0
    %v274 = vsel %vm270, %v259, 0.0
    %v275 = vsel %vm271, %v257, 0.0
    %v276 = vsel %vm272, %v263, 0.0
    %v277 = vsel %vm269, %v262, 0.0
    %v278 = vsel %vm270, %v260, 0.0
    %v279 = vsel %vm271, %v258, 0.0
    %v280 = vsel %vm272, %v264, 0.0
    %281 = vrot.lane.b32.xlu0 %v31, 113
    %v282 = vpop.permute.xlu0 %281
    %283 = vrot.lane.b32.xlu0 %v35, 113
    %v284 = vpop.permute.xlu0 %283
    %285 = vrot.lane.b32.xlu0 %v32, 113
    %v286 = vpop.permute.xlu0 %285
    %287 = vrot.lane.b32.xlu0 %v36, 113
    %v288 = vpop.permute.xlu0 %287
    %289 = vrot.lane.b32.xlu0 %v33, 113
    %v290 = vpop.permute.xlu0 %289
    %291 = vrot.lane.b32.xlu0 %v37, 113
    %v292 = vpop.permute.xlu0 %291
    %293 = vrot.lane.b32.xlu0 %v34, 113
    %v294 = vpop.permute.xlu0 %293
    %295 = vrot.lane.b32.xlu0 %v38, 113
    %v296 = vpop.permute.xlu0 %295
    %vm297 = vcmp.lt.s32.totalorder %v40, 113
    %v298 = vsel %vm297, %v290, %v294
    %v299 = vsel %vm297, %v292, %v296
    %v300 = vsel %vm297, %v286, %v290
    %v301 = vsel %vm297, %v288, %v292
    %v302 = vsel %vm297, %v282, %v286
    %v303 = vsel %vm297, %v284, %v288
    %v304 = vsel %vm297, %v294, %v282
    %v305 = vsel %vm297, %v296, %v284
    %vm306 = vmand %vm56, %vm60
    %vm307 = vmand %vm57, %vm61
    %vm308 = vmand %vm58, %vm62
    %vm309 = vmand %vm59, %vm63
    %v310 = vsel %vm306, 1, 0
    %v311 = vsel %vm307, 1, 0
    %v312 = vsel %vm308, 1, 0
    %v313 = vsel %vm309, 1, 0
    %vm314 = vcmp.eq.s32.totalorder %v310, 1
    %vm315 = vcmp.eq.s32.totalorder %v311, 1
    %vm316 = vcmp.eq.s32.totalorder %v312, 1
    %vm317 = vcmp.eq.s32.totalorder %v313, 1
    %v318 = vsel %vm314, %v302, 0.0
    %v319 = vsel %vm315, %v300, 0.0
    %v320 = vsel %vm316, %v298, 0.0
    %v321 = vsel %vm317, %v304, 0.0
    %v322 = vsel %vm314, %v303, 0.0
    %v323 = vsel %vm315, %v301, 0.0
    %v324 = vsel %vm316, %v299, 0.0
    %v325 = vsel %vm317, %v305, 0.0
    %326 = vrot.lane.b32.xlu0 %v31, 112
    %v327 = vpop.permute.xlu0 %326
    %328 = vrot.lane.b32.xlu0 %v35, 112
    %v329 = vpop.permute.xlu0 %328
    %330 = vrot.lane.b32.xlu0 %v32, 112
    %v331 = vpop.permute.xlu0 %330
    %332 = vrot.lane.b32.xlu0 %v36, 112
    %v333 = vpop.permute.xlu0 %332
    %334 = vrot.lane.b32.xlu0 %v33, 112
    %v335 = vpop.permute.xlu0 %334
    %336 = vrot.lane.b32.xlu0 %v37, 112
    %v337 = vpop.permute.xlu0 %336
    %338 = vrot.lane.b32.xlu0 %v34, 112
    %v339 = vpop.permute.xlu0 %338
    %340 = vrot.lane.b32.xlu0 %v38, 112
    %v341 = vpop.permute.xlu0 %340
    %vm342 = vcmp.lt.s32.totalorder %v40, 112
    %v343 = vsel %vm342, %v335, %v339
    %v344 = vsel %vm342, %v337, %v341
    %v345 = vsel %vm342, %v331, %v335
    %v346 = vsel %vm342, %v333, %v337
    %v347 = vsel %vm342, %v327, %v331
    %v348 = vsel %vm342, %v329, %v333
    %v349 = vsel %vm342, %v339, %v327
    %v350 = vsel %vm342, %v341, %v329
    %v351 = vsel %vm56, 1, 0
    %v352 = vsel %vm57, 1, 0
    %v353 = vsel %vm58, 1, 0
    %v354 = vsel %vm59, 1, 0
    %vm355 = vcmp.eq.s32.totalorder %v351, 1
    %vm356 = vcmp.eq.s32.totalorder %v352, 1
    %vm357 = vcmp.eq.s32.totalorder %v353, 1
    %vm358 = vcmp.eq.s32.totalorder %v354, 1
    %v359 = vsel %vm355, %v347, 0.0
    %v360 = vsel %vm356, %v345, 0.0
    %v361 = vsel %vm357, %v343, 0.0
    %v362 = vsel %vm358, %v349, 0.0
    %v363 = vsel %vm355, %v348, 0.0
    %v364 = vsel %vm356, %v346, 0.0
    %v365 = vsel %vm357, %v344, 0.0
    %v366 = vsel %vm358, %v350, 0.0
    %367 = vrot.lane.b32.xlu0 %v31, 111
    %v368 = vpop.permute.xlu0 %367
    %369 = vrot.lane.b32.xlu0 %v35, 111
    %v370 = vpop.permute.xlu0 %369
    %371 = vrot.lane.b32.xlu0 %v32, 111
    %v372 = vpop.permute.xlu0 %371
    %373 = vrot.lane.b32.xlu0 %v36, 111
    %v374 = vpop.permute.xlu0 %373
    %375 = vrot.lane.b32.xlu0 %v33, 111
    %v376 = vpop.permute.xlu0 %375
    %377 = vrot.lane.b32.xlu0 %v37, 111
    %v378 = vpop.permute.xlu0 %377
    %379 = vrot.lane.b32.xlu0 %v34, 111
    %v380 = vpop.permute.xlu0 %379
    %381 = vrot.lane.b32.xlu0 %v38, 111
    %v382 = vpop.permute.xlu0 %381
    %vm383 = vcmp.lt.s32.totalorder %v40, 111
    %v384 = vsel %vm383, %v376, %v380
    %v385 = vsel %vm383, %v378, %v382
    %v386 = vsel %vm383, %v372, %v376
    %v387 = vsel %vm383, %v374, %v378
    %v388 = vsel %vm383, %v368, %v372
    %v389 = vsel %vm383, %v370, %v374
    %v390 = vsel %vm383, %v380, %v368
    %v391 = vsel %vm383, %v382, %v370
    %vm392 = vmand %vm56, %vm64
    %vm393 = vmand %vm57, %vm65
    %vm394 = vmand %vm58, %vm66
    %vm395 = vmand %vm59, %vm67
    %v396 = vsel %vm392, 1, 0
    %v397 = vsel %vm393, 1, 0
    %v398 = vsel %vm394, 1, 0
    %v399 = vsel %vm395, 1, 0
    %vm400 = vcmp.eq.s32.totalorder %v396, 1
    %vm401 = vcmp.eq.s32.totalorder %v397, 1
    %vm402 = vcmp.eq.s32.totalorder %v398, 1
    %vm403 = vcmp.eq.s32.totalorder %v399, 1
    %v404 = vsel %vm400, %v388, 0.0
    %v405 = vsel %vm401, %v386, 0.0
    %v406 = vsel %vm402, %v384, 0.0
    %v407 = vsel %vm403, %v390, 0.0
    %v408 = vsel %vm400, %v389, 0.0
    %v409 = vsel %vm401, %v387, 0.0
    %v410 = vsel %vm402, %v385, 0.0
    %v411 = vsel %vm403, %v391, 0.0
    %v412 = vld [vmem:[#allocation2] sm:$0xff]
    %vm413 = vcmask 523264
    %v415 = vsel %vm413, %v412, 0
    %417 = vmatprep.subr.mxu0 0.0
    %418 = vmatpush1.msra.mxu0 0.0
    %419 = vmatprep.subr.mxu0 0.0
    %420 = vmatpush1.msra.mxu0 0.0
    %421 = vmatprep.subr.mxu0 0.0
    %422 = vmatpush1.msra.mxu0 0.0
    %423 = vmatprep.subr.mxu0 0.0
    %424 = vmatpush1.msra.mxu0 0.0
    %425 = vmatprep.subr.mxu0 0.0
    %426 = vmatpush1.msra.mxu0 0.0
    %427 = vmatprep.subr.mxu0 0.0
    %428 = vmatpush1.msra.mxu0 0.0
    %429 = vmatprep.subr.mxu0 0.0
    %430 = vmatpush1.msra.mxu0 0.0
    %431 = vmatprep.subr.mxu0 0.0
    %432 = vmatpush1.msra.mxu0 0.0
    %433 = vmatprep.subr.mxu0 %v110
    %434 = vmatpush1.msra.mxu0 %v109
    %435 = vmatprep.subr.mxu0 %v106
    %436 = vmatpush1.msra.mxu0 %v105
    %437 = vmatprep.subr.mxu0 %v151
    %438 = vmatpush1.msra.mxu0 %v150
    %439 = vmatprep.subr.mxu0 %v147
    %440 = vmatpush1.msra.mxu0 %v146
    %441 = vmatprep.subr.mxu0 %v237
    %442 = vmatpush1.msra.mxu0 %v236
    %443 = vmatprep.subr.mxu0 %v233
    %444 = vmatpush1.msra.mxu0 %v232
    %445 = vmatprep.subr.mxu0 %v36
    %446 = vmatpush1.msra.mxu0 %v35
    %447 = vmatprep.subr.mxu0 %v32
    %448 = vmatpush1.msra.mxu0 %v31
    %449 = vmatprep.subr.mxu0 0.0
    %450 = vmatpush2.msra.mxu0 0.0
    %451 = vmatprep.subr.mxu0 0.0
    %452 = vmatpush2.msra.mxu0 0.0
    %453 = vmatprep.subr.mxu0 0.0
    %454 = vmatpush2.msra.mxu0 0.0
    %455 = vmatprep.subr.mxu0 0.0
    %456 = vmatpush2.msra.mxu0 0.0
    %457 = vmatprep.subr.mxu0 0.0
    %458 = vmatpush2.msra.mxu0 0.0
    %459 = vmatprep.subr.mxu0 0.0
    %460 = vmatpush2.msra.mxu0 0.0
    %461 = vmatprep.subr.mxu0 0.0
    %462 = vmatpush2.msra.mxu0 0.0
    %463 = vmatprep.subr.mxu0 0.0
    %464 = vmatpush2.msra.mxu0 0.0
    %465 = vmatprep.subr.mxu0 0.0
    %466 = vmatpush2.msra.mxu0 0.0
    %467 = vmatprep.subr.mxu0 0.0
    %468 = vmatpush2.msra.mxu0 0.0
    %469 = vmatprep.subr.mxu0 0.0
    %470 = vmatpush2.msra.mxu0 0.0
    %471 = vmatprep.subr.mxu0 0.0
    %472 = vmatpush2.msra.mxu0 0.0
    %473 = vmatprep.subr.mxu0 0.0
    %474 = vmatpush2.msra.mxu0 0.0
    %475 = vmatprep.subr.mxu0 0.0
    %476 = vmatpush2.msra.mxu0 0.0
    %477 = vmatprep.subr.mxu0 0.0
    %478 = vmatpush2.msra.mxu0 0.0
    %479 = vmatprep.subr.mxu0 0.0
    %480 = vmatpush2.msra.mxu0 0.0
    %481 = vmatprep.mubr.f32.mxu0 0.0
    %482 = vmatmul.mubr.f32.gmra.mxu0 %v415
    %v483 = vpop.f32.mrf.mxu0
    %v484 = vadd.f32 0.0, %v483
    %v485 = vpop.f32.mrf.mxu0
    %v486 = vadd.f32 0.0, %v485
    %487 = vdwg.mxu0
    %488 = vmatprep.subr.mxu0 0.0
    %489 = vmatpush1.msra.mxu0 0.0
    %490 = vmatprep.subr.mxu0 0.0
    %491 = vmatpush1.msra.mxu0 0.0
    %492 = vmatprep.subr.mxu0 0.0
    %493 = vmatpush1.msra.mxu0 0.0
    %494 = vmatprep.subr.mxu0 0.0
    %495 = vmatpush1.msra.mxu0 0.0
    %496 = vmatprep.subr.mxu0 0.0
    %497 = vmatpush1.msra.mxu0 0.0
    %498 = vmatprep.subr.mxu0 0.0
    %499 = vmatpush1.msra.mxu0 0.0
    %500 = vmatprep.subr.mxu0 0.0
    %501 = vmatpush1.msra.mxu0 0.0
    %502 = vmatprep.subr.mxu0 0.0
    %503 = vmatpush1.msra.mxu0 0.0
    %504 = vmatprep.subr.mxu0 %v112
    %505 = vmatpush1.msra.mxu0 %v111
    %506 = vmatprep.subr.mxu0 %v108
    %507 = vmatpush1.msra.mxu0 %v107
    %508 = vmatprep.subr.mxu0 %v153
    %509 = vmatpush1.msra.mxu0 %v152
    %510 = vmatprep.subr.mxu0 %v149
    %511 = vmatpush1.msra.mxu0 %v148
    %512 = vmatprep.subr.mxu0 %v239
    %513 = vmatpush1.msra.mxu0 %v238
    %514 = vmatprep.subr.mxu0 %v235
    %515 = vmatpush1.msra.mxu0 %v234
    %516 = vmatprep.subr.mxu0 %v38
    %517 = vmatpush1.msra.mxu0 %v37
    %518 = vmatprep.subr.mxu0 %v34
    %519 = vmatpush1.msra.mxu0 %v33
    %520 = vmatprep.subr.mxu0 0.0
    %521 = vmatpush2.msra.mxu0 0.0
    %522 = vmatprep.subr.mxu0 0.0
    %523 = vmatpush2.msra.mxu0 0.0
    %524 = vmatprep.subr.mxu0 0.0
    %525 = vmatpush2.msra.mxu0 0.0
    %526 = vmatprep.subr.mxu0 0.0
    %527 = vmatpush2.msra.mxu0 0.0
    %528 = vmatprep.subr.mxu0 0.0
    %529 = vmatpush2.msra.mxu0 0.0
    %530 = vmatprep.subr.mxu0 0.0
    %531 = vmatpush2.msra.mxu0 0.0
    %532 = vmatprep.subr.mxu0 0.0
    %533 = vmatpush2.msra.mxu0 0.0
    %534 = vmatprep.subr.mxu0 0.0
    %535 = vmatpush2.msra.mxu0 0.0
    %536 = vmatprep.subr.mxu0 0.0
    %537 = vmatpush2.msra.mxu0 0.0
    %538 = vmatprep.subr.mxu0 0.0
    %539 = vmatpush2.msra.mxu0 0.0
    %540 = vmatprep.subr.mxu0 0.0
    %541 = vmatpush2.msra.mxu0 0.0
    %542 = vmatprep.subr.mxu0 0.0
    %543 = vmatpush2.msra.mxu0 0.0
    %544 = vmatprep.subr.mxu0 0.0
    %545 = vmatpush2.msra.mxu0 0.0
    %546 = vmatprep.subr.mxu0 0.0
    %547 = vmatpush2.msra.mxu0 0.0
    %548 = vmatprep.subr.mxu0 0.0
    %549 = vmatpush2.msra.mxu0 0.0
    %550 = vmatprep.subr.mxu0 0.0
    %551 = vmatpush2.msra.mxu0 0.0
    %552 = vmatprep.mubr.f32.mxu0 0.0
    %553 = vmatmul.mubr.f32.gmra.mxu0 %v415
    %v554 = vpop.f32.mrf.mxu0
    %v555 = vadd.f32 0.0, %v554
    %v556 = vpop.f32.mrf.mxu0
    %v557 = vadd.f32 0.0, %v556
    %558 = vdwg.mxu0
    %s559 = scalar_lea.vmem [#allocation2], 8
    %v560 = vld [vmem:[%s559] sm:$0xff]
    %v562 = vsel %vm413, %v560, 0
    %564 = vmatprep.subr.mxu0 0.0
    %565 = vmatpush1.msra.mxu0 0.0
    %566 = vmatprep.subr.mxu0 0.0
    %567 = vmatpush1.msra.mxu0 0.0
    %568 = vmatprep.subr.mxu0 0.0
    %569 = vmatpush1.msra.mxu0 0.0
    %570 = vmatprep.subr.mxu0 0.0
    %571 = vmatpush1.msra.mxu0 0.0
    %572 = vmatprep.subr.mxu0 0.0
    %573 = vmatpush1.msra.mxu0 0.0
    %574 = vmatprep.subr.mxu0 0.0
    %575 = vmatpush1.msra.mxu0 0.0
    %576 = vmatprep.subr.mxu0 0.0
    %577 = vmatpush1.msra.mxu0 0.0
    %578 = vmatprep.subr.mxu0 0.0
    %579 = vmatpush1.msra.mxu0 0.0
    %580 = vmatprep.subr.mxu0 %v196
    %581 = vmatpush1.msra.mxu0 %v195
    %582 = vmatprep.subr.mxu0 %v192
    %583 = vmatpush1.msra.mxu0 %v191
    %584 = vmatprep.subr.mxu0 %v151
    %585 = vmatpush1.msra.mxu0 %v150
    %586 = vmatprep.subr.mxu0 %v147
    %587 = vmatpush1.msra.mxu0 %v146
    %588 = vmatprep.subr.mxu0 %v278
    %589 = vmatpush1.msra.mxu0 %v277
    %590 = vmatprep.subr.mxu0 %v274
    %591 = vmatpush1.msra.mxu0 %v273
    %592 = vmatprep.subr.mxu0 %v36
    %593 = vmatpush1.msra.mxu0 %v35
    %594 = vmatprep.subr.mxu0 %v32
    %595 = vmatpush1.msra.mxu0 %v31
    %596 = vmatprep.subr.mxu0 0.0
    %597 = vmatpush2.msra.mxu0 0.0
    %598 = vmatprep.subr.mxu0 0.0
    %599 = vmatpush2.msra.mxu0 0.0
    %600 = vmatprep.subr.mxu0 0.0
    %601 = vmatpush2.msra.mxu0 0.0
    %602 = vmatprep.subr.mxu0 0.0
    %603 = vmatpush2.msra.mxu0 0.0
    %604 = vmatprep.subr.mxu0 0.0
    %605 = vmatpush2.msra.mxu0 0.0
    %606 = vmatprep.subr.mxu0 0.0
    %607 = vmatpush2.msra.mxu0 0.0
    %608 = vmatprep.subr.mxu0 0.0
    %609 = vmatpush2.msra.mxu0 0.0
    %610 = vmatprep.subr.mxu0 0.0
    %611 = vmatpush2.msra.mxu0 0.0
    %612 = vmatprep.subr.mxu0 0.0
    %613 = vmatpush2.msra.mxu0 0.0
    %614 = vmatprep.subr.mxu0 0.0
    %615 = vmatpush2.msra.mxu0 0.0
    %616 = vmatprep.subr.mxu0 0.0
    %617 = vmatpush2.msra.mxu0 0.0
    %618 = vmatprep.subr.mxu0 0.0
    %619 = vmatpush2.msra.mxu0 0.0
    %620 = vmatprep.subr.mxu0 0.0
    %621 = vmatpush2.msra.mxu0 0.0
    %622 = vmatprep.subr.mxu0 0.0
    %623 = vmatpush2.msra.mxu0 0.0
    %624 = vmatprep.subr.mxu0 0.0
    %625 = vmatpush2.msra.mxu0 0.0
    %626 = vmatprep.subr.mxu0 0.0
    %627 = vmatpush2.msra.mxu0 0.0
    %628 = vmatprep.mubr.f32.mxu0 0.0
    %629 = vmatmul.mubr.f32.gmra.mxu0 %v562
    %v630 = vpop.f32.mrf.mxu0
    %v631 = vadd.f32 0.0, %v630
    %v632 = vpop.f32.mrf.mxu0
    %v633 = vadd.f32 0.0, %v632
    %634 = vdwg.mxu0
    %635 = vmatprep.subr.mxu0 0.0
    %636 = vmatpush1.msra.mxu0 0.0
    %637 = vmatprep.subr.mxu0 0.0
    %638 = vmatpush1.msra.mxu0 0.0
    %639 = vmatprep.subr.mxu0 0.0
    %640 = vmatpush1.msra.mxu0 0.0
    %641 = vmatprep.subr.mxu0 0.0
    %642 = vmatpush1.msra.mxu0 0.0
    %643 = vmatprep.subr.mxu0 0.0
    %644 = vmatpush1.msra.mxu0 0.0
    %645 = vmatprep.subr.mxu0 0.0
    %646 = vmatpush1.msra.mxu0 0.0
    %647 = vmatprep.subr.mxu0 0.0
    %648 = vmatpush1.msra.mxu0 0.0
    %649 = vmatprep.subr.mxu0 0.0
    %650 = vmatpush1.msra.mxu0 0.0
    %651 = vmatprep.subr.mxu0 %v198
    %652 = vmatpush1.msra.mxu0 %v197
    %653 = vmatprep.subr.mxu0 %v194
    %654 = vmatpush1.msra.mxu0 %v193
    %655 = vmatprep.subr.mxu0 %v153
    %656 = vmatpush1.msra.mxu0 %v152
    %657 = vmatprep.subr.mxu0 %v149
    %658 = vmatpush1.msra.mxu0 %v148
    %659 = vmatprep.subr.mxu0 %v280
    %660 = vmatpush1.msra.mxu0 %v279
    %661 = vmatprep.subr.mxu0 %v276
    %662 = vmatpush1.msra.mxu0 %v275
    %663 = vmatprep.subr.mxu0 %v38
    %664 = vmatpush1.msra.mxu0 %v37
    %665 = vmatprep.subr.mxu0 %v34
    %666 = vmatpush1.msra.mxu0 %v33
    %667 = vmatprep.subr.mxu0 0.0
    %668 = vmatpush2.msra.mxu0 0.0
    %669 = vmatprep.subr.mxu0 0.0
    %670 = vmatpush2.msra.mxu0 0.0
    %671 = vmatprep.subr.mxu0 0.0
    %672 = vmatpush2.msra.mxu0 0.0
    %673 = vmatprep.subr.mxu0 0.0
    %674 = vmatpush2.msra.mxu0 0.0
    %675 = vmatprep.subr.mxu0 0.0
    %676 = vmatpush2.msra.mxu0 0.0
    %677 = vmatprep.subr.mxu0 0.0
    %678 = vmatpush2.msra.mxu0 0.0
    %679 = vmatprep.subr.mxu0 0.0
    %680 = vmatpush2.msra.mxu0 0.0
    %681 = vmatprep.subr.mxu0 0.0
    %682 = vmatpush2.msra.mxu0 0.0
    %683 = vmatprep.subr.mxu0 0.0
    %684 = vmatpush2.msra.mxu0 0.0
    %685 = vmatprep.subr.mxu0 0.0
    %686 = vmatpush2.msra.mxu0 0.0
    %687 = vmatprep.subr.mxu0 0.0
    %688 = vmatpush2.msra.mxu0 0.0
    %689 = vmatprep.subr.mxu0 0.0
    %690 = vmatpush2.msra.mxu0 0.0
    %691 = vmatprep.subr.mxu0 0.0
    %692 = vmatpush2.msra.mxu0 0.0
    %693 = vmatprep.subr.mxu0 0.0
    %694 = vmatpush2.msra.mxu0 0.0
    %695 = vmatprep.subr.mxu0 0.0
    %696 = vmatpush2.msra.mxu0 0.0
    %697 = vmatprep.subr.mxu0 0.0
    %698 = vmatpush2.msra.mxu0 0.0
    %699 = vmatprep.mubr.f32.mxu0 0.0
    %700 = vmatmul.mubr.f32.gmra.mxu0 %v562
    %v701 = vpop.f32.mrf.mxu0
    %v702 = vadd.f32 0.0, %v701
    %v703 = vpop.f32.mrf.mxu0
    %v704 = vadd.f32 0.0, %v703
    %705 = vdwg.mxu0
    %s706 = scalar_lea.vmem [#allocation2], 16
    %v707 = vld [vmem:[%s706] sm:$0xff]
    %v709 = vsel %vm413, %v707, 0
    %711 = vmatprep.subr.mxu0 0.0
    %712 = vmatpush1.msra.mxu0 0.0
    %713 = vmatprep.subr.mxu0 0.0
    %714 = vmatpush1.msra.mxu0 0.0
    %715 = vmatprep.subr.mxu0 0.0
    %716 = vmatpush1.msra.mxu0 0.0
    %717 = vmatprep.subr.mxu0 0.0
    %718 = vmatpush1.msra.mxu0 0.0
    %719 = vmatprep.subr.mxu0 0.0
    %720 = vmatpush1.msra.mxu0 0.0
    %721 = vmatprep.subr.mxu0 0.0
    %722 = vmatpush1.msra.mxu0 0.0
    %723 = vmatprep.subr.mxu0 0.0
    %724 = vmatpush1.msra.mxu0 0.0
    %725 = vmatprep.subr.mxu0 0.0
    %726 = vmatpush1.msra.mxu0 0.0
    %727 = vmatprep.subr.mxu0 %v323
    %728 = vmatpush1.msra.mxu0 %v322
    %729 = vmatprep.subr.mxu0 %v319
    %730 = vmatpush1.msra.mxu0 %v318
    %731 = vmatprep.subr.mxu0 %v364
    %732 = vmatpush1.msra.mxu0 %v363
    %733 = vmatprep.subr.mxu0 %v360
    %734 = vmatpush1.msra.mxu0 %v359
    %735 = vmatprep.subr.mxu0 %v237
    %736 = vmatpush1.msra.mxu0 %v236
    %737 = vmatprep.subr.mxu0 %v233
    %738 = vmatpush1.msra.mxu0 %v232
    %739 = vmatprep.subr.mxu0 %v36
    %740 = vmatpush1.msra.mxu0 %v35
    %741 = vmatprep.subr.mxu0 %v32
    %742 = vmatpush1.msra.mxu0 %v31
    %743 = vmatprep.subr.mxu0 0.0
    %744 = vmatpush2.msra.mxu0 0.0
    %745 = vmatprep.subr.mxu0 0.0
    %746 = vmatpush2.msra.mxu0 0.0
    %747 = vmatprep.subr.mxu0 0.0
    %748 = vmatpush2.msra.mxu0 0.0
    %749 = vmatprep.subr.mxu0 0.0
    %750 = vmatpush2.msra.mxu0 0.0
    %751 = vmatprep.subr.mxu0 0.0
    %752 = vmatpush2.msra.mxu0 0.0
    %753 = vmatprep.subr.mxu0 0.0
    %754 = vmatpush2.msra.mxu0 0.0
    %755 = vmatprep.subr.mxu0 0.0
    %756 = vmatpush2.msra.mxu0 0.0
    %757 = vmatprep.subr.mxu0 0.0
    %758 = vmatpush2.msra.mxu0 0.0
    %759 = vmatprep.subr.mxu0 0.0
    %760 = vmatpush2.msra.mxu0 0.0
    %761 = vmatprep.subr.mxu0 0.0
    %762 = vmatpush2.msra.mxu0 0.0
    %763 = vmatprep.subr.mxu0 0.0
    %764 = vmatpush2.msra.mxu0 0.0
    %765 = vmatprep.subr.mxu0 0.0
    %766 = vmatpush2.msra.mxu0 0.0
    %767 = vmatprep.subr.mxu0 0.0
    %768 = vmatpush2.msra.mxu0 0.0
    %769 = vmatprep.subr.mxu0 0.0
    %770 = vmatpush2.msra.mxu0 0.0
    %771 = vmatprep.subr.mxu0 0.0
    %772 = vmatpush2.msra.mxu0 0.0
    %773 = vmatprep.subr.mxu0 0.0
    %774 = vmatpush2.msra.mxu0 0.0
    %775 = vmatprep.mubr.f32.mxu0 0.0
    %776 = vmatmul.mubr.f32.gmra.mxu0 %v709
    %v777 = vpop.f32.mrf.mxu0
    %v778 = vadd.f32 0.0, %v777
    %v779 = vpop.f32.mrf.mxu0
    %v780 = vadd.f32 0.0, %v779
    %781 = vdwg.mxu0
    %782 = vmatprep.subr.mxu0 0.0
    %783 = vmatpush1.msra.mxu0 0.0
    %784 = vmatprep.subr.mxu0 0.0
    %785 = vmatpush1.msra.mxu0 0.0
    %786 = vmatprep.subr.mxu0 0.0
    %787 = vmatpush1.msra.mxu0 0.0
    %788 = vmatprep.subr.mxu0 0.0
    %789 = vmatpush1.msra.mxu0 0.0
    %790 = vmatprep.subr.mxu0 0.0
    %791 = vmatpush1.msra.mxu0 0.0
    %792 = vmatprep.subr.mxu0 0.0
    %793 = vmatpush1.msra.mxu0 0.0
    %794 = vmatprep.subr.mxu0 0.0
    %795 = vmatpush1.msra.mxu0 0.0
    %796 = vmatprep.subr.mxu0 0.0
    %797 = vmatpush1.msra.mxu0 0.0
    %798 = vmatprep.subr.mxu0 %v325
    %799 = vmatpush1.msra.mxu0 %v324
    %800 = vmatprep.subr.mxu0 %v321
    %801 = vmatpush1.msra.mxu0 %v320
    %802 = vmatprep.subr.mxu0 %v366
    %803 = vmatpush1.msra.mxu0 %v365
    %804 = vmatprep.subr.mxu0 %v362
    %805 = vmatpush1.msra.mxu0 %v361
    %806 = vmatprep.subr.mxu0 %v239
    %807 = vmatpush1.msra.mxu0 %v238
    %808 = vmatprep.subr.mxu0 %v235
    %809 = vmatpush1.msra.mxu0 %v234
    %810 = vmatprep.subr.mxu0 %v38
    %811 = vmatpush1.msra.mxu0 %v37
    %812 = vmatprep.subr.mxu0 %v34
    %813 = vmatpush1.msra.mxu0 %v33
    %814 = vmatprep.subr.mxu0 0.0
    %815 = vmatpush2.msra.mxu0 0.0
    %816 = vmatprep.subr.mxu0 0.0
    %817 = vmatpush2.msra.mxu0 0.0
    %818 = vmatprep.subr.mxu0 0.0
    %819 = vmatpush2.msra.mxu0 0.0
    %820 = vmatprep.subr.mxu0 0.0
    %821 = vmatpush2.msra.mxu0 0.0
    %822 = vmatprep.subr.mxu0 0.0
    %823 = vmatpush2.msra.mxu0 0.0
    %824 = vmatprep.subr.mxu0 0.0
    %825 = vmatpush2.msra.mxu0 0.0
    %826 = vmatprep.subr.mxu0 0.0
    %827 = vmatpush2.msra.mxu0 0.0
    %828 = vmatprep.subr.mxu0 0.0
    %829 = vmatpush2.msra.mxu0 0.0
    %830 = vmatprep.subr.mxu0 0.0
    %831 = vmatpush2.msra.mxu0 0.0
    %832 = vmatprep.subr.mxu0 0.0
    %833 = vmatpush2.msra.mxu0 0.0
    %834 = vmatprep.subr.mxu0 0.0
    %835 = vmatpush2.msra.mxu0 0.0
    %836 = vmatprep.subr.mxu0 0.0
    %837 = vmatpush2.msra.mxu0 0.0
    %838 = vmatprep.subr.mxu0 0.0
    %839 = vmatpush2.msra.mxu0 0.0
    %840 = vmatprep.subr.mxu0 0.0
    %841 = vmatpush2.msra.mxu0 0.0
    %842 = vmatprep.subr.mxu0 0.0
    %843 = vmatpush2.msra.mxu0 0.0
    %844 = vmatprep.subr.mxu0 0.0
    %845 = vmatpush2.msra.mxu0 0.0
    %846 = vmatprep.mubr.f32.mxu0 0.0
    %847 = vmatmul.mubr.f32.gmra.mxu0 %v709
    %v848 = vpop.f32.mrf.mxu0
    %v849 = vadd.f32 0.0, %v848
    %v850 = vpop.f32.mrf.mxu0
    %v851 = vadd.f32 0.0, %v850
    %852 = vdwg.mxu0
    %s853 = scalar_lea.vmem [#allocation2], 24
    %v854 = vld [vmem:[%s853] sm:$0xff]
    %v856 = vsel %vm413, %v854, 0
    %858 = vmatprep.subr.mxu0 0.0
    %859 = vmatpush1.msra.mxu0 0.0
    %860 = vmatprep.subr.mxu0 0.0
    %861 = vmatpush1.msra.mxu0 0.0
    %862 = vmatprep.subr.mxu0 0.0
    %863 = vmatpush1.msra.mxu0 0.0
    %864 = vmatprep.subr.mxu0 0.0
    %865 = vmatpush1.msra.mxu0 0.0
    %866 = vmatprep.subr.mxu0 0.0
    %867 = vmatpush1.msra.mxu0 0.0
    %868 = vmatprep.subr.mxu0 0.0
    %869 = vmatpush1.msra.mxu0 0.0
    %870 = vmatprep.subr.mxu0 0.0
    %871 = vmatpush1.msra.mxu0 0.0
    %872 = vmatprep.subr.mxu0 0.0
    %873 = vmatpush1.msra.mxu0 0.0
    %874 = vmatprep.subr.mxu0 %v409
    %875 = vmatpush1.msra.mxu0 %v408
    %876 = vmatprep.subr.mxu0 %v405
    %877 = vmatpush1.msra.mxu0 %v404
    %878 = vmatprep.subr.mxu0 %v364
    %879 = vmatpush1.msra.mxu0 %v363
    %880 = vmatprep.subr.mxu0 %v360
    %881 = vmatpush1.msra.mxu0 %v359
    %882 = vmatprep.subr.mxu0 %v278
    %883 = vmatpush1.msra.mxu0 %v277
    %884 = vmatprep.subr.mxu0 %v274
    %885 = vmatpush1.msra.mxu0 %v273
    %886 = vmatprep.subr.mxu0 %v36
    %887 = vmatpush1.msra.mxu0 %v35
    %888 = vmatprep.subr.mxu0 %v32
    %889 = vmatpush1.msra.mxu0 %v31
    %890 = vmatprep.subr.mxu0 0.0
    %891 = vmatpush2.msra.mxu0 0.0
    %892 = vmatprep.subr.mxu0 0.0
    %893 = vmatpush2.msra.mxu0 0.0
    %894 = vmatprep.subr.mxu0 0.0
    %895 = vmatpush2.msra.mxu0 0.0
    %896 = vmatprep.subr.mxu0 0.0
    %897 = vmatpush2.msra.mxu0 0.0
    %898 = vmatprep.subr.mxu0 0.0
    %899 = vmatpush2.msra.mxu0 0.0
    %900 = vmatprep.subr.mxu0 0.0
    %901 = vmatpush2.msra.mxu0 0.0
    %902 = vmatprep.subr.mxu0 0.0
    %903 = vmatpush2.msra.mxu0 0.0
    %904 = vmatprep.subr.mxu0 0.0
    %905 = vmatpush2.msra.mxu0 0.0
    %906 = vmatprep.subr.mxu0 0.0
    %907 = vmatpush2.msra.mxu0 0.0
    %908 = vmatprep.subr.mxu0 0.0
    %909 = vmatpush2.msra.mxu0 0.0
    %910 = vmatprep.subr.mxu0 0.0
    %911 = vmatpush2.msra.mxu0 0.0
    %912 = vmatprep.subr.mxu0 0.0
    %913 = vmatpush2.msra.mxu0 0.0
    %914 = vmatprep.subr.mxu0 0.0
    %915 = vmatpush2.msra.mxu0 0.0
    %916 = vmatprep.subr.mxu0 0.0
    %917 = vmatpush2.msra.mxu0 0.0
    %918 = vmatprep.subr.mxu0 0.0
    %919 = vmatpush2.msra.mxu0 0.0
    %920 = vmatprep.subr.mxu0 0.0
    %921 = vmatpush2.msra.mxu0 0.0
    %922 = vmatprep.mubr.f32.mxu0 0.0
    %923 = vmatmul.mubr.f32.gmra.mxu0 %v856
    %v924 = vpop.f32.mrf.mxu0
    %v925 = vadd.f32 0.0, %v924
    %v926 = vpop.f32.mrf.mxu0
    %v927 = vadd.f32 0.0, %v926
    %928 = vdwg.mxu0
    %929 = vmatprep.subr.mxu0 0.0
    %930 = vmatpush1.msra.mxu0 0.0
    %931 = vmatprep.subr.mxu0 0.0
    %932 = vmatpush1.msra.mxu0 0.0
    %933 = vmatprep.subr.mxu0 0.0
    %934 = vmatpush1.msra.mxu0 0.0
    %935 = vmatprep.subr.mxu0 0.0
    %936 = vmatpush1.msra.mxu0 0.0
    %937 = vmatprep.subr.mxu0 0.0
    %938 = vmatpush1.msra.mxu0 0.0
    %939 = vmatprep.subr.mxu0 0.0
    %940 = vmatpush1.msra.mxu0 0.0
    %941 = vmatprep.subr.mxu0 0.0
    %942 = vmatpush1.msra.mxu0 0.0
    %943 = vmatprep.subr.mxu0 0.0
    %944 = vmatpush1.msra.mxu0 0.0
    %945 = vmatprep.subr.mxu0 %v411
    %946 = vmatpush1.msra.mxu0 %v410
    %947 = vmatprep.subr.mxu0 %v407
    %948 = vmatpush1.msra.mxu0 %v406
    %949 = vmatprep.subr.mxu0 %v366
    %950 = vmatpush1.msra.mxu0 %v365
    %951 = vmatprep.subr.mxu0 %v362
    %952 = vmatpush1.msra.mxu0 %v361
    %953 = vmatprep.subr.mxu0 %v280
    %954 = vmatpush1.msra.mxu0 %v279
    %955 = vmatprep.subr.mxu0 %v276
    %956 = vmatpush1.msra.mxu0 %v275
    %957 = vmatprep.subr.mxu0 %v38
    %958 = vmatpush1.msra.mxu0 %v37
    %959 = vmatprep.subr.mxu0 %v34
    %960 = vmatpush1.msra.mxu0 %v33
    %961 = vmatprep.subr.mxu0 0.0
    %962 = vmatpush2.msra.mxu0 0.0
    %963 = vmatprep.subr.mxu0 0.0
    %964 = vmatpush2.msra.mxu0 0.0
    %965 = vmatprep.subr.mxu0 0.0
    %966 = vmatpush2.msra.mxu0 0.0
    %967 = vmatprep.subr.mxu0 0.0
    %968 = vmatpush2.msra.mxu0 0.0
    %969 = vmatprep.subr.mxu0 0.0
    %970 = vmatpush2.msra.mxu0 0.0
    %971 = vmatprep.subr.mxu0 0.0
    %972 = vmatpush2.msra.mxu0 0.0
    %973 = vmatprep.subr.mxu0 0.0
    %974 = vmatpush2.msra.mxu0 0.0
    %975 = vmatprep.subr.mxu0 0.0
    %976 = vmatpush2.msra.mxu0 0.0
    %977 = vmatprep.subr.mxu0 0.0
    %978 = vmatpush2.msra.mxu0 0.0
    %979 = vmatprep.subr.mxu0 0.0
    %980 = vmatpush2.msra.mxu0 0.0
    %981 = vmatprep.subr.mxu0 0.0
    %982 = vmatpush2.msra.mxu0 0.0
    %983 = vmatprep.subr.mxu0 0.0
    %984 = vmatpush2.msra.mxu0 0.0
    %985 = vmatprep.subr.mxu0 0.0
    %986 = vmatpush2.msra.mxu0 0.0
    %987 = vmatprep.subr.mxu0 0.0
    %988 = vmatpush2.msra.mxu0 0.0
    %989 = vmatprep.subr.mxu0 0.0
    %990 = vmatpush2.msra.mxu0 0.0
    %991 = vmatprep.subr.mxu0 0.0
    %992 = vmatpush2.msra.mxu0 0.0
    %993 = vmatprep.mubr.f32.mxu0 0.0
    %994 = vmatmul.mubr.f32.gmra.mxu0 %v856
    %v995 = vpop.f32.mrf.mxu0
    %v996 = vadd.f32 0.0, %v995
    %v997 = vpop.f32.mrf.mxu0
    %v998 = vadd.f32 0.0, %v997
    %999 = vdwg.mxu0
    %v1000 = vadd.f32 %v484, %v486
    %v1001 = vadd.f32 %v1000, %v555
    %v1002 = vadd.f32 %v1001, %v557
    %1003 = vadd.xlane.f32.xlu0 %v1002
    %v1004 = vpop.xlane.xlu0 %1003
    %v1005 = vadd.f32 %v1004, 0.0
    %v1006 = vadd.f32 %v631, %v633
    %v1007 = vadd.f32 %v1006, %v702
    %v1008 = vadd.f32 %v1007, %v704
    %1009 = vadd.xlane.f32.xlu0 %v1008
    %v1010 = vpop.xlane.xlu0 %1009
    %v1011 = vadd.f32 %v1005, %v1010
    %v1012 = vadd.f32 %v778, %v780
    %v1013 = vadd.f32 %v1012, %v849
    %v1014 = vadd.f32 %v1013, %v851
    %1015 = vadd.xlane.f32.xlu0 %v1014
    %v1016 = vpop.xlane.xlu0 %1015
    %v1017 = vadd.f32 %v1011, %v1016
    %v1018 = vadd.f32 %v925, %v927
    %v1019 = vadd.f32 %v1018, %v996
    %v1020 = vadd.f32 %v1019, %v998
    %1021 = vadd.xlane.f32.xlu0 %v1020
    %v1022 = vpop.xlane.xlu0 %1021
    %v1023 = vadd.f32 %v1017, %v1022
    %v1024 = vmul.f32 %v484, %v484
    %v1025 = vmul.f32 %v486, %v486
    %v1026 = vmul.f32 %v555, %v555
    %v1027 = vmul.f32 %v557, %v557
    %v1028 = vadd.f32 %v1024, %v1025
    %v1029 = vadd.f32 %v1028, %v1026
    %v1030 = vadd.f32 %v1029, %v1027
    %1031 = vadd.xlane.f32.xlu0 %v1030
    %v1032 = vpop.xlane.xlu0 %1031
    %v1033 = vadd.f32 %v1032, 0.0
    %v1034 = vmul.f32 %v631, %v631
    %v1035 = vmul.f32 %v633, %v633
    %v1036 = vmul.f32 %v702, %v702
    %v1037 = vmul.f32 %v704, %v704
    %v1038 = vadd.f32 %v1034, %v1035
    %v1039 = vadd.f32 %v1038, %v1036
    %v1040 = vadd.f32 %v1039, %v1037
    %1041 = vadd.xlane.f32.xlu0 %v1040
    %v1042 = vpop.xlane.xlu0 %1041
    %v1043 = vadd.f32 %v1033, %v1042
    %v1044 = vmul.f32 %v778, %v778
    %v1045 = vmul.f32 %v780, %v780
    %v1046 = vmul.f32 %v849, %v849
    %v1047 = vmul.f32 %v851, %v851
    %v1048 = vadd.f32 %v1044, %v1045
    %v1049 = vadd.f32 %v1048, %v1046
    %v1050 = vadd.f32 %v1049, %v1047
    %1051 = vadd.xlane.f32.xlu0 %v1050
    %v1052 = vpop.xlane.xlu0 %1051
    %v1053 = vadd.f32 %v1043, %v1052
    %v1054 = vmul.f32 %v925, %v925
    %v1055 = vmul.f32 %v927, %v927
    %v1056 = vmul.f32 %v996, %v996
    %v1057 = vmul.f32 %v998, %v998
    %v1058 = vadd.f32 %v1054, %v1055
    %v1059 = vadd.f32 %v1058, %v1056
    %v1060 = vadd.f32 %v1059, %v1057
    %1061 = vadd.xlane.f32.xlu0 %v1060
    %v1062 = vpop.xlane.xlu0 %1061
    %v1063 = vadd.f32 %v1053, %v1062
    %v1064 = vrcp.pop 2048.0
    %v1065 = vmul.f32 %v1023, %v1064
    %v1066 = vmul.f32 %v1063, %v1064
    %v1067 = vmul.f32 %v1065, %v1065
    %v1068 = vsub.f32 %v1066, %v1067
    %v1069 = vld [vmem:[%s2] sm:$0xff]
    %v1070 = vadd.f32 %v1068, 1e-05
    %v1071 = vrsqrt.pop %v1070
    %v1072 = vmul.f32 %v1069, %v1071
    %v1073 = vld [vmem:[%s3] sm:$0xff]
    %v1074 = vmul.f32 %v1065, %v1072
    %v1075 = vsub.f32 %v1073, %v1074
    %1077 = vset.pattern.permute.xlu0 0
    %1078 = vperm.xlu0 %1077, %v1072
    %v1079 = vpop.permute.xlu0 %1078
    %v1081 = vmul.f32 %v484, %v1079
    %v1082 = vmul.f32 %v486, %v1079
    %v1083 = vmul.f32 %v555, %v1079
    %v1084 = vmul.f32 %v557, %v1079
    %1086 = vset.pattern.permute.xlu0 0
    %1087 = vperm.xlu0 %1086, %v1075
    %v1088 = vpop.permute.xlu0 %1087
    %v1090 = vadd.f32 %v1081, %v1088
    %v1091 = vadd.f32 %v1082, %v1088
    %v1092 = vadd.f32 %v1083, %v1088
    %v1093 = vadd.f32 %v1084, %v1088
    %v1094 = vmax.f32 %v1090, 0.0
    %v1095 = vmax.f32 %v1091, 0.0
    %v1096 = vmax.f32 %v1092, 0.0
    %v1097 = vmax.f32 %v1093, 0.0
    %1098 = vst [vmem:[%s4] sm:$0xff] %v1094
    %1099 = vst [vmem:[%s4 + $0x8] sm:$0xff] %v1095
    %1100 = vst [vmem:[%s4 + $0x10] sm:$0xff] %v1096
    %1101 = vst [vmem:[%s4 + $0x18] sm:$0xff] %v1097
    %v1102 = vmul.f32 %v631, %v1079
    %v1103 = vmul.f32 %v633, %v1079
    %v1104 = vmul.f32 %v702, %v1079
    %v1105 = vmul.f32 %v704, %v1079
    %v1106 = vadd.f32 %v1102, %v1088
    %v1107 = vadd.f32 %v1103, %v1088
    %v1108 = vadd.f32 %v1104, %v1088
    %v1109 = vadd.f32 %v1105, %v1088
    %v1110 = vmax.f32 %v1106, 0.0
    %v1111 = vmax.f32 %v1107, 0.0
    %v1112 = vmax.f32 %v1108, 0.0
    %v1113 = vmax.f32 %v1109, 0.0
    %s1114 = scalar_lea.vmem %s4, 32
    %1115 = vst [vmem:[%s1114] sm:$0xff] %v1110
    %1116 = vst [vmem:[%s1114 + $0x8] sm:$0xff] %v1111
    %1117 = vst [vmem:[%s1114 + $0x10] sm:$0xff] %v1112
    %1118 = vst [vmem:[%s1114 + $0x18] sm:$0xff] %v1113
    %v1119 = vmul.f32 %v778, %v1079
    %v1120 = vmul.f32 %v780, %v1079
    %v1121 = vmul.f32 %v849, %v1079
    %v1122 = vmul.f32 %v851, %v1079
    %v1123 = vadd.f32 %v1119, %v1088
    %v1124 = vadd.f32 %v1120, %v1088
    %v1125 = vadd.f32 %v1121, %v1088
    %v1126 = vadd.f32 %v1122, %v1088
    %v1127 = vmax.f32 %v1123, 0.0
    %v1128 = vmax.f32 %v1124, 0.0
    %v1129 = vmax.f32 %v1125, 0.0
    %v1130 = vmax.f32 %v1126, 0.0
    %s1131 = scalar_lea.vmem %s4, 64
    %1132 = vst [vmem:[%s1131] sm:$0xff] %v1127
    %1133 = vst [vmem:[%s1131 + $0x8] sm:$0xff] %v1128
    %1134 = vst [vmem:[%s1131 + $0x10] sm:$0xff] %v1129
    %1135 = vst [vmem:[%s1131 + $0x18] sm:$0xff] %v1130
    %v1136 = vmul.f32 %v925, %v1079
    %v1137 = vmul.f32 %v927, %v1079
    %v1138 = vmul.f32 %v996, %v1079
    %v1139 = vmul.f32 %v998, %v1079
    %v1140 = vadd.f32 %v1136, %v1088
    %v1141 = vadd.f32 %v1137, %v1088
    %v1142 = vadd.f32 %v1138, %v1088
    %v1143 = vadd.f32 %v1139, %v1088
    %v1144 = vmax.f32 %v1140, 0.0
    %v1145 = vmax.f32 %v1141, 0.0
    %v1146 = vmax.f32 %v1142, 0.0
    %v1147 = vmax.f32 %v1143, 0.0
    %s1148 = scalar_lea.vmem %s4, 96
    %1149 = vst [vmem:[%s1148] sm:$0xff] %v1144
    %1150 = vst [vmem:[%s1148 + $0x8] sm:$0xff] %v1145
    %1151 = vst [vmem:[%s1148 + $0x10] sm:$0xff] %v1146
    %1152 = vst [vmem:[%s1148 + $0x18] sm:$0xff] %v1147
    // Predicated region
    $region22: #{generator_forward.8} parent=1 // pred_check
      _
    $region23: #{generator_forward.8} parent=1 // pred_check_branch
      %1154 = sbr.rel (0) target = $region25
    $region24: #{generator_forward.8} parent=1 // pred_region
      _
    $region25: #{generator_forward.8} parent=1 // pred_fallthru
      _
    // Predicated region
    $region26: #{generator_forward.8} parent=1 // pred_check
      _
    $region27: #{generator_forward.8} parent=1 // pred_check_branch
      %1156 = sbr.rel (0) target = $region29
    $region28: #{generator_forward.8} parent=1 // pred_region
      _
    $region29: #{generator_forward.8} parent=1 // pred_fallthru
      _
    %1157 = vsyncpa [#allocation3], 1

// kernel: generator_forward.9
$region0: #{generator_forward.9}
  #allocation0 [shape = 'u32[]', space=smem, size = 0x4, offset = 0x4, fixed_abs, tag = 'smem constant byte address 0x4 - core index']
  #allocation1 [shape = 'u32[144,128]{1,0:T(1,128)}', space=vmem, size = 0x12000, scoped, tag = 'internal scratch']
  %s0 = inlined_call_operand.vmem [shape: f32[8,2048], index: 0, kind: input, shape index: {}]
  %s1 = inlined_call_operand.vmem [shape: f32[4,3,32], index: 1, kind: input, shape index: {}]
  %s2 = inlined_call_operand.vmem [shape: f32[4,3,2048], index: 2, kind: output, shape index: {}]
  %s3 = sld [smem:[#allocation0]]
  $region18: #{generator_forward.9} parent=0
    _
  %s5 = ssub.s32 1, %s3
  %s6 = scalar_select 0, %s5, %s3
  // Predicated region
  $region2: #{generator_forward.9} parent=0 // pred_check
    _
  $region3: #{generator_forward.9} parent=0 // pred_check_branch
    %8 = sbr.rel (0) target = $region5
  $region4: #{generator_forward.9} parent=0 // pred_region
    _
  $region5: #{generator_forward.9} parent=0 // pred_fallthru
    _
  // Predicated region
  $region6: #{generator_forward.9} parent=0 // pred_check
    _
  $region7: #{generator_forward.9} parent=0 // pred_check_branch
    %10 = sbr.rel (0) target = $region9
  $region8: #{generator_forward.9} parent=0 // pred_region
    _
  $region9: #{generator_forward.9} parent=0 // pred_fallthru
    _
  %v11 = vld [vmem:[%s0] sm:$0xff]
  %v12 = vld [vmem:[%s0 + $0x8] sm:$0xff]
  %v13 = vld [vmem:[%s0 + $0x10] sm:$0xff]
  %v14 = vld [vmem:[%s0 + $0x18] sm:$0xff]
  %v15 = vld [vmem:[%s0 + $0x20] sm:$0xff]
  %v16 = vld [vmem:[%s0 + $0x28] sm:$0xff]
  %v17 = vld [vmem:[%s0 + $0x30] sm:$0xff]
  %v18 = vld [vmem:[%s0 + $0x38] sm:$0xff]
  %v19 = vld [vmem:[%s0 + $0x40] sm:$0xff]
  %v20 = vld [vmem:[%s0 + $0x48] sm:$0xff]
  %v21 = vld [vmem:[%s0 + $0x50] sm:$0xff]
  %v22 = vld [vmem:[%s0 + $0x58] sm:$0xff]
  %v23 = vld [vmem:[%s0 + $0x60] sm:$0xff]
  %v24 = vld [vmem:[%s0 + $0x68] sm:$0xff]
  %v25 = vld [vmem:[%s0 + $0x70] sm:$0xff]
  %v26 = vld [vmem:[%s0 + $0x78] sm:$0xff]
  %v27 = vlaneseq
  %v28 = vand.u32 %v27, 127
  %v29 = vadd.s32 %v28, 128
  %v30 = vadd.s32 %v28, 256
  %v31 = vadd.s32 %v28, 384
  %v32 = vadd.s32 %v28, 512
  %v33 = vadd.s32 %v28, 640
  %v34 = vadd.s32 %v28, 768
  %v35 = vadd.s32 %v28, 896
  %v36 = vadd.s32 %v28, 1024
  %v37 = vadd.s32 %v28, 1152
  %v38 = vadd.s32 %v28, 1280
  %v39 = vadd.s32 %v28, 1408
  %v40 = vadd.s32 %v28, 1536
  %v41 = vadd.s32 %v28, 1664
  %v42 = vadd.s32 %v28, 1792
  %v43 = vadd.s32 %v28, 1920
  %v44 = vand.u32 %v28, 31
  %v45 = vand.u32 %v29, 31
  %v46 = vand.u32 %v30, 31
  %v47 = vand.u32 %v31, 31
  %v48 = vand.u32 %v32, 31
  %v49 = vand.u32 %v33, 31
  %v50 = vand.u32 %v34, 31
  %v51 = vand.u32 %v35, 31
  %v52 = vand.u32 %v36, 31
  %v53 = vand.u32 %v37, 31
  %v54 = vand.u32 %v38, 31
  %v55 = vand.u32 %v39, 31
  %v56 = vand.u32 %v40, 31
  %v57 = vand.u32 %v41, 31
  %v58 = vand.u32 %v42, 31
  %v59 = vand.u32 %v43, 31
  %v60 = vand.u32 %v28, 1023
  %v61 = vand.u32 %v29, 1023
  %v62 = vand.u32 %v30, 1023
  %v63 = vand.u32 %v31, 1023
  %v64 = vand.u32 %v32, 1023
  %v65 = vand.u32 %v33, 1023
  %v66 = vand.u32 %v34, 1023
  %v67 = vand.u32 %v35, 1023
  %v68 = vand.u32 %v36, 1023
  %v69 = vand.u32 %v37, 1023
  %v70 = vand.u32 %v38, 1023
  %v71 = vand.u32 %v39, 1023
  %v72 = vand.u32 %v40, 1023
  %v73 = vand.u32 %v41, 1023
  %v74 = vand.u32 %v42, 1023
  %v75 = vand.u32 %v43, 1023
  %vm76 = vcmp.ge.s32.totalorder %v60, 32
  %vm77 = vcmp.ge.s32.totalorder %v61, 32
  %vm78 = vcmp.ge.s32.totalorder %v62, 32
  %vm79 = vcmp.ge.s32.totalorder %v63, 32
  %vm80 = vcmp.ge.s32.totalorder %v64, 32
  %vm81 = vcmp.ge.s32.totalorder %v65, 32
  %vm82 = vcmp.ge.s32.totalorder %v66, 32
  %vm83 = vcmp.ge.s32.totalorder %v67, 32
  %vm84 = vcmp.ge.s32.totalorder %v68, 32
  %vm85 = vcmp.ge.s32.totalorder %v69, 32
  %vm86 = vcmp.ge.s32.totalorder %v70, 32
  %vm87 = vcmp.ge.s32.totalorder %v71, 32
  %vm88 = vcmp.ge.s32.totalorder %v72, 32
  %vm89 = vcmp.ge.s32.totalorder %v73, 32
  %vm90 = vcmp.ge.s32.totalorder %v74, 32
  %vm91 = vcmp.ge.s32.totalorder %v75, 32
  %vm92 = vcmp.lt.s32.totalorder %v60, 992
  %vm93 = vcmp.lt.s32.totalorder %v61, 992
  %vm94 = vcmp.lt.s32.totalorder %v62, 992
  %vm95 = vcmp.lt.s32.totalorder %v63, 992
  %vm96 = vcmp.lt.s32.totalorder %v64, 992
  %vm97 = vcmp.lt.s32.totalorder %v65, 992
  %vm98 = vcmp.lt.s32.totalorder %v66, 992
  %vm99 = vcmp.lt.s32.totalorder %v67, 992
  %vm100 = vcmp.lt.s32.totalorder %v68, 992
  %vm101 = vcmp.lt.s32.totalorder %v69, 992
  %vm102 = vcmp.lt.s32.totalorder %v70, 992
  %vm103 = vcmp.lt.s32.totalorder %v71, 992
  %vm104 = vcmp.lt.s32.totalorder %v72, 992
  %vm105 = vcmp.lt.s32.totalorder %v73, 992
  %vm106 = vcmp.lt.s32.totalorder %v74, 992
  %vm107 = vcmp.lt.s32.totalorder %v75, 992
  %vm108 = vcmp.ge.s32.totalorder %v44, 1
  %vm109 = vcmp.ge.s32.totalorder %v45, 1
  %vm110 = vcmp.ge.s32.totalorder %v46, 1
  %vm111 = vcmp.ge.s32.totalorder %v47, 1
  %vm112 = vcmp.ge.s32.totalorder %v48, 1
  %vm113 = vcmp.ge.s32.totalorder %v49, 1
  %vm114 = vcmp.ge.s32.totalorder %v50, 1
  %vm115 = vcmp.ge.s32.totalorder %v51, 1
  %vm116 = vcmp.ge.s32.totalorder %v52, 1
  %vm117 = vcmp.ge.s32.totalorder %v53, 1
  %vm118 = vcmp.ge.s32.totalorder %v54, 1
  %vm119 = vcmp.ge.s32.totalorder %v55, 1
  %vm120 = vcmp.ge.s32.totalorder %v56, 1
  %vm121 = vcmp.ge.s32.totalorder %v57, 1
  %vm122 = vcmp.ge.s32.totalorder %v58, 1
  %vm123 = vcmp.ge.s32.totalorder %v59, 1
  %vm124 = vcmp.lt.s32.totalorder %v44, 31
  %vm125 = vcmp.lt.s32.totalorder %v45, 31
  %vm126 = vcmp.lt.s32.totalorder %v46, 31
  %vm127 = vcmp.lt.s32.totalorder %v47, 31
  %vm128 = vcmp.lt.s32.totalorder %v48, 31
  %vm129 = vcmp.lt.s32.totalorder %v49, 31
  %vm130 = vcmp.lt.s32.totalorder %v50, 31
  %vm131 = vcmp.lt.s32.totalorder %v51, 31
  %vm132 = vcmp.lt.s32.totalorder %v52, 31
  %vm133 = vcmp.lt.s32.totalorder %v53, 31
  %vm134 = vcmp.lt.s32.totalorder %v54, 31
  %vm135 = vcmp.lt.s32.totalorder %v55, 31
  %vm136 = vcmp.lt.s32.totalorder %v56, 31
  %vm137 = vcmp.lt.s32.totalorder %v57, 31
  %vm138 = vcmp.lt.s32.totalorder %v58, 31
  %vm139 = vcmp.lt.s32.totalorder %v59, 31
  %140 = vrot.lane.b32.xlu0 %v11, 33
  %v141 = vpop.permute.xlu0 %140
  %142 = vrot.lane.b32.xlu0 %v12, 33
  %v143 = vpop.permute.xlu0 %142
  %144 = vrot.lane.b32.xlu0 %v13, 33
  %v145 = vpop.permute.xlu0 %144
  %146 = vrot.lane.b32.xlu0 %v14, 33
  %v147 = vpop.permute.xlu0 %146
  %148 = vrot.lane.b32.xlu0 %v15, 33
  %v149 = vpop.permute.xlu0 %148
  %150 = vrot.lane.b32.xlu0 %v16, 33
  %v151 = vpop.permute.xlu0 %150
  %152 = vrot.lane.b32.xlu0 %v17, 33
  %v153 = vpop.permute.xlu0 %152
  %154 = vrot.lane.b32.xlu0 %v18, 33
  %v155 = vpop.permute.xlu0 %154
  %156 = vrot.lane.b32.xlu0 %v19, 33
  %v157 = vpop.permute.xlu0 %156
  %158 = vrot.lane.b32.xlu0 %v20, 33
  %v159 = vpop.permute.xlu0 %158
  %160 = vrot.lane.b32.xlu0 %v21, 33
  %v161 = vpop.permute.xlu0 %160
  %162 = vrot.lane.b32.xlu0 %v22, 33
  %v163 = vpop.permute.xlu0 %162
  %164 = vrot.lane.b32.xlu0 %v23, 33
  %v165 = vpop.permute.xlu0 %164
  %166 = vrot.lane.b32.xlu0 %v24, 33
  %v167 = vpop.permute.xlu0 %166
  %168 = vrot.lane.b32.xlu0 %v25, 33
  %v169 = vpop.permute.xlu0 %168
  %170 = vrot.lane.b32.xlu0 %v26, 33
  %v171 = vpop.permute.xlu0 %170
  %vm172 = vcmp.lt.s32.totalorder %v28, 33
  %v173 = vsel %vm172, %v169, %v171
  %v174 = vsel %vm172, %v167, %v169
  %v175 = vsel %vm172, %v165, %v167
  %v176 = vsel %vm172, %v163, %v165
  %v177 = vsel %vm172, %v161, %v163
  %v178 = vsel %vm172, %v159, %v161
  %v179 = vsel %vm172, %v157, %v159
  %v180 = vsel %vm172, %v155, %v157
  %v181 = vsel %vm172, %v153, %v155
  %v182 = vsel %vm172, %v151, %v153
  %v183 = vsel %vm172, %v149, %v151
  %v184 = vsel %vm172, %v147, %v149
  %v185 = vsel %vm172, %v145, %v147
  %v186 = vsel %vm172, %v143, %v145
  %v187 = vsel %vm172, %v141, %v143
  %v188 = vsel %vm172, %v171, %v141
  %vm189 = vmand %vm76, %vm108
  %vm190 = vmand %vm77, %vm109
  %vm191 = vmand %vm78, %vm110
  %vm192 = vmand %vm79, %vm111
  %vm193 = vmand %vm80, %vm112
  %vm194 = vmand %vm81, %vm113
  %vm195 = vmand %vm82, %vm114
  %vm196 = vmand %vm83, %vm115
  %vm197 = vmand %vm84, %vm116
  %vm198 = vmand %vm85, %vm117
  %vm199 = vmand %vm86, %vm118
  %vm200 = vmand %vm87, %vm119
  %vm201 = vmand %vm88, %vm120
  %vm202 = vmand %vm89, %vm121
  %vm203 = vmand %vm90, %vm122
  %vm204 = vmand %vm91, %vm123
  %v205 = vsel %vm189, 1, 0
  %v206 = vsel %vm190, 1, 0
  %v207 = vsel %vm191, 1, 0
  %v208 = vsel %vm192, 1, 0
  %v209 = vsel %vm193, 1, 0
  %v210 = vsel %vm194, 1, 0
  %v211 = vsel %vm195, 1, 0
  %v212 = vsel %vm196, 1, 0
  %v213 = vsel %vm197, 1, 0
  %v214 = vsel %vm198, 1, 0
  %v215 = vsel %vm199, 1, 0
  %v216 = vsel %vm200, 1, 0
  %v217 = vsel %vm201, 1, 0
  %v218 = vsel %vm202, 1, 0
  %v219 = vsel %vm203, 1, 0
  %v220 = vsel %vm204, 1, 0
  %vm221 = vcmp.eq.s32.totalorder %v205, 1
  %vm222 = vcmp.eq.s32.totalorder %v206, 1
  %vm223 = vcmp.eq.s32.totalorder %v207, 1
  %vm224 = vcmp.eq.s32.totalorder %v208, 1
  %vm225 = vcmp.eq.s32.totalorder %v209, 1
  %vm226 = vcmp.eq.s32.totalorder %v210, 1
  %vm227 = vcmp.eq.s32.totalorder %v211, 1
  %vm228 = vcmp.eq.s32.totalorder %v212, 1
  %vm229 = vcmp.eq.s32.totalorder %v213, 1
  %vm230 = vcmp.eq.s32.totalorder %v214, 1
  %vm231 = vcmp.eq.s32.totalorder %v215, 1
  %vm232 = vcmp.eq.s32.totalorder %v216, 1
  %vm233 = vcmp.eq.s32.totalorder %v217, 1
  %vm234 = vcmp.eq.s32.totalorder %v218, 1
  %vm235 = vcmp.eq.s32.totalorder %v219, 1
  %vm236 = vcmp.eq.s32.totalorder %v220, 1
  %v237 = vsel %vm221, %v188, 0.0
  %v238 = vsel %vm222, %v187, 0.0
  %v239 = vsel %vm223, %v186, 0.0
  %v240 = vsel %vm224, %v185, 0.0
  %v241 = vsel %vm225, %v184, 0.0
  %v242 = vsel %vm226, %v183, 0.0
  %v243 = vsel %vm227, %v182, 0.0
  %v244 = vsel %vm228, %v181, 0.0
  %v245 = vsel %vm229, %v180, 0.0
  %v246 = vsel %vm230, %v179, 0.0
  %v247 = vsel %vm231, %v178, 0.0
  %v248 = vsel %vm232, %v177, 0.0
  %v249 = vsel %vm233, %v176, 0.0
  %v250 = vsel %vm234, %v175, 0.0
  %v251 = vsel %vm235, %v174, 0.0
  %v252 = vsel %vm236, %v173, 0.0
  %253 = vrot.lane.b32.xlu0 %v11, 32
  %v254 = vpop.permute.xlu0 %253
  %255 = vrot.lane.b32.xlu0 %v12, 32
  %v256 = vpop.permute.xlu0 %255
  %257 = vrot.lane.b32.xlu0 %v13, 32
  %v258 = vpop.permute.xlu0 %257
  %259 = vrot.lane.b32.xlu0 %v14, 32
  %v260 = vpop.permute.xlu0 %259
  %261 = vrot.lane.b32.xlu0 %v15, 32
  %v262 = vpop.permute.xlu0 %261
  %263 = vrot.lane.b32.xlu0 %v16, 32
  %v264 = vpop.permute.xlu0 %263
  %265 = vrot.lane.b32.xlu0 %v17, 32
  %v266 = vpop.permute.xlu0 %265
  %267 = vrot.lane.b32.xlu0 %v18, 32
  %v268 = vpop.permute.xlu0 %267
  %269 = vrot.lane.b32.xlu0 %v19, 32
  %v270 = vpop.permute.xlu0 %269
  %271 = vrot.lane.b32.xlu0 %v20, 32
  %v272 = vpop.permute.xlu0 %271
  %273 = vrot.lane.b32.xlu0 %v21, 32
  %v274 = vpop.permute.xlu0 %273
  %275 = vrot.lane.b32.xlu0 %v22, 32
  %v276 = vpop.permute.xlu0 %275
  %277 = vrot.lane.b32.xlu0 %v23, 32
  %v278 = vpop.permute.xlu0 %277
  %279 = vrot.lane.b32.xlu0 %v24, 32
  %v280 = vpop.permute.xlu0 %279
  %281 = vrot.lane.b32.xlu0 %v25, 32
  %v282 = vpop.permute.xlu0 %281
  %283 = vrot.lane.b32.xlu0 %v26, 32
  %v284 = vpop.permute.xlu0 %283
  %vm285 = vcmp.lt.s32.totalorder %v28, 32
  %v286 = vsel %vm285, %v282, %v284
  %v287 = vsel %vm285, %v280, %v282
  %v288 = vsel %vm285, %v278, %v280
  %v289 = vsel %vm285, %v276, %v278
  %v290 = vsel %vm285, %v274, %v276
  %v291 = vsel %vm285, %v272, %v274
  %v292 = vsel %vm285, %v270, %v272
  %v293 = vsel %vm285, %v268, %v270
  %v294 = vsel %vm285, %v266, %v268
  %v295 = vsel %vm285, %v264, %v266
  %v296 = vsel %vm285, %v262, %v264
  %v297 = vsel %vm285, %v260, %v262
  %v298 = vsel %vm285, %v258, %v260
  %v299 = vsel %vm285, %v256, %v258
  %v300 = vsel %vm285, %v254, %v256
  %v301 = vsel %vm285, %v284, %v254
  %v302 = vsel %vm76, 1, 0
  %v303 = vsel %vm77, 1, 0
  %v304 = vsel %vm78, 1, 0
  %v305 = vsel %vm79, 1, 0
  %v306 = vsel %vm80, 1, 0
  %v307 = vsel %vm81, 1, 0
  %v308 = vsel %vm82, 1, 0
  %v309 = vsel %vm83, 1, 0
  %v310 = vsel %vm84, 1, 0
  %v311 = vsel %vm85, 1, 0
  %v312 = vsel %vm86, 1, 0
  %v313 = vsel %vm87, 1, 0
  %v314 = vsel %vm88, 1, 0
  %v315 = vsel %vm89, 1, 0
  %v316 = vsel %vm90, 1, 0
  %v317 = vsel %vm91, 1, 0
  %vm318 = vcmp.eq.s32.totalorder %v302, 1
  %vm319 = vcmp.eq.s32.totalorder %v303, 1
  %vm320 = vcmp.eq.s32.totalorder %v304, 1
  %vm321 = vcmp.eq.s32.totalorder %v305, 1
  %vm322 = vcmp.eq.s32.totalorder %v306, 1
  %vm323 = vcmp.eq.s32.totalorder %v307, 1
  %vm324 = vcmp.eq.s32.totalorder %v308, 1
  %vm325 = vcmp.eq.s32.totalorder %v309, 1
  %vm326 = vcmp.eq.s32.totalorder %v310, 1
  %vm327 = vcmp.eq.s32.totalorder %v311, 1
  %vm328 = vcmp.eq.s32.totalorder %v312, 1
  %vm329 = vcmp.eq.s32.totalorder %v313, 1
  %vm330 = vcmp.eq.s32.totalorder %v314, 1
  %vm331 = vcmp.eq.s32.totalorder %v315, 1
  %vm332 = vcmp.eq.s32.totalorder %v316, 1
  %vm333 = vcmp.eq.s32.totalorder %v317, 1
  %v334 = vsel %vm318, %v301, 0.0
  %v335 = vsel %vm319, %v300, 0.0
  %v336 = vsel %vm320, %v299, 0.0
  %v337 = vsel %vm321, %v298, 0.0
  %v338 = vsel %vm322, %v297, 0.0
  %v339 = vsel %vm323, %v296, 0.0
  %v340 = vsel %vm324, %v295, 0.0
  %v341 = vsel %vm325, %v294, 0.0
  %v342 = vsel %vm326, %v293, 0.0
  %v343 = vsel %vm327, %v292, 0.0
  %v344 = vsel %vm328, %v291, 0.0
  %v345 = vsel %vm329, %v290, 0.0
  %v346 = vsel %vm330, %v289, 0.0
  %v347 = vsel %vm331, %v288, 0.0
  %v348 = vsel %vm332, %v287, 0.0
  %v349 = vsel %vm333, %v286, 0.0
  %350 = vrot.lane.b32.xlu0 %v11, 31
  %v351 = vpop.permute.xlu0 %350
  %352 = vrot.lane.b32.xlu0 %v12, 31
  %v353 = vpop.permute.xlu0 %352
  %354 = vrot.lane.b32.xlu0 %v13, 31
  %v355 = vpop.permute.xlu0 %354
  %356 = vrot.lane.b32.xlu0 %v14, 31
  %v357 = vpop.permute.xlu0 %356
  %358 = vrot.lane.b32.xlu0 %v15, 31
  %v359 = vpop.permute.xlu0 %358
  %360 = vrot.lane.b32.xlu0 %v16, 31
  %v361 = vpop.permute.xlu0 %360
  %362 = vrot.lane.b32.xlu0 %v17, 31
  %v363 = vpop.permute.xlu0 %362
  %364 = vrot.lane.b32.xlu0 %v18, 31
  %v365 = vpop.permute.xlu0 %364
  %366 = vrot.lane.b32.xlu0 %v19, 31
  %v367 = vpop.permute.xlu0 %366
  %368 = vrot.lane.b32.xlu0 %v20, 31
  %v369 = vpop.permute.xlu0 %368
  %370 = vrot.lane.b32.xlu0 %v21, 31
  %v371 = vpop.permute.xlu0 %370
  %372 = vrot.lane.b32.xlu0 %v22, 31
  %v373 = vpop.permute.xlu0 %372
  %374 = vrot.lane.b32.xlu0 %v23, 31
  %v375 = vpop.permute.xlu0 %374
  %376 = vrot.lane.b32.xlu0 %v24, 31
  %v377 = vpop.permute.xlu0 %376
  %378 = vrot.lane.b32.xlu0 %v25, 31
  %v379 = vpop.permute.xlu0 %378
  %380 = vrot.lane.b32.xlu0 %v26, 31
  %v381 = vpop.permute.xlu0 %380
  %vm382 = vcmp.lt.s32.totalorder %v28, 31
  %v383 = vsel %vm382, %v379, %v381
  %v384 = vsel %vm382, %v377, %v379
  %v385 = vsel %vm382, %v375, %v377
  %v386 = vsel %vm382, %v373, %v375
  %v387 = vsel %vm382, %v371, %v373
  %v388 = vsel %vm382, %v369, %v371
  %v389 = vsel %vm382, %v367, %v369
  %v390 = vsel %vm382, %v365, %v367
  %v391 = vsel %vm382, %v363, %v365
  %v392 = vsel %vm382, %v361, %v363
  %v393 = vsel %vm382, %v359, %v361
  %v394 = vsel %vm382, %v357, %v359
  %v395 = vsel %vm382, %v355, %v357
  %v396 = vsel %vm382, %v353, %v355
  %v397 = vsel %vm382, %v351, %v353
  %v398 = vsel %vm382, %v381, %v351
  %vm399 = vmand %vm76, %vm124
  %vm400 = vmand %vm77, %vm125
  %vm401 = vmand %vm78, %vm126
  %vm402 = vmand %vm79, %vm127
  %vm403 = vmand %vm80, %vm128
  %vm404 = vmand %vm81, %vm129
  %vm405 = vmand %vm82, %vm130
  %vm406 = vmand %vm83, %vm131
  %vm407 = vmand %vm84, %vm132
  %vm408 = vmand %vm85, %vm133
  %vm409 = vmand %vm86, %vm134
  %vm410 = vmand %vm87, %vm135
  %vm411 = vmand %vm88, %vm136
  %vm412 = vmand %vm89, %vm137
  %vm413 = vmand %vm90, %vm138
  %vm414 = vmand %vm91, %vm139
  %v415 = vsel %vm399, 1, 0
  %v416 = vsel %vm400, 1, 0
  %v417 = vsel %vm401, 1, 0
  %v418 = vsel %vm402, 1, 0
  %v419 = vsel %vm403, 1, 0
  %v420 = vsel %vm404, 1, 0
  %v421 = vsel %vm405, 1, 0
  %v422 = vsel %vm406, 1, 0
  %v423 = vsel %vm407, 1, 0
  %v424 = vsel %vm408, 1, 0
  %v425 = vsel %vm409, 1, 0
  %v426 = vsel %vm410, 1, 0
  %v427 = vsel %vm411, 1, 0
  %v428 = vsel %vm412, 1, 0
  %v429 = vsel %vm413, 1, 0
  %v430 = vsel %vm414, 1, 0
  %vm431 = vcmp.eq.s32.totalorder %v415, 1
  %vm432 = vcmp.eq.s32.totalorder %v416, 1
  %vm433 = vcmp.eq.s32.totalorder %v417, 1
  %vm434 = vcmp.eq.s32.totalorder %v418, 1
  %vm435 = vcmp.eq.s32.totalorder %v419, 1
  %vm436 = vcmp.eq.s32.totalorder %v420, 1
  %vm437 = vcmp.eq.s32.totalorder %v421, 1
  %vm438 = vcmp.eq.s32.totalorder %v422, 1
  %vm439 = vcmp.eq.s32.totalorder %v423, 1
  %vm440 = vcmp.eq.s32.totalorder %v424, 1
  %vm441 = vcmp.eq.s32.totalorder %v425, 1
  %vm442 = vcmp.eq.s32.totalorder %v426, 1
  %vm443 = vcmp.eq.s32.totalorder %v427, 1
  %vm444 = vcmp.eq.s32.totalorder %v428, 1
  %vm445 = vcmp.eq.s32.totalorder %v429, 1
  %vm446 = vcmp.eq.s32.totalorder %v430, 1
  %v447 = vsel %vm431, %v398, 0.0
  %v448 = vsel %vm432, %v397, 0.0
  %v449 = vsel %vm433, %v396, 0.0
  %v450 = vsel %vm434, %v395, 0.0
  %v451 = vsel %vm435, %v394, 0.0
  %v452 = vsel %vm436, %v393, 0.0
  %v453 = vsel %vm437, %v392, 0.0
  %v454 = vsel %vm438, %v391, 0.0
  %v455 = vsel %vm439, %v390, 0.0
  %v456 = vsel %vm440, %v389, 0.0
  %v457 = vsel %vm441, %v388, 0.0
  %v458 = vsel %vm442, %v387, 0.0
  %v459 = vsel %vm443, %v386, 0.0
  %v460 = vsel %vm444, %v385, 0.0
  %v461 = vsel %vm445, %v384, 0.0
  %v462 = vsel %vm446, %v383, 0.0
  %463 = vrot.lane.b32.xlu0 %v11, 1
  %v464 = vpop.permute.xlu0 %463
  %465 = vrot.lane.b32.xlu0 %v12, 1
  %v466 = vpop.permute.xlu0 %465
  %467 = vrot.lane.b32.xlu0 %v13, 1
  %v468 = vpop.permute.xlu0 %467
  %469 = vrot.lane.b32.xlu0 %v14, 1
  %v470 = vpop.permute.xlu0 %469
  %471 = vrot.lane.b32.xlu0 %v15, 1
  %v472 = vpop.permute.xlu0 %471
  %473 = vrot.lane.b32.xlu0 %v16, 1
  %v474 = vpop.permute.xlu0 %473
  %475 = vrot.lane.b32.xlu0 %v17, 1
  %v476 = vpop.permute.xlu0 %475
  %477 = vrot.lane.b32.xlu0 %v18, 1
  %v478 = vpop.permute.xlu0 %477
  %479 = vrot.lane.b32.xlu0 %v19, 1
  %v480 = vpop.permute.xlu0 %479
  %481 = vrot.lane.b32.xlu0 %v20, 1
  %v482 = vpop.permute.xlu0 %481
  %483 = vrot.lane.b32.xlu0 %v21, 1
  %v484 = vpop.permute.xlu0 %483
  %485 = vrot.lane.b32.xlu0 %v22, 1
  %v486 = vpop.permute.xlu0 %485
  %487 = vrot.lane.b32.xlu0 %v23, 1
  %v488 = vpop.permute.xlu0 %487
  %489 = vrot.lane.b32.xlu0 %v24, 1
  %v490 = vpop.permute.xlu0 %489
  %491 = vrot.lane.b32.xlu0 %v25, 1
  %v492 = vpop.permute.xlu0 %491
  %493 = vrot.lane.b32.xlu0 %v26, 1
  %v494 = vpop.permute.xlu0 %493
  %vm495 = vcmp.lt.s32.totalorder %v28, 1
  %v496 = vsel %vm495, %v492, %v494
  %v497 = vsel %vm495, %v490, %v492
  %v498 = vsel %vm495, %v488, %v490
  %v499 = vsel %vm495, %v486, %v488
  %v500 = vsel %vm495, %v484, %v486
  %v501 = vsel %vm495, %v482, %v484
  %v502 = vsel %vm495, %v480, %v482
  %v503 = vsel %vm495, %v478, %v480
  %v504 = vsel %vm495, %v476, %v478
  %v505 = vsel %vm495, %v474, %v476
  %v506 = vsel %vm495, %v472, %v474
  %v507 = vsel %vm495, %v470, %v472
  %v508 = vsel %vm495, %v468, %v470
  %v509 = vsel %vm495, %v466, %v468
  %v510 = vsel %vm495, %v464, %v466
  %v511 = vsel %vm495, %v494, %v464
  %v512 = vsel %vm108, 1, 0
  %v513 = vsel %vm109, 1, 0
  %v514 = vsel %vm110, 1, 0
  %v515 = vsel %vm111, 1, 0
  %v516 = vsel %vm112, 1, 0
  %v517 = vsel %vm113, 1, 0
  %v518 = vsel %vm114, 1, 0
  %v519 = vsel %vm115, 1, 0
  %v520 = vsel %vm116, 1, 0
  %v521 = vsel %vm117, 1, 0
  %v522 = vsel %vm118, 1, 0
  %v523 = vsel %vm119, 1, 0
  %v524 = vsel %vm120, 1, 0
  %v525 = vsel %vm121, 1, 0
  %v526 = vsel %vm122, 1, 0
  %v527 = vsel %vm123, 1, 0
  %vm528 = vcmp.eq.s32.totalorder %v512, 1
  %vm529 = vcmp.eq.s32.totalorder %v513, 1
  %vm530 = vcmp.eq.s32.totalorder %v514, 1
  %vm531 = vcmp.eq.s32.totalorder %v515, 1
  %vm532 = vcmp.eq.s32.totalorder %v516, 1
  %vm533 = vcmp.eq.s32.totalorder %v517, 1
  %vm534 = vcmp.eq.s32.totalorder %v518, 1
  %vm535 = vcmp.eq.s32.totalorder %v519, 1
  %vm536 = vcmp.eq.s32.totalorder %v520, 1
  %vm537 = vcmp.eq.s32.totalorder %v521, 1
  %vm538 = vcmp.eq.s32.totalorder %v522, 1
  %vm539 = vcmp.eq.s32.totalorder %v523, 1
  %vm540 = vcmp.eq.s32.totalorder %v524, 1
  %vm541 = vcmp.eq.s32.totalorder %v525, 1
  %vm542 = vcmp.eq.s32.totalorder %v526, 1
  %vm543 = vcmp.eq.s32.totalorder %v527, 1
  %v544 = vsel %vm528, %v511, 0.0
  %v545 = vsel %vm529, %v510, 0.0
  %v546 = vsel %vm530, %v509, 0.0
  %v547 = vsel %vm531, %v508, 0.0
  %v548 = vsel %vm532, %v507, 0.0
  %v549 = vsel %vm533, %v506, 0.0
  %v550 = vsel %vm534, %v505, 0.0
  %v551 = vsel %vm535, %v504, 0.0
  %v552 = vsel %vm536, %v503, 0.0
  %v553 = vsel %vm537, %v502, 0.0
  %v554 = vsel %vm538, %v501, 0.0
  %v555 = vsel %vm539, %v500, 0.0
  %v556 = vsel %vm540, %v499, 0.0
  %v557 = vsel %vm541, %v498, 0.0
  %v558 = vsel %vm542, %v497, 0.0
  %v559 = vsel %vm543, %v496, 0.0
  %560 = vrot.lane.b32.xlu0 %v11, 127
  %v561 = vpop.permute.xlu0 %560
  %562 = vrot.lane.b32.xlu0 %v12, 127
  %v563 = vpop.permute.xlu0 %562
  %564 = vrot.lane.b32.xlu0 %v13, 127
  %v565 = vpop.permute.xlu0 %564
  %566 = vrot.lane.b32.xlu0 %v14, 127
  %v567 = vpop.permute.xlu0 %566
  %568 = vrot.lane.b32.xlu0 %v15, 127
  %v569 = vpop.permute.xlu0 %568
  %570 = vrot.lane.b32.xlu0 %v16, 127
  %v571 = vpop.permute.xlu0 %570
  %572 = vrot.lane.b32.xlu0 %v17, 127
  %v573 = vpop.permute.xlu0 %572
  %574 = vrot.lane.b32.xlu0 %v18, 127
  %v575 = vpop.permute.xlu0 %574
  %576 = vrot.lane.b32.xlu0 %v19, 127
  %v577 = vpop.permute.xlu0 %576
  %578 = vrot.lane.b32.xlu0 %v20, 127
  %v579 = vpop.permute.xlu0 %578
  %580 = vrot.lane.b32.xlu0 %v21, 127
  %v581 = vpop.permute.xlu0 %580
  %582 = vrot.lane.b32.xlu0 %v22, 127
  %v583 = vpop.permute.xlu0 %582
  %584 = vrot.lane.b32.xlu0 %v23, 127
  %v585 = vpop.permute.xlu0 %584
  %586 = vrot.lane.b32.xlu0 %v24, 127
  %v587 = vpop.permute.xlu0 %586
  %588 = vrot.lane.b32.xlu0 %v25, 127
  %v589 = vpop.permute.xlu0 %588
  %590 = vrot.lane.b32.xlu0 %v26, 127
  %v591 = vpop.permute.xlu0 %590
  %vm592 = vcmp.lt.s32.totalorder %v28, 127
  %v593 = vsel %vm592, %v589, %v591
  %v594 = vsel %vm592, %v587, %v589
  %v595 = vsel %vm592, %v585, %v587
  %v596 = vsel %vm592, %v583, %v585
  %v597 = vsel %vm592, %v581, %v583
  %v598 = vsel %vm592, %v579, %v581
  %v599 = vsel %vm592, %v577, %v579
  %v600 = vsel %vm592, %v575, %v577
  %v601 = vsel %vm592, %v573, %v575
  %v602 = vsel %vm592, %v571, %v573
  %v603 = vsel %vm592, %v569, %v571
  %v604 = vsel %vm592, %v567, %v569
  %v605 = vsel %vm592, %v565, %v567
  %v606 = vsel %vm592, %v563, %v565
  %v607 = vsel %vm592, %v561, %v563
  %v608 = vsel %vm592, %v591, %v561
  %v609 = vsel %vm124, 1, 0
  %v610 = vsel %vm125, 1, 0
  %v611 = vsel %vm126, 1, 0
  %v612 = vsel %vm127, 1, 0
  %v613 = vsel %vm128, 1, 0
  %v614 = vsel %vm129, 1, 0
  %v615 = vsel %vm130, 1, 0
  %v616 = vsel %vm131, 1, 0
  %v617 = vsel %vm132, 1, 0
  %v618 = vsel %vm133, 1, 0
  %v619 = vsel %vm134, 1, 0
  %v620 = vsel %vm135, 1, 0
  %v621 = vsel %vm136, 1, 0
  %v622 = vsel %vm137, 1, 0
  %v623 = vsel %vm138, 1, 0
  %v624 = vsel %vm139, 1, 0
  %vm625 = vcmp.eq.s32.totalorder %v609, 1
  %vm626 = vcmp.eq.s32.totalorder %v610, 1
  %vm627 = vcmp.eq.s32.totalorder %v611, 1
  %vm628 = vcmp.eq.s32.totalorder %v612, 1
  %vm629 = vcmp.eq.s32.totalorder %v613, 1
  %vm630 = vcmp.eq.s32.totalorder %v614, 1
  %vm631 = vcmp.eq.s32.totalorder %v615, 1
  %vm632 = vcmp.eq.s32.totalorder %v616, 1
  %vm633 = vcmp.eq.s32.totalorder %v617, 1
  %vm634 = vcmp.eq.s32.totalorder %v618, 1
  %vm635 = vcmp.eq.s32.totalorder %v619, 1
  %vm636 = vcmp.eq.s32.totalorder %v620, 1
  %vm637 = vcmp.eq.s32.totalorder %v621, 1
  %vm638 = vcmp.eq.s32.totalorder %v622, 1
  %vm639 = vcmp.eq.s32.totalorder %v623, 1
  %vm640 = vcmp.eq.s32.totalorder %v624, 1
  %v641 = vsel %vm625, %v607, 0.0
  %v642 = vsel %vm626, %v606, 0.0
  %v643 = vsel %vm627, %v605, 0.0
  %v644 = vsel %vm628, %v604, 0.0
  %v645 = vsel %vm629, %v603, 0.0
  %v646 = vsel %vm630, %v602, 0.0
  %v647 = vsel %vm631, %v601, 0.0
  %v648 = vsel %vm632, %v600, 0.0
  %v649 = vsel %vm633, %v599, 0.0
  %v650 = vsel %vm634, %v598, 0.0
  %v651 = vsel %vm635, %v597, 0.0
  %v652 = vsel %vm636, %v596, 0.0
  %v653 = vsel %vm637, %v595, 0.0
  %v654 = vsel %vm638, %v594, 0.0
  %v655 = vsel %vm639, %v593, 0.0
  %v656 = vsel %vm640, %v608, 0.0
  %657 = vrot.lane.b32.xlu0 %v11, 97
  %v658 = vpop.permute.xlu0 %657
  %659 = vrot.lane.b32.xlu0 %v12, 97
  %v660 = vpop.permute.xlu0 %659
  %661 = vrot.lane.b32.xlu0 %v13, 97
  %v662 = vpop.permute.xlu0 %661
  %663 = vrot.lane.b32.xlu0 %v14, 97
  %v664 = vpop.permute.xlu0 %663
  %665 = vrot.lane.b32.xlu0 %v15, 97
  %v666 = vpop.permute.xlu0 %665
  %667 = vrot.lane.b32.xlu0 %v16, 97
  %v668 = vpop.permute.xlu0 %667
  %669 = vrot.lane.b32.xlu0 %v17, 97
  %v670 = vpop.permute.xlu0 %669
  %671 = vrot.lane.b32.xlu0 %v18, 97
  %v672 = vpop.permute.xlu0 %671
  %673 = vrot.lane.b32.xlu0 %v19, 97
  %v674 = vpop.permute.xlu0 %673
  %675 = vrot.lane.b32.xlu0 %v20, 97
  %v676 = vpop.permute.xlu0 %675
  %677 = vrot.lane.b32.xlu0 %v21, 97
  %v678 = vpop.permute.xlu0 %677
  %679 = vrot.lane.b32.xlu0 %v22, 97
  %v680 = vpop.permute.xlu0 %679
  %681 = vrot.lane.b32.xlu0 %v23, 97
  %v682 = vpop.permute.xlu0 %681
  %683 = vrot.lane.b32.xlu0 %v24, 97
  %v684 = vpop.permute.xlu0 %683
  %685 = vrot.lane.b32.xlu0 %v25, 97
  %v686 = vpop.permute.xlu0 %685
  %687 = vrot.lane.b32.xlu0 %v26, 97
  %v688 = vpop.permute.xlu0 %687
  %vm689 = vcmp.lt.s32.totalorder %v28, 97
  %v690 = vsel %vm689, %v686, %v688
  %v691 = vsel %vm689, %v684, %v686
  %v692 = vsel %vm689, %v682, %v684
  %v693 = vsel %vm689, %v680, %v682
  %v694 = vsel %vm689, %v678, %v680
  %v695 = vsel %vm689, %v676, %v678
  %v696 = vsel %vm689, %v674, %v676
  %v697 = vsel %vm689, %v672, %v674
  %v698 = vsel %vm689, %v670, %v672
  %v699 = vsel %vm689, %v668, %v670
  %v700 = vsel %vm689, %v666, %v668
  %v701 = vsel %vm689, %v664, %v666
  %v702 = vsel %vm689, %v662, %v664
  %v703 = vsel %vm689, %v660, %v662
  %v704 = vsel %vm689, %v658, %v660
  %v705 = vsel %vm689, %v688, %v658
  %vm706 = vmand %vm92, %vm108
  %vm707 = vmand %vm93, %vm109
  %vm708 = vmand %vm94, %vm110
  %vm709 = vmand %vm95, %vm111
  %vm710 = vmand %vm96, %vm112
  %vm711 = vmand %vm97, %vm113
  %vm712 = vmand %vm98, %vm114
  %vm713 = vmand %vm99, %vm115
  %vm714 = vmand %vm100, %vm116
  %vm715 = vmand %vm101, %vm117
  %vm716 = vmand %vm102, %vm118
  %vm717 = vmand %vm103, %vm119
  %vm718 = vmand %vm104, %vm120
  %vm719 = vmand %vm105, %vm121
  %vm720 = vmand %vm106, %vm122
  %vm721 = vmand %vm107, %vm123
  %v722 = vsel %vm706, 1, 0
  %v723 = vsel %vm707, 1, 0
  %v724 = vsel %vm708, 1, 0
  %v725 = vsel %vm709, 1, 0
  %v726 = vsel %vm710, 1, 0
  %v727 = vsel %vm711, 1, 0
  %v728 = vsel %vm712, 1, 0
  %v729 = vsel %vm713, 1, 0
  %v730 = vsel %vm714, 1, 0
  %v731 = vsel %vm715, 1, 0
  %v732 = vsel %vm716, 1, 0
  %v733 = vsel %vm717, 1, 0
  %v734 = vsel %vm718, 1, 0
  %v735 = vsel %vm719, 1, 0
  %v736 = vsel %vm720, 1, 0
  %v737 = vsel %vm721, 1, 0
  %vm738 = vcmp.eq.s32.totalorder %v722, 1
  %vm739 = vcmp.eq.s32.totalorder %v723, 1
  %vm740 = vcmp.eq.s32.totalorder %v724, 1
  %vm741 = vcmp.eq.s32.totalorder %v725, 1
  %vm742 = vcmp.eq.s32.totalorder %v726, 1
  %vm743 = vcmp.eq.s32.totalorder %v727, 1
  %vm744 = vcmp.eq.s32.totalorder %v728, 1
  %vm745 = vcmp.eq.s32.totalorder %v729, 1
  %vm746 = vcmp.eq.s32.totalorder %v730, 1
  %vm747 = vcmp.eq.s32.totalorder %v731, 1
  %vm748 = vcmp.eq.s32.totalorder %v732, 1
  %vm749 = vcmp.eq.s32.totalorder %v733, 1
  %vm750 = vcmp.eq.s32.totalorder %v734, 1
  %vm751 = vcmp.eq.s32.totalorder %v735, 1
  %vm752 = vcmp.eq.s32.totalorder %v736, 1
  %vm753 = vcmp.eq.s32.totalorder %v737, 1
  %v754 = vsel %vm738, %v704, 0.0
  %v755 = vsel %vm739, %v703, 0.0
  %v756 = vsel %vm740, %v702, 0.0
  %v757 = vsel %vm741, %v701, 0.0
  %v758 = vsel %vm742, %v700, 0.0
  %v759 = vsel %vm743, %v699, 0.0
  %v760 = vsel %vm744, %v698, 0.0
  %v761 = vsel %vm745, %v697, 0.0
  %v762 = vsel %vm746, %v696, 0.0
  %v763 = vsel %vm747, %v695, 0.0
  %v764 = vsel %vm748, %v694, 0.0
  %v765 = vsel %vm749, %v693, 0.0
  %v766 = vsel %vm750, %v692, 0.0
  %v767 = vsel %vm751, %v691, 0.0
  %v768 = vsel %vm752, %v690, 0.0
  %v769 = vsel %vm753, %v705, 0.0
  %770 = vrot.lane.b32.xlu0 %v11, 96
  %v771 = vpop.permute.xlu0 %770
  %772 = vrot.lane.b32.xlu0 %v12, 96
  %v773 = vpop.permute.xlu0 %772
  %774 = vrot.lane.b32.xlu0 %v13, 96
  %v775 = vpop.permute.xlu0 %774
  %776 = vrot.lane.b32.xlu0 %v14, 96
  %v777 = vpop.permute.xlu0 %776
  %778 = vrot.lane.b32.xlu0 %v15, 96
  %v779 = vpop.permute.xlu0 %778
  %780 = vrot.lane.b32.xlu0 %v16, 96
  %v781 = vpop.permute.xlu0 %780
  %782 = vrot.lane.b32.xlu0 %v17, 96
  %v783 = vpop.permute.xlu0 %782
  %784 = vrot.lane.b32.xlu0 %v18, 96
  %v785 = vpop.permute.xlu0 %784
  %786 = vrot.lane.b32.xlu0 %v19, 96
  %v787 = vpop.permute.xlu0 %786
  %788 = vrot.lane.b32.xlu0 %v20, 96
  %v789 = vpop.permute.xlu0 %788
  %790 = vrot.lane.b32.xlu0 %v21, 96
  %v791 = vpop.permute.xlu0 %790
  %792 = vrot.lane.b32.xlu0 %v22, 96
  %v793 = vpop.permute.xlu0 %792
  %794 = vrot.lane.b32.xlu0 %v23, 96
  %v795 = vpop.permute.xlu0 %794
  %796 = vrot.lane.b32.xlu0 %v24, 96
  %v797 = vpop.permute.xlu0 %796
  %798 = vrot.lane.b32.xlu0 %v25, 96
  %v799 = vpop.permute.xlu0 %798
  %800 = vrot.lane.b32.xlu0 %v26, 96
  %v801 = vpop.permute.xlu0 %800
  %vm802 = vcmp.lt.s32.totalorder %v28, 96
  %v803 = vsel %vm802, %v799, %v801
  %v804 = vsel %vm802, %v797, %v799
  %v805 = vsel %vm802, %v795, %v797
  %v806 = vsel %vm802, %v793, %v795
  %v807 = vsel %vm802, %v791, %v793
  %v808 = vsel %vm802, %v789, %v791
  %v809 = vsel %vm802, %v787, %v789
  %v810 = vsel %vm802, %v785, %v787
  %v811 = vsel %vm802, %v783, %v785
  %v812 = vsel %vm802, %v781, %v783
  %v813 = vsel %vm802, %v779, %v781
  %v814 = vsel %vm802, %v777, %v779
  %v815 = vsel %vm802, %v775, %v777
  %v816 = vsel %vm802, %v773, %v775
  %v817 = vsel %vm802, %v771, %v773
  %v818 = vsel %vm802, %v801, %v771
  %v819 = vsel %vm92, 1, 0
  %v820 = vsel %vm93, 1, 0
  %v821 = vsel %vm94, 1, 0
  %v822 = vsel %vm95, 1, 0
  %v823 = vsel %vm96, 1, 0
  %v824 = vsel %vm97, 1, 0
  %v825 = vsel %vm98, 1, 0
  %v826 = vsel %vm99, 1, 0
  %v827 = vsel %vm100, 1, 0
  %v828 = vsel %vm101, 1, 0
  %v829 = vsel %vm102, 1, 0
  %v830 = vsel %vm103, 1, 0
  %v831 = vsel %vm104, 1, 0
  %v832 = vsel %vm105, 1, 0
  %v833 = vsel %vm106, 1, 0
  %v834 = vsel %vm107, 1, 0
  %vm835 = vcmp.eq.s32.totalorder %v819, 1
  %vm836 = vcmp.eq.s32.totalorder %v820, 1
  %vm837 = vcmp.eq.s32.totalorder %v821, 1
  %vm838 = vcmp.eq.s32.totalorder %v822, 1
  %vm839 = vcmp.eq.s32.totalorder %v823, 1
  %vm840 = vcmp.eq.s32.totalorder %v824, 1
  %vm841 = vcmp.eq.s32.totalorder %v825, 1
  %vm842 = vcmp.eq.s32.totalorder %v826, 1
  %vm843 = vcmp.eq.s32.totalorder %v827, 1
  %vm844 = vcmp.eq.s32.totalorder %v828, 1
  %vm845 = vcmp.eq.s32.totalorder %v829, 1
  %vm846 = vcmp.eq.s32.totalorder %v830, 1
  %vm847 = vcmp.eq.s32.totalorder %v831, 1
  %vm848 = vcmp.eq.s32.totalorder %v832, 1
  %vm849 = vcmp.eq.s32.totalorder %v833, 1
  %vm850 = vcmp.eq.s32.totalorder %v834, 1
  %v851 = vsel %vm835, %v817, 0.0
  %v852 = vsel %vm836, %v816, 0.0
  %v853 = vsel %vm837, %v815, 0.0
  %v854 = vsel %vm838, %v814, 0.0
  %v855 = vsel %vm839, %v813, 0.0
  %v856 = vsel %vm840, %v812, 0.0
  %v857 = vsel %vm841, %v811, 0.0
  %v858 = vsel %vm842, %v810, 0.0
  %v859 = vsel %vm843, %v809, 0.0
  %v860 = vsel %vm844, %v808, 0.0
  %v861 = vsel %vm845, %v807, 0.0
  %v862 = vsel %vm846, %v806, 0.0
  %v863 = vsel %vm847, %v805, 0.0
  %v864 = vsel %vm848, %v804, 0.0
  %v865 = vsel %vm849, %v803, 0.0
  %v866 = vsel %vm850, %v818, 0.0
  %867 = vrot.lane.b32.xlu0 %v11, 95
  %v868 = vpop.permute.xlu0 %867
  %869 = vrot.lane.b32.xlu0 %v12, 95
  %v870 = vpop.permute.xlu0 %869
  %871 = vrot.lane.b32.xlu0 %v13, 95
  %v872 = vpop.permute.xlu0 %871
  %873 = vrot.lane.b32.xlu0 %v14, 95
  %v874 = vpop.permute.xlu0 %873
  %875 = vrot.lane.b32.xlu0 %v15, 95
  %v876 = vpop.permute.xlu0 %875
  %877 = vrot.lane.b32.xlu0 %v16, 95
  %v878 = vpop.permute.xlu0 %877
  %879 = vrot.lane.b32.xlu0 %v17, 95
  %v880 = vpop.permute.xlu0 %879
  %881 = vrot.lane.b32.xlu0 %v18, 95
  %v882 = vpop.permute.xlu0 %881
  %883 = vrot.lane.b32.xlu0 %v19, 95
  %v884 = vpop.permute.xlu0 %883
  %885 = vrot.lane.b32.xlu0 %v20, 95
  %v886 = vpop.permute.xlu0 %885
  %887 = vrot.lane.b32.xlu0 %v21, 95
  %v888 = vpop.permute.xlu0 %887
  %889 = vrot.lane.b32.xlu0 %v22, 95
  %v890 = vpop.permute.xlu0 %889
  %891 = vrot.lane.b32.xlu0 %v23, 95
  %v892 = vpop.permute.xlu0 %891
  %893 = vrot.lane.b32.xlu0 %v24, 95
  %v894 = vpop.permute.xlu0 %893
  %895 = vrot.lane.b32.xlu0 %v25, 95
  %v896 = vpop.permute.xlu0 %895
  %897 = vrot.lane.b32.xlu0 %v26, 95
  %v898 = vpop.permute.xlu0 %897
  %vm899 = vcmp.lt.s32.totalorder %v28, 95
  %v900 = vsel %vm899, %v896, %v898
  %v901 = vsel %vm899, %v894, %v896
  %v902 = vsel %vm899, %v892, %v894
  %v903 = vsel %vm899, %v890, %v892
  %v904 = vsel %vm899, %v888, %v890
  %v905 = vsel %vm899, %v886, %v888
  %v906 = vsel %vm899, %v884, %v886
  %v907 = vsel %vm899, %v882, %v884
  %v908 = vsel %vm899, %v880, %v882
  %v909 = vsel %vm899, %v878, %v880
  %v910 = vsel %vm899, %v876, %v878
  %v911 = vsel %vm899, %v874, %v876
  %v912 = vsel %vm899, %v872, %v874
  %v913 = vsel %vm899, %v870, %v872
  %v914 = vsel %vm899, %v868, %v870
  %v915 = vsel %vm899, %v898, %v868
  %vm916 = vmand %vm92, %vm124
  %vm917 = vmand %vm93, %vm125
  %vm918 = vmand %vm94, %vm126
  %vm919 = vmand %vm95, %vm127
  %vm920 = vmand %vm96, %vm128
  %vm921 = vmand %vm97, %vm129
  %vm922 = vmand %vm98, %vm130
  %vm923 = vmand %vm99, %vm131
  %vm924 = vmand %vm100, %vm132
  %vm925 = vmand %vm101, %vm133
  %vm926 = vmand %vm102, %vm134
  %vm927 = vmand %vm103, %vm135
  %vm928 = vmand %vm104, %vm136
  %vm929 = vmand %vm105, %vm137
  %vm930 = vmand %vm106, %vm138
  %vm931 = vmand %vm107, %vm139
  %v932 = vsel %vm916, 1, 0
  %v933 = vsel %vm917, 1, 0
  %v934 = vsel %vm918, 1, 0
  %v935 = vsel %vm919, 1, 0
  %v936 = vsel %vm920, 1, 0
  %v937 = vsel %vm921, 1, 0
  %v938 = vsel %vm922, 1, 0
  %v939 = vsel %vm923, 1, 0
  %v940 = vsel %vm924, 1, 0
  %v941 = vsel %vm925, 1, 0
  %v942 = vsel %vm926, 1, 0
  %v943 = vsel %vm927, 1, 0
  %v944 = vsel %vm928, 1, 0
  %v945 = vsel %vm929, 1, 0
  %v946 = vsel %vm930, 1, 0
  %v947 = vsel %vm931, 1, 0
  %vm948 = vcmp.eq.s32.totalorder %v932, 1
  %vm949 = vcmp.eq.s32.totalorder %v933, 1
  %vm950 = vcmp.eq.s32.totalorder %v934, 1
  %vm951 = vcmp.eq.s32.totalorder %v935, 1
  %vm952 = vcmp.eq.s32.totalorder %v936, 1
  %vm953 = vcmp.eq.s32.totalorder %v937, 1
  %vm954 = vcmp.eq.s32.totalorder %v938, 1
  %vm955 = vcmp.eq.s32.totalorder %v939, 1
  %vm956 = vcmp.eq.s32.totalorder %v940, 1
  %vm957 = vcmp.eq.s32.totalorder %v941, 1
  %vm958 = vcmp.eq.s32.totalorder %v942, 1
  %vm959 = vcmp.eq.s32.totalorder %v943, 1
  %vm960 = vcmp.eq.s32.totalorder %v944, 1
  %vm961 = vcmp.eq.s32.totalorder %v945, 1
  %vm962 = vcmp.eq.s32.totalorder %v946, 1
  %vm963 = vcmp.eq.s32.totalorder %v947, 1
  %v964 = vsel %vm948, %v914, 0.0
  %v965 = vsel %vm949, %v913, 0.0
  %v966 = vsel %vm950, %v912, 0.0
  %v967 = vsel %vm951, %v911, 0.0
  %v968 = vsel %vm952, %v910, 0.0
  %v969 = vsel %vm953, %v909, 0.0
  %v970 = vsel %vm954, %v908, 0.0
  %v971 = vsel %vm955, %v907, 0.0
  %v972 = vsel %vm956, %v906, 0.0
  %v973 = vsel %vm957, %v905, 0.0
  %v974 = vsel %vm958, %v904, 0.0
  %v975 = vsel %vm959, %v903, 0.0
  %v976 = vsel %vm960, %v902, 0.0
  %v977 = vsel %vm961, %v901, 0.0
  %v978 = vsel %vm962, %v900, 0.0
  %v979 = vsel %vm963, %v915, 0.0
  %v980 = vld [vmem:[%s1] sm:$0x7]
  %vm981 = vcmask 261120
  %v983 = vsel %vm981, %v980, 0
  %985 = vmatprep.subr.mxu0 0.0
  %986 = vmatpush1.msra.mxu0 0.0
  %987 = vmatprep.subr.mxu0 0.0
  %988 = vmatpush1.msra.mxu0 0.0
  %989 = vmatprep.subr.mxu0 0.0
  %990 = vmatpush1.msra.mxu0 0.0
  %991 = vmatprep.subr.mxu0 0.0
  %992 = vmatpush1.msra.mxu0 0.0
  %993 = vmatprep.subr.mxu0 0.0
  %994 = vmatpush1.msra.mxu0 0.0
  %995 = vmatprep.subr.mxu0 0.0
  %996 = vmatpush1.msra.mxu0 0.0
  %997 = vmatprep.subr.mxu0 0.0
  %998 = vmatpush1.msra.mxu0 0.0
  %999 = vmatprep.subr.mxu0 0.0
  %1000 = vmatpush1.msra.mxu0 0.0
  %1001 = vmatprep.subr.mxu0 0.0
  %1002 = vmatpush1.msra.mxu0 0.0
  %1003 = vmatprep.subr.mxu0 0.0
  %1004 = vmatpush1.msra.mxu0 0.0
  %1005 = vmatprep.subr.mxu0 0.0
  %1006 = vmatpush1.msra.mxu0 0.0
  %1007 = vmatprep.subr.mxu0 0.0
  %1008 = vmatpush1.msra.mxu0 0.0
  %1009 = vmatprep.subr.mxu0 %v238
  %1010 = vmatpush1.msra.mxu0 %v237
  %1011 = vmatprep.subr.mxu0 %v335
  %1012 = vmatpush1.msra.mxu0 %v334
  %1013 = vmatprep.subr.mxu0 %v545
  %1014 = vmatpush1.msra.mxu0 %v544
  %1015 = vmatprep.subr.mxu0 %v12
  %1016 = vmatpush1.msra.mxu0 %v11
  %1017 = vmatprep.subr.mxu0 0.0
  %1018 = vmatpush2.msra.mxu0 0.0
  %1019 = vmatprep.subr.mxu0 0.0
  %1020 = vmatpush2.msra.mxu0 0.0
  %1021 = vmatprep.subr.mxu0 0.0
  %1022 = vmatpush2.msra.mxu0 0.0
  %1023 = vmatprep.subr.mxu0 0.0
  %1024 = vmatpush2.msra.mxu0 0.0
  %1025 = vmatprep.subr.mxu0 0.0
  %1026 = vmatpush2.msra.mxu0 0.0
  %1027 = vmatprep.subr.mxu0 0.0
  %1028 = vmatpush2.msra.mxu0 0.0
  %1029 = vmatprep.subr.mxu0 0.0
  %1030 = vmatpush2.msra.mxu0 0.0
  %1031 = vmatprep.subr.mxu0 0.0
  %1032 = vmatpush2.msra.mxu0 0.0
  %1033 = vmatprep.subr.mxu0 0.0
  %1034 = vmatpush2.msra.mxu0 0.0
  %1035 = vmatprep.subr.mxu0 0.0
  %1036 = vmatpush2.msra.mxu0 0.0
  %1037 = vmatprep.subr.mxu0 0.0
  %1038 = vmatpush2.msra.mxu0 0.0
  %1039 = vmatprep.subr.mxu0 0.0
  %1040 = vmatpush2.msra.mxu0 0.0
  %1041 = vmatprep.subr.mxu0 0.0
  %1042 = vmatpush2.msra.mxu0 0.0
  %1043 = vmatprep.subr.mxu0 0.0
  %1044 = vmatpush2.msra.mxu0 0.0
  %1045 = vmatprep.subr.mxu0 0.0
  %1046 = vmatpush2.msra.mxu0 0.0
  %1047 = vmatprep.subr.mxu0 0.0
  %1048 = vmatpush2.msra.mxu0 0.0
  %1049 = vmatprep.mubr.f32.mxu0 0.0
  %1050 = vmatmul.mubr.f32.gmra.mxu0 %v983
  %v1051 = vpop.f32.mrf.mxu0
  %v1052 = vadd.f32 0.0, %v1051
  %v1053 = vpop.f32.mrf.mxu0
  %v1054 = vadd.f32 0.0, %v1053
  %1055 = vdwg.mxu0
  %1056 = vmatprep.subr.mxu0 0.0
  %1057 = vmatpush1.msra.mxu0 0.0
  %1058 = vmatprep.subr.mxu0 0.0
  %1059 = vmatpush1.msra.mxu0 0.0
  %1060 = vmatprep.subr.mxu0 0.0
  %1061 = vmatpush1.msra.mxu0 0.0
  %1062 = vmatprep.subr.mxu0 0.0
  %1063 = vmatpush1.msra.mxu0 0.0
  %1064 = vmatprep.subr.mxu0 0.0
  %1065 = vmatpush1.msra.mxu0 0.0
  %1066 = vmatprep.subr.mxu0 0.0
  %1067 = vmatpush1.msra.mxu0 0.0
  %1068 = vmatprep.subr.mxu0 0.0
  %1069 = vmatpush1.msra.mxu0 0.0
  %1070 = vmatprep.subr.mxu0 0.0
  %1071 = vmatpush1.msra.mxu0 0.0
  %1072 = vmatprep.subr.mxu0 0.0
  %1073 = vmatpush1.msra.mxu0 0.0
  %1074 = vmatprep.subr.mxu0 0.0
  %1075 = vmatpush1.msra.mxu0 0.0
  %1076 = vmatprep.subr.mxu0 0.0
  %1077 = vmatpush1.msra.mxu0 0.0
  %1078 = vmatprep.subr.mxu0 0.0
  %1079 = vmatpush1.msra.mxu0 0.0
  %1080 = vmatprep.subr.mxu0 %v240
  %1081 = vmatpush1.msra.mxu0 %v239
  %1082 = vmatprep.subr.mxu0 %v337
  %1083 = vmatpush1.msra.mxu0 %v336
  %1084 = vmatprep.subr.mxu0 %v547
  %1085 = vmatpush1.msra.mxu0 %v546
  %1086 = vmatprep.subr.mxu0 %v14
  %1087 = vmatpush1.msra.mxu0 %v13
  %1088 = vmatprep.subr.mxu0 0.0
  %1089 = vmatpush2.msra.mxu0 0.0
  %1090 = vmatprep.subr.mxu0 0.0
  %1091 = vmatpush2.msra.mxu0 0.0
  %1092 = vmatprep.subr.mxu0 0.0
  %1093 = vmatpush2.msra.mxu0 0.0
  %1094 = vmatprep.subr.mxu0 0.0
  %1095 = vmatpush2.msra.mxu0 0.0
  %1096 = vmatprep.subr.mxu0 0.0
  %1097 = vmatpush2.msra.mxu0 0.0
  %1098 = vmatprep.subr.mxu0 0.0
  %1099 = vmatpush2.msra.mxu0 0.0
  %1100 = vmatprep.subr.mxu0 0.0
  %1101 = vmatpush2.msra.mxu0 0.0
  %1102 = vmatprep.subr.mxu0 0.0
  %1103 = vmatpush2.msra.mxu0 0.0
  %1104 = vmatprep.subr.mxu0 0.0
  %1105 = vmatpush2.msra.mxu0 0.0
  %1106 = vmatprep.subr.mxu0 0.0
  %1107 = vmatpush2.msra.mxu0 0.0
  %1108 = vmatprep.subr.mxu0 0.0
  %1109 = vmatpush2.msra.mxu0 0.0
  %1110 = vmatprep.subr.mxu0 0.0
  %1111 = vmatpush2.msra.mxu0 0.0
  %1112 = vmatprep.subr.mxu0 0.0
  %1113 = vmatpush2.msra.mxu0 0.0
  %1114 = vmatprep.subr.mxu0 0.0
  %1115 = vmatpush2.msra.mxu0 0.0
  %1116 = vmatprep.subr.mxu0 0.0
  %1117 = vmatpush2.msra.mxu0 0.0
  %1118 = vmatprep.subr.mxu0 0.0
  %1119 = vmatpush2.msra.mxu0 0.0
  %1120 = vmatprep.mubr.f32.mxu0 0.0
  %1121 = vmatmul.mubr.f32.gmra.mxu0 %v983
  %v1122 = vpop.f32.mrf.mxu0
  %v1123 = vadd.f32 0.0, %v1122
  %v1124 = vpop.f32.mrf.mxu0
  %v1125 = vadd.f32 0.0, %v1124
  %1126 = vdwg.mxu0
  %1127 = vmatprep.subr.mxu0 0.0
  %1128 = vmatpush1.msra.mxu0 0.0
  %1129 = vmatprep.subr.mxu0 0.0
  %1130 = vmatpush1.msra.mxu0 0.0
  %1131 = vmatprep.subr.mxu0 0.0
  %1132 = vmatpush1.msra.mxu0 0.0
  %1133 = vmatprep.subr.mxu0 0.0
  %1134 = vmatpush1.msra.mxu0 0.0
  %1135 = vmatprep.subr.mxu0 0.0
  %1136 = vmatpush1.msra.mxu0 0.0
  %1137 = vmatprep.subr.mxu0 0.0
  %1138 = vmatpush1.msra.mxu0 0.0
  %1139 = vmatprep.subr.mxu0 0.0
  %1140 = vmatpush1.msra.mxu0 0.0
  %1141 = vmatprep.subr.mxu0 0.0
  %1142 = vmatpush1.msra.mxu0 0.0
  %1143 = vmatprep.subr.mxu0 0.0
  %1144 = vmatpush1.msra.mxu0 0.0
  %1145 = vmatprep.subr.mxu0 0.0
  %1146 = vmatpush1.msra.mxu0 0.0
  %1147 = vmatprep.subr.mxu0 0.0
  %1148 = vmatpush1.msra.mxu0 0.0
  %1149 = vmatprep.subr.mxu0 0.0
  %1150 = vmatpush1.msra.mxu0 0.0
  %1151 = vmatprep.subr.mxu0 %v242
  %1152 = vmatpush1.msra.mxu0 %v241
  %1153 = vmatprep.subr.mxu0 %v339
  %1154 = vmatpush1.msra.mxu0 %v338
  %1155 = vmatprep.subr.mxu0 %v549
  %1156 = vmatpush1.msra.mxu0 %v548
  %1157 = vmatprep.subr.mxu0 %v16
  %1158 = vmatpush1.msra.mxu0 %v15
  %1159 = vmatprep.subr.mxu0 0.0
  %1160 = vmatpush2.msra.mxu0 0.0
  %1161 = vmatprep.subr.mxu0 0.0
  %1162 = vmatpush2.msra.mxu0 0.0
  %1163 = vmatprep.subr.mxu0 0.0
  %1164 = vmatpush2.msra.mxu0 0.0
  %1165 = vmatprep.subr.mxu0 0.0
  %1166 = vmatpush2.msra.mxu0 0.0
  %1167 = vmatprep.subr.mxu0 0.0
  %1168 = vmatpush2.msra.mxu0 0.0
  %1169 = vmatprep.subr.mxu0 0.0
  %1170 = vmatpush2.msra.mxu0 0.0
  %1171 = vmatprep.subr.mxu0 0.0
  %1172 = vmatpush2.msra.mxu0 0.0
  %1173 = vmatprep.subr.mxu0 0.0
  %1174 = vmatpush2.msra.mxu0 0.0
  %1175 = vmatprep.subr.mxu0 0.0
  %1176 = vmatpush2.msra.mxu0 0.0
  %1177 = vmatprep.subr.mxu0 0.0
  %1178 = vmatpush2.msra.mxu0 0.0
  %1179 = vmatprep.subr.mxu0 0.0
  %1180 = vmatpush2.msra.mxu0 0.0
  %1181 = vmatprep.subr.mxu0 0.0
  %1182 = vmatpush2.msra.mxu0 0.0
  %1183 = vmatprep.subr.mxu0 0.0
  %1184 = vmatpush2.msra.mxu0 0.0
  %1185 = vmatprep.subr.mxu0 0.0
  %1186 = vmatpush2.msra.mxu0 0.0
  %1187 = vmatprep.subr.mxu0 0.0
  %1188 = vmatpush2.msra.mxu0 0.0
  %1189 = vmatprep.subr.mxu0 0.0
  %1190 = vmatpush2.msra.mxu0 0.0
  %1191 = vmatprep.mubr.f32.mxu0 0.0
  %1192 = vmatmul.mubr.f32.gmra.mxu0 %v983
  %v1193 = vpop.f32.mrf.mxu0
  %v1194 = vadd.f32 0.0, %v1193
  %v1195 = vpop.f32.mrf.mxu0
  %v1196 = vadd.f32 0.0, %v1195
  %1197 = vdwg.mxu0
  %1198 = vmatprep.subr.mxu0 0.0
  %1199 = vmatpush1.msra.mxu0 0.0
  %1200 = vmatprep.subr.mxu0 0.0
  %1201 = vmatpush1.msra.mxu0 0.0
  %1202 = vmatprep.subr.mxu0 0.0
  %1203 = vmatpush1.msra.mxu0 0.0
  %1204 = vmatprep.subr.mxu0 0.0
  %1205 = vmatpush1.msra.mxu0 0.0
  %1206 = vmatprep.subr.mxu0 0.0
  %1207 = vmatpush1.msra.mxu0 0.0
  %1208 = vmatprep.subr.mxu0 0.0
  %1209 = vmatpush1.msra.mxu0 0.0
  %1210 = vmatprep.subr.mxu0 0.0
  %1211 = vmatpush1.msra.mxu0 0.0
  %1212 = vmatprep.subr.mxu0 0.0
  %1213 = vmatpush1.msra.mxu0 0.0
  %1214 = vmatprep.subr.mxu0 0.0
  %1215 = vmatpush1.msra.mxu0 0.0
  %1216 = vmatprep.subr.mxu0 0.0
  %1217 = vmatpush1.msra.mxu0 0.0
  %1218 = vmatprep.subr.mxu0 0.0
  %1219 = vmatpush1.msra.mxu0 0.0
  %1220 = vmatprep.subr.mxu0 0.0
  %1221 = vmatpush1.msra.mxu0 0.0
  %1222 = vmatprep.subr.mxu0 %v244
  %1223 = vmatpush1.msra.mxu0 %v243
  %1224 = vmatprep.subr.mxu0 %v341
  %1225 = vmatpush1.msra.mxu0 %v340
  %1226 = vmatprep.subr.mxu0 %v551
  %1227 = vmatpush1.msra.mxu0 %v550
  %1228 = vmatprep.subr.mxu0 %v18
  %1229 = vmatpush1.msra.mxu0 %v17
  %1230 = vmatprep.subr.mxu0 0.0
  %1231 = vmatpush2.msra.mxu0 0.0
  %1232 = vmatprep.subr.mxu0 0.0
  %1233 = vmatpush2.msra.mxu0 0.0
  %1234 = vmatprep.subr.mxu0 0.0
  %1235 = vmatpush2.msra.mxu0 0.0
  %1236 = vmatprep.subr.mxu0 0.0
  %1237 = vmatpush2.msra.mxu0 0.0
  %1238 = vmatprep.subr.mxu0 0.0
  %1239 = vmatpush2.msra.mxu0 0.0
  %1240 = vmatprep.subr.mxu0 0.0
  %1241 = vmatpush2.msra.mxu0 0.0
  %1242 = vmatprep.subr.mxu0 0.0
  %1243 = vmatpush2.msra.mxu0 0.0
  %1244 = vmatprep.subr.mxu0 0.0
  %1245 = vmatpush2.msra.mxu0 0.0
  %1246 = vmatprep.subr.mxu0 0.0
  %1247 = vmatpush2.msra.mxu0 0.0
  %1248 = vmatprep.subr.mxu0 0.0
  %1249 = vmatpush2.msra.mxu0 0.0
  %1250 = vmatprep.subr.mxu0 0.0
  %1251 = vmatpush2.msra.mxu0 0.0
  %1252 = vmatprep.subr.mxu0 0.0
  %1253 = vmatpush2.msra.mxu0 0.0
  %1254 = vmatprep.subr.mxu0 0.0
  %1255 = vmatpush2.msra.mxu0 0.0
  %1256 = vmatprep.subr.mxu0 0.0
  %1257 = vmatpush2.msra.mxu0 0.0
  %1258 = vmatprep.subr.mxu0 0.0
  %1259 = vmatpush2.msra.mxu0 0.0
  %1260 = vmatprep.subr.mxu0 0.0
  %1261 = vmatpush2.msra.mxu0 0.0
  %1262 = vmatprep.mubr.f32.mxu0 0.0
  %1263 = vmatmul.mubr.f32.gmra.mxu0 %v983
  %v1264 = vpop.f32.mrf.mxu0
  %v1265 = vadd.f32 0.0, %v1264
  %v1266 = vpop.f32.mrf.mxu0
  %v1267 = vadd.f32 0.0, %v1266
  %1268 = vdwg.mxu0
  %1269 = vmatprep.subr.mxu0 0.0
  %1270 = vmatpush1.msra.mxu0 0.0
  %1271 = vmatprep.subr.mxu0 0.0
  %1272 = vmatpush1.msra.mxu0 0.0
  %1273 = vmatprep.subr.mxu0 0.0
  %1274 = vmatpush1.msra.mxu0 0.0
  %1275 = vmatprep.subr.mxu0 0.0
  %1276 = vmatpush1.msra.mxu0 0.0
  %1277 = vmatprep.subr.mxu0 0.0
  %1278 = vmatpush1.msra.mxu0 0.0
  %1279 = vmatprep.subr.mxu0 0.0
  %1280 = vmatpush1.msra.mxu0 0.0
  %1281 = vmatprep.subr.mxu0 0.0
  %1282 = vmatpush1.msra.mxu0 0.0
  %1283 = vmatprep.subr.mxu0 0.0
  %1284 = vmatpush1.msra.mxu0 0.0
  %1285 = vmatprep.subr.mxu0 0.0
  %1286 = vmatpush1.msra.mxu0 0.0
  %1287 = vmatprep.subr.mxu0 0.0
  %1288 = vmatpush1.msra.mxu0 0.0
  %1289 = vmatprep.subr.mxu0 0.0
  %1290 = vmatpush1.msra.mxu0 0.0
  %1291 = vmatprep.subr.mxu0 0.0
  %1292 = vmatpush1.msra.mxu0 0.0
  %1293 = vmatprep.subr.mxu0 %v246
  %1294 = vmatpush1.msra.mxu0 %v245
  %1295 = vmatprep.subr.mxu0 %v343
  %1296 = vmatpush1.msra.mxu0 %v342
  %1297 = vmatprep.subr.mxu0 %v553
  %1298 = vmatpush1.msra.mxu0 %v552
  %1299 = vmatprep.subr.mxu0 %v20
  %1300 = vmatpush1.msra.mxu0 %v19
  %1301 = vmatprep.subr.mxu0 0.0
  %1302 = vmatpush2.msra.mxu0 0.0
  %1303 = vmatprep.subr.mxu0 0.0
  %1304 = vmatpush2.msra.mxu0 0.0
  %1305 = vmatprep.subr.mxu0 0.0
  %1306 = vmatpush2.msra.mxu0 0.0
  %1307 = vmatprep.subr.mxu0 0.0
  %1308 = vmatpush2.msra.mxu0 0.0
  %1309 = vmatprep.subr.mxu0 0.0
  %1310 = vmatpush2.msra.mxu0 0.0
  %1311 = vmatprep.subr.mxu0 0.0
  %1312 = vmatpush2.msra.mxu0 0.0
  %1313 = vmatprep.subr.mxu0 0.0
  %1314 = vmatpush2.msra.mxu0 0.0
  %1315 = vmatprep.subr.mxu0 0.0
  %1316 = vmatpush2.msra.mxu0 0.0
  %1317 = vmatprep.subr.mxu0 0.0
  %1318 = vmatpush2.msra.mxu0 0.0
  %1319 = vmatprep.subr.mxu0 0.0
  %1320 = vmatpush2.msra.mxu0 0.0
  %1321 = vmatprep.subr.mxu0 0.0
  %1322 = vmatpush2.msra.mxu0 0.0
  %1323 = vmatprep.subr.mxu0 0.0
  %1324 = vmatpush2.msra.mxu0 0.0
  %1325 = vmatprep.subr.mxu0 0.0
  %1326 = vmatpush2.msra.mxu0 0.0
  %1327 = vmatprep.subr.mxu0 0.0
  %1328 = vmatpush2.msra.mxu0 0.0
  %1329 = vmatprep.subr.mxu0 0.0
  %1330 = vmatpush2.msra.mxu0 0.0
  %1331 = vmatprep.subr.mxu0 0.0
  %1332 = vmatpush2.msra.mxu0 0.0
  %1333 = vmatprep.mubr.f32.mxu0 0.0
  %1334 = vmatmul.mubr.f32.gmra.mxu0 %v983
  %v1335 = vpop.f32.mrf.mxu0
  %v1336 = vadd.f32 0.0, %v1335
  %v1337 = vpop.f32.mrf.mxu0
  %v1338 = vadd.f32 0.0, %v1337
  %1339 = vdwg.mxu0
  %1340 = vmatprep.subr.mxu0 0.0
  %1341 = vmatpush1.msra.mxu0 0.0
  %1342 = vmatprep.subr.mxu0 0.0
  %1343 = vmatpush1.msra.mxu0 0.0
  %1344 = vmatprep.subr.mxu0 0.0
  %1345 = vmatpush1.msra.mxu0 0.0
  %1346 = vmatprep.subr.mxu0 0.0
  %1347 = vmatpush1.msra.mxu0 0.0
  %1348 = vmatprep.subr.mxu0 0.0
  %1349 = vmatpush1.msra.mxu0 0.0
  %1350 = vmatprep.subr.mxu0 0.0
  %1351 = vmatpush1.msra.mxu0 0.0
  %1352 = vmatprep.subr.mxu0 0.0
  %1353 = vmatpush1.msra.mxu0 0.0
  %1354 = vmatprep.subr.mxu0 0.0
  %1355 = vmatpush1.msra.mxu0 0.0
  %1356 = vmatprep.subr.mxu0 0.0
  %1357 = vmatpush1.msra.mxu0 0.0
  %1358 = vmatprep.subr.mxu0 0.0
  %1359 = vmatpush1.msra.mxu0 0.0
  %1360 = vmatprep.subr.mxu0 0.0
  %1361 = vmatpush1.msra.mxu0 0.0
  %1362 = vmatprep.subr.mxu0 0.0
  %1363 = vmatpush1.msra.mxu0 0.0
  %1364 = vmatprep.subr.mxu0 %v248
  %1365 = vmatpush1.msra.mxu0 %v247
  %1366 = vmatprep.subr.mxu0 %v345
  %1367 = vmatpush1.msra.mxu0 %v344
  %1368 = vmatprep.subr.mxu0 %v555
  %1369 = vmatpush1.msra.mxu0 %v554
  %1370 = vmatprep.subr.mxu0 %v22
  %1371 = vmatpush1.msra.mxu0 %v21
  %1372 = vmatprep.subr.mxu0 0.0
  %1373 = vmatpush2.msra.mxu0 0.0
  %1374 = vmatprep.subr.mxu0 0.0
  %1375 = vmatpush2.msra.mxu0 0.0
  %1376 = vmatprep.subr.mxu0 0.0
  %1377 = vmatpush2.msra.mxu0 0.0
  %1378 = vmatprep.subr.mxu0 0.0
  %1379 = vmatpush2.msra.mxu0 0.0
  %1380 = vmatprep.subr.mxu0 0.0
  %1381 = vmatpush2.msra.mxu0 0.0
  %1382 = vmatprep.subr.mxu0 0.0
  %1383 = vmatpush2.msra.mxu0 0.0
  %1384 = vmatprep.subr.mxu0 0.0
  %1385 = vmatpush2.msra.mxu0 0.0
  %1386 = vmatprep.subr.mxu0 0.0
  %1387 = vmatpush2.msra.mxu0 0.0
  %1388 = vmatprep.subr.mxu0 0.0
  %1389 = vmatpush2.msra.mxu0 0.0
  %1390 = vmatprep.subr.mxu0 0.0
  %1391 = vmatpush2.msra.mxu0 0.0
  %1392 = vmatprep.subr.mxu0 0.0
  %1393 = vmatpush2.msra.mxu0 0.0
  %1394 = vmatprep.subr.mxu0 0.0
  %1395 = vmatpush2.msra.mxu0 0.0
  %1396 = vmatprep.subr.mxu0 0.0
  %1397 = vmatpush2.msra.mxu0 0.0
  %1398 = vmatprep.subr.mxu0 0.0
  %1399 = vmatpush2.msra.mxu0 0.0
  %1400 = vmatprep.subr.mxu0 0.0
  %1401 = vmatpush2.msra.mxu0 0.0
  %1402 = vmatprep.subr.mxu0 0.0
  %1403 = vmatpush2.msra.mxu0 0.0
  %1404 = vmatprep.mubr.f32.mxu0 0.0
  %1405 = vmatmul.mubr.f32.gmra.mxu0 %v983
  %v1406 = vpop.f32.mrf.mxu0
  %v1407 = vadd.f32 0.0, %v1406
  %v1408 = vpop.f32.mrf.mxu0
  %v1409 = vadd.f32 0.0, %v1408
  %1410 = vdwg.mxu0
  %1411 = vmatprep.subr.mxu0 0.0
  %1412 = vmatpush1.msra.mxu0 0.0
  %1413 = vmatprep.subr.mxu0 0.0
  %1414 = vmatpush1.msra.mxu0 0.0
  %1415 = vmatprep.subr.mxu0 0.0
  %1416 = vmatpush1.msra.mxu0 0.0
  %1417 = vmatprep.subr.mxu0 0.0
  %1418 = vmatpush1.msra.mxu0 0.0
  %1419 = vmatprep.subr.mxu0 0.0
  %1420 = vmatpush1.msra.mxu0 0.0
  %1421 = vmatprep.subr.mxu0 0.0
  %1422 = vmatpush1.msra.mxu0 0.0
  %1423 = vmatprep.subr.mxu0 0.0
  %1424 = vmatpush1.msra.mxu0 0.0
  %1425 = vmatprep.subr.mxu0 0.0
  %1426 = vmatpush1.msra.mxu0 0.0
  %1427 = vmatprep.subr.mxu0 0.0
  %1428 = vmatpush1.msra.mxu0 0.0
  %1429 = vmatprep.subr.mxu0 0.0
  %1430 = vmatpush1.msra.mxu0 0.0
  %1431 = vmatprep.subr.mxu0 0.0
  %1432 = vmatpush1.msra.mxu0 0.0
  %1433 = vmatprep.subr.mxu0 0.0
  %1434 = vmatpush1.msra.mxu0 0.0
  %1435 = vmatprep.subr.mxu0 %v250
  %1436 = vmatpush1.msra.mxu0 %v249
  %1437 = vmatprep.subr.mxu0 %v347
  %1438 = vmatpush1.msra.mxu0 %v346
  %1439 = vmatprep.subr.mxu0 %v557
  %1440 = vmatpush1.msra.mxu0 %v556
  %1441 = vmatprep.subr.mxu0 %v24
  %1442 = vmatpush1.msra.mxu0 %v23
  %1443 = vmatprep.subr.mxu0 0.0
  %1444 = vmatpush2.msra.mxu0 0.0
  %1445 = vmatprep.subr.mxu0 0.0
  %1446 = vmatpush2.msra.mxu0 0.0
  %1447 = vmatprep.subr.mxu0 0.0
  %1448 = vmatpush2.msra.mxu0 0.0
  %1449 = vmatprep.subr.mxu0 0.0
  %1450 = vmatpush2.msra.mxu0 0.0
  %1451 = vmatprep.subr.mxu0 0.0
  %1452 = vmatpush2.msra.mxu0 0.0
  %1453 = vmatprep.subr.mxu0 0.0
  %1454 = vmatpush2.msra.mxu0 0.0
  %1455 = vmatprep.subr.mxu0 0.0
  %1456 = vmatpush2.msra.mxu0 0.0
  %1457 = vmatprep.subr.mxu0 0.0
  %1458 = vmatpush2.msra.mxu0 0.0
  %1459 = vmatprep.subr.mxu0 0.0
  %1460 = vmatpush2.msra.mxu0 0.0
  %1461 = vmatprep.subr.mxu0 0.0
  %1462 = vmatpush2.msra.mxu0 0.0
  %1463 = vmatprep.subr.mxu0 0.0
  %1464 = vmatpush2.msra.mxu0 0.0
  %1465 = vmatprep.subr.mxu0 0.0
  %1466 = vmatpush2.msra.mxu0 0.0
  %1467 = vmatprep.subr.mxu0 0.0
  %1468 = vmatpush2.msra.mxu0 0.0
  %1469 = vmatprep.subr.mxu0 0.0
  %1470 = vmatpush2.msra.mxu0 0.0
  %1471 = vmatprep.subr.mxu0 0.0
  %1472 = vmatpush2.msra.mxu0 0.0
  %1473 = vmatprep.subr.mxu0 0.0
  %1474 = vmatpush2.msra.mxu0 0.0
  %1475 = vmatprep.mubr.f32.mxu0 0.0
  %1476 = vmatmul.mubr.f32.gmra.mxu0 %v983
  %v1477 = vpop.f32.mrf.mxu0
  %v1478 = vadd.f32 0.0, %v1477
  %v1479 = vpop.f32.mrf.mxu0
  %v1480 = vadd.f32 0.0, %v1479
  %1481 = vdwg.mxu0
  %1482 = vmatprep.subr.mxu0 0.0
  %1483 = vmatpush1.msra.mxu0 0.0
  %1484 = vmatprep.subr.mxu0 0.0
  %1485 = vmatpush1.msra.mxu0 0.0
  %1486 = vmatprep.subr.mxu0 0.0
  %1487 = vmatpush1.msra.mxu0 0.0
  %1488 = vmatprep.subr.mxu0 0.0
  %1489 = vmatpush1.msra.mxu0 0.0
  %1490 = vmatprep.subr.mxu0 0.0
  %1491 = vmatpush1.msra.mxu0 0.0
  %1492 = vmatprep.subr.mxu0 0.0
  %1493 = vmatpush1.msra.mxu0 0.0
  %1494 = vmatprep.subr.mxu0 0.0
  %1495 = vmatpush1.msra.mxu0 0.0
  %1496 = vmatprep.subr.mxu0 0.0
  %1497 = vmatpush1.msra.mxu0 0.0
  %1498 = vmatprep.subr.mxu0 0.0
  %1499 = vmatpush1.msra.mxu0 0.0
  %1500 = vmatprep.subr.mxu0 0.0
  %1501 = vmatpush1.msra.mxu0 0.0
  %1502 = vmatprep.subr.mxu0 0.0
  %1503 = vmatpush1.msra.mxu0 0.0
  %1504 = vmatprep.subr.mxu0 0.0
  %1505 = vmatpush1.msra.mxu0 0.0
  %1506 = vmatprep.subr.mxu0 %v252
  %1507 = vmatpush1.msra.mxu0 %v251
  %1508 = vmatprep.subr.mxu0 %v349
  %1509 = vmatpush1.msra.mxu0 %v348
  %1510 = vmatprep.subr.mxu0 %v559
  %1511 = vmatpush1.msra.mxu0 %v558
  %1512 = vmatprep.subr.mxu0 %v26
  %1513 = vmatpush1.msra.mxu0 %v25
  %1514 = vmatprep.subr.mxu0 0.0
  %1515 = vmatpush2.msra.mxu0 0.0
  %1516 = vmatprep.subr.mxu0 0.0
  %1517 = vmatpush2.msra.mxu0 0.0
  %1518 = vmatprep.subr.mxu0 0.0
  %1519 = vmatpush2.msra.mxu0 0.0
  %1520 = vmatprep.subr.mxu0 0.0
  %1521 = vmatpush2.msra.mxu0 0.0
  %1522 = vmatprep.subr.mxu0 0.0
  %1523 = vmatpush2.msra.mxu0 0.0
  %1524 = vmatprep.subr.mxu0 0.0
  %1525 = vmatpush2.msra.mxu0 0.0
  %1526 = vmatprep.subr.mxu0 0.0
  %1527 = vmatpush2.msra.mxu0 0.0
  %1528 = vmatprep.subr.mxu0 0.0
  %1529 = vmatpush2.msra.mxu0 0.0
  %1530 = vmatprep.subr.mxu0 0.0
  %1531 = vmatpush2.msra.mxu0 0.0
  %1532 = vmatprep.subr.mxu0 0.0
  %1533 = vmatpush2.msra.mxu0 0.0
  %1534 = vmatprep.subr.mxu0 0.0
  %1535 = vmatpush2.msra.mxu0 0.0
  %1536 = vmatprep.subr.mxu0 0.0
  %1537 = vmatpush2.msra.mxu0 0.0
  %1538 = vmatprep.subr.mxu0 0.0
  %1539 = vmatpush2.msra.mxu0 0.0
  %1540 = vmatprep.subr.mxu0 0.0
  %1541 = vmatpush2.msra.mxu0 0.0
  %1542 = vmatprep.subr.mxu0 0.0
  %1543 = vmatpush2.msra.mxu0 0.0
  %1544 = vmatprep.subr.mxu0 0.0
  %1545 = vmatpush2.msra.mxu0 0.0
  %1546 = vmatprep.mubr.f32.mxu0 0.0
  %1547 = vmatmul.mubr.f32.gmra.mxu0 %v983
  %v1548 = vpop.f32.mrf.mxu0
  %v1549 = vadd.f32 0.0, %v1548
  %v1550 = vpop.f32.mrf.mxu0
  %v1551 = vadd.f32 0.0, %v1550
  %1552 = vdwg.mxu0
  %v1553 = vtanh.pop %v1052
  %v1554 = vtanh.pop %v1054
  %v1555 = vtanh.pop %v1123
  %v1556 = vtanh.pop %v1125
  %v1557 = vtanh.pop %v1194
  %v1558 = vtanh.pop %v1196
  %v1559 = vtanh.pop %v1265
  %v1560 = vtanh.pop %v1267
  %v1561 = vtanh.pop %v1336
  %v1562 = vtanh.pop %v1338
  %v1563 = vtanh.pop %v1407
  %v1564 = vtanh.pop %v1409
  %v1565 = vtanh.pop %v1478
  %v1566 = vtanh.pop %v1480
  %v1567 = vtanh.pop %v1549
  %v1568 = vtanh.pop %v1551
  %v1585 = vcombine.low %v1553, %v1554
  %v1586 = vcombine.low %v1555, %v1556
  %v1587 = vcombine.low %v1557, %v1558
  %v1588 = vcombine.low %v1559, %v1560
  %v1589 = vcombine.low %v1561, %v1562
  %v1590 = vcombine.low %v1563, %v1564
  %v1591 = vcombine.low %v1565, %v1566
  %v1592 = vcombine.low %v1567, %v1568
  %1601 = vst [vmem:[%s2] sm:$0x77] %v1585
  %1602 = vst [vmem:[%s2 + $0x8] sm:$0x77] %v1586
  %1603 = vst [vmem:[%s2 + $0x10] sm:$0x77] %v1587
  %1604 = vst [vmem:[%s2 + $0x18] sm:$0x77] %v1588
  %1605 = vst [vmem:[%s2 + $0x20] sm:$0x77] %v1589
  %1606 = vst [vmem:[%s2 + $0x28] sm:$0x77] %v1590
  %1607 = vst [vmem:[%s2 + $0x30] sm:$0x77] %v1591
  %1608 = vst [vmem:[%s2 + $0x38] sm:$0x77] %v1592
  %s1609 = scalar_lea.vmem %s1, 4
  %v1610 = vld [vmem:[%s1609] sm:$0x7]
  %v1612 = vsel %vm981, %v1610, 0
  %1614 = vmatprep.subr.mxu0 0.0
  %1615 = vmatpush1.msra.mxu0 0.0
  %1616 = vmatprep.subr.mxu0 0.0
  %1617 = vmatpush1.msra.mxu0 0.0
  %1618 = vmatprep.subr.mxu0 0.0
  %1619 = vmatpush1.msra.mxu0 0.0
  %1620 = vmatprep.subr.mxu0 0.0
  %1621 = vmatpush1.msra.mxu0 0.0
  %1622 = vmatprep.subr.mxu0 0.0
  %1623 = vmatpush1.msra.mxu0 0.0
  %1624 = vmatprep.subr.mxu0 0.0
  %1625 = vmatpush1.msra.mxu0 0.0
  %1626 = vmatprep.subr.mxu0 0.0
  %1627 = vmatpush1.msra.mxu0 0.0
  %1628 = vmatprep.subr.mxu0 0.0
  %1629 = vmatpush1.msra.mxu0 0.0
  %1630 = vmatprep.subr.mxu0 0.0
  %1631 = vmatpush1.msra.mxu0 0.0
  %1632 = vmatprep.subr.mxu0 0.0
  %1633 = vmatpush1.msra.mxu0 0.0
  %1634 = vmatprep.subr.mxu0 0.0
  %1635 = vmatpush1.msra.mxu0 0.0
  %1636 = vmatprep.subr.mxu0 0.0
  %1637 = vmatpush1.msra.mxu0 0.0
  %1638 = vmatprep.subr.mxu0 %v448
  %1639 = vmatpush1.msra.mxu0 %v447
  %1640 = vmatprep.subr.mxu0 %v335
  %1641 = vmatpush1.msra.mxu0 %v334
  %1642 = vmatprep.subr.mxu0 %v642
  %1643 = vmatpush1.msra.mxu0 %v641
  %1644 = vmatprep.subr.mxu0 %v12
  %1645 = vmatpush1.msra.mxu0 %v11
  %1646 = vmatprep.subr.mxu0 0.0
  %1647 = vmatpush2.msra.mxu0 0.0
  %1648 = vmatprep.subr.mxu0 0.0
  %1649 = vmatpush2.msra.mxu0 0.0
  %1650 = vmatprep.subr.mxu0 0.0
  %1651 = vmatpush2.msra.mxu0 0.0
  %1652 = vmatprep.subr.mxu0 0.0
  %1653 = vmatpush2.msra.mxu0 0.0
  %1654 = vmatprep.subr.mxu0 0.0
  %1655 = vmatpush2.msra.mxu0 0.0
  %1656 = vmatprep.subr.mxu0 0.0
  %1657 = vmatpush2.msra.mxu0 0.0
  %1658 = vmatprep.subr.mxu0 0.0
  %1659 = vmatpush2.msra.mxu0 0.0
  %1660 = vmatprep.subr.mxu0 0.0
  %1661 = vmatpush2.msra.mxu0 0.0
  %1662 = vmatprep.subr.mxu0 0.0
  %1663 = vmatpush2.msra.mxu0 0.0
  %1664 = vmatprep.subr.mxu0 0.0
  %1665 = vmatpush2.msra.mxu0 0.0
  %1666 = vmatprep.subr.mxu0 0.0
  %1667 = vmatpush2.msra.mxu0 0.0
  %1668 = vmatprep.subr.mxu0 0.0
  %1669 = vmatpush2.msra.mxu0 0.0
  %1670 = vmatprep.subr.mxu0 0.0
  %1671 = vmatpush2.msra.mxu0 0.0
  %1672 = vmatprep.subr.mxu0 0.0
  %1673 = vmatpush2.msra.mxu0 0.0
  %1674 = vmatprep.subr.mxu0 0.0
  %1675 = vmatpush2.msra.mxu0 0.0
  %1676 = vmatprep.subr.mxu0 0.0
  %1677 = vmatpush2.msra.mxu0 0.0
  %1678 = vmatprep.mubr.f32.mxu0 0.0
  %1679 = vmatmul.mubr.f32.gmra.mxu0 %v1612
  %v1680 = vpop.f32.mrf.mxu0
  %v1681 = vadd.f32 0.0, %v1680
  %v1682 = vpop.f32.mrf.mxu0
  %v1683 = vadd.f32 0.0, %v1682
  %1684 = vdwg.mxu0
  %1685 = vmatprep.subr.mxu0 0.0
  %1686 = vmatpush1.msra.mxu0 0.0
  %1687 = vmatprep.subr.mxu0 0.0
  %1688 = vmatpush1.msra.mxu0 0.0
  %1689 = vmatprep.subr.mxu0 0.0
  %1690 = vmatpush1.msra.mxu0 0.0
  %1691 = vmatprep.subr.mxu0 0.0
  %1692 = vmatpush1.msra.mxu0 0.0
  %1693 = vmatprep.subr.mxu0 0.0
  %1694 = vmatpush1.msra.mxu0 0.0
  %1695 = vmatprep.subr.mxu0 0.0
  %1696 = vmatpush1.msra.mxu0 0.0
  %1697 = vmatprep.subr.mxu0 0.0
  %1698 = vmatpush1.msra.mxu0 0.0
  %1699 = vmatprep.subr.mxu0 0.0
  %1700 = vmatpush1.msra.mxu0 0.0
  %1701 = vmatprep.subr.mxu0 0.0
  %1702 = vmatpush1.msra.mxu0 0.0
  %1703 = vmatprep.subr.mxu0 0.0
  %1704 = vmatpush1.msra.mxu0 0.0
  %1705 = vmatprep.subr.mxu0 0.0
  %1706 = vmatpush1.msra.mxu0 0.0
  %1707 = vmatprep.subr.mxu0 0.0
  %1708 = vmatpush1.msra.mxu0 0.0
  %1709 = vmatprep.subr.mxu0 %v450
  %1710 = vmatpush1.msra.mxu0 %v449
  %1711 = vmatprep.subr.mxu0 %v337
  %1712 = vmatpush1.msra.mxu0 %v336
  %1713 = vmatprep.subr.mxu0 %v644
  %1714 = vmatpush1.msra.mxu0 %v643
  %1715 = vmatprep.subr.mxu0 %v14
  %1716 = vmatpush1.msra.mxu0 %v13
  %1717 = vmatprep.subr.mxu0 0.0
  %1718 = vmatpush2.msra.mxu0 0.0
  %1719 = vmatprep.subr.mxu0 0.0
  %1720 = vmatpush2.msra.mxu0 0.0
  %1721 = vmatprep.subr.mxu0 0.0
  %1722 = vmatpush2.msra.mxu0 0.0
  %1723 = vmatprep.subr.mxu0 0.0
  %1724 = vmatpush2.msra.mxu0 0.0
  %1725 = vmatprep.subr.mxu0 0.0
  %1726 = vmatpush2.msra.mxu0 0.0
  %1727 = vmatprep.subr.mxu0 0.0
  %1728 = vmatpush2.msra.mxu0 0.0
  %1729 = vmatprep.subr.mxu0 0.0
  %1730 = vmatpush2.msra.mxu0 0.0
  %1731 = vmatprep.subr.mxu0 0.0
  %1732 = vmatpush2.msra.mxu0 0.0
  %1733 = vmatprep.subr.mxu0 0.0
  %1734 = vmatpush2.msra.mxu0 0.0
  %1735 = vmatprep.subr.mxu0 0.0
  %1736 = vmatpush2.msra.mxu0 0.0
  %1737 = vmatprep.subr.mxu0 0.0
  %1738 = vmatpush2.msra.mxu0 0.0
  %1739 = vmatprep.subr.mxu0 0.0
  %1740 = vmatpush2.msra.mxu0 0.0
  %1741 = vmatprep.subr.mxu0 0.0
  %1742 = vmatpush2.msra.mxu0 0.0
  %1743 = vmatprep.subr.mxu0 0.0
  %1744 = vmatpush2.msra.mxu0 0.0
  %1745 = vmatprep.subr.mxu0 0.0
  %1746 = vmatpush2.msra.mxu0 0.0
  %1747 = vmatprep.subr.mxu0 0.0
  %1748 = vmatpush2.msra.mxu0 0.0
  %1749 = vmatprep.mubr.f32.mxu0 0.0
  %1750 = vmatmul.mubr.f32.gmra.mxu0 %v1612
  %v1751 = vpop.f32.mrf.mxu0
  %v1752 = vadd.f32 0.0, %v1751
  %v1753 = vpop.f32.mrf.mxu0
  %v1754 = vadd.f32 0.0, %v1753
  %1755 = vdwg.mxu0
  %1756 = vmatprep.subr.mxu0 0.0
  %1757 = vmatpush1.msra.mxu0 0.0
  %1758 = vmatprep.subr.mxu0 0.0
  %1759 = vmatpush1.msra.mxu0 0.0
  %1760 = vmatprep.subr.mxu0 0.0
  %1761 = vmatpush1.msra.mxu0 0.0
  %1762 = vmatprep.subr.mxu0 0.0
  %1763 = vmatpush1.msra.mxu0 0.0
  %1764 = vmatprep.subr.mxu0 0.0
  %1765 = vmatpush1.msra.mxu0 0.0
  %1766 = vmatprep.subr.mxu0 0.0
  %1767 = vmatpush1.msra.mxu0 0.0
  %1768 = vmatprep.subr.mxu0 0.0
  %1769 = vmatpush1.msra.mxu0 0.0
  %1770 = vmatprep.subr.mxu0 0.0
  %1771 = vmatpush1.msra.mxu0 0.0
  %1772 = vmatprep.subr.mxu0 0.0
  %1773 = vmatpush1.msra.mxu0 0.0
  %1774 = vmatprep.subr.mxu0 0.0
  %1775 = vmatpush1.msra.mxu0 0.0
  %1776 = vmatprep.subr.mxu0 0.0
  %1777 = vmatpush1.msra.mxu0 0.0
  %1778 = vmatprep.subr.mxu0 0.0
  %1779 = vmatpush1.msra.mxu0 0.0
  %1780 = vmatprep.subr.mxu0 %v452
  %1781 = vmatpush1.msra.mxu0 %v451
  %1782 = vmatprep.subr.mxu0 %v339
  %1783 = vmatpush1.msra.mxu0 %v338
  %1784 = vmatprep.subr.mxu0 %v646
  %1785 = vmatpush1.msra.mxu0 %v645
  %1786 = vmatprep.subr.mxu0 %v16
  %1787 = vmatpush1.msra.mxu0 %v15
  %1788 = vmatprep.subr.mxu0 0.0
  %1789 = vmatpush2.msra.mxu0 0.0
  %1790 = vmatprep.subr.mxu0 0.0
  %1791 = vmatpush2.msra.mxu0 0.0
  %1792 = vmatprep.subr.mxu0 0.0
  %1793 = vmatpush2.msra.mxu0 0.0
  %1794 = vmatprep.subr.mxu0 0.0
  %1795 = vmatpush2.msra.mxu0 0.0
  %1796 = vmatprep.subr.mxu0 0.0
  %1797 = vmatpush2.msra.mxu0 0.0
  %1798 = vmatprep.subr.mxu0 0.0
  %1799 = vmatpush2.msra.mxu0 0.0
  %1800 = vmatprep.subr.mxu0 0.0
  %1801 = vmatpush2.msra.mxu0 0.0
  %1802 = vmatprep.subr.mxu0 0.0
  %1803 = vmatpush2.msra.mxu0 0.0
  %1804 = vmatprep.subr.mxu0 0.0
  %1805 = vmatpush2.msra.mxu0 0.0
  %1806 = vmatprep.subr.mxu0 0.0
  %1807 = vmatpush2.msra.mxu0 0.0
  %1808 = vmatprep.subr.mxu0 0.0
  %1809 = vmatpush2.msra.mxu0 0.0
  %1810 = vmatprep.subr.mxu0 0.0
  %1811 = vmatpush2.msra.mxu0 0.0
  %1812 = vmatprep.subr.mxu0 0.0
  %1813 = vmatpush2.msra.mxu0 0.0
  %1814 = vmatprep.subr.mxu0 0.0
  %1815 = vmatpush2.msra.mxu0 0.0
  %1816 = vmatprep.subr.mxu0 0.0
  %1817 = vmatpush2.msra.mxu0 0.0
  %1818 = vmatprep.subr.mxu0 0.0
  %1819 = vmatpush2.msra.mxu0 0.0
  %1820 = vmatprep.mubr.f32.mxu0 0.0
  %1821 = vmatmul.mubr.f32.gmra.mxu0 %v1612
  %v1822 = vpop.f32.mrf.mxu0
  %v1823 = vadd.f32 0.0, %v1822
  %v1824 = vpop.f32.mrf.mxu0
  %v1825 = vadd.f32 0.0, %v1824
  %1826 = vdwg.mxu0
  %1827 = vmatprep.subr.mxu0 0.0
  %1828 = vmatpush1.msra.mxu0 0.0
  %1829 = vmatprep.subr.mxu0 0.0
  %1830 = vmatpush1.msra.mxu0 0.0
  %1831 = vmatprep.subr.mxu0 0.0
  %1832 = vmatpush1.msra.mxu0 0.0
  %1833 = vmatprep.subr.mxu0 0.0
  %1834 = vmatpush1.msra.mxu0 0.0
  %1835 = vmatprep.subr.mxu0 0.0
  %1836 = vmatpush1.msra.mxu0 0.0
  %1837 = vmatprep.subr.mxu0 0.0
  %1838 = vmatpush1.msra.mxu0 0.0
  %1839 = vmatprep.subr.mxu0 0.0
  %1840 = vmatpush1.msra.mxu0 0.0
  %1841 = vmatprep.subr.mxu0 0.0
  %1842 = vmatpush1.msra.mxu0 0.0
  %1843 = vmatprep.subr.mxu0 0.0
  %1844 = vmatpush1.msra.mxu0 0.0
  %1845 = vmatprep.subr.mxu0 0.0
  %1846 = vmatpush1.msra.mxu0 0.0
  %1847 = vmatprep.subr.mxu0 0.0
  %1848 = vmatpush1.msra.mxu0 0.0
  %1849 = vmatprep.subr.mxu0 0.0
  %1850 = vmatpush1.msra.mxu0 0.0
  %1851 = vmatprep.subr.mxu0 %v454
  %1852 = vmatpush1.msra.mxu0 %v453
  %1853 = vmatprep.subr.mxu0 %v341
  %1854 = vmatpush1.msra.mxu0 %v340
  %1855 = vmatprep.subr.mxu0 %v648
  %1856 = vmatpush1.msra.mxu0 %v647
  %1857 = vmatprep.subr.mxu0 %v18
  %1858 = vmatpush1.msra.mxu0 %v17
  %1859 = vmatprep.subr.mxu0 0.0
  %1860 = vmatpush2.msra.mxu0 0.0
  %1861 = vmatprep.subr.mxu0 0.0
  %1862 = vmatpush2.msra.mxu0 0.0
  %1863 = vmatprep.subr.mxu0 0.0
  %1864 = vmatpush2.msra.mxu0 0.0
  %1865 = vmatprep.subr.mxu0 0.0
  %1866 = vmatpush2.msra.mxu0 0.0
  %1867 = vmatprep.subr.mxu0 0.0
  %1868 = vmatpush2.msra.mxu0 0.0
  %1869 = vmatprep.subr.mxu0 0.0
  %1870 = vmatpush2.msra.mxu0 0.0
  %1871 = vmatprep.subr.mxu0 0.0
  %1872 = vmatpush2.msra.mxu0 0.0
  %1873 = vmatprep.subr.mxu0 0.0
  %1874 = vmatpush2.msra.mxu0 0.0
  %1875 = vmatprep.subr.mxu0 0.0
  %1876 = vmatpush2.msra.mxu0 0.0
  %1877 = vmatprep.subr.mxu0 0.0
  %1878 = vmatpush2.msra.mxu0 0.0
  %1879 = vmatprep.subr.mxu0 0.0
  %1880 = vmatpush2.msra.mxu0 0.0
  %1881 = vmatprep.subr.mxu0 0.0
  %1882 = vmatpush2.msra.mxu0 0.0
  %1883 = vmatprep.subr.mxu0 0.0
  %1884 = vmatpush2.msra.mxu0 0.0
  %1885 = vmatprep.subr.mxu0 0.0
  %1886 = vmatpush2.msra.mxu0 0.0
  %1887 = vmatprep.subr.mxu0 0.0
  %1888 = vmatpush2.msra.mxu0 0.0
  %1889 = vmatprep.subr.mxu0 0.0
  %1890 = vmatpush2.msra.mxu0 0.0
  %1891 = vmatprep.mubr.f32.mxu0 0.0
  %1892 = vmatmul.mubr.f32.gmra.mxu0 %v1612
  %v1893 = vpop.f32.mrf.mxu0
  %v1894 = vadd.f32 0.0, %v1893
  %v1895 = vpop.f32.mrf.mxu0
  %v1896 = vadd.f32 0.0, %v1895
  %1897 = vdwg.mxu0
  %1898 = vmatprep.subr.mxu0 0.0
  %1899 = vmatpush1.msra.mxu0 0.0
  %1900 = vmatprep.subr.mxu0 0.0
  %1901 = vmatpush1.msra.mxu0 0.0
  %1902 = vmatprep.subr.mxu0 0.0
  %1903 = vmatpush1.msra.mxu0 0.0
  %1904 = vmatprep.subr.mxu0 0.0
  %1905 = vmatpush1.msra.mxu0 0.0
  %1906 = vmatprep.subr.mxu0 0.0
  %1907 = vmatpush1.msra.mxu0 0.0
  %1908 = vmatprep.subr.mxu0 0.0
  %1909 = vmatpush1.msra.mxu0 0.0
  %1910 = vmatprep.subr.mxu0 0.0
  %1911 = vmatpush1.msra.mxu0 0.0
  %1912 = vmatprep.subr.mxu0 0.0
  %1913 = vmatpush1.msra.mxu0 0.0
  %1914 = vmatprep.subr.mxu0 0.0
  %1915 = vmatpush1.msra.mxu0 0.0
  %1916 = vmatprep.subr.mxu0 0.0
  %1917 = vmatpush1.msra.mxu0 0.0
  %1918 = vmatprep.subr.mxu0 0.0
  %1919 = vmatpush1.msra.mxu0 0.0
  %1920 = vmatprep.subr.mxu0 0.0
  %1921 = vmatpush1.msra.mxu0 0.0
  %1922 = vmatprep.subr.mxu0 %v456
  %1923 = vmatpush1.msra.mxu0 %v455
  %1924 = vmatprep.subr.mxu0 %v343
  %1925 = vmatpush1.msra.mxu0 %v342
  %1926 = vmatprep.subr.mxu0 %v650
  %1927 = vmatpush1.msra.mxu0 %v649
  %1928 = vmatprep.subr.mxu0 %v20
  %1929 = vmatpush1.msra.mxu0 %v19
  %1930 = vmatprep.subr.mxu0 0.0
  %1931 = vmatpush2.msra.mxu0 0.0
  %1932 = vmatprep.subr.mxu0 0.0
  %1933 = vmatpush2.msra.mxu0 0.0
  %1934 = vmatprep.subr.mxu0 0.0
  %1935 = vmatpush2.msra.mxu0 0.0
  %1936 = vmatprep.subr.mxu0 0.0
  %1937 = vmatpush2.msra.mxu0 0.0
  %1938 = vmatprep.subr.mxu0 0.0
  %1939 = vmatpush2.msra.mxu0 0.0
  %1940 = vmatprep.subr.mxu0 0.0
  %1941 = vmatpush2.msra.mxu0 0.0
  %1942 = vmatprep.subr.mxu0 0.0
  %1943 = vmatpush2.msra.mxu0 0.0
  %1944 = vmatprep.subr.mxu0 0.0
  %1945 = vmatpush2.msra.mxu0 0.0
  %1946 = vmatprep.subr.mxu0 0.0
  %1947 = vmatpush2.msra.mxu0 0.0
  %1948 = vmatprep.subr.mxu0 0.0
  %1949 = vmatpush2.msra.mxu0 0.0
  %1950 = vmatprep.subr.mxu0 0.0
  %1951 = vmatpush2.msra.mxu0 0.0
  %1952 = vmatprep.subr.mxu0 0.0
  %1953 = vmatpush2.msra.mxu0 0.0
  %1954 = vmatprep.subr.mxu0 0.0
  %1955 = vmatpush2.msra.mxu0 0.0
  %1956 = vmatprep.subr.mxu0 0.0
  %1957 = vmatpush2.msra.mxu0 0.0
  %1958 = vmatprep.subr.mxu0 0.0
  %1959 = vmatpush2.msra.mxu0 0.0
  %1960 = vmatprep.subr.mxu0 0.0
  %1961 = vmatpush2.msra.mxu0 0.0
  %1962 = vmatprep.mubr.f32.mxu0 0.0
  %1963 = vmatmul.mubr.f32.gmra.mxu0 %v1612
  %v1964 = vpop.f32.mrf.mxu0
  %v1965 = vadd.f32 0.0, %v1964
  %v1966 = vpop.f32.mrf.mxu0
  %v1967 = vadd.f32 0.0, %v1966
  %1968 = vdwg.mxu0
  %1969 = vmatprep.subr.mxu0 0.0
  %1970 = vmatpush1.msra.mxu0 0.0
  %1971 = vmatprep.subr.mxu0 0.0
  %1972 = vmatpush1.msra.mxu0 0.0
  %1973 = vmatprep.subr.mxu0 0.0
  %1974 = vmatpush1.msra.mxu0 0.0
  %1975 = vmatprep.subr.mxu0 0.0
  %1976 = vmatpush1.msra.mxu0 0.0
  %1977 = vmatprep.subr.mxu0 0.0
  %1978 = vmatpush1.msra.mxu0 0.0
  %1979 = vmatprep.subr.mxu0 0.0
  %1980 = vmatpush1.msra.mxu0 0.0
  %1981 = vmatprep.subr.mxu0 0.0
  %1982 = vmatpush1.msra.mxu0 0.0
  %1983 = vmatprep.subr.mxu0 0.0
  %1984 = vmatpush1.msra.mxu0 0.0
  %1985 = vmatprep.subr.mxu0 0.0
  %1986 = vmatpush1.msra.mxu0 0.0
  %1987 = vmatprep.subr.mxu0 0.0
  %1988 = vmatpush1.msra.mxu0 0.0
  %1989 = vmatprep.subr.mxu0 0.0
  %1990 = vmatpush1.msra.mxu0 0.0
  %1991 = vmatprep.subr.mxu0 0.0
  %1992 = vmatpush1.msra.mxu0 0.0
  %1993 = vmatprep.subr.mxu0 %v458
  %1994 = vmatpush1.msra.mxu0 %v457
  %1995 = vmatprep.subr.mxu0 %v345
  %1996 = vmatpush1.msra.mxu0 %v344
  %1997 = vmatprep.subr.mxu0 %v652
  %1998 = vmatpush1.msra.mxu0 %v651
  %1999 = vmatprep.subr.mxu0 %v22
  %2000 = vmatpush1.msra.mxu0 %v21
  %2001 = vmatprep.subr.mxu0 0.0
  %2002 = vmatpush2.msra.mxu0 0.0
  %2003 = vmatprep.subr.mxu0 0.0
  %2004 = vmatpush2.msra.mxu0 0.0
  %2005 = vmatprep.subr.mxu0 0.0
  %2006 = vmatpush2.msra.mxu0 0.0
  %2007 = vmatprep.subr.mxu0 0.0
  %2008 = vmatpush2.msra.mxu0 0.0
  %2009 = vmatprep.subr.mxu0 0.0
  %2010 = vmatpush2.msra.mxu0 0.0
  %2011 = vmatprep.subr.mxu0 0.0
  %2012 = vmatpush2.msra.mxu0 0.0
  %2013 = vmatprep.subr.mxu0 0.0
  %2014 = vmatpush2.msra.mxu0 0.0
  %2015 = vmatprep.subr.mxu0 0.0
  %2016 = vmatpush2.msra.mxu0 0.0
  %2017 = vmatprep.subr.mxu0 0.0
  %2018 = vmatpush2.msra.mxu0 0.0
  %2019 = vmatprep.subr.mxu0 0.0
  %2020 = vmatpush2.msra.mxu0 0.0
  %2021 = vmatprep.subr.mxu0 0.0
  %2022 = vmatpush2.msra.mxu0 0.0
  %2023 = vmatprep.subr.mxu0 0.0
  %2024 = vmatpush2.msra.mxu0 0.0
  %2025 = vmatprep.subr.mxu0 0.0
  %2026 = vmatpush2.msra.mxu0 0.0
  %2027 = vmatprep.subr.mxu0 0.0
  %2028 = vmatpush2.msra.mxu0 0.0
  %2029 = vmatprep.subr.mxu0 0.0
  %2030 = vmatpush2.msra.mxu0 0.0
  %2031 = vmatprep.subr.mxu0 0.0
  %2032 = vmatpush2.msra.mxu0 0.0
  %2033 = vmatprep.mubr.f32.mxu0 0.0
  %2034 = vmatmul.mubr.f32.gmra.mxu0 %v1612
  %v2035 = vpop.f32.mrf.mxu0
  %v2036 = vadd.f32 0.0, %v2035
  %v2037 = vpop.f32.mrf.mxu0
  %v2038 = vadd.f32 0.0, %v2037
  %2039 = vdwg.mxu0
  %2040 = vmatprep.subr.mxu0 0.0
  %2041 = vmatpush1.msra.mxu0 0.0
  %2042 = vmatprep.subr.mxu0 0.0
  %2043 = vmatpush1.msra.mxu0 0.0
  %2044 = vmatprep.subr.mxu0 0.0
  %2045 = vmatpush1.msra.mxu0 0.0
  %2046 = vmatprep.subr.mxu0 0.0
  %2047 = vmatpush1.msra.mxu0 0.0
  %2048 = vmatprep.subr.mxu0 0.0
  %2049 = vmatpush1.msra.mxu0 0.0
  %2050 = vmatprep.subr.mxu0 0.0
  %2051 = vmatpush1.msra.mxu0 0.0
  %2052 = vmatprep.subr.mxu0 0.0
  %2053 = vmatpush1.msra.mxu0 0.0
  %2054 = vmatprep.subr.mxu0 0.0
  %2055 = vmatpush1.msra.mxu0 0.0
  %2056 = vmatprep.subr.mxu0 0.0
  %2057 = vmatpush1.msra.mxu0 0.0
  %2058 = vmatprep.subr.mxu0 0.0
  %2059 = vmatpush1.msra.mxu0 0.0
  %2060 = vmatprep.subr.mxu0 0.0
  %2061 = vmatpush1.msra.mxu0 0.0
  %2062 = vmatprep.subr.mxu0 0.0
  %2063 = vmatpush1.msra.mxu0 0.0
  %2064 = vmatprep.subr.mxu0 %v460
  %2065 = vmatpush1.msra.mxu0 %v459
  %2066 = vmatprep.subr.mxu0 %v347
  %2067 = vmatpush1.msra.mxu0 %v346
  %2068 = vmatprep.subr.mxu0 %v654
  %2069 = vmatpush1.msra.mxu0 %v653
  %2070 = vmatprep.subr.mxu0 %v24
  %2071 = vmatpush1.msra.mxu0 %v23
  %2072 = vmatprep.subr.mxu0 0.0
  %2073 = vmatpush2.msra.mxu0 0.0
  %2074 = vmatprep.subr.mxu0 0.0
  %2075 = vmatpush2.msra.mxu0 0.0
  %2076 = vmatprep.subr.mxu0 0.0
  %2077 = vmatpush2.msra.mxu0 0.0
  %2078 = vmatprep.subr.mxu0 0.0
  %2079 = vmatpush2.msra.mxu0 0.0
  %2080 = vmatprep.subr.mxu0 0.0
  %2081 = vmatpush2.msra.mxu0 0.0
  %2082 = vmatprep.subr.mxu0 0.0
  %2083 = vmatpush2.msra.mxu0 0.0
  %2084 = vmatprep.subr.mxu0 0.0
  %2085 = vmatpush2.msra.mxu0 0.0
  %2086 = vmatprep.subr.mxu0 0.0
  %2087 = vmatpush2.msra.mxu0 0.0
  %2088 = vmatprep.subr.mxu0 0.0
  %2089 = vmatpush2.msra.mxu0 0.0
  %2090 = vmatprep.subr.mxu0 0.0
  %2091 = vmatpush2.msra.mxu0 0.0
  %2092 = vmatprep.subr.mxu0 0.0
  %2093 = vmatpush2.msra.mxu0 0.0
  %2094 = vmatprep.subr.mxu0 0.0
  %2095 = vmatpush2.msra.mxu0 0.0
  %2096 = vmatprep.subr.mxu0 0.0
  %2097 = vmatpush2.msra.mxu0 0.0
  %2098 = vmatprep.subr.mxu0 0.0
  %2099 = vmatpush2.msra.mxu0 0.0
  %2100 = vmatprep.subr.mxu0 0.0
  %2101 = vmatpush2.msra.mxu0 0.0
  %2102 = vmatprep.subr.mxu0 0.0
  %2103 = vmatpush2.msra.mxu0 0.0
  %2104 = vmatprep.mubr.f32.mxu0 0.0
  %2105 = vmatmul.mubr.f32.gmra.mxu0 %v1612
  %v2106 = vpop.f32.mrf.mxu0
  %v2107 = vadd.f32 0.0, %v2106
  %v2108 = vpop.f32.mrf.mxu0
  %v2109 = vadd.f32 0.0, %v2108
  %2110 = vdwg.mxu0
  %2111 = vmatprep.subr.mxu0 0.0
  %2112 = vmatpush1.msra.mxu0 0.0
  %2113 = vmatprep.subr.mxu0 0.0
  %2114 = vmatpush1.msra.mxu0 0.0
  %2115 = vmatprep.subr.mxu0 0.0
  %2116 = vmatpush1.msra.mxu0 0.0
  %2117 = vmatprep.subr.mxu0 0.0
  %2118 = vmatpush1.msra.mxu0 0.0
  %2119 = vmatprep.subr.mxu0 0.0
  %2120 = vmatpush1.msra.mxu0 0.0
  %2121 = vmatprep.subr.mxu0 0.0
  %2122 = vmatpush1.msra.mxu0 0.0
  %2123 = vmatprep.subr.mxu0 0.0
  %2124 = vmatpush1.msra.mxu0 0.0
  %2125 = vmatprep.subr.mxu0 0.0
  %2126 = vmatpush1.msra.mxu0 0.0
  %2127 = vmatprep.subr.mxu0 0.0
  %2128 = vmatpush1.msra.mxu0 0.0
  %2129 = vmatprep.subr.mxu0 0.0
  %2130 = vmatpush1.msra.mxu0 0.0
  %2131 = vmatprep.subr.mxu0 0.0
  %2132 = vmatpush1.msra.mxu0 0.0
  %2133 = vmatprep.subr.mxu0 0.0
  %2134 = vmatpush1.msra.mxu0 0.0
  %2135 = vmatprep.subr.mxu0 %v462
  %2136 = vmatpush1.msra.mxu0 %v461
  %2137 = vmatprep.subr.mxu0 %v349
  %2138 = vmatpush1.msra.mxu0 %v348
  %2139 = vmatprep.subr.mxu0 %v656
  %2140 = vmatpush1.msra.mxu0 %v655
  %2141 = vmatprep.subr.mxu0 %v26
  %2142 = vmatpush1.msra.mxu0 %v25
  %2143 = vmatprep.subr.mxu0 0.0
  %2144 = vmatpush2.msra.mxu0 0.0
  %2145 = vmatprep.subr.mxu0 0.0
  %2146 = vmatpush2.msra.mxu0 0.0
  %2147 = vmatprep.subr.mxu0 0.0
  %2148 = vmatpush2.msra.mxu0 0.0
  %2149 = vmatprep.subr.mxu0 0.0
  %2150 = vmatpush2.msra.mxu0 0.0
  %2151 = vmatprep.subr.mxu0 0.0
  %2152 = vmatpush2.msra.mxu0 0.0
  %2153 = vmatprep.subr.mxu0 0.0
  %2154 = vmatpush2.msra.mxu0 0.0
  %2155 = vmatprep.subr.mxu0 0.0
  %2156 = vmatpush2.msra.mxu0 0.0
  %2157 = vmatprep.subr.mxu0 0.0
  %2158 = vmatpush2.msra.mxu0 0.0
  %2159 = vmatprep.subr.mxu0 0.0
  %2160 = vmatpush2.msra.mxu0 0.0
  %2161 = vmatprep.subr.mxu0 0.0
  %2162 = vmatpush2.msra.mxu0 0.0
  %2163 = vmatprep.subr.mxu0 0.0
  %2164 = vmatpush2.msra.mxu0 0.0
  %2165 = vmatprep.subr.mxu0 0.0
  %2166 = vmatpush2.msra.mxu0 0.0
  %2167 = vmatprep.subr.mxu0 0.0
  %2168 = vmatpush2.msra.mxu0 0.0
  %2169 = vmatprep.subr.mxu0 0.0
  %2170 = vmatpush2.msra.mxu0 0.0
  %2171 = vmatprep.subr.mxu0 0.0
  %2172 = vmatpush2.msra.mxu0 0.0
  %2173 = vmatprep.subr.mxu0 0.0
  %2174 = vmatpush2.msra.mxu0 0.0
  %2175 = vmatprep.mubr.f32.mxu0 0.0
  %2176 = vmatmul.mubr.f32.gmra.mxu0 %v1612
  %v2177 = vpop.f32.mrf.mxu0
  %v2178 = vadd.f32 0.0, %v2177
  %v2179 = vpop.f32.mrf.mxu0
  %v2180 = vadd.f32 0.0, %v2179
  %2181 = vdwg.mxu0
  %v2182 = vtanh.pop %v1681
  %v2183 = vtanh.pop %v1683
  %v2184 = vtanh.pop %v1752
  %v2185 = vtanh.pop %v1754
  %v2186 = vtanh.pop %v1823
  %v2187 = vtanh.pop %v1825
  %v2188 = vtanh.pop %v1894
  %v2189 = vtanh.pop %v1896
  %v2190 = vtanh.pop %v1965
  %v2191 = vtanh.pop %v1967
  %v2192 = vtanh.pop %v2036
  %v2193 = vtanh.pop %v2038
  %v2194 = vtanh.pop %v2107
  %v2195 = vtanh.pop %v2109
  %v2196 = vtanh.pop %v2178
  %v2197 = vtanh.pop %v2180
  %v2214 = vcombine.low %v2182, %v2183
  %v2215 = vcombine.low %v2184, %v2185
  %v2216 = vcombine.low %v2186, %v2187
  %v2217 = vcombine.low %v2188, %v2189
  %v2218 = vcombine.low %v2190, %v2191
  %v2219 = vcombine.low %v2192, %v2193
  %v2220 = vcombine.low %v2194, %v2195
  %v2221 = vcombine.low %v2196, %v2197
  %s2230 = scalar_lea.vmem %s2, 64
  %2231 = vst [vmem:[%s2230] sm:$0x77] %v2214
  %2232 = vst [vmem:[%s2230 + $0x8] sm:$0x77] %v2215
  %2233 = vst [vmem:[%s2230 + $0x10] sm:$0x77] %v2216
  %2234 = vst [vmem:[%s2230 + $0x18] sm:$0x77] %v2217
  %2235 = vst [vmem:[%s2230 + $0x20] sm:$0x77] %v2218
  %2236 = vst [vmem:[%s2230 + $0x28] sm:$0x77] %v2219
  %2237 = vst [vmem:[%s2230 + $0x30] sm:$0x77] %v2220
  %2238 = vst [vmem:[%s2230 + $0x38] sm:$0x77] %v2221
  %s2239 = scalar_lea.vmem %s1, 8
  %v2240 = vld [vmem:[%s2239] sm:$0x7]
  %v2242 = vsel %vm981, %v2240, 0
  %2244 = vmatprep.subr.mxu0 0.0
  %2245 = vmatpush1.msra.mxu0 0.0
  %2246 = vmatprep.subr.mxu0 0.0
  %2247 = vmatpush1.msra.mxu0 0.0
  %2248 = vmatprep.subr.mxu0 0.0
  %2249 = vmatpush1.msra.mxu0 0.0
  %2250 = vmatprep.subr.mxu0 0.0
  %2251 = vmatpush1.msra.mxu0 0.0
  %2252 = vmatprep.subr.mxu0 0.0
  %2253 = vmatpush1.msra.mxu0 0.0
  %2254 = vmatprep.subr.mxu0 0.0
  %2255 = vmatpush1.msra.mxu0 0.0
  %2256 = vmatprep.subr.mxu0 0.0
  %2257 = vmatpush1.msra.mxu0 0.0
  %2258 = vmatprep.subr.mxu0 0.0
  %2259 = vmatpush1.msra.mxu0 0.0
  %2260 = vmatprep.subr.mxu0 0.0
  %2261 = vmatpush1.msra.mxu0 0.0
  %2262 = vmatprep.subr.mxu0 0.0
  %2263 = vmatpush1.msra.mxu0 0.0
  %2264 = vmatprep.subr.mxu0 0.0
  %2265 = vmatpush1.msra.mxu0 0.0
  %2266 = vmatprep.subr.mxu0 0.0
  %2267 = vmatpush1.msra.mxu0 0.0
  %2268 = vmatprep.subr.mxu0 %v755
  %2269 = vmatpush1.msra.mxu0 %v754
  %2270 = vmatprep.subr.mxu0 %v852
  %2271 = vmatpush1.msra.mxu0 %v851
  %2272 = vmatprep.subr.mxu0 %v545
  %2273 = vmatpush1.msra.mxu0 %v544
  %2274 = vmatprep.subr.mxu0 %v12
  %2275 = vmatpush1.msra.mxu0 %v11
  %2276 = vmatprep.subr.mxu0 0.0
  %2277 = vmatpush2.msra.mxu0 0.0
  %2278 = vmatprep.subr.mxu0 0.0
  %2279 = vmatpush2.msra.mxu0 0.0
  %2280 = vmatprep.subr.mxu0 0.0
  %2281 = vmatpush2.msra.mxu0 0.0
  %2282 = vmatprep.subr.mxu0 0.0
  %2283 = vmatpush2.msra.mxu0 0.0
  %2284 = vmatprep.subr.mxu0 0.0
  %2285 = vmatpush2.msra.mxu0 0.0
  %2286 = vmatprep.subr.mxu0 0.0
  %2287 = vmatpush2.msra.mxu0 0.0
  %2288 = vmatprep.subr.mxu0 0.0
  %2289 = vmatpush2.msra.mxu0 0.0
  %2290 = vmatprep.subr.mxu0 0.0
  %2291 = vmatpush2.msra.mxu0 0.0
  %2292 = vmatprep.subr.mxu0 0.0
  %2293 = vmatpush2.msra.mxu0 0.0
  %2294 = vmatprep.subr.mxu0 0.0
  %2295 = vmatpush2.msra.mxu0 0.0
  %2296 = vmatprep.subr.mxu0 0.0
  %2297 = vmatpush2.msra.mxu0 0.0
  %2298 = vmatprep.subr.mxu0 0.0
  %2299 = vmatpush2.msra.mxu0 0.0
  %2300 = vmatprep.subr.mxu0 0.0
  %2301 = vmatpush2.msra.mxu0 0.0
  %2302 = vmatprep.subr.mxu0 0.0
  %2303 = vmatpush2.msra.mxu0 0.0
  %2304 = vmatprep.subr.mxu0 0.0
  %2305 = vmatpush2.msra.mxu0 0.0
  %2306 = vmatprep.subr.mxu0 0.0
  %2307 = vmatpush2.msra.mxu0 0.0
  %2308 = vmatprep.mubr.f32.mxu0 0.0
  %2309 = vmatmul.mubr.f32.gmra.mxu0 %v2242
  %v2310 = vpop.f32.mrf.mxu0
  %v2311 = vadd.f32 0.0, %v2310
  %v2312 = vpop.f32.mrf.mxu0
  %v2313 = vadd.f32 0.0, %v2312
  %2314 = vdwg.mxu0
  %2315 = vmatprep.subr.mxu0 0.0
  %2316 = vmatpush1.msra.mxu0 0.0
  %2317 = vmatprep.subr.mxu0 0.0
  %2318 = vmatpush1.msra.mxu0 0.0
  %2319 = vmatprep.subr.mxu0 0.0
  %2320 = vmatpush1.msra.mxu0 0.0
  %2321 = vmatprep.subr.mxu0 0.0
  %2322 = vmatpush1.msra.mxu0 0.0
  %2323 = vmatprep.subr.mxu0 0.0
  %2324 = vmatpush1.msra.mxu0 0.0
  %2325 = vmatprep.subr.mxu0 0.0
  %2326 = vmatpush1.msra.mxu0 0.0
  %2327 = vmatprep.subr.mxu0 0.0
  %2328 = vmatpush1.msra.mxu0 0.0
  %2329 = vmatprep.subr.mxu0 0.0
  %2330 = vmatpush1.msra.mxu0 0.0
  %2331 = vmatprep.subr.mxu0 0.0
  %2332 = vmatpush1.msra.mxu0 0.0
  %2333 = vmatprep.subr.mxu0 0.0
  %2334 = vmatpush1.msra.mxu0 0.0
  %2335 = vmatprep.subr.mxu0 0.0
  %2336 = vmatpush1.msra.mxu0 0.0
  %2337 = vmatprep.subr.mxu0 0.0
  %2338 = vmatpush1.msra.mxu0 0.0
  %2339 = vmatprep.subr.mxu0 %v757
  %2340 = vmatpush1.msra.mxu0 %v756
  %2341 = vmatprep.subr.mxu0 %v854
  %2342 = vmatpush1.msra.mxu0 %v853
  %2343 = vmatprep.subr.mxu0 %v547
  %2344 = vmatpush1.msra.mxu0 %v546
  %2345 = vmatprep.subr.mxu0 %v14
  %2346 = vmatpush1.msra.mxu0 %v13
  %2347 = vmatprep.subr.mxu0 0.0
  %2348 = vmatpush2.msra.mxu0 0.0
  %2349 = vmatprep.subr.mxu0 0.0
  %2350 = vmatpush2.msra.mxu0 0.0
  %2351 = vmatprep.subr.mxu0 0.0
  %2352 = vmatpush2.msra.mxu0 0.0
  %2353 = vmatprep.subr.mxu0 0.0
  %2354 = vmatpush2.msra.mxu0 0.0
  %2355 = vmatprep.subr.mxu0 0.0
  %2356 = vmatpush2.msra.mxu0 0.0
  %2357 = vmatprep.subr.mxu0 0.0
  %2358 = vmatpush2.msra.mxu0 0.0
  %2359 = vmatprep.subr.mxu0 0.0
  %2360 = vmatpush2.msra.mxu0 0.0
  %2361 = vmatprep.subr.mxu0 0.0
  %2362 = vmatpush2.msra.mxu0 0.0
  %2363 = vmatprep.subr.mxu0 0.0
  %2364 = vmatpush2.msra.mxu0 0.0
  %2365 = vmatprep.subr.mxu0 0.0
  %2366 = vmatpush2.msra.mxu0 0.0
  %2367 = vmatprep.subr.mxu0 0.0
  %2368 = vmatpush2.msra.mxu0 0.0
  %2369 = vmatprep.subr.mxu0 0.0
  %2370 = vmatpush2.msra.mxu0 0.0
  %2371 = vmatprep.subr.mxu0 0.0
  %2372 = vmatpush2.msra.mxu0 0.0
  %2373 = vmatprep.subr.mxu0 0.0
  %2374 = vmatpush2.msra.mxu0 0.0
  %2375 = vmatprep.subr.mxu0 0.0
  %2376 = vmatpush2.msra.mxu0 0.0
  %2377 = vmatprep.subr.mxu0 0.0
  %2378 = vmatpush2.msra.mxu0 0.0
  %2379 = vmatprep.mubr.f32.mxu0 0.0
  %2380 = vmatmul.mubr.f32.gmra.mxu0 %v2242
  %v2381 = vpop.f32.mrf.mxu0
  %v2382 = vadd.f32 0.0, %v2381
  %v2383 = vpop.f32.mrf.mxu0
  %v2384 = vadd.f32 0.0, %v2383
  %2385 = vdwg.mxu0
  %2386 = vmatprep.subr.mxu0 0.0
  %2387 = vmatpush1.msra.mxu0 0.0
  %2388 = vmatprep.subr.mxu0 0.0
  %2389 = vmatpush1.msra.mxu0 0.0
  %2390 = vmatprep.subr.mxu0 0.0
  %2391 = vmatpush1.msra.mxu0 0.0
  %2392 = vmatprep.subr.mxu0 0.0
  %2393 = vmatpush1.msra.mxu0 0.0
  %2394 = vmatprep.subr.mxu0 0.0
  %2395 = vmatpush1.msra.mxu0 0.0
  %2396 = vmatprep.subr.mxu0 0.0
  %2397 = vmatpush1.msra.mxu0 0.0
  %2398 = vmatprep.subr.mxu0 0.0
  %2399 = vmatpush1.msra.mxu0 0.0
  %2400 = vmatprep.subr.mxu0 0.0
  %2401 = vmatpush1.msra.mxu0 0.0
  %2402 = vmatprep.subr.mxu0 0.0
  %2403 = vmatpush1.msra.mxu0 0.0
  %2404 = vmatprep.subr.mxu0 0.0
  %2405 = vmatpush1.msra.mxu0 0.0
  %2406 = vmatprep.subr.mxu0 0.0
  %2407 = vmatpush1.msra.mxu0 0.0
  %2408 = vmatprep.subr.mxu0 0.0
  %2409 = vmatpush1.msra.mxu0 0.0
  %2410 = vmatprep.subr.mxu0 %v759
  %2411 = vmatpush1.msra.mxu0 %v758
  %2412 = vmatprep.subr.mxu0 %v856
  %2413 = vmatpush1.msra.mxu0 %v855
  %2414 = vmatprep.subr.mxu0 %v549
  %2415 = vmatpush1.msra.mxu0 %v548
  %2416 = vmatprep.subr.mxu0 %v16
  %2417 = vmatpush1.msra.mxu0 %v15
  %2418 = vmatprep.subr.mxu0 0.0
  %2419 = vmatpush2.msra.mxu0 0.0
  %2420 = vmatprep.subr.mxu0 0.0
  %2421 = vmatpush2.msra.mxu0 0.0
  %2422 = vmatprep.subr.mxu0 0.0
  %2423 = vmatpush2.msra.mxu0 0.0
  %2424 = vmatprep.subr.mxu0 0.0
  %2425 = vmatpush2.msra.mxu0 0.0
  %2426 = vmatprep.subr.mxu0 0.0
  %2427 = vmatpush2.msra.mxu0 0.0
  %2428 = vmatprep.subr.mxu0 0.0
  %2429 = vmatpush2.msra.mxu0 0.0
  %2430 = vmatprep.subr.mxu0 0.0
  %2431 = vmatpush2.msra.mxu0 0.0
  %2432 = vmatprep.subr.mxu0 0.0
  %2433 = vmatpush2.msra.mxu0 0.0
  %2434 = vmatprep.subr.mxu0 0.0
  %2435 = vmatpush2.msra.mxu0 0.0
  %2436 = vmatprep.subr.mxu0 0.0
  %2437 = vmatpush2.msra.mxu0 0.0
  %2438 = vmatprep.subr.mxu0 0.0
  %2439 = vmatpush2.msra.mxu0 0.0
  %2440 = vmatprep.subr.mxu0 0.0
  %2441 = vmatpush2.msra.mxu0 0.0
  %2442 = vmatprep.subr.mxu0 0.0
  %2443 = vmatpush2.msra.mxu0 0.0
  %2444 = vmatprep.subr.mxu0 0.0
  %2445 = vmatpush2.msra.mxu0 0.0
  %2446 = vmatprep.subr.mxu0 0.0
  %2447 = vmatpush2.msra.mxu0 0.0
  %2448 = vmatprep.subr.mxu0 0.0
  %2449 = vmatpush2.msra.mxu0 0.0
  %2450 = vmatprep.mubr.f32.mxu0 0.0
  %2451 = vmatmul.mubr.f32.gmra.mxu0 %v2242
  %v2452 = vpop.f32.mrf.mxu0
  %v2453 = vadd.f32 0.0, %v2452
  %v2454 = vpop.f32.mrf.mxu0
  %v2455 = vadd.f32 0.0, %v2454
  %2456 = vdwg.mxu0
  %2457 = vmatprep.subr.mxu0 0.0
  %2458 = vmatpush1.msra.mxu0 0.0
  %2459 = vmatprep.subr.mxu0 0.0
  %2460 = vmatpush1.msra.mxu0 0.0
  %2461 = vmatprep.subr.mxu0 0.0
  %2462 = vmatpush1.msra.mxu0 0.0
  %2463 = vmatprep.subr.mxu0 0.0
  %2464 = vmatpush1.msra.mxu0 0.0
  %2465 = vmatprep.subr.mxu0 0.0
  %2466 = vmatpush1.msra.mxu0 0.0
  %2467 = vmatprep.subr.mxu0 0.0
  %2468 = vmatpush1.msra.mxu0 0.0
  %2469 = vmatprep.subr.mxu0 0.0
  %2470 = vmatpush1.msra.mxu0 0.0
  %2471 = vmatprep.subr.mxu0 0.0
  %2472 = vmatpush1.msra.mxu0 0.0
  %2473 = vmatprep.subr.mxu0 0.0
  %2474 = vmatpush1.msra.mxu0 0.0
  %2475 = vmatprep.subr.mxu0 0.0
  %2476 = vmatpush1.msra.mxu0 0.0
  %2477 = vmatprep.subr.mxu0 0.0
  %2478 = vmatpush1.msra.mxu0 0.0
  %2479 = vmatprep.subr.mxu0 0.0
  %2480 = vmatpush1.msra.mxu0 0.0
  %2481 = vmatprep.subr.mxu0 %v761
  %2482 = vmatpush1.msra.mxu0 %v760
  %2483 = vmatprep.subr.mxu0 %v858
  %2484 = vmatpush1.msra.mxu0 %v857
  %2485 = vmatprep.subr.mxu0 %v551
  %2486 = vmatpush1.msra.mxu0 %v550
  %2487 = vmatprep.subr.mxu0 %v18
  %2488 = vmatpush1.msra.mxu0 %v17
  %2489 = vmatprep.subr.mxu0 0.0
  %2490 = vmatpush2.msra.mxu0 0.0
  %2491 = vmatprep.subr.mxu0 0.0
  %2492 = vmatpush2.msra.mxu0 0.0
  %2493 = vmatprep.subr.mxu0 0.0
  %2494 = vmatpush2.msra.mxu0 0.0
  %2495 = vmatprep.subr.mxu0 0.0
  %2496 = vmatpush2.msra.mxu0 0.0
  %2497 = vmatprep.subr.mxu0 0.0
  %2498 = vmatpush2.msra.mxu0 0.0
  %2499 = vmatprep.subr.mxu0 0.0
  %2500 = vmatpush2.msra.mxu0 0.0
  %2501 = vmatprep.subr.mxu0 0.0
  %2502 = vmatpush2.msra.mxu0 0.0
  %2503 = vmatprep.subr.mxu0 0.0
  %2504 = vmatpush2.msra.mxu0 0.0
  %2505 = vmatprep.subr.mxu0 0.0
  %2506 = vmatpush2.msra.mxu0 0.0
  %2507 = vmatprep.subr.mxu0 0.0
  %2508 = vmatpush2.msra.mxu0 0.0
  %2509 = vmatprep.subr.mxu0 0.0
  %2510 = vmatpush2.msra.mxu0 0.0
  %2511 = vmatprep.subr.mxu0 0.0
  %2512 = vmatpush2.msra.mxu0 0.0
  %2513 = vmatprep.subr.mxu0 0.0
  %2514 = vmatpush2.msra.mxu0 0.0
  %2515 = vmatprep.subr.mxu0 0.0
  %2516 = vmatpush2.msra.mxu0 0.0
  %2517 = vmatprep.subr.mxu0 0.0
  %2518 = vmatpush2.msra.mxu0 0.0
  %2519 = vmatprep.subr.mxu0 0.0
  %2520 = vmatpush2.msra.mxu0 0.0
  %2521 = vmatprep.mubr.f32.mxu0 0.0
  %2522 = vmatmul.mubr.f32.gmra.mxu0 %v2242
  %v2523 = vpop.f32.mrf.mxu0
  %v2524 = vadd.f32 0.0, %v2523
  %v2525 = vpop.f32.mrf.mxu0
  %v2526 = vadd.f32 0.0, %v2525
  %2527 = vdwg.mxu0
  %2528 = vmatprep.subr.mxu0 0.0
  %2529 = vmatpush1.msra.mxu0 0.0
  %2530 = vmatprep.subr.mxu0 0.0
  %2531 = vmatpush1.msra.mxu0 0.0
  %2532 = vmatprep.subr.mxu0 0.0
  %2533 = vmatpush1.msra.mxu0 0.0
  %2534 = vmatprep.subr.mxu0 0.0
  %2535 = vmatpush1.msra.mxu0 0.0
  %2536 = vmatprep.subr.mxu0 0.0
  %2537 = vmatpush1.msra.mxu0 0.0
  %2538 = vmatprep.subr.mxu0 0.0
  %2539 = vmatpush1.msra.mxu0 0.0
  %2540 = vmatprep.subr.mxu0 0.0
  %2541 = vmatpush1.msra.mxu0 0.0
  %2542 = vmatprep.subr.mxu0 0.0
  %2543 = vmatpush1.msra.mxu0 0.0
  %2544 = vmatprep.subr.mxu0 0.0
  %2545 = vmatpush1.msra.mxu0 0.0
  %2546 = vmatprep.subr.mxu0 0.0
  %2547 = vmatpush1.msra.mxu0 0.0
  %2548 = vmatprep.subr.mxu0 0.0
  %2549 = vmatpush1.msra.mxu0 0.0
  %2550 = vmatprep.subr.mxu0 0.0
  %2551 = vmatpush1.msra.mxu0 0.0
  %2552 = vmatprep.subr.mxu0 %v763
  %2553 = vmatpush1.msra.mxu0 %v762
  %2554 = vmatprep.subr.mxu0 %v860
  %2555 = vmatpush1.msra.mxu0 %v859
  %2556 = vmatprep.subr.mxu0 %v553
  %2557 = vmatpush1.msra.mxu0 %v552
  %2558 = vmatprep.subr.mxu0 %v20
  %2559 = vmatpush1.msra.mxu0 %v19
  %2560 = vmatprep.subr.mxu0 0.0
  %2561 = vmatpush2.msra.mxu0 0.0
  %2562 = vmatprep.subr.mxu0 0.0
  %2563 = vmatpush2.msra.mxu0 0.0
  %2564 = vmatprep.subr.mxu0 0.0
  %2565 = vmatpush2.msra.mxu0 0.0
  %2566 = vmatprep.subr.mxu0 0.0
  %2567 = vmatpush2.msra.mxu0 0.0
  %2568 = vmatprep.subr.mxu0 0.0
  %2569 = vmatpush2.msra.mxu0 0.0
  %2570 = vmatprep.subr.mxu0 0.0
  %2571 = vmatpush2.msra.mxu0 0.0
  %2572 = vmatprep.subr.mxu0 0.0
  %2573 = vmatpush2.msra.mxu0 0.0
  %2574 = vmatprep.subr.mxu0 0.0
  %2575 = vmatpush2.msra.mxu0 0.0
  %2576 = vmatprep.subr.mxu0 0.0
  %2577 = vmatpush2.msra.mxu0 0.0
  %2578 = vmatprep.subr.mxu0 0.0
  %2579 = vmatpush2.msra.mxu0 0.0
  %2580 = vmatprep.subr.mxu0 0.0
  %2581 = vmatpush2.msra.mxu0 0.0
  %2582 = vmatprep.subr.mxu0 0.0
  %2583 = vmatpush2.msra.mxu0 0.0
  %2584 = vmatprep.subr.mxu0 0.0
  %2585 = vmatpush2.msra.mxu0 0.0
  %2586 = vmatprep.subr.mxu0 0.0
  %2587 = vmatpush2.msra.mxu0 0.0
  %2588 = vmatprep.subr.mxu0 0.0
  %2589 = vmatpush2.msra.mxu0 0.0
  %2590 = vmatprep.subr.mxu0 0.0
  %2591 = vmatpush2.msra.mxu0 0.0
  %2592 = vmatprep.mubr.f32.mxu0 0.0
  %2593 = vmatmul.mubr.f32.gmra.mxu0 %v2242
  %v2594 = vpop.f32.mrf.mxu0
  %v2595 = vadd.f32 0.0, %v2594
  %v2596 = vpop.f32.mrf.mxu0
  %v2597 = vadd.f32 0.0, %v2596
  %2598 = vdwg.mxu0
  %2599 = vmatprep.subr.mxu0 0.0
  %2600 = vmatpush1.msra.mxu0 0.0
  %2601 = vmatprep.subr.mxu0 0.0
  %2602 = vmatpush1.msra.mxu0 0.0
  %2603 = vmatprep.subr.mxu0 0.0
  %2604 = vmatpush1.msra.mxu0 0.0
  %2605 = vmatprep.subr.mxu0 0.0
  %2606 = vmatpush1.msra.mxu0 0.0
  %2607 = vmatprep.subr.mxu0 0.0
  %2608 = vmatpush1.msra.mxu0 0.0
  %2609 = vmatprep.subr.mxu0 0.0
  %2610 = vmatpush1.msra.mxu0 0.0
  %2611 = vmatprep.subr.mxu0 0.0
  %2612 = vmatpush1.msra.mxu0 0.0
  %2613 = vmatprep.subr.mxu0 0.0
  %2614 = vmatpush1.msra.mxu0 0.0
  %2615 = vmatprep.subr.mxu0 0.0
  %2616 = vmatpush1.msra.mxu0 0.0
  %2617 = vmatprep.subr.mxu0 0.0
  %2618 = vmatpush1.msra.mxu0 0.0
  %2619 = vmatprep.subr.mxu0 0.0
  %2620 = vmatpush1.msra.mxu0 0.0
  %2621 = vmatprep.subr.mxu0 0.0
  %2622 = vmatpush1.msra.mxu0 0.0
  %2623 = vmatprep.subr.mxu0 %v765
  %2624 = vmatpush1.msra.mxu0 %v764
  %2625 = vmatprep.subr.mxu0 %v862
  %2626 = vmatpush1.msra.mxu0 %v861
  %2627 = vmatprep.subr.mxu0 %v555
  %2628 = vmatpush1.msra.mxu0 %v554
  %2629 = vmatprep.subr.mxu0 %v22
  %2630 = vmatpush1.msra.mxu0 %v21
  %2631 = vmatprep.subr.mxu0 0.0
  %2632 = vmatpush2.msra.mxu0 0.0
  %2633 = vmatprep.subr.mxu0 0.0
  %2634 = vmatpush2.msra.mxu0 0.0
  %2635 = vmatprep.subr.mxu0 0.0
  %2636 = vmatpush2.msra.mxu0 0.0
  %2637 = vmatprep.subr.mxu0 0.0
  %2638 = vmatpush2.msra.mxu0 0.0
  %2639 = vmatprep.subr.mxu0 0.0
  %2640 = vmatpush2.msra.mxu0 0.0
  %2641 = vmatprep.subr.mxu0 0.0
  %2642 = vmatpush2.msra.mxu0 0.0
  %2643 = vmatprep.subr.mxu0 0.0
  %2644 = vmatpush2.msra.mxu0 0.0
  %2645 = vmatprep.subr.mxu0 0.0
  %2646 = vmatpush2.msra.mxu0 0.0
  %2647 = vmatprep.subr.mxu0 0.0
  %2648 = vmatpush2.msra.mxu0 0.0
  %2649 = vmatprep.subr.mxu0 0.0
  %2650 = vmatpush2.msra.mxu0 0.0
  %2651 = vmatprep.subr.mxu0 0.0
  %2652 = vmatpush2.msra.mxu0 0.0
  %2653 = vmatprep.subr.mxu0 0.0
  %2654 = vmatpush2.msra.mxu0 0.0
  %2655 = vmatprep.subr.mxu0 0.0
  %2656 = vmatpush2.msra.mxu0 0.0
  %2657 = vmatprep.subr.mxu0 0.0
  %2658 = vmatpush2.msra.mxu0 0.0
  %2659 = vmatprep.subr.mxu0 0.0
  %2660 = vmatpush2.msra.mxu0 0.0
  %2661 = vmatprep.subr.mxu0 0.0
  %2662 = vmatpush2.msra.mxu0 0.0
  %2663 = vmatprep.mubr.f32.mxu0 0.0
  %2664 = vmatmul.mubr.f32.gmra.mxu0 %v2242
  %v2665 = vpop.f32.mrf.mxu0
  %v2666 = vadd.f32 0.0, %v2665
  %v2667 = vpop.f32.mrf.mxu0
  %v2668 = vadd.f32 0.0, %v2667
  %2669 = vdwg.mxu0
  %2670 = vmatprep.subr.mxu0 0.0
  %2671 = vmatpush1.msra.mxu0 0.0
  %2672 = vmatprep.subr.mxu0 0.0
  %2673 = vmatpush1.msra.mxu0 0.0
  %2674 = vmatprep.subr.mxu0 0.0
  %2675 = vmatpush1.msra.mxu0 0.0
  %2676 = vmatprep.subr.mxu0 0.0
  %2677 = vmatpush1.msra.mxu0 0.0
  %2678 = vmatprep.subr.mxu0 0.0
  %2679 = vmatpush1.msra.mxu0 0.0
  %2680 = vmatprep.subr.mxu0 0.0
  %2681 = vmatpush1.msra.mxu0 0.0
  %2682 = vmatprep.subr.mxu0 0.0
  %2683 = vmatpush1.msra.mxu0 0.0
  %2684 = vmatprep.subr.mxu0 0.0
  %2685 = vmatpush1.msra.mxu0 0.0
  %2686 = vmatprep.subr.mxu0 0.0
  %2687 = vmatpush1.msra.mxu0 0.0
  %2688 = vmatprep.subr.mxu0 0.0
  %2689 = vmatpush1.msra.mxu0 0.0
  %2690 = vmatprep.subr.mxu0 0.0
  %2691 = vmatpush1.msra.mxu0 0.0
  %2692 = vmatprep.subr.mxu0 0.0
  %2693 = vmatpush1.msra.mxu0 0.0
  %2694 = vmatprep.subr.mxu0 %v767
  %2695 = vmatpush1.msra.mxu0 %v766
  %2696 = vmatprep.subr.mxu0 %v864
  %2697 = vmatpush1.msra.mxu0 %v863
  %2698 = vmatprep.subr.mxu0 %v557
  %2699 = vmatpush1.msra.mxu0 %v556
  %2700 = vmatprep.subr.mxu0 %v24
  %2701 = vmatpush1.msra.mxu0 %v23
  %2702 = vmatprep.subr.mxu0 0.0
  %2703 = vmatpush2.msra.mxu0 0.0
  %2704 = vmatprep.subr.mxu0 0.0
  %2705 = vmatpush2.msra.mxu0 0.0
  %2706 = vmatprep.subr.mxu0 0.0
  %2707 = vmatpush2.msra.mxu0 0.0
  %2708 = vmatprep.subr.mxu0 0.0
  %2709 = vmatpush2.msra.mxu0 0.0
  %2710 = vmatprep.subr.mxu0 0.0
  %2711 = vmatpush2.msra.mxu0 0.0
  %2712 = vmatprep.subr.mxu0 0.0
  %2713 = vmatpush2.msra.mxu0 0.0
  %2714 = vmatprep.subr.mxu0 0.0
  %2715 = vmatpush2.msra.mxu0 0.0
  %2716 = vmatprep.subr.mxu0 0.0
  %2717 = vmatpush2.msra.mxu0 0.0
  %2718 = vmatprep.subr.mxu0 0.0
  %2719 = vmatpush2.msra.mxu0 0.0
  %2720 = vmatprep.subr.mxu0 0.0
  %2721 = vmatpush2.msra.mxu0 0.0
  %2722 = vmatprep.subr.mxu0 0.0
  %2723 = vmatpush2.msra.mxu0 0.0
  %2724 = vmatprep.subr.mxu0 0.0
  %2725 = vmatpush2.msra.mxu0 0.0
  %2726 = vmatprep.subr.mxu0 0.0
  %2727 = vmatpush2.msra.mxu0 0.0
  %2728 = vmatprep.subr.mxu0 0.0
  %2729 = vmatpush2.msra.mxu0 0.0
  %2730 = vmatprep.subr.mxu0 0.0
  %2731 = vmatpush2.msra.mxu0 0.0
  %2732 = vmatprep.subr.mxu0 0.0
  %2733 = vmatpush2.msra.mxu0 0.0
  %2734 = vmatprep.mubr.f32.mxu0 0.0
  %2735 = vmatmul.mubr.f32.gmra.mxu0 %v2242
  %v2736 = vpop.f32.mrf.mxu0
  %v2737 = vadd.f32 0.0, %v2736
  %v2738 = vpop.f32.mrf.mxu0
  %v2739 = vadd.f32 0.0, %v2738
  %2740 = vdwg.mxu0
  %2741 = vmatprep.subr.mxu0 0.0
  %2742 = vmatpush1.msra.mxu0 0.0
  %2743 = vmatprep.subr.mxu0 0.0
  %2744 = vmatpush1.msra.mxu0 0.0
  %2745 = vmatprep.subr.mxu0 0.0
  %2746 = vmatpush1.msra.mxu0 0.0
  %2747 = vmatprep.subr.mxu0 0.0
  %2748 = vmatpush1.msra.mxu0 0.0
  %2749 = vmatprep.subr.mxu0 0.0
  %2750 = vmatpush1.msra.mxu0 0.0
  %2751 = vmatprep.subr.mxu0 0.0
  %2752 = vmatpush1.msra.mxu0 0.0
  %2753 = vmatprep.subr.mxu0 0.0
  %2754 = vmatpush1.msra.mxu0 0.0
  %2755 = vmatprep.subr.mxu0 0.0
  %2756 = vmatpush1.msra.mxu0 0.0
  %2757 = vmatprep.subr.mxu0 0.0
  %2758 = vmatpush1.msra.mxu0 0.0
  %2759 = vmatprep.subr.mxu0 0.0
  %2760 = vmatpush1.msra.mxu0 0.0
  %2761 = vmatprep.subr.mxu0 0.0
  %2762 = vmatpush1.msra.mxu0 0.0
  %2763 = vmatprep.subr.mxu0 0.0
  %2764 = vmatpush1.msra.mxu0 0.0
  %2765 = vmatprep.subr.mxu0 %v769
  %2766 = vmatpush1.msra.mxu0 %v768
  %2767 = vmatprep.subr.mxu0 %v866
  %2768 = vmatpush1.msra.mxu0 %v865
  %2769 = vmatprep.subr.mxu0 %v559
  %2770 = vmatpush1.msra.mxu0 %v558
  %2771 = vmatprep.subr.mxu0 %v26
  %2772 = vmatpush1.msra.mxu0 %v25
  %2773 = vmatprep.subr.mxu0 0.0
  %2774 = vmatpush2.msra.mxu0 0.0
  %2775 = vmatprep.subr.mxu0 0.0
  %2776 = vmatpush2.msra.mxu0 0.0
  %2777 = vmatprep.subr.mxu0 0.0
  %2778 = vmatpush2.msra.mxu0 0.0
  %2779 = vmatprep.subr.mxu0 0.0
  %2780 = vmatpush2.msra.mxu0 0.0
  %2781 = vmatprep.subr.mxu0 0.0
  %2782 = vmatpush2.msra.mxu0 0.0
  %2783 = vmatprep.subr.mxu0 0.0
  %2784 = vmatpush2.msra.mxu0 0.0
  %2785 = vmatprep.subr.mxu0 0.0
  %2786 = vmatpush2.msra.mxu0 0.0
  %2787 = vmatprep.subr.mxu0 0.0
  %2788 = vmatpush2.msra.mxu0 0.0
  %2789 = vmatprep.subr.mxu0 0.0
  %2790 = vmatpush2.msra.mxu0 0.0
  %2791 = vmatprep.subr.mxu0 0.0
  %2792 = vmatpush2.msra.mxu0 0.0
  %2793 = vmatprep.subr.mxu0 0.0
  %2794 = vmatpush2.msra.mxu0 0.0
  %2795 = vmatprep.subr.mxu0 0.0
  %2796 = vmatpush2.msra.mxu0 0.0
  %2797 = vmatprep.subr.mxu0 0.0
  %2798 = vmatpush2.msra.mxu0 0.0
  %2799 = vmatprep.subr.mxu0 0.0
  %2800 = vmatpush2.msra.mxu0 0.0
  %2801 = vmatprep.subr.mxu0 0.0
  %2802 = vmatpush2.msra.mxu0 0.0
  %2803 = vmatprep.subr.mxu0 0.0
  %2804 = vmatpush2.msra.mxu0 0.0
  %2805 = vmatprep.mubr.f32.mxu0 0.0
  %2806 = vmatmul.mubr.f32.gmra.mxu0 %v2242
  %v2807 = vpop.f32.mrf.mxu0
  %v2808 = vadd.f32 0.0, %v2807
  %v2809 = vpop.f32.mrf.mxu0
  %v2810 = vadd.f32 0.0, %v2809
  %2811 = vdwg.mxu0
  %v2812 = vtanh.pop %v2311
  %v2813 = vtanh.pop %v2313
  %v2814 = vtanh.pop %v2382
  %v2815 = vtanh.pop %v2384
  %v2816 = vtanh.pop %v2453
  %v2817 = vtanh.pop %v2455
  %v2818 = vtanh.pop %v2524
  %v2819 = vtanh.pop %v2526
  %v2820 = vtanh.pop %v2595
  %v2821 = vtanh.pop %v2597
  %v2822 = vtanh.pop %v2666
  %v2823 = vtanh.pop %v2668
  %v2824 = vtanh.pop %v2737
  %v2825 = vtanh.pop %v2739
  %v2826 = vtanh.pop %v2808
  %v2827 = vtanh.pop %v2810
  %v2844 = vcombine.low %v2812, %v2813
  %v2845 = vcombine.low %v2814, %v2815
  %v2846 = vcombine.low %v2816, %v2817
  %v2847 = vcombine.low %v2818, %v2819
  %v2848 = vcombine.low %v2820, %v2821
  %v2849 = vcombine.low %v2822, %v2823
  %v2850 = vcombine.low %v2824, %v2825
  %v2851 = vcombine.low %v2826, %v2827
  %s2860 = scalar_lea.vmem %s2, 128
  %2861 = vst [vmem:[%s2860] sm:$0x77] %v2844
  %2862 = vst [vmem:[%s2860 + $0x8] sm:$0x77] %v2845
  %2863 = vst [vmem:[%s2860 + $0x10] sm:$0x77] %v2846
  %2864 = vst [vmem:[%s2860 + $0x18] sm:$0x77] %v2847
  %2865 = vst [vmem:[%s2860 + $0x20] sm:$0x77] %v2848
  %2866 = vst [vmem:[%s2860 + $0x28] sm:$0x77] %v2849
  %2867 = vst [vmem:[%s2860 + $0x30] sm:$0x77] %v2850
  %2868 = vst [vmem:[%s2860 + $0x38] sm:$0x77] %v2851
  %s2869 = scalar_lea.vmem %s1, 12
  %v2870 = vld [vmem:[%s2869] sm:$0x7]
  %v2872 = vsel %vm981, %v2870, 0
  %2874 = vmatprep.subr.mxu0 0.0
  %2875 = vmatpush1.msra.mxu0 0.0
  %2876 = vmatprep.subr.mxu0 0.0
  %2877 = vmatpush1.msra.mxu0 0.0
  %2878 = vmatprep.subr.mxu0 0.0
  %2879 = vmatpush1.msra.mxu0 0.0
  %2880 = vmatprep.subr.mxu0 0.0
  %2881 = vmatpush1.msra.mxu0 0.0
  %2882 = vmatprep.subr.mxu0 0.0
  %2883 = vmatpush1.msra.mxu0 0.0
  %2884 = vmatprep.subr.mxu0 0.0
  %2885 = vmatpush1.msra.mxu0 0.0
  %2886 = vmatprep.subr.mxu0 0.0
  %2887 = vmatpush1.msra.mxu0 0.0
  %2888 = vmatprep.subr.mxu0 0.0
  %2889 = vmatpush1.msra.mxu0 0.0
  %2890 = vmatprep.subr.mxu0 0.0
  %2891 = vmatpush1.msra.mxu0 0.0
  %2892 = vmatprep.subr.mxu0 0.0
  %2893 = vmatpush1.msra.mxu0 0.0
  %2894 = vmatprep.subr.mxu0 0.0
  %2895 = vmatpush1.msra.mxu0 0.0
  %2896 = vmatprep.subr.mxu0 0.0
  %2897 = vmatpush1.msra.mxu0 0.0
  %2898 = vmatprep.subr.mxu0 %v965
  %2899 = vmatpush1.msra.mxu0 %v964
  %2900 = vmatprep.subr.mxu0 %v852
  %2901 = vmatpush1.msra.mxu0 %v851
  %2902 = vmatprep.subr.mxu0 %v642
  %2903 = vmatpush1.msra.mxu0 %v641
  %2904 = vmatprep.subr.mxu0 %v12
  %2905 = vmatpush1.msra.mxu0 %v11
  %2906 = vmatprep.subr.mxu0 0.0
  %2907 = vmatpush2.msra.mxu0 0.0
  %2908 = vmatprep.subr.mxu0 0.0
  %2909 = vmatpush2.msra.mxu0 0.0
  %2910 = vmatprep.subr.mxu0 0.0
  %2911 = vmatpush2.msra.mxu0 0.0
  %2912 = vmatprep.subr.mxu0 0.0
  %2913 = vmatpush2.msra.mxu0 0.0
  %2914 = vmatprep.subr.mxu0 0.0
  %2915 = vmatpush2.msra.mxu0 0.0
  %2916 = vmatprep.subr.mxu0 0.0
  %2917 = vmatpush2.msra.mxu0 0.0
  %2918 = vmatprep.subr.mxu0 0.0
  %2919 = vmatpush2.msra.mxu0 0.0
  %2920 = vmatprep.subr.mxu0 0.0
  %2921 = vmatpush2.msra.mxu0 0.0
  %2922 = vmatprep.subr.mxu0 0.0
  %2923 = vmatpush2.msra.mxu0 0.0
  %2924 = vmatprep.subr.mxu0 0.0
  %2925 = vmatpush2.msra.mxu0 0.0
  %2926 = vmatprep.subr.mxu0 0.0
  %2927 = vmatpush2.msra.mxu0 0.0
  %2928 = vmatprep.subr.mxu0 0.0
  %2929 = vmatpush2.msra.mxu0 0.0
  %2930 = vmatprep.subr.mxu0 0.0
  %2931 = vmatpush2.msra.mxu0 0.0
  %2932 = vmatprep.subr.mxu0 0.0
  %2933 = vmatpush2.msra.mxu0 0.0
  %2934 = vmatprep.subr.mxu0 0.0
  %2935 = vmatpush2.msra.mxu0 0.0
  %2936 = vmatprep.subr.mxu0 0.0
  %2937 = vmatpush2.msra.mxu0 0.0
  %2938 = vmatprep.mubr.f32.mxu0 0.0
  %2939 = vmatmul.mubr.f32.gmra.mxu0 %v2872
  %v2940 = vpop.f32.mrf.mxu0
  %v2941 = vadd.f32 0.0, %v2940
  %v2942 = vpop.f32.mrf.mxu0
  %v2943 = vadd.f32 0.0, %v2942
  %2944 = vdwg.mxu0
  %2945 = vmatprep.subr.mxu0 0.0
  %2946 = vmatpush1.msra.mxu0 0.0
  %2947 = vmatprep.subr.mxu0 0.0
  %2948 = vmatpush1.msra.mxu0 0.0
  %2949 = vmatprep.subr.mxu0 0.0
  %2950 = vmatpush1.msra.mxu0 0.0
  %2951 = vmatprep.subr.mxu0 0.0
  %2952 = vmatpush1.msra.mxu0 0.0
  %2953 = vmatprep.subr.mxu0 0.0
  %2954 = vmatpush1.msra.mxu0 0.0
  %2955 = vmatprep.subr.mxu0 0.0
  %2956 = vmatpush1.msra.mxu0 0.0
  %2957 = vmatprep.subr.mxu0 0.0
  %2958 = vmatpush1.msra.mxu0 0.0
  %2959 = vmatprep.subr.mxu0 0.0
  %2960 = vmatpush1.msra.mxu0 0.0
  %2961 = vmatprep.subr.mxu0 0.0
  %2962 = vmatpush1.msra.mxu0 0.0
  %2963 = vmatprep.subr.mxu0 0.0
  %2964 = vmatpush1.msra.mxu0 0.0
  %2965 = vmatprep.subr.mxu0 0.0
  %2966 = vmatpush1.msra.mxu0 0.0
  %2967 = vmatprep.subr.mxu0 0.0
  %2968 = vmatpush1.msra.mxu0 0.0
  %2969 = vmatprep.subr.mxu0 %v967
  %2970 = vmatpush1.msra.mxu0 %v966
  %2971 = vmatprep.subr.mxu0 %v854
  %2972 = vmatpush1.msra.mxu0 %v853
  %2973 = vmatprep.subr.mxu0 %v644
  %2974 = vmatpush1.msra.mxu0 %v643
  %2975 = vmatprep.subr.mxu0 %v14
  %2976 = vmatpush1.msra.mxu0 %v13
  %2977 = vmatprep.subr.mxu0 0.0
  %2978 = vmatpush2.msra.mxu0 0.0
  %2979 = vmatprep.subr.mxu0 0.0
  %2980 = vmatpush2.msra.mxu0 0.0
  %2981 = vmatprep.subr.mxu0 0.0
  %2982 = vmatpush2.msra.mxu0 0.0
  %2983 = vmatprep.subr.mxu0 0.0
  %2984 = vmatpush2.msra.mxu0 0.0
  %2985 = vmatprep.subr.mxu0 0.0
  %2986 = vmatpush2.msra.mxu0 0.0
  %2987 = vmatprep.subr.mxu0 0.0
  %2988 = vmatpush2.msra.mxu0 0.0
  %2989 = vmatprep.subr.mxu0 0.0
  %2990 = vmatpush2.msra.mxu0 0.0
  %2991 = vmatprep.subr.mxu0 0.0
  %2992 = vmatpush2.msra.mxu0 0.0
  %2993 = vmatprep.subr.mxu0 0.0
  %2994 = vmatpush2.msra.mxu0 0.0
  %2995 = vmatprep.subr.mxu0 0.0
  %2996 = vmatpush2.msra.mxu0 0.0
  %2997 = vmatprep.subr.mxu0 0.0
  %2998 = vmatpush2.msra.mxu0 0.0
  %2999 = vmatprep.subr.mxu0 0.0
  %3000 = vmatpush2.msra.mxu0 0.0
  %3001 = vmatprep.subr.mxu0 0.0
  %3002 = vmatpush2.msra.mxu0 0.0
  %3003 = vmatprep.subr.mxu0 0.0
  %3004 = vmatpush2.msra.mxu0 0.0
  %3005 = vmatprep.subr.mxu0 0.0
  %3006 = vmatpush2.msra.mxu0 0.0
  %3007 = vmatprep.subr.mxu0 0.0
  %3008 = vmatpush2.msra.mxu0 0.0
  %3009 = vmatprep.mubr.f32.mxu0 0.0
  %3010 = vmatmul.mubr.f32.gmra.mxu0 %v2872
  %v3011 = vpop.f32.mrf.mxu0
  %v3012 = vadd.f32 0.0, %v3011
  %v3013 = vpop.f32.mrf.mxu0
  %v3014 = vadd.f32 0.0, %v3013
  %3015 = vdwg.mxu0
  %3016 = vmatprep.subr.mxu0 0.0
  %3017 = vmatpush1.msra.mxu0 0.0
  %3018 = vmatprep.subr.mxu0 0.0
  %3019 = vmatpush1.msra.mxu0 0.0
  %3020 = vmatprep.subr.mxu0 0.0
  %3021 = vmatpush1.msra.mxu0 0.0
  %3022 = vmatprep.subr.mxu0 0.0
  %3023 = vmatpush1.msra.mxu0 0.0
  %3024 = vmatprep.subr.mxu0 0.0
  %3025 = vmatpush1.msra.mxu0 0.0
  %3026 = vmatprep.subr.mxu0 0.0
  %3027 = vmatpush1.msra.mxu0 0.0
  %3028 = vmatprep.subr.mxu0 0.0
  %3029 = vmatpush1.msra.mxu0 0.0
  %3030 = vmatprep.subr.mxu0 0.0
  %3031 = vmatpush1.msra.mxu0 0.0
  %3032 = vmatprep.subr.mxu0 0.0
  %3033 = vmatpush1.msra.mxu0 0.0
  %3034 = vmatprep.subr.mxu0 0.0
  %3035 = vmatpush1.msra.mxu0 0.0
  %3036 = vmatprep.subr.mxu0 0.0
  %3037 = vmatpush1.msra.mxu0 0.0
  %3038 = vmatprep.subr.mxu0 0.0
  %3039 = vmatpush1.msra.mxu0 0.0
  %3040 = vmatprep.subr.mxu0 %v969
  %3041 = vmatpush1.msra.mxu0 %v968
  %3042 = vmatprep.subr.mxu0 %v856
  %3043 = vmatpush1.msra.mxu0 %v855
  %3044 = vmatprep.subr.mxu0 %v646
  %3045 = vmatpush1.msra.mxu0 %v645
  %3046 = vmatprep.subr.mxu0 %v16
  %3047 = vmatpush1.msra.mxu0 %v15
  %3048 = vmatprep.subr.mxu0 0.0
  %3049 = vmatpush2.msra.mxu0 0.0
  %3050 = vmatprep.subr.mxu0 0.0
  %3051 = vmatpush2.msra.mxu0 0.0
  %3052 = vmatprep.subr.mxu0 0.0
  %3053 = vmatpush2.msra.mxu0 0.0
  %3054 = vmatprep.subr.mxu0 0.0
  %3055 = vmatpush2.msra.mxu0 0.0
  %3056 = vmatprep.subr.mxu0 0.0
  %3057 = vmatpush2.msra.mxu0 0.0
  %3058 = vmatprep.subr.mxu0 0.0
  %3059 = vmatpush2.msra.mxu0 0.0
  %3060 = vmatprep.subr.mxu0 0.0
  %3061 = vmatpush2.msra.mxu0 0.0
  %3062 = vmatprep.subr.mxu0 0.0
  %3063 = vmatpush2.msra.mxu0 0.0
  %3064 = vmatprep.subr.mxu0 0.0
  %3065 = vmatpush2.msra.mxu0 0.0
  %3066 = vmatprep.subr.mxu0 0.0
  %3067 = vmatpush2.msra.mxu0 0.0
  %3068 = vmatprep.subr.mxu0 0.0
  %3069 = vmatpush2.msra.mxu0 0.0
  %3070 = vmatprep.subr.mxu0 0.0
  %3071 = vmatpush2.msra.mxu0 0.0
  %3072 = vmatprep.subr.mxu0 0.0
  %3073 = vmatpush2.msra.mxu0 0.0
  %3074 = vmatprep.subr.mxu0 0.0
  %3075 = vmatpush2.msra.mxu0 0.0
  %3076 = vmatprep.subr.mxu0 0.0
  %3077 = vmatpush2.msra.mxu0 0.0
  %3078 = vmatprep.subr.mxu0 0.0
  %3079 = vmatpush2.msra.mxu0 0.0
  %3080 = vmatprep.mubr.f32.mxu0 0.0
  %3081 = vmatmul.mubr.f32.gmra.mxu0 %v2872
  %v3082 = vpop.f32.mrf.mxu0
  %v3083 = vadd.f32 0.0, %v3082
  %v3084 = vpop.f32.mrf.mxu0
  %v3085 = vadd.f32 0.0, %v3084
  %3086 = vdwg.mxu0
  %3087 = vmatprep.subr.mxu0 0.0
  %3088 = vmatpush1.msra.mxu0 0.0
  %3089 = vmatprep.subr.mxu0 0.0
  %3090 = vmatpush1.msra.mxu0 0.0
  %3091 = vmatprep.subr.mxu0 0.0
  %3092 = vmatpush1.msra.mxu0 0.0
  %3093 = vmatprep.subr.mxu0 0.0
  %3094 = vmatpush1.msra.mxu0 0.0
  %3095 = vmatprep.subr.mxu0 0.0
  %3096 = vmatpush1.msra.mxu0 0.0
  %3097 = vmatprep.subr.mxu0 0.0
  %3098 = vmatpush1.msra.mxu0 0.0
  %3099 = vmatprep.subr.mxu0 0.0
  %3100 = vmatpush1.msra.mxu0 0.0
  %3101 = vmatprep.subr.mxu0 0.0
  %3102 = vmatpush1.msra.mxu0 0.0
  %3103 = vmatprep.subr.mxu0 0.0
  %3104 = vmatpush1.msra.mxu0 0.0
  %3105 = vmatprep.subr.mxu0 0.0
  %3106 = vmatpush1.msra.mxu0 0.0
  %3107 = vmatprep.subr.mxu0 0.0
  %3108 = vmatpush1.msra.mxu0 0.0
  %3109 = vmatprep.subr.mxu0 0.0
  %3110 = vmatpush1.msra.mxu0 0.0
  %3111 = vmatprep.subr.mxu0 %v971
  %3112 = vmatpush1.msra.mxu0 %v970
  %3113 = vmatprep.subr.mxu0 %v858
  %3114 = vmatpush1.msra.mxu0 %v857
  %3115 = vmatprep.subr.mxu0 %v648
  %3116 = vmatpush1.msra.mxu0 %v647
  %3117 = vmatprep.subr.mxu0 %v18
  %3118 = vmatpush1.msra.mxu0 %v17
  %3119 = vmatprep.subr.mxu0 0.0
  %3120 = vmatpush2.msra.mxu0 0.0
  %3121 = vmatprep.subr.mxu0 0.0
  %3122 = vmatpush2.msra.mxu0 0.0
  %3123 = vmatprep.subr.mxu0 0.0
  %3124 = vmatpush2.msra.mxu0 0.0
  %3125 = vmatprep.subr.mxu0 0.0
  %3126 = vmatpush2.msra.mxu0 0.0
  %3127 = vmatprep.subr.mxu0 0.0
  %3128 = vmatpush2.msra.mxu0 0.0
  %3129 = vmatprep.subr.mxu0 0.0
  %3130 = vmatpush2.msra.mxu0 0.0
  %3131 = vmatprep.subr.mxu0 0.0
  %3132 = vmatpush2.msra.mxu0 0.0
  %3133 = vmatprep.subr.mxu0 0.0
  %3134 = vmatpush2.msra.mxu0 0.0
  %3135 = vmatprep.subr.mxu0 0.0
  %3136 = vmatpush2.msra.mxu0 0.0
  %3137 = vmatprep.subr.mxu0 0.0
  %3138 = vmatpush2.msra.mxu0 0.0
  %3139 = vmatprep.subr.mxu0 0.0
  %3140 = vmatpush2.msra.mxu0 0.0
  %3141 = vmatprep.subr.mxu0 0.0
  %3142 = vmatpush2.msra.mxu0 0.0
  %3143 = vmatprep.subr.mxu0 0.0
  %3144 = vmatpush2.msra.mxu0 0.0
  %3145 = vmatprep.subr.mxu0 0.0
  %3146 = vmatpush2.msra.mxu0 0.0
  %3147 = vmatprep.subr.mxu0 0.0
  %3148 = vmatpush2.msra.mxu0 0.0
  %3149 = vmatprep.subr.mxu0 0.0
  %3150 = vmatpush2.msra.mxu0 0.0
  %3151 = vmatprep.mubr.f32.mxu0 0.0
  %3152 = vmatmul.mubr.f32.gmra.mxu0 %v2872
  %v3153 = vpop.f32.mrf.mxu0
  %v3154 = vadd.f32 0.0, %v3153
  %v3155 = vpop.f32.mrf.mxu0
  %v3156 = vadd.f32 0.0, %v3155
  %3157 = vdwg.mxu0
  %3158 = vmatprep.subr.mxu0 0.0
  %3159 = vmatpush1.msra.mxu0 0.0
  %3160 = vmatprep.subr.mxu0 0.0
  %3161 = vmatpush1.msra.mxu0 0.0
  %3162 = vmatprep.subr.mxu0 0.0
  %3163 = vmatpush1.msra.mxu0 0.0
  %3164 = vmatprep.subr.mxu0 0.0
  %3165 = vmatpush1.msra.mxu0 0.0
  %3166 = vmatprep.subr.mxu0 0.0
  %3167 = vmatpush1.msra.mxu0 0.0
  %3168 = vmatprep.subr.mxu0 0.0
  %3169 = vmatpush1.msra.mxu0 0.0
  %3170 = vmatprep.subr.mxu0 0.0
  %3171 = vmatpush1.msra.mxu0 0.0
  %3172 = vmatprep.subr.mxu0 0.0
  %3173 = vmatpush1.msra.mxu0 0.0
  %3174 = vmatprep.subr.mxu0 0.0
  %3175 = vmatpush1.msra.mxu0 0.0
  %3176 = vmatprep.subr.mxu0 0.0
  %3177 = vmatpush1.msra.mxu0 0.0
  %3178 = vmatprep.subr.mxu0 0.0
  %3179 = vmatpush1.msra.mxu0 0.0
  %3180 = vmatprep.subr.mxu0 0.0
  %3181 = vmatpush1.msra.mxu0 0.0
  %3182 = vmatprep.subr.mxu0 %v973
  %3183 = vmatpush1.msra.mxu0 %v972
  %3184 = vmatprep.subr.mxu0 %v860
  %3185 = vmatpush1.msra.mxu0 %v859
  %3186 = vmatprep.subr.mxu0 %v650
  %3187 = vmatpush1.msra.mxu0 %v649
  %3188 = vmatprep.subr.mxu0 %v20
  %3189 = vmatpush1.msra.mxu0 %v19
  %3190 = vmatprep.subr.mxu0 0.0
  %3191 = vmatpush2.msra.mxu0 0.0
  %3192 = vmatprep.subr.mxu0 0.0
  %3193 = vmatpush2.msra.mxu0 0.0
  %3194 = vmatprep.subr.mxu0 0.0
  %3195 = vmatpush2.msra.mxu0 0.0
  %3196 = vmatprep.subr.mxu0 0.0
  %3197 = vmatpush2.msra.mxu0 0.0
  %3198 = vmatprep.subr.mxu0 0.0
  %3199 = vmatpush2.msra.mxu0 0.0
  %3200 = vmatprep.subr.mxu0 0.0
  %3201 = vmatpush2.msra.mxu0 0.0
  %3202 = vmatprep.subr.mxu0 0.0
  %3203 = vmatpush2.msra.mxu0 0.0
  %3204 = vmatprep.subr.mxu0 0.0
  %3205 = vmatpush2.msra.mxu0 0.0
  %3206 = vmatprep.subr.mxu0 0.0
  %3207 = vmatpush2.msra.mxu0 0.0
  %3208 = vmatprep.subr.mxu0 0.0
  %3209 = vmatpush2.msra.mxu0 0.0
  %3210 = vmatprep.subr.mxu0 0.0
  %3211 = vmatpush2.msra.mxu0 0.0
  %3212 = vmatprep.subr.mxu0 0.0
  %3213 = vmatpush2.msra.mxu0 0.0
  %3214 = vmatprep.subr.mxu0 0.0
  %3215 = vmatpush2.msra.mxu0 0.0
  %3216 = vmatprep.subr.mxu0 0.0
  %3217 = vmatpush2.msra.mxu0 0.0
  %3218 = vmatprep.subr.mxu0 0.0
  %3219 = vmatpush2.msra.mxu0 0.0
  %3220 = vmatprep.subr.mxu0 0.0
  %3221 = vmatpush2.msra.mxu0 0.0
  %3222 = vmatprep.mubr.f32.mxu0 0.0
  %3223 = vmatmul.mubr.f32.gmra.mxu0 %v2872
  %v3224 = vpop.f32.mrf.mxu0
  %v3225 = vadd.f32 0.0, %v3224
  %v3226 = vpop.f32.mrf.mxu0
  %v3227 = vadd.f32 0.0, %v3226
  %3228 = vdwg.mxu0
  %3229 = vmatprep.subr.mxu0 0.0
  %3230 = vmatpush1.msra.mxu0 0.0
  %3231 = vmatprep.subr.mxu0 0.0
  %3232 = vmatpush1.msra.mxu0 0.0
  %3233 = vmatprep.subr.mxu0 0.0
  %3234 = vmatpush1.msra.mxu0 0.0
  %3235 = vmatprep.subr.mxu0 0.0
  %3236 = vmatpush1.msra.mxu0 0.0
  %3237 = vmatprep.subr.mxu0 0.0
  %3238 = vmatpush1.msra.mxu0 0.0
  %3239 = vmatprep.subr.mxu0 0.0
  %3240 = vmatpush1.msra.mxu0 0.0
  %3241 = vmatprep.subr.mxu0 0.0
  %3242 = vmatpush1.msra.mxu0 0.0
  %3243 = vmatprep.subr.mxu0 0.0
  %3244 = vmatpush1.msra.mxu0 0.0
  %3245 = vmatprep.subr.mxu0 0.0
  %3246 = vmatpush1.msra.mxu0 0.0
  %3247 = vmatprep.subr.mxu0 0.0
  %3248 = vmatpush1.msra.mxu0 0.0
  %3249 = vmatprep.subr.mxu0 0.0
  %3250 = vmatpush1.msra.mxu0 0.0
  %3251 = vmatprep.subr.mxu0 0.0
  %3252 = vmatpush1.msra.mxu0 0.0
  %3253 = vmatprep.subr.mxu0 %v975
  %3254 = vmatpush1.msra.mxu0 %v974
  %3255 = vmatprep.subr.mxu0 %v862
  %3256 = vmatpush1.msra.mxu0 %v861
  %3257 = vmatprep.subr.mxu0 %v652
  %3258 = vmatpush1.msra.mxu0 %v651
  %3259 = vmatprep.subr.mxu0 %v22
  %3260 = vmatpush1.msra.mxu0 %v21
  %3261 = vmatprep.subr.mxu0 0.0
  %3262 = vmatpush2.msra.mxu0 0.0
  %3263 = vmatprep.subr.mxu0 0.0
  %3264 = vmatpush2.msra.mxu0 0.0
  %3265 = vmatprep.subr.mxu0 0.0
  %3266 = vmatpush2.msra.mxu0 0.0
  %3267 = vmatprep.subr.mxu0 0.0
  %3268 = vmatpush2.msra.mxu0 0.0
  %3269 = vmatprep.subr.mxu0 0.0
  %3270 = vmatpush2.msra.mxu0 0.0
  %3271 = vmatprep.subr.mxu0 0.0
  %3272 = vmatpush2.msra.mxu0 0.0
  %3273 = vmatprep.subr.mxu0 0.0
  %3274 = vmatpush2.msra.mxu0 0.0
  %3275 = vmatprep.subr.mxu0 0.0
  %3276 = vmatpush2.msra.mxu0 0.0
  %3277 = vmatprep.subr.mxu0 0.0
  %3278 = vmatpush2.msra.mxu0 0.0
  %3279 = vmatprep.subr.mxu0 0.0
  %3280 = vmatpush2.msra.mxu0 0.0
  %3281 = vmatprep.subr.mxu0 0.0
  %3282 = vmatpush2.msra.mxu0 0.0
  %3283 = vmatprep.subr.mxu0 0.0
  %3284 = vmatpush2.msra.mxu0 0.0
  %3285 = vmatprep.subr.mxu0 0.0
  %3286 = vmatpush2.msra.mxu0 0.0
  %3287 = vmatprep.subr.mxu0 0.0
  %3288 = vmatpush2.msra.mxu0 0.0
  %3289 = vmatprep.subr.mxu0 0.0
  %3290 = vmatpush2.msra.mxu0 0.0
  %3291 = vmatprep.subr.mxu0 0.0
  %3292 = vmatpush2.msra.mxu0 0.0
  %3293 = vmatprep.mubr.f32.mxu0 0.0
  %3294 = vmatmul.mubr.f32.gmra.mxu0 %v2872
  %v3295 = vpop.f32.mrf.mxu0
  %v3296 = vadd.f32 0.0, %v3295
  %v3297 = vpop.f32.mrf.mxu0
  %v3298 = vadd.f32 0.0, %v3297
  %3299 = vdwg.mxu0
  %3300 = vmatprep.subr.mxu0 0.0
  %3301 = vmatpush1.msra.mxu0 0.0
  %3302 = vmatprep.subr.mxu0 0.0
  %3303 = vmatpush1.msra.mxu0 0.0
  %3304 = vmatprep.subr.mxu0 0.0
  %3305 = vmatpush1.msra.mxu0 0.0
  %3306 = vmatprep.subr.mxu0 0.0
  %3307 = vmatpush1.msra.mxu0 0.0
  %3308 = vmatprep.subr.mxu0 0.0
  %3309 = vmatpush1.msra.mxu0 0.0
  %3310 = vmatprep.subr.mxu0 0.0
  %3311 = vmatpush1.msra.mxu0 0.0
  %3312 = vmatprep.subr.mxu0 0.0
  %3313 = vmatpush1.msra.mxu0 0.0
  %3314 = vmatprep.subr.mxu0 0.0
  %3315 = vmatpush1.msra.mxu0 0.0
  %3316 = vmatprep.subr.mxu0 0.0
  %3317 = vmatpush1.msra.mxu0 0.0
  %3318 = vmatprep.subr.mxu0 0.0
  %3319 = vmatpush1.msra.mxu0 0.0
  %3320 = vmatprep.subr.mxu0 0.0
  %3321 = vmatpush1.msra.mxu0 0.0
  %3322 = vmatprep.subr.mxu0 0.0
  %3323 = vmatpush1.msra.mxu0 0.0
  %3324 = vmatprep.subr.mxu0 %v977
  %3325 = vmatpush1.msra.mxu0 %v976
  %3326 = vmatprep.subr.mxu0 %v864
  %3327 = vmatpush1.msra.mxu0 %v863
  %3328 = vmatprep.subr.mxu0 %v654
  %3329 = vmatpush1.msra.mxu0 %v653
  %3330 = vmatprep.subr.mxu0 %v24
  %3331 = vmatpush1.msra.mxu0 %v23
  %3332 = vmatprep.subr.mxu0 0.0
  %3333 = vmatpush2.msra.mxu0 0.0
  %3334 = vmatprep.subr.mxu0 0.0
  %3335 = vmatpush2.msra.mxu0 0.0
  %3336 = vmatprep.subr.mxu0 0.0
  %3337 = vmatpush2.msra.mxu0 0.0
  %3338 = vmatprep.subr.mxu0 0.0
  %3339 = vmatpush2.msra.mxu0 0.0
  %3340 = vmatprep.subr.mxu0 0.0
  %3341 = vmatpush2.msra.mxu0 0.0
  %3342 = vmatprep.subr.mxu0 0.0
  %3343 = vmatpush2.msra.mxu0 0.0
  %3344 = vmatprep.subr.mxu0 0.0
  %3345 = vmatpush2.msra.mxu0 0.0
  %3346 = vmatprep.subr.mxu0 0.0
  %3347 = vmatpush2.msra.mxu0 0.0
  %3348 = vmatprep.subr.mxu0 0.0
  %3349 = vmatpush2.msra.mxu0 0.0
  %3350 = vmatprep.subr.mxu0 0.0
  %3351 = vmatpush2.msra.mxu0 0.0
  %3352 = vmatprep.subr.mxu0 0.0
  %3353 = vmatpush2.msra.mxu0 0.0
  %3354 = vmatprep.subr.mxu0 0.0
  %3355 = vmatpush2.msra.mxu0 0.0
  %3356 = vmatprep.subr.mxu0 0.0
  %3357 = vmatpush2.msra.mxu0 0.0
  %3358 = vmatprep.subr.mxu0 0.0
  %3359 = vmatpush2.msra.mxu0 0.0
  %3360 = vmatprep.subr.mxu0 0.0
  %3361 = vmatpush2.msra.mxu0 0.0
  %3362 = vmatprep.subr.mxu0 0.0
  %3363 = vmatpush2.msra.mxu0 0.0
  %3364 = vmatprep.mubr.f32.mxu0 0.0
  %3365 = vmatmul.mubr.f32.gmra.mxu0 %v2872
  %v3366 = vpop.f32.mrf.mxu0
  %v3367 = vadd.f32 0.0, %v3366
  %v3368 = vpop.f32.mrf.mxu0
  %v3369 = vadd.f32 0.0, %v3368
  %3370 = vdwg.mxu0
  %3371 = vmatprep.subr.mxu0 0.0
  %3372 = vmatpush1.msra.mxu0 0.0
  %3373 = vmatprep.subr.mxu0 0.0
  %3374 = vmatpush1.msra.mxu0 0.0
  %3375 = vmatprep.subr.mxu0 0.0
  %3376 = vmatpush1.msra.mxu0 0.0
  %3377 = vmatprep.subr.mxu0 0.0
  %3378 = vmatpush1.msra.mxu0 0.0
  %3379 = vmatprep.subr.mxu0 0.0
  %3380 = vmatpush1.msra.mxu0 0.0
  %3381 = vmatprep.subr.mxu0 0.0
  %3382 = vmatpush1.msra.mxu0 0.0
  %3383 = vmatprep.subr.mxu0 0.0
  %3384 = vmatpush1.msra.mxu0 0.0
  %3385 = vmatprep.subr.mxu0 0.0
  %3386 = vmatpush1.msra.mxu0 0.0
  %3387 = vmatprep.subr.mxu0 0.0
  %3388 = vmatpush1.msra.mxu0 0.0
  %3389 = vmatprep.subr.mxu0 0.0
  %3390 = vmatpush1.msra.mxu0 0.0
  %3391 = vmatprep.subr.mxu0 0.0
  %3392 = vmatpush1.msra.mxu0 0.0
  %3393 = vmatprep.subr.mxu0 0.0
  %3394 = vmatpush1.msra.mxu0 0.0
  %3395 = vmatprep.subr.mxu0 %v979
  %3396 = vmatpush1.msra.mxu0 %v978
  %3397 = vmatprep.subr.mxu0 %v866
  %3398 = vmatpush1.msra.mxu0 %v865
  %3399 = vmatprep.subr.mxu0 %v656
  %3400 = vmatpush1.msra.mxu0 %v655
  %3401 = vmatprep.subr.mxu0 %v26
  %3402 = vmatpush1.msra.mxu0 %v25
  %3403 = vmatprep.subr.mxu0 0.0
  %3404 = vmatpush2.msra.mxu0 0.0
  %3405 = vmatprep.subr.mxu0 0.0
  %3406 = vmatpush2.msra.mxu0 0.0
  %3407 = vmatprep.subr.mxu0 0.0
  %3408 = vmatpush2.msra.mxu0 0.0
  %3409 = vmatprep.subr.mxu0 0.0
  %3410 = vmatpush2.msra.mxu0 0.0
  %3411 = vmatprep.subr.mxu0 0.0
  %3412 = vmatpush2.msra.mxu0 0.0
  %3413 = vmatprep.subr.mxu0 0.0
  %3414 = vmatpush2.msra.mxu0 0.0
  %3415 = vmatprep.subr.mxu0 0.0
  %3416 = vmatpush2.msra.mxu0 0.0
  %3417 = vmatprep.subr.mxu0 0.0
  %3418 = vmatpush2.msra.mxu0 0.0
  %3419 = vmatprep.subr.mxu0 0.0
  %3420 = vmatpush2.msra.mxu0 0.0
  %3421 = vmatprep.subr.mxu0 0.0
  %3422 = vmatpush2.msra.mxu0 0.0
  %3423 = vmatprep.subr.mxu0 0.0
  %3424 = vmatpush2.msra.mxu0 0.0
  %3425 = vmatprep.subr.mxu0 0.0
  %3426 = vmatpush2.msra.mxu0 0.0
  %3427 = vmatprep.subr.mxu0 0.0
  %3428 = vmatpush2.msra.mxu0 0.0
  %3429 = vmatprep.subr.mxu0 0.0
  %3430 = vmatpush2.msra.mxu0 0.0
  %3431 = vmatprep.subr.mxu0 0.0
  %3432 = vmatpush2.msra.mxu0 0.0
  %3433 = vmatprep.subr.mxu0 0.0
  %3434 = vmatpush2.msra.mxu0 0.0
  %3435 = vmatprep.mubr.f32.mxu0 0.0
  %3436 = vmatmul.mubr.f32.gmra.mxu0 %v2872
  %v3437 = vpop.f32.mrf.mxu0
  %v3438 = vadd.f32 0.0, %v3437
  %v3439 = vpop.f32.mrf.mxu0
  %v3440 = vadd.f32 0.0, %v3439
  %3441 = vdwg.mxu0
  %v3442 = vtanh.pop %v2941
  %v3443 = vtanh.pop %v2943
  %v3444 = vtanh.pop %v3012
  %v3445 = vtanh.pop %v3014
  %v3446 = vtanh.pop %v3083
  %v3447 = vtanh.pop %v3085
  %v3448 = vtanh.pop %v3154
  %v3449 = vtanh.pop %v3156
  %v3450 = vtanh.pop %v3225
  %v3451 = vtanh.pop %v3227
  %v3452 = vtanh.pop %v3296
  %v3453 = vtanh.pop %v3298
  %v3454 = vtanh.pop %v3367
  %v3455 = vtanh.pop %v3369
  %v3456 = vtanh.pop %v3438
  %v3457 = vtanh.pop %v3440
  %v3474 = vcombine.low %v3442, %v3443
  %v3475 = vcombine.low %v3444, %v3445
  %v3476 = vcombine.low %v3446, %v3447
  %v3477 = vcombine.low %v3448, %v3449
  %v3478 = vcombine.low %v3450, %v3451
  %v3479 = vcombine.low %v3452, %v3453
  %v3480 = vcombine.low %v3454, %v3455
  %v3481 = vcombine.low %v3456, %v3457
  %s3490 = scalar_lea.vmem %s2, 192
  %3491 = vst [vmem:[%s3490] sm:$0x77] %v3474
  %3492 = vst [vmem:[%s3490 + $0x8] sm:$0x77] %v3475
  %3493 = vst [vmem:[%s3490 + $0x10] sm:$0x77] %v3476
  %3494 = vst [vmem:[%s3490 + $0x18] sm:$0x77] %v3477
  %3495 = vst [vmem:[%s3490 + $0x20] sm:$0x77] %v3478
  %3496 = vst [vmem:[%s3490 + $0x28] sm:$0x77] %v3479
  %3497 = vst [vmem:[%s3490 + $0x30] sm:$0x77] %v3480
  %3498 = vst [vmem:[%s3490 + $0x38] sm:$0x77] %v3481
  // Predicated region
  $region10: #{generator_forward.9} parent=0 // pred_check
    _
  $region11: #{generator_forward.9} parent=0 // pred_check_branch
    %3500 = sbr.rel (0) target = $region13
  $region12: #{generator_forward.9} parent=0 // pred_region
    _
  $region13: #{generator_forward.9} parent=0 // pred_fallthru
    _
  // Predicated region
  $region14: #{generator_forward.9} parent=0 // pred_check
    _
  $region15: #{generator_forward.9} parent=0 // pred_check_branch
    %3502 = sbr.rel (0) target = $region17
  $region16: #{generator_forward.9} parent=0 // pred_region
    _
  $region17: #{generator_forward.9} parent=0 // pred_fallthru
    _

</llo_original>
